<compile_context>
chip_gen: v7x
topology: tpu7x:2x2x1
jax: 0.10.0
libtpu: 0.0.40
codegen_flags: <defaults>
</compile_context>

<pallas_src>
import functools

import jax
import jax.numpy as jnp
from jax.experimental import pallas as pl
from jax.experimental.pallas import tpu as pltpu

IMAGE_H, IMAGE_W = 64, 80       # IMAGE_SIZE = (64, 80) in the PyTorch module
N_OUTPUTS = 6                   # Pong action space
BN_EPS = 1e-5
LEAKY_SLOPE = 0.01              # nn.LeakyReLU() default

# Conv output spatial sizes (VALID): conv1 k8 s4, conv4 k4 s2
H1 = (IMAGE_H - 8) // 4 + 1     # 15
W1 = (IMAGE_W - 8) // 4 + 1     # 19
H2 = (H1 - 4) // 2 + 1          # 6
W2 = (W1 - 4) // 2 + 1          # 8
LIN_IN = H2 * W2 * 64           # 3072

# conv4 only consumes conv1-output pixels (r, c) with r < 2*H2 + 2 = 14 and
# c < 2*W2 + 2 = 18.  The fused kernel therefore works on a parity-blocked
# 14x18 pixel grid: per-image patch-row index = g*PR*PC + R*PC + C with
#   g = 2*(r%2) + (c%2),  R = r//2 (7 used, padded to PR=8),
#   C = c//2 (9 used, padded to PC=16).
# PC is a multiple of 8, so every in-kernel reshape is a layout-preserving
# re-tiling and every conv4 tap (kr, kc) is a contiguous (H2, W2) slice of one
# parity group.
PR, PC = 8, 16
ROWS_PER_IMG = 4 * PR * PC      # 512
CONV1_K = 8 * 8 * 4             # 256


# ----------------------------- Pallas kernels ------------------------------

def _convnet_kernel(p_ref, w1_ref, w2_ref, w3_ref, w4_ref, sb3_ref, sb4_ref,
                    o_ref):
    """Whole conv stack for `ib` images: conv1(8x8 s4 as matmul)+bn1+relu,
    conv2(1x1)+bn2+relu, conv3(1x1)+residual+bn3+relu, conv4(4x4 s2 as 16
    accumulated per-tap matmuls)+bn4+relu.  Everything stays in VMEM."""
    ib = p_ref.shape[0]
    sb = sb3_ref[...]                                  # (6, 32) f32: s1,b1,s2,b2,s3,b3
    sb4 = sb4_ref[...]                                 # (2, 64) f32: s4,b4

    p = p_ref[...].reshape(ib * ROWS_PER_IMG, CONV1_K)
    y1 = jnp.dot(p, w1_ref[...], preferred_element_type=jnp.float32)
    y1 = jnp.maximum(y1 * sb[0:1] + sb[1:2], 0.0)      # identity (stays in VMEM)
    y2 = jnp.dot(y1.astype(w2_ref.dtype), w2_ref[...],
                 preferred_element_type=jnp.float32)
    y2 = jnp.maximum(y2 * sb[2:3] + sb[3:4], 0.0)
    y3 = jnp.dot(y2.astype(w3_ref.dtype), w3_ref[...],
                 preferred_element_type=jnp.float32) + y1
    y3 = jnp.maximum(y3 * sb[4:5] + sb[5:6], 0.0)      # (ib*512, 32) f32

    # conv4: rows are parity-blocked, so tap (kr, kc) is the contiguous
    # (H2, W2) window [kr//2 : kr//2+H2, kc//2 : kc//2+W2] of parity group
    # g = 2*(kr%2) + (kc%2).  Accumulate 16 small matmuls in f32.
    y3 = y3.reshape(ib, 4, PR * PC, 32)
    groups = [y3[:, g].reshape(ib, PR, PC, 32) for g in range(4)]
    w4 = w4_ref[...]                                   # (16, 32, 64), tap = kr*4+kc
    acc = jnp.zeros((ib * H2 * W2, 64), jnp.float32)
    for kr in range(4):
        for kc in range(4):
            g = (kr % 2) * 2 + (kc % 2)
            dr, dc = kr // 2, kc // 2
            blk = groups[g][:, dr:dr + H2, dc:dc + W2, :].reshape(ib * H2 * W2, 32)
            acc = acc + jnp.dot(blk.astype(w4.dtype), w4[kr * 4 + kc],
                                preferred_element_type=jnp.float32)
    f = jnp.maximum(acc * sb4[0:1] + sb4[1:2], 0.0)
    o_ref[...] = f.reshape(ib, H2 * W2, 64).astype(o_ref.dtype)


def fused_convnet(p1, w1, w2, w3, w4, sb123, sb4, out_dtype, ib):
    B = p1.shape[0]
    assert B % ib == 0
    return pl.pallas_call(
        _convnet_kernel,
        out_shape=jax.ShapeDtypeStruct((B, H2 * W2, 64), out_dtype),
        grid=(B // ib,),
        in_specs=[
            pl.BlockSpec((ib, ROWS_PER_IMG, CONV1_K), lambda i: (i, 0, 0)),
            pl.BlockSpec((CONV1_K, 32), lambda i: (0, 0)),
            pl.BlockSpec((32, 32), lambda i: (0, 0)),
            pl.BlockSpec((32, 32), lambda i: (0, 0)),
            pl.BlockSpec((16, 32, 64), lambda i: (0, 0, 0)),
            pl.BlockSpec((6, 32), lambda i: (0, 0)),
            pl.BlockSpec((2, 64), lambda i: (0, 0)),
        ],
        out_specs=pl.BlockSpec((ib, H2 * W2, 64), lambda i: (i, 0, 0)),
        compiler_params=pltpu.CompilerParams(dimension_semantics=("parallel",)),
    )(p1, w1, w2, w3, w4, sb123, sb4)


def _head_kernel(f_ref, w1_ref, b1_ref, w2_ref, b2_ref, o_ref):
    """Fused dueling head: [a_lin1 | v_lin1] (K=3072, N=256) + leaky-relu,
    block-diagonal lin2 ([ax | vx] in one dot), q = vx + (ax - ax.mean())
    (scalar mean over batch x actions, matching the PyTorch module)."""
    na = o_ref.shape[1]
    h = jnp.dot(f_ref[...], w1_ref[...], preferred_element_type=jnp.float32)
    h = h + b1_ref[...]
    h = jnp.where(h > 0.0, h, LEAKY_SLOPE * h)
    y = jnp.dot(h, w2_ref[...], preferred_element_type=jnp.float32) + b2_ref[...]
    ax = y[:, :na]
    vx = y[:, na:na + 1]
    o_ref[...] = vx + (ax - jnp.mean(ax))


def dueling_head(feat, w1, b1, w2, b2):
    # Single block over batch: ax.mean() couples all batch rows and the head
    # is tiny at RL batch sizes (feat + the 3072x256 weight fit VMEM easily).
    B, K = feat.shape
    n_out = w2.shape[1] - 1
    return pl.pallas_call(
        _head_kernel,
        out_shape=jax.ShapeDtypeStruct((B, n_out), jnp.float32),
        grid=(1,),
        in_specs=[
            pl.BlockSpec((B, K), lambda i: (0, 0)),
            pl.BlockSpec((K, 256), lambda i: (0, 0)),
            pl.BlockSpec((1, 256), lambda i: (0, 0)),
            pl.BlockSpec((256, n_out + 1), lambda i: (0, 0)),
            pl.BlockSpec((1, n_out + 1), lambda i: (0, 0)),
        ],
        out_specs=pl.BlockSpec((B, n_out), lambda i: (0, 0)),
    )(feat, w1, b1, w2, b2)


# ------------------------------- JAX glue ----------------------------------

def conv1_patches(x_nhwc):
    """conv1 (8x8 s4) im2col via reshape-only space-to-depth-4 (no gathers),
    restricted to the 14x18 conv1-output region consumed by conv4 and laid out
    in the parity-blocked order expected by the fused kernel.
    Returns (B, ROWS_PER_IMG, CONV1_K)."""
    B = x_nhwc.shape[0]
    # space-to-depth 4: channel index = ir*16 + ic*4 + cin
    s2d = x_nhwc.reshape(B, 16, 4, 20, 4, 4).transpose(0, 1, 3, 2, 4, 5)
    s2d = s2d.reshape(B, 16, 20, 64)
    # 8x8 s4 conv == 2x2 s1 conv on s2d; patch feature index = (2*dr+dc)*64 + ch
    p = jnp.concatenate([
        s2d[:, 0:14, 0:18], s2d[:, 0:14, 1:19],
        s2d[:, 1:15, 0:18], s2d[:, 1:15, 1:19]], axis=-1)       # (B,14,18,256)
    # parity-block: (b, R, r%2, C, c%2, k) -> (b, r%2, c%2, R, C, k), pad R->8, C->16
    p = p.reshape(B, 7, 2, 9, 2, CONV1_K).transpose(0, 2, 4, 1, 3, 5)
    p = jnp.pad(p, ((0, 0), (0, 0), (0, 0), (0, PR - 7), (0, PC - 9), (0, 0)))
    return p.reshape(B, ROWS_PER_IMG, CONV1_K)


def _pick_images_per_block(batch):
    """Largest divisor of `batch` (<= 8) that still leaves >= 2 grid steps so
    both v7x TensorCores get work; falls back to 1 image per step."""
    for ib in (8, 4, 2):
        if batch % ib == 0 and batch // ib >= 2:
            return ib
    return 1


def fold_bn(params, name, conv_bias):
    """Fold BatchNorm (inference) + conv bias into per-channel scale/bias."""
    gamma = params[name + "_gamma"]
    beta = params[name + "_beta"]
    mean = params[name + "_mean"]
    var = params[name + "_var"]
    scale = gamma / jnp.sqrt(var + BN_EPS)
    bias = beta + scale * (conv_bias - mean)
    return scale, bias


def prepare_params(params):
    """One-time folding: conv weights -> matmul layout (conv1 rows permuted to
    the space-to-depth patch order, conv4 split per tap), BN -> scale/bias,
    linear weights pre-transposed, lin1 rows permuted to NHWC-flatten order,
    lin2 packed block-diagonally."""
    prep = {}
    w1 = params["conv1_w"].reshape(32, 4, 2, 4, 2, 4)        # (cout,cin,dr,ir,dc,ic)
    prep["w1"] = w1.transpose(2, 4, 3, 5, 1, 0).reshape(CONV1_K, 32)
    prep["w2"] = params["conv2_w"].transpose(2, 3, 1, 0).reshape(32, 32)
    prep["w3"] = params["conv3_w"].transpose(2, 3, 1, 0).reshape(32, 32)
    prep["w4"] = params["conv4_w"].transpose(2, 3, 1, 0).reshape(16, 32, 64)

    s1, b1 = fold_bn(params, "bn1", params["conv1_b"])
    s2, b2 = fold_bn(params, "bn2", params["conv2_b"])
    s3, b3 = fold_bn(params, "bn3", params["conv3_b"])
    s4, b4 = fold_bn(params, "bn4", params["conv4_b"])
    prep["sb123"] = jnp.stack([s1, b1, s2, b2, s3, b3]).astype(jnp.float32)  # (6,32)
    prep["sb4"] = jnp.stack([s4, b4]).astype(jnp.float32)                    # (2,64)

    def permute_lin1(w):   # (128, 3072) in PyTorch NCHW-flatten column order
        w = w.reshape(128, 64, H2, W2).transpose(0, 2, 3, 1).reshape(128, LIN_IN)
        return w.T                                        # (3072, 128), NHWC order

    wa1 = permute_lin1(params["a_lin1_w"])
    wv1 = permute_lin1(params["v_lin1_w"])
    prep["w_lin1"] = jnp.concatenate([wa1, wv1], axis=1)                      # (3072, 256)
    prep["b_lin1"] = jnp.concatenate(
        [params["a_lin1_b"], params["v_lin1_b"]]).reshape(1, 256).astype(jnp.float32)

    n_out = params["a_lin2_w"].shape[0]
    wa2 = params["a_lin2_w"].T.astype(jnp.float32)                            # (128, 6)
    wv2 = params["v_lin2_w"].T.astype(jnp.float32)                            # (128, 1)
    prep["w_lin2"] = jnp.concatenate(
        [jnp.concatenate([wa2, jnp.zeros((128, 1), jnp.float32)], axis=1),
         jnp.concatenate([jnp.zeros((128, n_out), jnp.float32), wv2], axis=1)],
        axis=0)                                                               # (256, 7)
    prep["b_lin2"] = jnp.concatenate(
        [params["a_lin2_b"], params["v_lin2_b"]]).reshape(1, n_out + 1).astype(jnp.float32)
    return prep


def init_params(key, n_outputs=N_OUTPUTS):
    keys = iter(jax.random.split(key, 32))

    def nrm(shape, scale=0.05):
        return scale * jax.random.normal(next(keys), shape, jnp.float32)

    p = {}
    # Conv weights in PyTorch layout (Cout, Cin, kh, kw)
    p["conv1_w"] = nrm((32, 4, 8, 8));   p["conv1_b"] = nrm((32,))
    p["conv2_w"] = nrm((32, 32, 1, 1));  p["conv2_b"] = nrm((32,))
    p["conv3_w"] = nrm((32, 32, 1, 1));  p["conv3_b"] = nrm((32,))
    p["conv4_w"] = nrm((64, 32, 4, 4));  p["conv4_b"] = nrm((64,))
    for name, c in [("bn1", 32), ("bn2", 32), ("bn3", 32), ("bn4", 64)]:
        p[name + "_gamma"] = 1.0 + nrm((c,), 0.1)
        p[name + "_beta"] = nrm((c,), 0.1)
        p[name + "_mean"] = nrm((c,), 0.1)
        p[name + "_var"] = 1.0 + 0.1 * jnp.abs(
            jax.random.normal(next(keys), (c,), jnp.float32))
    # Linear weights in PyTorch layout (out_features, in_features)
    p["a_lin1_w"] = nrm((128, LIN_IN));      p["a_lin1_b"] = nrm((128,))
    p["a_lin2_w"] = nrm((n_outputs, 128));   p["a_lin2_b"] = nrm((n_outputs,))
    p["v_lin1_w"] = nrm((128, LIN_IN));      p["v_lin1_b"] = nrm((128,))
    p["v_lin2_w"] = nrm((1, 128));           p["v_lin2_b"] = nrm((1,))
    return p


def ddqn_forward(prep, x_nchw, dtype=jnp.bfloat16):
    """Forward pass.  `dtype` is the streamed matmul-operand dtype (bf16 or
    f32); accumulation and the BN/activation epilogues are always f32."""
    B = x_nchw.shape[0]
    x = jnp.transpose(x_nchw, (0, 2, 3, 1)).astype(dtype)         # NHWC

    p1 = conv1_patches(x)                                          # (B, 512, 256)
    ib = _pick_images_per_block(B)
    f = fused_convnet(p1,
                      prep["w1"].astype(dtype), prep["w2"].astype(dtype),
                      prep["w3"].astype(dtype), prep["w4"].astype(dtype),
                      prep["sb123"], prep["sb4"], dtype, ib)       # (B, 48, 64)

    # NHWC flatten (no transpose needed: lin1 weights were pre-permuted)
    feat = f.reshape(B, LIN_IN)                                    # (B, 3072)
    return dueling_head(feat,
                        prep["w_lin1"].astype(dtype), prep["b_lin1"],
                        prep["w_lin2"], prep["b_lin2"])            # (B, N_OUTPUTS) f32


# ----------------------- pure-JAX reference (check) ------------------------

def ref_forward(params, x):
    def conv(t, w, b, stride):
        y = jax.lax.conv_general_dilated(
            t, w, window_strides=(stride, stride), padding="VALID",
            dimension_numbers=("NCHW", "OIHW", "NCHW"))
        return y + b[None, :, None, None]

    def bn(t, name):
        g = params[name + "_gamma"][None, :, None, None]
        be = params[name + "_beta"][None, :, None, None]
        m = params[name + "_mean"][None, :, None, None]
        v = params[name + "_var"][None, :, None, None]
        return g * (t - m) / jnp.sqrt(v + BN_EPS) + be

    relu = lambda t: jnp.maximum(t, 0.0)
    lrelu = lambda t: jnp.where(t > 0, t, LEAKY_SLOPE * t)

    y = relu(bn(conv(x, params["conv1_w"], params["conv1_b"], 4), "bn1"))
    identity = y
    y = relu(bn(conv(y, params["conv2_w"], params["conv2_b"], 1), "bn2"))
    y = relu(bn(conv(y, params["conv3_w"], params["conv3_b"], 1) + identity, "bn3"))
    y = relu(bn(conv(y, params["conv4_w"], params["conv4_b"], 2), "bn4"))
    feat = y.reshape(y.shape[0], -1)
    ax = lrelu(feat @ params["a_lin1_w"].T + params["a_lin1_b"])
    ax = ax @ params["a_lin2_w"].T + params["a_lin2_b"]
    vx = lrelu(feat @ params["v_lin1_w"].T + params["v_lin1_b"])
    vx = vx @ params["v_lin2_w"].T + params["v_lin2_b"]
    return vx + (ax - jnp.mean(ax))


if __name__ == "__main__":
    key = jax.random.PRNGKey(0)
    pkey, xkey = jax.random.split(key)
    params = init_params(pkey, N_OUTPUTS)
    x = jax.random.normal(xkey, (2, 4, IMAGE_H, IMAGE_W), jnp.float32)

    prep = prepare_params(params)
    q_ref = ref_forward(params, x)

    # Strict check with f32 operands (same math path as the reference).
    fwd_f32 = jax.jit(functools.partial(ddqn_forward, dtype=jnp.float32))
    q32 = jax.block_until_ready(fwd_f32(prep, x))
    assert q32.shape == (2, N_OUTPUTS), q32.shape
    err32 = float(jnp.max(jnp.abs(q32 - q_ref)))
    assert err32 < 1e-2, f"f32 mismatch vs reference: {err32}"

    # Fast path: bf16 streamed operands, f32 accumulation / epilogues.
    fwd_bf16 = jax.jit(functools.partial(ddqn_forward, dtype=jnp.bfloat16))
    q16 = jax.block_until_ready(fwd_bf16(prep, x))
    assert q16.shape == (2, N_OUTPUTS), q16.shape
    err16 = float(jnp.max(jnp.abs(q16 - q_ref)))
    assert err16 < 5e-2, f"bf16 mismatch vs reference: {err16}"

    print("KERNEL_OK")
</pallas_src>

<mosaic_0001>
module attributes {stable_mosaic.version = 11 : i64} {
  func.func @_convnet_kernel(%arg0: i32, %arg1: memref<1x512x256xf32, #tpu.memory_space<vmem>>, %arg2: memref<256x32xf32, #tpu.memory_space<vmem>>, %arg3: memref<32x32xf32, #tpu.memory_space<vmem>>, %arg4: memref<32x32xf32, #tpu.memory_space<vmem>>, %arg5: memref<16x32x64xf32, #tpu.memory_space<vmem>>, %arg6: memref<6x32xf32, #tpu.memory_space<vmem>>, %arg7: memref<2x64xf32, #tpu.memory_space<vmem>>, %arg8: memref<1x48x64xf32, #tpu.memory_space<vmem>>) attributes {dimension_semantics = [#tpu.dimension_semantics<parallel>], iteration_bounds = array<i64: 2>, scalar_prefetch = 0 : i64, scratch_operands = 0 : i64, tpu.core_type = #tpu.core_type<tc>, window_params = [{transform_indices = @transform_0, window_bounds = array<i64: 1, 512, 256>}, {pipeline_mode = #tpu.pipeline_mode<synchronous>, transform_indices = @transform_1, window_bounds = array<i64: 256, 32>}, {pipeline_mode = #tpu.pipeline_mode<synchronous>, transform_indices = @transform_2, window_bounds = array<i64: 32, 32>}, {pipeline_mode = #tpu.pipeline_mode<synchronous>, transform_indices = @transform_3, window_bounds = array<i64: 32, 32>}, {pipeline_mode = #tpu.pipeline_mode<synchronous>, transform_indices = @transform_4, window_bounds = array<i64: 16, 32, 64>}, {pipeline_mode = #tpu.pipeline_mode<synchronous>, transform_indices = @transform_5, window_bounds = array<i64: 6, 32>}, {pipeline_mode = #tpu.pipeline_mode<synchronous>, transform_indices = @transform_6, window_bounds = array<i64: 2, 64>}, {transform_indices = @transform_7, window_bounds = array<i64: 1, 48, 64>}]} {
    %c0 = arith.constant 0 : index
    %c0_0 = arith.constant 0 : index
    %0 = vector.load %arg6[%c0, %c0_0] : memref<6x32xf32, #tpu.memory_space<vmem>>, vector<6x32xf32>
    %c0_1 = arith.constant 0 : index
    %c0_2 = arith.constant 0 : index
    %1 = vector.load %arg7[%c0_1, %c0_2] : memref<2x64xf32, #tpu.memory_space<vmem>>, vector<2x64xf32>
    %c0_3 = arith.constant 0 : index
    %c0_4 = arith.constant 0 : index
    %c0_5 = arith.constant 0 : index
    %2 = vector.load %arg1[%c0_3, %c0_4, %c0_5] : memref<1x512x256xf32, #tpu.memory_space<vmem>>, vector<1x512x256xf32>
    %3 = vector.shape_cast %2 : vector<1x512x256xf32> to vector<512x256xf32>
    %c0_6 = arith.constant 0 : index
    %c0_7 = arith.constant 0 : index
    %4 = vector.load %arg2[%c0_6, %c0_7] : memref<256x32xf32, #tpu.memory_space<vmem>>, vector<256x32xf32>
    %cst = arith.constant dense<0.000000e+00> : vector<512x32xf32>
    %5 = tpu.matmul %3, %4, %cst {dimension_numbers = #tpu.dot_dimension_numbers<[1], [0], [0], [1], [0, 0, 1, 1], [], []>} : vector<512x256xf32>, vector<256x32xf32>, vector<512x32xf32> -> vector<512x32xf32>
    %6 = vector.extract_strided_slice %0 {offsets = [0, 0], sizes = [1, 32], strides = [1, 1]} : vector<6x32xf32> to vector<1x32xf32>
    %7 = vector.broadcast %6 : vector<1x32xf32> to vector<512x32xf32>
    %8 = arith.mulf %5, %7 : vector<512x32xf32>
    %9 = vector.extract_strided_slice %0 {offsets = [1, 0], sizes = [1, 32], strides = [1, 1]} : vector<6x32xf32> to vector<1x32xf32>
    %10 = vector.broadcast %9 : vector<1x32xf32> to vector<512x32xf32>
    %11 = arith.addf %8, %10 : vector<512x32xf32>
    %cst_8 = arith.constant 0.000000e+00 : f32
    %12 = vector.broadcast %cst_8 : f32 to vector<512x32xf32>
    %13 = arith.maximumf %11, %12 : vector<512x32xf32>
    %c0_9 = arith.constant 0 : index
    %c0_10 = arith.constant 0 : index
    %14 = vector.load %arg3[%c0_9, %c0_10] : memref<32x32xf32, #tpu.memory_space<vmem>>, vector<32x32xf32>
    %cst_11 = arith.constant dense<0.000000e+00> : vector<512x32xf32>
    %15 = tpu.matmul %13, %14, %cst_11 {dimension_numbers = #tpu.dot_dimension_numbers<[1], [0], [0], [1], [0, 0, 1, 1], [], []>} : vector<512x32xf32>, vector<32x32xf32>, vector<512x32xf32> -> vector<512x32xf32>
    %16 = vector.extract_strided_slice %0 {offsets = [2, 0], sizes = [1, 32], strides = [1, 1]} : vector<6x32xf32> to vector<1x32xf32>
    %17 = vector.broadcast %16 : vector<1x32xf32> to vector<512x32xf32>
    %18 = arith.mulf %15, %17 : vector<512x32xf32>
    %19 = vector.extract_strided_slice %0 {offsets = [3, 0], sizes = [1, 32], strides = [1, 1]} : vector<6x32xf32> to vector<1x32xf32>
    %20 = vector.broadcast %19 : vector<1x32xf32> to vector<512x32xf32>
    %21 = arith.addf %18, %20 : vector<512x32xf32>
    %cst_12 = arith.constant 0.000000e+00 : f32
    %22 = vector.broadcast %cst_12 : f32 to vector<512x32xf32>
    %23 = arith.maximumf %21, %22 : vector<512x32xf32>
    %c0_13 = arith.constant 0 : index
    %c0_14 = arith.constant 0 : index
    %24 = vector.load %arg4[%c0_13, %c0_14] : memref<32x32xf32, #tpu.memory_space<vmem>>, vector<32x32xf32>
    %cst_15 = arith.constant dense<0.000000e+00> : vector<512x32xf32>
    %25 = tpu.matmul %23, %24, %cst_15 {dimension_numbers = #tpu.dot_dimension_numbers<[1], [0], [0], [1], [0, 0, 1, 1], [], []>} : vector<512x32xf32>, vector<32x32xf32>, vector<512x32xf32> -> vector<512x32xf32>
    %26 = arith.addf %25, %13 : vector<512x32xf32>
    %27 = vector.extract_strided_slice %0 {offsets = [4, 0], sizes = [1, 32], strides = [1, 1]} : vector<6x32xf32> to vector<1x32xf32>
    %28 = vector.broadcast %27 : vector<1x32xf32> to vector<512x32xf32>
    %29 = arith.mulf %26, %28 : vector<512x32xf32>
    %30 = vector.extract_strided_slice %0 {offsets = [5, 0], sizes = [1, 32], strides = [1, 1]} : vector<6x32xf32> to vector<1x32xf32>
    %31 = vector.broadcast %30 : vector<1x32xf32> to vector<512x32xf32>
    %32 = arith.addf %29, %31 : vector<512x32xf32>
    %cst_16 = arith.constant 0.000000e+00 : f32
    %33 = vector.broadcast %cst_16 : f32 to vector<512x32xf32>
    %34 = arith.maximumf %32, %33 : vector<512x32xf32>
    %35 = vector.shape_cast %34 : vector<512x32xf32> to vector<1x4x128x32xf32>
    %36 = vector.extract_strided_slice %35 {offsets = [0, 0, 0, 0], sizes = [1, 1, 128, 32], strides = [1, 1, 1, 1]} : vector<1x4x128x32xf32> to vector<1x1x128x32xf32>
    %37 = vector.shape_cast %36 : vector<1x1x128x32xf32> to vector<1x128x32xf32>
    %38 = vector.shape_cast %37 : vector<1x128x32xf32> to vector<1x8x16x32xf32>
    %39 = vector.extract_strided_slice %35 {offsets = [0, 1, 0, 0], sizes = [1, 1, 128, 32], strides = [1, 1, 1, 1]} : vector<1x4x128x32xf32> to vector<1x1x128x32xf32>
    %40 = vector.shape_cast %39 : vector<1x1x128x32xf32> to vector<1x128x32xf32>
    %41 = vector.shape_cast %40 : vector<1x128x32xf32> to vector<1x8x16x32xf32>
    %42 = vector.extract_strided_slice %35 {offsets = [0, 2, 0, 0], sizes = [1, 1, 128, 32], strides = [1, 1, 1, 1]} : vector<1x4x128x32xf32> to vector<1x1x128x32xf32>
    %43 = vector.shape_cast %42 : vector<1x1x128x32xf32> to vector<1x128x32xf32>
    %44 = vector.shape_cast %43 : vector<1x128x32xf32> to vector<1x8x16x32xf32>
    %45 = vector.extract_strided_slice %35 {offsets = [0, 3, 0, 0], sizes = [1, 1, 128, 32], strides = [1, 1, 1, 1]} : vector<1x4x128x32xf32> to vector<1x1x128x32xf32>
    %46 = vector.shape_cast %45 : vector<1x1x128x32xf32> to vector<1x128x32xf32>
    %47 = vector.shape_cast %46 : vector<1x128x32xf32> to vector<1x8x16x32xf32>
    %c0_17 = arith.constant 0 : index
    %c0_18 = arith.constant 0 : index
    %c0_19 = arith.constant 0 : index
    %48 = vector.load %arg5[%c0_17, %c0_18, %c0_19] : memref<16x32x64xf32, #tpu.memory_space<vmem>>, vector<16x32x64xf32>
    %cst_20 = arith.constant 0.000000e+00 : f32
    %49 = vector.broadcast %cst_20 : f32 to vector<48x64xf32>
    %50 = vector.extract_strided_slice %38 {offsets = [0, 0, 0, 0], sizes = [1, 6, 8, 32], strides = [1, 1, 1, 1]} : vector<1x8x16x32xf32> to vector<1x6x8x32xf32>
    %51 = vector.shape_cast %50 : vector<1x6x8x32xf32> to vector<48x32xf32>
    %52 = vector.extract_strided_slice %48 {offsets = [0, 0, 0], sizes = [1, 32, 64], strides = [1, 1, 1]} : vector<16x32x64xf32> to vector<1x32x64xf32>
    %53 = vector.shape_cast %52 : vector<1x32x64xf32> to vector<32x64xf32>
    %cst_21 = arith.constant dense<0.000000e+00> : vector<48x64xf32>
    %54 = tpu.matmul %51, %53, %cst_21 {dimension_numbers = #tpu.dot_dimension_numbers<[1], [0], [0], [1], [0, 0, 1, 1], [], []>} : vector<48x32xf32>, vector<32x64xf32>, vector<48x64xf32> -> vector<48x64xf32>
    %55 = arith.addf %49, %54 : vector<48x64xf32>
    %56 = vector.extract_strided_slice %41 {offsets = [0, 0, 0, 0], sizes = [1, 6, 8, 32], strides = [1, 1, 1, 1]} : vector<1x8x16x32xf32> to vector<1x6x8x32xf32>
    %57 = vector.shape_cast %56 : vector<1x6x8x32xf32> to vector<48x32xf32>
    %58 = vector.extract_strided_slice %48 {offsets = [1, 0, 0], sizes = [1, 32, 64], strides = [1, 1, 1]} : vector<16x32x64xf32> to vector<1x32x64xf32>
    %59 = vector.shape_cast %58 : vector<1x32x64xf32> to vector<32x64xf32>
    %cst_22 = arith.constant dense<0.000000e+00> : vector<48x64xf32>
    %60 = tpu.matmul %57, %59, %cst_22 {dimension_numbers = #tpu.dot_dimension_numbers<[1], [0], [0], [1], [0, 0, 1, 1], [], []>} : vector<48x32xf32>, vector<32x64xf32>, vector<48x64xf32> -> vector<48x64xf32>
    %61 = arith.addf %55, %60 : vector<48x64xf32>
    %62 = vector.extract_strided_slice %38 {offsets = [0, 0, 1, 0], sizes = [1, 6, 8, 32], strides = [1, 1, 1, 1]} : vector<1x8x16x32xf32> to vector<1x6x8x32xf32>
    %63 = vector.shape_cast %62 : vector<1x6x8x32xf32> to vector<48x32xf32>
    %64 = vector.extract_strided_slice %48 {offsets = [2, 0, 0], sizes = [1, 32, 64], strides = [1, 1, 1]} : vector<16x32x64xf32> to vector<1x32x64xf32>
    %65 = vector.shape_cast %64 : vector<1x32x64xf32> to vector<32x64xf32>
    %cst_23 = arith.constant dense<0.000000e+00> : vector<48x64xf32>
    %66 = tpu.matmul %63, %65, %cst_23 {dimension_numbers = #tpu.dot_dimension_numbers<[1], [0], [0], [1], [0, 0, 1, 1], [], []>} : vector<48x32xf32>, vector<32x64xf32>, vector<48x64xf32> -> vector<48x64xf32>
    %67 = arith.addf %61, %66 : vector<48x64xf32>
    %68 = vector.extract_strided_slice %41 {offsets = [0, 0, 1, 0], sizes = [1, 6, 8, 32], strides = [1, 1, 1, 1]} : vector<1x8x16x32xf32> to vector<1x6x8x32xf32>
    %69 = vector.shape_cast %68 : vector<1x6x8x32xf32> to vector<48x32xf32>
    %70 = vector.extract_strided_slice %48 {offsets = [3, 0, 0], sizes = [1, 32, 64], strides = [1, 1, 1]} : vector<16x32x64xf32> to vector<1x32x64xf32>
    %71 = vector.shape_cast %70 : vector<1x32x64xf32> to vector<32x64xf32>
    %cst_24 = arith.constant dense<0.000000e+00> : vector<48x64xf32>
    %72 = tpu.matmul %69, %71, %cst_24 {dimension_numbers = #tpu.dot_dimension_numbers<[1], [0], [0], [1], [0, 0, 1, 1], [], []>} : vector<48x32xf32>, vector<32x64xf32>, vector<48x64xf32> -> vector<48x64xf32>
    %73 = arith.addf %67, %72 : vector<48x64xf32>
    %74 = vector.extract_strided_slice %44 {offsets = [0, 0, 0, 0], sizes = [1, 6, 8, 32], strides = [1, 1, 1, 1]} : vector<1x8x16x32xf32> to vector<1x6x8x32xf32>
    %75 = vector.shape_cast %74 : vector<1x6x8x32xf32> to vector<48x32xf32>
    %76 = vector.extract_strided_slice %48 {offsets = [4, 0, 0], sizes = [1, 32, 64], strides = [1, 1, 1]} : vector<16x32x64xf32> to vector<1x32x64xf32>
    %77 = vector.shape_cast %76 : vector<1x32x64xf32> to vector<32x64xf32>
    %cst_25 = arith.constant dense<0.000000e+00> : vector<48x64xf32>
    %78 = tpu.matmul %75, %77, %cst_25 {dimension_numbers = #tpu.dot_dimension_numbers<[1], [0], [0], [1], [0, 0, 1, 1], [], []>} : vector<48x32xf32>, vector<32x64xf32>, vector<48x64xf32> -> vector<48x64xf32>
    %79 = arith.addf %73, %78 : vector<48x64xf32>
    %80 = vector.extract_strided_slice %47 {offsets = [0, 0, 0, 0], sizes = [1, 6, 8, 32], strides = [1, 1, 1, 1]} : vector<1x8x16x32xf32> to vector<1x6x8x32xf32>
    %81 = vector.shape_cast %80 : vector<1x6x8x32xf32> to vector<48x32xf32>
    %82 = vector.extract_strided_slice %48 {offsets = [5, 0, 0], sizes = [1, 32, 64], strides = [1, 1, 1]} : vector<16x32x64xf32> to vector<1x32x64xf32>
    %83 = vector.shape_cast %82 : vector<1x32x64xf32> to vector<32x64xf32>
    %cst_26 = arith.constant dense<0.000000e+00> : vector<48x64xf32>
    %84 = tpu.matmul %81, %83, %cst_26 {dimension_numbers = #tpu.dot_dimension_numbers<[1], [0], [0], [1], [0, 0, 1, 1], [], []>} : vector<48x32xf32>, vector<32x64xf32>, vector<48x64xf32> -> vector<48x64xf32>
    %85 = arith.addf %79, %84 : vector<48x64xf32>
    %86 = vector.extract_strided_slice %44 {offsets = [0, 0, 1, 0], sizes = [1, 6, 8, 32], strides = [1, 1, 1, 1]} : vector<1x8x16x32xf32> to vector<1x6x8x32xf32>
    %87 = vector.shape_cast %86 : vector<1x6x8x32xf32> to vector<48x32xf32>
    %88 = vector.extract_strided_slice %48 {offsets = [6, 0, 0], sizes = [1, 32, 64], strides = [1, 1, 1]} : vector<16x32x64xf32> to vector<1x32x64xf32>
    %89 = vector.shape_cast %88 : vector<1x32x64xf32> to vector<32x64xf32>
    %cst_27 = arith.constant dense<0.000000e+00> : vector<48x64xf32>
    %90 = tpu.matmul %87, %89, %cst_27 {dimension_numbers = #tpu.dot_dimension_numbers<[1], [0], [0], [1], [0, 0, 1, 1], [], []>} : vector<48x32xf32>, vector<32x64xf32>, vector<48x64xf32> -> vector<48x64xf32>
    %91 = arith.addf %85, %90 : vector<48x64xf32>
    %92 = vector.extract_strided_slice %47 {offsets = [0, 0, 1, 0], sizes = [1, 6, 8, 32], strides = [1, 1, 1, 1]} : vector<1x8x16x32xf32> to vector<1x6x8x32xf32>
    %93 = vector.shape_cast %92 : vector<1x6x8x32xf32> to vector<48x32xf32>
    %94 = vector.extract_strided_slice %48 {offsets = [7, 0, 0], sizes = [1, 32, 64], strides = [1, 1, 1]} : vector<16x32x64xf32> to vector<1x32x64xf32>
    %95 = vector.shape_cast %94 : vector<1x32x64xf32> to vector<32x64xf32>
    %cst_28 = arith.constant dense<0.000000e+00> : vector<48x64xf32>
    %96 = tpu.matmul %93, %95, %cst_28 {dimension_numbers = #tpu.dot_dimension_numbers<[1], [0], [0], [1], [0, 0, 1, 1], [], []>} : vector<48x32xf32>, vector<32x64xf32>, vector<48x64xf32> -> vector<48x64xf32>
    %97 = arith.addf %91, %96 : vector<48x64xf32>
    %98 = vector.extract_strided_slice %38 {offsets = [0, 1, 0, 0], sizes = [1, 6, 8, 32], strides = [1, 1, 1, 1]} : vector<1x8x16x32xf32> to vector<1x6x8x32xf32>
    %99 = vector.shape_cast %98 : vector<1x6x8x32xf32> to vector<48x32xf32>
    %100 = vector.extract_strided_slice %48 {offsets = [8, 0, 0], sizes = [1, 32, 64], strides = [1, 1, 1]} : vector<16x32x64xf32> to vector<1x32x64xf32>
    %101 = vector.shape_cast %100 : vector<1x32x64xf32> to vector<32x64xf32>
    %cst_29 = arith.constant dense<0.000000e+00> : vector<48x64xf32>
    %102 = tpu.matmul %99, %101, %cst_29 {dimension_numbers = #tpu.dot_dimension_numbers<[1], [0], [0], [1], [0, 0, 1, 1], [], []>} : vector<48x32xf32>, vector<32x64xf32>, vector<48x64xf32> -> vector<48x64xf32>
    %103 = arith.addf %97, %102 : vector<48x64xf32>
    %104 = vector.extract_strided_slice %41 {offsets = [0, 1, 0, 0], sizes = [1, 6, 8, 32], strides = [1, 1, 1, 1]} : vector<1x8x16x32xf32> to vector<1x6x8x32xf32>
    %105 = vector.shape_cast %104 : vector<1x6x8x32xf32> to vector<48x32xf32>
    %106 = vector.extract_strided_slice %48 {offsets = [9, 0, 0], sizes = [1, 32, 64], strides = [1, 1, 1]} : vector<16x32x64xf32> to vector<1x32x64xf32>
    %107 = vector.shape_cast %106 : vector<1x32x64xf32> to vector<32x64xf32>
    %cst_30 = arith.constant dense<0.000000e+00> : vector<48x64xf32>
    %108 = tpu.matmul %105, %107, %cst_30 {dimension_numbers = #tpu.dot_dimension_numbers<[1], [0], [0], [1], [0, 0, 1, 1], [], []>} : vector<48x32xf32>, vector<32x64xf32>, vector<48x64xf32> -> vector<48x64xf32>
    %109 = arith.addf %103, %108 : vector<48x64xf32>
    %110 = vector.extract_strided_slice %38 {offsets = [0, 1, 1, 0], sizes = [1, 6, 8, 32], strides = [1, 1, 1, 1]} : vector<1x8x16x32xf32> to vector<1x6x8x32xf32>
    %111 = vector.shape_cast %110 : vector<1x6x8x32xf32> to vector<48x32xf32>
    %112 = vector.extract_strided_slice %48 {offsets = [10, 0, 0], sizes = [1, 32, 64], strides = [1, 1, 1]} : vector<16x32x64xf32> to vector<1x32x64xf32>
    %113 = vector.shape_cast %112 : vector<1x32x64xf32> to vector<32x64xf32>
    %cst_31 = arith.constant dense<0.000000e+00> : vector<48x64xf32>
    %114 = tpu.matmul %111, %113, %cst_31 {dimension_numbers = #tpu.dot_dimension_numbers<[1], [0], [0], [1], [0, 0, 1, 1], [], []>} : vector<48x32xf32>, vector<32x64xf32>, vector<48x64xf32> -> vector<48x64xf32>
    %115 = arith.addf %109, %114 : vector<48x64xf32>
    %116 = vector.extract_strided_slice %41 {offsets = [0, 1, 1, 0], sizes = [1, 6, 8, 32], strides = [1, 1, 1, 1]} : vector<1x8x16x32xf32> to vector<1x6x8x32xf32>
    %117 = vector.shape_cast %116 : vector<1x6x8x32xf32> to vector<48x32xf32>
    %118 = vector.extract_strided_slice %48 {offsets = [11, 0, 0], sizes = [1, 32, 64], strides = [1, 1, 1]} : vector<16x32x64xf32> to vector<1x32x64xf32>
    %119 = vector.shape_cast %118 : vector<1x32x64xf32> to vector<32x64xf32>
    %cst_32 = arith.constant dense<0.000000e+00> : vector<48x64xf32>
    %120 = tpu.matmul %117, %119, %cst_32 {dimension_numbers = #tpu.dot_dimension_numbers<[1], [0], [0], [1], [0, 0, 1, 1], [], []>} : vector<48x32xf32>, vector<32x64xf32>, vector<48x64xf32> -> vector<48x64xf32>
    %121 = arith.addf %115, %120 : vector<48x64xf32>
    %122 = vector.extract_strided_slice %44 {offsets = [0, 1, 0, 0], sizes = [1, 6, 8, 32], strides = [1, 1, 1, 1]} : vector<1x8x16x32xf32> to vector<1x6x8x32xf32>
    %123 = vector.shape_cast %122 : vector<1x6x8x32xf32> to vector<48x32xf32>
    %124 = vector.extract_strided_slice %48 {offsets = [12, 0, 0], sizes = [1, 32, 64], strides = [1, 1, 1]} : vector<16x32x64xf32> to vector<1x32x64xf32>
    %125 = vector.shape_cast %124 : vector<1x32x64xf32> to vector<32x64xf32>
    %cst_33 = arith.constant dense<0.000000e+00> : vector<48x64xf32>
    %126 = tpu.matmul %123, %125, %cst_33 {dimension_numbers = #tpu.dot_dimension_numbers<[1], [0], [0], [1], [0, 0, 1, 1], [], []>} : vector<48x32xf32>, vector<32x64xf32>, vector<48x64xf32> -> vector<48x64xf32>
    %127 = arith.addf %121, %126 : vector<48x64xf32>
    %128 = vector.extract_strided_slice %47 {offsets = [0, 1, 0, 0], sizes = [1, 6, 8, 32], strides = [1, 1, 1, 1]} : vector<1x8x16x32xf32> to vector<1x6x8x32xf32>
    %129 = vector.shape_cast %128 : vector<1x6x8x32xf32> to vector<48x32xf32>
    %130 = vector.extract_strided_slice %48 {offsets = [13, 0, 0], sizes = [1, 32, 64], strides = [1, 1, 1]} : vector<16x32x64xf32> to vector<1x32x64xf32>
    %131 = vector.shape_cast %130 : vector<1x32x64xf32> to vector<32x64xf32>
    %cst_34 = arith.constant dense<0.000000e+00> : vector<48x64xf32>
    %132 = tpu.matmul %129, %131, %cst_34 {dimension_numbers = #tpu.dot_dimension_numbers<[1], [0], [0], [1], [0, 0, 1, 1], [], []>} : vector<48x32xf32>, vector<32x64xf32>, vector<48x64xf32> -> vector<48x64xf32>
    %133 = arith.addf %127, %132 : vector<48x64xf32>
    %134 = vector.extract_strided_slice %44 {offsets = [0, 1, 1, 0], sizes = [1, 6, 8, 32], strides = [1, 1, 1, 1]} : vector<1x8x16x32xf32> to vector<1x6x8x32xf32>
    %135 = vector.shape_cast %134 : vector<1x6x8x32xf32> to vector<48x32xf32>
    %136 = vector.extract_strided_slice %48 {offsets = [14, 0, 0], sizes = [1, 32, 64], strides = [1, 1, 1]} : vector<16x32x64xf32> to vector<1x32x64xf32>
    %137 = vector.shape_cast %136 : vector<1x32x64xf32> to vector<32x64xf32>
    %cst_35 = arith.constant dense<0.000000e+00> : vector<48x64xf32>
    %138 = tpu.matmul %135, %137, %cst_35 {dimension_numbers = #tpu.dot_dimension_numbers<[1], [0], [0], [1], [0, 0, 1, 1], [], []>} : vector<48x32xf32>, vector<32x64xf32>, vector<48x64xf32> -> vector<48x64xf32>
    %139 = arith.addf %133, %138 : vector<48x64xf32>
    %140 = vector.extract_strided_slice %47 {offsets = [0, 1, 1, 0], sizes = [1, 6, 8, 32], strides = [1, 1, 1, 1]} : vector<1x8x16x32xf32> to vector<1x6x8x32xf32>
    %141 = vector.shape_cast %140 : vector<1x6x8x32xf32> to vector<48x32xf32>
    %142 = vector.extract_strided_slice %48 {offsets = [15, 0, 0], sizes = [1, 32, 64], strides = [1, 1, 1]} : vector<16x32x64xf32> to vector<1x32x64xf32>
    %143 = vector.shape_cast %142 : vector<1x32x64xf32> to vector<32x64xf32>
    %cst_36 = arith.constant dense<0.000000e+00> : vector<48x64xf32>
    %144 = tpu.matmul %141, %143, %cst_36 {dimension_numbers = #tpu.dot_dimension_numbers<[1], [0], [0], [1], [0, 0, 1, 1], [], []>} : vector<48x32xf32>, vector<32x64xf32>, vector<48x64xf32> -> vector<48x64xf32>
    %145 = arith.addf %139, %144 : vector<48x64xf32>
    %146 = vector.extract_strided_slice %1 {offsets = [0, 0], sizes = [1, 64], strides = [1, 1]} : vector<2x64xf32> to vector<1x64xf32>
    %147 = vector.broadcast %146 : vector<1x64xf32> to vector<48x64xf32>
    %148 = arith.mulf %145, %147 : vector<48x64xf32>
    %149 = vector.extract_strided_slice %1 {offsets = [1, 0], sizes = [1, 64], strides = [1, 1]} : vector<2x64xf32> to vector<1x64xf32>
    %150 = vector.broadcast %149 : vector<1x64xf32> to vector<48x64xf32>
    %151 = arith.addf %148, %150 : vector<48x64xf32>
    %cst_37 = arith.constant 0.000000e+00 : f32
    %152 = vector.broadcast %cst_37 : f32 to vector<48x64xf32>
    %153 = arith.maximumf %151, %152 : vector<48x64xf32>
    %154 = vector.shape_cast %153 : vector<48x64xf32> to vector<1x48x64xf32>
    %c0_38 = arith.constant 0 : index
    %c0_39 = arith.constant 0 : index
    %c0_40 = arith.constant 0 : index
    %155 = vector.load %arg8[%c0_38, %c0_39, %c0_40] : memref<1x48x64xf32, #tpu.memory_space<vmem>>, vector<1x48x64xf32>
    tpu.vector_store %arg8[%c0_38, %c0_39, %c0_40], %154 {strides = array<i32>} : memref<1x48x64xf32, #tpu.memory_space<vmem>>, vector<1x48x64xf32>,
    return
  }
  func.func @transform_0(%arg0: i32) -> (i32, i32, i32) {
    %c0_i32 = arith.constant 0 : i32
    %c0_i32_0 = arith.constant 0 : i32
    %c0_i32_1 = arith.constant 0 : i32
    return %arg0, %c0_i32, %c0_i32_0 : i32, i32, i32
  }
  func.func @transform_1(%arg0: i32) -> (i32, i32) {
    %c0_i32 = arith.constant 0 : i32
    %c0_i32_0 = arith.constant 0 : i32
    %c0_i32_1 = arith.constant 0 : i32
    return %c0_i32, %c0_i32_0 : i32, i32
  }
  func.func @transform_2(%arg0: i32) -> (i32, i32) {
    %c0_i32 = arith.constant 0 : i32
    %c0_i32_0 = arith.constant 0 : i32
    %c0_i32_1 = arith.constant 0 : i32
    return %c0_i32, %c0_i32_0 : i32, i32
  }
  func.func @transform_3(%arg0: i32) -> (i32, i32) {
    %c0_i32 = arith.constant 0 : i32
    %c0_i32_0 = arith.constant 0 : i32
    %c0_i32_1 = arith.constant 0 : i32
    return %c0_i32, %c0_i32_0 : i32, i32
  }
  func.func @transform_4(%arg0: i32) -> (i32, i32, i32) {
    %c0_i32 = arith.constant 0 : i32
    %c0_i32_0 = arith.constant 0 : i32
    %c0_i32_1 = arith.constant 0 : i32
    %c0_i32_2 = arith.constant 0 : i32
    return %c0_i32, %c0_i32_0, %c0_i32_1 : i32, i32, i32
  }
  func.func @transform_5(%arg0: i32) -> (i32, i32) {
    %c0_i32 = arith.constant 0 : i32
    %c0_i32_0 = arith.constant 0 : i32
    %c0_i32_1 = arith.constant 0 : i32
    return %c0_i32, %c0_i32_0 : i32, i32
  }
  func.func @transform_6(%arg0: i32) -> (i32, i32) {
    %c0_i32 = arith.constant 0 : i32
    %c0_i32_0 = arith.constant 0 : i32
    %c0_i32_1 = arith.constant 0 : i32
    return %c0_i32, %c0_i32_0 : i32, i32
  }
  func.func @transform_7(%arg0: i32) -> (i32, i32, i32) {
    %c0_i32 = arith.constant 0 : i32
    %c0_i32_0 = arith.constant 0 : i32
    %c0_i32_1 = arith.constant 0 : i32
    return %arg0, %c0_i32, %c0_i32_0 : i32, i32, i32
  }
}

module attributes {stable_mosaic.version = 11 : i64} {
  func.func @_head_kernel(%arg0: i32, %arg1: memref<2x3072xf32, #tpu.memory_space<vmem>>, %arg2: memref<3072x256xf32, #tpu.memory_space<vmem>>, %arg3: memref<1x256xf32, #tpu.memory_space<vmem>>, %arg4: memref<256x7xf32, #tpu.memory_space<vmem>>, %arg5: memref<1x7xf32, #tpu.memory_space<vmem>>, %arg6: memref<2x6xf32, #tpu.memory_space<vmem>>) attributes {dimension_semantics = [#tpu.dimension_semantics<arbitrary>], iteration_bounds = array<i64: 1>, scalar_prefetch = 0 : i64, scratch_operands = 0 : i64, tpu.core_type = #tpu.core_type<tc>, window_params = [{pipeline_mode = #tpu.pipeline_mode<synchronous>, transform_indices = @transform_0, window_bounds = array<i64: 2, 3072>}, {pipeline_mode = #tpu.pipeline_mode<synchronous>, transform_indices = @transform_1, window_bounds = array<i64: 3072, 256>}, {pipeline_mode = #tpu.pipeline_mode<synchronous>, transform_indices = @transform_2, window_bounds = array<i64: 1, 256>}, {pipeline_mode = #tpu.pipeline_mode<synchronous>, transform_indices = @transform_3, window_bounds = array<i64: 256, 7>}, {pipeline_mode = #tpu.pipeline_mode<synchronous>, transform_indices = @transform_4, window_bounds = array<i64: 1, 7>}, {pipeline_mode = #tpu.pipeline_mode<synchronous>, transform_indices = @transform_5, window_bounds = array<i64: 2, 6>}]} {
    %c0 = arith.constant 0 : index
    %c0_0 = arith.constant 0 : index
    %0 = vector.load %arg1[%c0, %c0_0] : memref<2x3072xf32, #tpu.memory_space<vmem>>, vector<2x3072xf32>
    %c0_1 = arith.constant 0 : index
    %c0_2 = arith.constant 0 : index
    %1 = vector.load %arg2[%c0_1, %c0_2] : memref<3072x256xf32, #tpu.memory_space<vmem>>, vector<3072x256xf32>
    %cst = arith.constant dense<0.000000e+00> : vector<2x256xf32>
    %2 = tpu.matmul %0, %1, %cst {dimension_numbers = #tpu.dot_dimension_numbers<[1], [0], [0], [1], [0, 0, 1, 1], [], []>} : vector<2x3072xf32>, vector<3072x256xf32>, vector<2x256xf32> -> vector<2x256xf32>
    %c0_3 = arith.constant 0 : index
    %c0_4 = arith.constant 0 : index
    %3 = vector.load %arg3[%c0_3, %c0_4] : memref<1x256xf32, #tpu.memory_space<vmem>>, vector<1x256xf32>
    %4 = vector.broadcast %3 : vector<1x256xf32> to vector<2x256xf32>
    %5 = arith.addf %2, %4 : vector<2x256xf32>
    %cst_5 = arith.constant 0.000000e+00 : f32
    %6 = vector.broadcast %cst_5 : f32 to vector<2x256xf32>
    %7 = arith.cmpf ogt, %5, %6 : vector<2x256xf32>
    %cst_6 = arith.constant 0.00999999977 : f32
    %8 = vector.broadcast %cst_6 : f32 to vector<2x256xf32>
    %9 = arith.mulf %8, %5 : vector<2x256xf32>
    %10 = arith.select %7, %5, %9 : vector<2x256xi1>, vector<2x256xf32>
    %c0_7 = arith.constant 0 : index
    %c0_8 = arith.constant 0 : index
    %11 = vector.load %arg4[%c0_7, %c0_8] : memref<256x7xf32, #tpu.memory_space<vmem>>, vector<256x7xf32>
    %cst_9 = arith.constant dense<0.000000e+00> : vector<2x7xf32>
    %12 = tpu.matmul %10, %11, %cst_9 {dimension_numbers = #tpu.dot_dimension_numbers<[1], [0], [0], [1], [0, 0, 1, 1], [], []>} : vector<2x256xf32>, vector<256x7xf32>, vector<2x7xf32> -> vector<2x7xf32>
    %c0_10 = arith.constant 0 : index
    %c0_11 = arith.constant 0 : index
    %13 = vector.load %arg5[%c0_10, %c0_11] : memref<1x7xf32, #tpu.memory_space<vmem>>, vector<1x7xf32>
    %14 = vector.broadcast %13 : vector<1x7xf32> to vector<2x7xf32>
    %15 = arith.addf %12, %14 : vector<2x7xf32>
    %16 = vector.extract_strided_slice %15 {offsets = [0, 0], sizes = [2, 6], strides = [1, 1]} : vector<2x7xf32> to vector<2x6xf32>
    %17 = vector.extract_strided_slice %15 {offsets = [0, 6], sizes = [2, 1], strides = [1, 1]} : vector<2x7xf32> to vector<2x1xf32>
    %18 = vector.shape_cast %16 : vector<2x6xf32> to vector<1x2x6xf32>
    %cst_12 = arith.constant dense<0.000000e+00> : vector<1xf32>
    %19 = vector.multi_reduction <add>, %18, %cst_12 [1, 2] : vector<1x2x6xf32> to vector<1xf32>
    %20 = vector.shape_cast %19 : vector<1xf32> to vector<1x1x1xf32>
    %21 = vector.extract %20[0, 0, 0] : f32 from vector<1x1x1xf32>
    %cst_13 = arith.constant 1.200000e+01 : f32
    %22 = arith.divf %21, %cst_13 : f32
    %23 = vector.broadcast %22 : f32 to vector<2x6xf32>
    %24 = arith.subf %16, %23 : vector<2x6xf32>
    %25 = vector.broadcast %17 : vector<2x1xf32> to vector<2x6xf32>
    %26 = arith.addf %25, %24 : vector<2x6xf32>
    %c0_14 = arith.constant 0 : index
    %c0_15 = arith.constant 0 : index
    %27 = vector.load %arg6[%c0_14, %c0_15] : memref<2x6xf32, #tpu.memory_space<vmem>>, vector<2x6xf32>
    tpu.vector_store %arg6[%c0_14, %c0_15], %26 {strides = array<i32>} : memref<2x6xf32, #tpu.memory_space<vmem>>, vector<2x6xf32>,
    return
  }
  func.func @transform_0(%arg0: i32) -> (i32, i32) {
    %c0_i32 = arith.constant 0 : i32
    %c0_i32_0 = arith.constant 0 : i32
    %c0_i32_1 = arith.constant 0 : i32
    return %c0_i32, %c0_i32_0 : i32, i32
  }
  func.func @transform_1(%arg0: i32) -> (i32, i32) {
    %c0_i32 = arith.constant 0 : i32
    %c0_i32_0 = arith.constant 0 : i32
    %c0_i32_1 = arith.constant 0 : i32
    return %c0_i32, %c0_i32_0 : i32, i32
  }
  func.func @transform_2(%arg0: i32) -> (i32, i32) {
    %c0_i32 = arith.constant 0 : i32
    %c0_i32_0 = arith.constant 0 : i32
    %c0_i32_1 = arith.constant 0 : i32
    return %c0_i32, %c0_i32_0 : i32, i32
  }
  func.func @transform_3(%arg0: i32) -> (i32, i32) {
    %c0_i32 = arith.constant 0 : i32
    %c0_i32_0 = arith.constant 0 : i32
    %c0_i32_1 = arith.constant 0 : i32
    return %c0_i32, %c0_i32_0 : i32, i32
  }
  func.func @transform_4(%arg0: i32) -> (i32, i32) {
    %c0_i32 = arith.constant 0 : i32
    %c0_i32_0 = arith.constant 0 : i32
    %c0_i32_1 = arith.constant 0 : i32
    return %c0_i32, %c0_i32_0 : i32, i32
  }
  func.func @transform_5(%arg0: i32) -> (i32, i32) {
    %c0_i32 = arith.constant 0 : i32
    %c0_i32_0 = arith.constant 0 : i32
    %c0_i32_1 = arith.constant 0 : i32
    return %c0_i32, %c0_i32_0 : i32, i32
  }
}

</mosaic_0001>

<llo_original>
// kernel: ddqn_forward.2
$region0: #{ddqn_forward.2}
  #allocation0 [shape = 'u32[]', space=smem, size = 0x4, offset = 0x4, fixed_abs, tag = 'smem constant byte address 0x4 - core index']
  #allocation1 [shape = 'u32[144,128]{1,0:T(1,128)}', space=vmem, size = 0x12000, scoped, tag = 'internal scratch']
  %s0 = inlined_call_operand.vmem [shape: f32[2,512,256], index: 0, kind: input, shape index: {}]
  %s1 = inlined_call_operand.vmem [shape: f32[256,32], index: 1, kind: input, shape index: {}]
  %s2 = inlined_call_operand.vmem [shape: f32[32,32], index: 2, kind: input, shape index: {}]
  %s3 = inlined_call_operand.vmem [shape: f32[32,32], index: 3, kind: input, shape index: {}]
  %s4 = inlined_call_operand.vmem [shape: f32[16,32,64], index: 4, kind: input, shape index: {}]
  %s5 = inlined_call_operand.vmem [shape: f32[6,32], index: 5, kind: input, shape index: {}]
  %s6 = inlined_call_operand.vmem [shape: f32[2,64], index: 6, kind: input, shape index: {}]
  %s7 = inlined_call_operand.vmem [shape: f32[2,48,64], index: 7, kind: output, shape index: {}]
  %s8 = sld [smem:[#allocation0]]
  $region61: #{ddqn_forward.2} parent=0
    _
  %s10 = ssub.s32 1, %s8
  %s11 = scalar_select 0, %s10, %s8
  loop: start=0, step=1, limit=4
  $region2: #{ddqn_forward.2} parent=0 // loop_pre_header
    _
  $region3: #{ddqn_forward.2} parent=0 // loop_header
    %s13 = sphi 0, %s17
    %p14 = scmp.ge.s32.totalorder %s13, 4
    %s23 = sphi 0, %s25
    %s26 = sphi 0, %s23
    %s27 = sphi 0, %s26
    %s43 = sphi 0, %s27
    %s47 = sphi 0, %s47
    %s49 = sphi 0, %s47
    %s50 = sphi 0, %s49
    %s64 = sphi 0, %s50
    %s68 = sphi 0, %s68
    %s70 = sphi 0, %s68
    %s71 = sphi 0, %s70
    %s85 = sphi 0, %s71
    %s89 = sphi 0, %s89
    %s91 = sphi 0, %s89
    %s92 = sphi 0, %s91
    %s106 = sphi 0, %s92
    %s110 = sphi 0, %s110
    %s112 = sphi 0, %s110
    %s113 = sphi 0, %s112
    %s127 = sphi 0, %s113
    %s131 = sphi 0, %s131
    %s133 = sphi 0, %s131
    %s134 = sphi 0, %s133
    %s148 = sphi 0, %s134
    %s152 = sphi 0, %s152
    %s154 = sphi 0, %s152
    %s155 = sphi 0, %s154
    %s169 = sphi 0, %s155
    %s175 = sphi 0, %s177
    %s178 = sphi 0, %s175
    %s179 = sphi 0, %s178
    %s195 = sphi 0, %s179
  $region4: #{ddqn_forward.2} parent=0 // loop_header_branch
    %16 = sbr.rel (%p14) target = $region8
  $region5: #{ddqn_forward.2} parent=0 // loop_body
    %s18 = ssub.s32 %s13, 1
    %s19 = ssub.s32 %s13, 2
    %s20 = sadd.s32 %s13, 1
    %s21 = ssub.s32 %s13, %s20
    %p22 = scmp.eq.s32.totalorder %s21, 0
    %s24 = sadd.s32 %s23, 1
    %s25 = scalar_select %p22, %s23, %s24
    %p28 = pneg %p22
    %p29 = scmp.eq.s32.totalorder %s13, 1
    %p30 = por %p28, %p29
    %p31 = scmp.ne.s32.totalorder %s23, %s26
    %p32 = scmp.eq.s32.totalorder %s13, 0
    %p33 = por %p31, %p32
    %p34 = scmp.ne.s32.totalorder %s23, %s26
    %p35 = scmp.eq.s32.totalorder %s18, 1
    %p36 = por %p34, %p35
    %p37 = scmp.ne.s32.totalorder %s26, %s27
    %p38 = scmp.eq.s32.totalorder %s18, 0
    %p39 = por %p37, %p38
    %p40 = scmp.ne.s32.totalorder %s26, %s27
    %p41 = scmp.eq.s32.totalorder %s19, 1
    %p42 = por %p40, %p41
    %p44 = scmp.ne.s32.totalorder %s27, %s43
    %p45 = scmp.eq.s32.totalorder %s19, 0
    %p46 = por %p44, %p45
    %s48 = sadd.s32 %s47, 1
    %p51 = scmp.eq.s32.totalorder %s13, 1
    %p52 = scmp.ne.s32.totalorder %s47, %s49
    %p53 = scmp.eq.s32.totalorder %s13, 0
    %p54 = por %p52, %p53
    %p55 = scmp.ne.s32.totalorder %s47, %s49
    %p56 = scmp.eq.s32.totalorder %s18, 1
    %p57 = por %p55, %p56
    %p58 = scmp.ne.s32.totalorder %s49, %s50
    %p59 = scmp.eq.s32.totalorder %s18, 0
    %p60 = por %p58, %p59
    %p61 = scmp.ne.s32.totalorder %s49, %s50
    %p62 = scmp.eq.s32.totalorder %s19, 1
    %p63 = por %p61, %p62
    %p65 = scmp.ne.s32.totalorder %s50, %s64
    %p66 = scmp.eq.s32.totalorder %s19, 0
    %p67 = por %p65, %p66
    %s69 = sadd.s32 %s68, 1
    %p72 = scmp.eq.s32.totalorder %s13, 1
    %p73 = scmp.ne.s32.totalorder %s68, %s70
    %p74 = scmp.eq.s32.totalorder %s13, 0
    %p75 = por %p73, %p74
    %p76 = scmp.ne.s32.totalorder %s68, %s70
    %p77 = scmp.eq.s32.totalorder %s18, 1
    %p78 = por %p76, %p77
    %p79 = scmp.ne.s32.totalorder %s70, %s71
    %p80 = scmp.eq.s32.totalorder %s18, 0
    %p81 = por %p79, %p80
    %p82 = scmp.ne.s32.totalorder %s70, %s71
    %p83 = scmp.eq.s32.totalorder %s19, 1
    %p84 = por %p82, %p83
    %p86 = scmp.ne.s32.totalorder %s71, %s85
    %p87 = scmp.eq.s32.totalorder %s19, 0
    %p88 = por %p86, %p87
    %s90 = sadd.s32 %s89, 1
    %p93 = scmp.eq.s32.totalorder %s13, 1
    %p94 = scmp.ne.s32.totalorder %s89, %s91
    %p95 = scmp.eq.s32.totalorder %s13, 0
    %p96 = por %p94, %p95
    %p97 = scmp.ne.s32.totalorder %s89, %s91
    %p98 = scmp.eq.s32.totalorder %s18, 1
    %p99 = por %p97, %p98
    %p100 = scmp.ne.s32.totalorder %s91, %s92
    %p101 = scmp.eq.s32.totalorder %s18, 0
    %p102 = por %p100, %p101
    %p103 = scmp.ne.s32.totalorder %s91, %s92
    %p104 = scmp.eq.s32.totalorder %s19, 1
    %p105 = por %p103, %p104
    %p107 = scmp.ne.s32.totalorder %s92, %s106
    %p108 = scmp.eq.s32.totalorder %s19, 0
    %p109 = por %p107, %p108
    %s111 = sadd.s32 %s110, 1
    %p114 = scmp.eq.s32.totalorder %s13, 1
    %p115 = scmp.ne.s32.totalorder %s110, %s112
    %p116 = scmp.eq.s32.totalorder %s13, 0
    %p117 = por %p115, %p116
    %p118 = scmp.ne.s32.totalorder %s110, %s112
    %p119 = scmp.eq.s32.totalorder %s18, 1
    %p120 = por %p118, %p119
    %p121 = scmp.ne.s32.totalorder %s112, %s113
    %p122 = scmp.eq.s32.totalorder %s18, 0
    %p123 = por %p121, %p122
    %p124 = scmp.ne.s32.totalorder %s112, %s113
    %p125 = scmp.eq.s32.totalorder %s19, 1
    %p126 = por %p124, %p125
    %p128 = scmp.ne.s32.totalorder %s113, %s127
    %p129 = scmp.eq.s32.totalorder %s19, 0
    %p130 = por %p128, %p129
    %s132 = sadd.s32 %s131, 1
    %p135 = scmp.eq.s32.totalorder %s13, 1
    %p136 = scmp.ne.s32.totalorder %s131, %s133
    %p137 = scmp.eq.s32.totalorder %s13, 0
    %p138 = por %p136, %p137
    %p139 = scmp.ne.s32.totalorder %s131, %s133
    %p140 = scmp.eq.s32.totalorder %s18, 1
    %p141 = por %p139, %p140
    %p142 = scmp.ne.s32.totalorder %s133, %s134
    %p143 = scmp.eq.s32.totalorder %s18, 0
    %p144 = por %p142, %p143
    %p145 = scmp.ne.s32.totalorder %s133, %s134
    %p146 = scmp.eq.s32.totalorder %s19, 1
    %p147 = por %p145, %p146
    %p149 = scmp.ne.s32.totalorder %s134, %s148
    %p150 = scmp.eq.s32.totalorder %s19, 0
    %p151 = por %p149, %p150
    %s153 = sadd.s32 %s152, 1
    %p156 = scmp.eq.s32.totalorder %s13, 1
    %p157 = scmp.ne.s32.totalorder %s152, %s154
    %p158 = scmp.eq.s32.totalorder %s13, 0
    %p159 = por %p157, %p158
    %p160 = scmp.ne.s32.totalorder %s152, %s154
    %p161 = scmp.eq.s32.totalorder %s18, 1
    %p162 = por %p160, %p161
    %p163 = scmp.ne.s32.totalorder %s154, %s155
    %p164 = scmp.eq.s32.totalorder %s18, 0
    %p165 = por %p163, %p164
    %p166 = scmp.ne.s32.totalorder %s154, %s155
    %p167 = scmp.eq.s32.totalorder %s19, 1
    %p168 = por %p166, %p167
    %p170 = scmp.ne.s32.totalorder %s155, %s169
    %p171 = scmp.eq.s32.totalorder %s19, 0
    %p172 = por %p170, %p171
    %s173 = ssub.s32 %s13, %s20
    %p174 = scmp.eq.s32.totalorder %s173, 0
    %s176 = sadd.s32 %s175, 1
    %s177 = scalar_select %p174, %s175, %s176
    %p180 = pneg %p174
    %p181 = scmp.eq.s32.totalorder %s13, 1
    %p182 = por %p180, %p181
    %p183 = scmp.ne.s32.totalorder %s175, %s178
    %p184 = scmp.eq.s32.totalorder %s13, 0
    %p185 = por %p183, %p184
    %p186 = scmp.ne.s32.totalorder %s175, %s178
    %p187 = scmp.eq.s32.totalorder %s18, 1
    %p188 = por %p186, %p187
    %p189 = scmp.ne.s32.totalorder %s178, %s179
    %p190 = scmp.eq.s32.totalorder %s18, 0
    %p191 = por %p189, %p190
    %p192 = scmp.ne.s32.totalorder %s178, %s179
    %p193 = scmp.eq.s32.totalorder %s19, 1
    %p194 = por %p192, %p193
    %p196 = scmp.ne.s32.totalorder %s179, %s195
    %p197 = scmp.eq.s32.totalorder %s19, 0
    %p198 = por %p196, %p197
    %p199 = scmp.le.s32.totalorder 1, %s13
    %p200 = scmp.lt.s32.totalorder %s13, 3
    %p201 = pnand %p199, %p200
    %p202 = pneg %p201
    // Predicated region
    $region9: #{ddqn_forward.2} parent=5 // pred_check
      _
    $region10: #{ddqn_forward.2} parent=5 // pred_check_branch
      %204 = sbr.rel (%p201) target = $region12
    $region11: #{ddqn_forward.2} parent=5 // pred_region
      %s205 = ssub.s32 %s13, 1
      // Predicated region
      $region13: #{ddqn_forward.2} parent=11 // pred_check
        %p206 = pneg %p60
      $region14: #{ddqn_forward.2} parent=11 // pred_check_branch
        %208 = sbr.rel (%p206) target = $region16
      $region15: #{ddqn_forward.2} parent=11 // pred_region
        _
      $region16: #{ddqn_forward.2} parent=11 // pred_fallthru
        _
      // Predicated region
      $region17: #{ddqn_forward.2} parent=11 // pred_check
        %p209 = pneg %p81
      $region18: #{ddqn_forward.2} parent=11 // pred_check_branch
        %211 = sbr.rel (%p209) target = $region20
      $region19: #{ddqn_forward.2} parent=11 // pred_region
        _
      $region20: #{ddqn_forward.2} parent=11 // pred_fallthru
        _
      // Predicated region
      $region21: #{ddqn_forward.2} parent=11 // pred_check
        %p212 = pneg %p102
      $region22: #{ddqn_forward.2} parent=11 // pred_check_branch
        %214 = sbr.rel (%p212) target = $region24
      $region23: #{ddqn_forward.2} parent=11 // pred_region
        _
      $region24: #{ddqn_forward.2} parent=11 // pred_fallthru
        _
      // Predicated region
      $region25: #{ddqn_forward.2} parent=11 // pred_check
        %p215 = pneg %p123
      $region26: #{ddqn_forward.2} parent=11 // pred_check_branch
        %217 = sbr.rel (%p215) target = $region28
      $region27: #{ddqn_forward.2} parent=11 // pred_region
        _
      $region28: #{ddqn_forward.2} parent=11 // pred_fallthru
        _
      // Predicated region
      $region29: #{ddqn_forward.2} parent=11 // pred_check
        %p218 = pneg %p144
      $region30: #{ddqn_forward.2} parent=11 // pred_check_branch
        %220 = sbr.rel (%p218) target = $region32
      $region31: #{ddqn_forward.2} parent=11 // pred_region
        _
      $region32: #{ddqn_forward.2} parent=11 // pred_fallthru
        _
      // Predicated region
      $region33: #{ddqn_forward.2} parent=11 // pred_check
        %p221 = pneg %p165
      $region34: #{ddqn_forward.2} parent=11 // pred_check_branch
        %223 = sbr.rel (%p221) target = $region36
      $region35: #{ddqn_forward.2} parent=11 // pred_region
        _
      $region36: #{ddqn_forward.2} parent=11 // pred_fallthru
        _
    $region12: #{ddqn_forward.2} parent=5 // pred_fallthru
      _
    %p224 = scmp.lt.s32.totalorder %s13, 2
    // Predicated region
    $region37: #{ddqn_forward.2} parent=5 // pred_check
      %p225 = pneg %p224
    $region38: #{ddqn_forward.2} parent=5 // pred_check_branch
      %227 = sbr.rel (%p225) target = $region40
    $region39: #{ddqn_forward.2} parent=5 // pred_region
      // Predicated region
      $region41: #{ddqn_forward.2} parent=39 // pred_check
        %p228 = pneg %p33
      $region42: #{ddqn_forward.2} parent=39 // pred_check_branch
        %230 = sbr.rel (%p228) target = $region44
      $region43: #{ddqn_forward.2} parent=39 // pred_region
        %p231 = scmp.lt.s32.totalorder %s13, 1
        %s232 = scalar_select %p231, %s13, 1
        %s233 = smul.addr %s232, 128
        %s234 = smul.addr %s233, 8
        %s235 = scalar_lea.vmem %s0, %s234
      $region44: #{ddqn_forward.2} parent=39 // pred_fallthru
        _
    $region40: #{ddqn_forward.2} parent=5 // pred_fallthru
      _
    %p236 = scmp.le.s32.totalorder 1, %s13
    %p237 = scmp.lt.s32.totalorder %s13, 3
    %p238 = pnand %p236, %p237
    %p239 = pneg %p238
    // Predicated region
    $region45: #{ddqn_forward.2} parent=5 // pred_check
      _
    $region46: #{ddqn_forward.2} parent=5 // pred_check_branch
      %241 = sbr.rel (%p238) target = $region48
    $region47: #{ddqn_forward.2} parent=5 // pred_region
      %s242 = ssub.s32 %s13, 1
      %p243 = scmp.lt.s32.totalorder %s18, 1
      %s244 = scalar_select %p243, %s18, 1
      %s245 = smul.addr %s244, 128
      %s246 = smul.addr %s245, 8
      %s247 = scalar_lea.vmem %s0, %s246
      %p248 = pneg %p39
      %p249 = pneg %p36
      %p250 = pneg %p60
      %p251 = pneg %p57
      %p252 = pneg %p81
      %p253 = pneg %p78
      %p254 = pneg %p102
      %p255 = pneg %p99
      %p256 = pneg %p123
      %p257 = pneg %p120
      %p258 = pneg %p144
      %p259 = pneg %p141
      %p260 = pneg %p165
      %p261 = pneg %p162
      %p262 = pneg %p191
      %p263 = pneg %p188
      %p264 = scmp.lt.s32.totalorder %s18, 1
      %s265 = scalar_select %p264, %s18, 1
      %s266 = smul.addr %s265, 6
      %s267 = smul.addr %s266, 8
      %s268 = scalar_lea.vmem %s7, %s267
      %p269 = scmp.lt.s32.totalorder %s18, 1
      %s270 = scalar_select %p269, %s18, 1
      %s271 = smul.addr %s270, 128
      %s272 = smul.addr %s271, 8
      %s273 = scalar_lea.vmem %s0, %s272
      %p274 = scmp.lt.s32.totalorder %s18, 1
      %s275 = scalar_select %p274, %s18, 1
      %s276 = smul.addr %s275, 6
      %s277 = smul.addr %s276, 8
      %s278 = scalar_lea.vmem %s7, %s277
      %v279 = vld [vmem:[%s5] sm:$0x3f]
      %v280 = vld [vmem:[%s6] sm:$0x3]
      %v281 = vld [vmem:[%s273] sm:$0xff]
      %v282 = vld [vmem:[%s273 + $0x8] sm:$0xff]
      %v283 = vld [vmem:[%s273 + $0x10] sm:$0xff]
      %v284 = vld [vmem:[%s273 + $0x18] sm:$0xff]
      %v285 = vld [vmem:[%s273 + $0x20] sm:$0xff]
      %v286 = vld [vmem:[%s273 + $0x28] sm:$0xff]
      %v287 = vld [vmem:[%s273 + $0x30] sm:$0xff]
      %v288 = vld [vmem:[%s273 + $0x38] sm:$0xff]
      %v289 = vld [vmem:[%s273 + $0x40] sm:$0xff]
      %v290 = vld [vmem:[%s273 + $0x48] sm:$0xff]
      %v291 = vld [vmem:[%s273 + $0x50] sm:$0xff]
      %v292 = vld [vmem:[%s273 + $0x58] sm:$0xff]
      %v293 = vld [vmem:[%s273 + $0x60] sm:$0xff]
      %v294 = vld [vmem:[%s273 + $0x68] sm:$0xff]
      %v295 = vld [vmem:[%s273 + $0x70] sm:$0xff]
      %v296 = vld [vmem:[%s273 + $0x78] sm:$0xff]
      %v297 = vld [vmem:[%s273 + $0x80] sm:$0xff]
      %v298 = vld [vmem:[%s273 + $0x88] sm:$0xff]
      %v299 = vld [vmem:[%s273 + $0x90] sm:$0xff]
      %v300 = vld [vmem:[%s273 + $0x98] sm:$0xff]
      %v301 = vld [vmem:[%s273 + $0xa0] sm:$0xff]
      %v302 = vld [vmem:[%s273 + $0xa8] sm:$0xff]
      %v303 = vld [vmem:[%s273 + $0xb0] sm:$0xff]
      %v304 = vld [vmem:[%s273 + $0xb8] sm:$0xff]
      %v305 = vld [vmem:[%s273 + $0xc0] sm:$0xff]
      %v306 = vld [vmem:[%s273 + $0xc8] sm:$0xff]
      %v307 = vld [vmem:[%s273 + $0xd0] sm:$0xff]
      %v308 = vld [vmem:[%s273 + $0xd8] sm:$0xff]
      %v309 = vld [vmem:[%s273 + $0xe0] sm:$0xff]
      %v310 = vld [vmem:[%s273 + $0xe8] sm:$0xff]
      %v311 = vld [vmem:[%s273 + $0xf0] sm:$0xff]
      %v312 = vld [vmem:[%s273 + $0xf8] sm:$0xff]
      %v313 = vld [vmem:[%s273 + $0x100] sm:$0xff]
      %v314 = vld [vmem:[%s273 + $0x108] sm:$0xff]
      %v315 = vld [vmem:[%s273 + $0x110] sm:$0xff]
      %v316 = vld [vmem:[%s273 + $0x118] sm:$0xff]
      %v317 = vld [vmem:[%s273 + $0x120] sm:$0xff]
      %v318 = vld [vmem:[%s273 + $0x128] sm:$0xff]
      %v319 = vld [vmem:[%s273 + $0x130] sm:$0xff]
      %v320 = vld [vmem:[%s273 + $0x138] sm:$0xff]
      %v321 = vld [vmem:[%s273 + $0x140] sm:$0xff]
      %v322 = vld [vmem:[%s273 + $0x148] sm:$0xff]
      %v323 = vld [vmem:[%s273 + $0x150] sm:$0xff]
      %v324 = vld [vmem:[%s273 + $0x158] sm:$0xff]
      %v325 = vld [vmem:[%s273 + $0x160] sm:$0xff]
      %v326 = vld [vmem:[%s273 + $0x168] sm:$0xff]
      %v327 = vld [vmem:[%s273 + $0x170] sm:$0xff]
      %v328 = vld [vmem:[%s273 + $0x178] sm:$0xff]
      %v329 = vld [vmem:[%s273 + $0x180] sm:$0xff]
      %v330 = vld [vmem:[%s273 + $0x188] sm:$0xff]
      %v331 = vld [vmem:[%s273 + $0x190] sm:$0xff]
      %v332 = vld [vmem:[%s273 + $0x198] sm:$0xff]
      %v333 = vld [vmem:[%s273 + $0x1a0] sm:$0xff]
      %v334 = vld [vmem:[%s273 + $0x1a8] sm:$0xff]
      %v335 = vld [vmem:[%s273 + $0x1b0] sm:$0xff]
      %v336 = vld [vmem:[%s273 + $0x1b8] sm:$0xff]
      %v337 = vld [vmem:[%s273 + $0x1c0] sm:$0xff]
      %v338 = vld [vmem:[%s273 + $0x1c8] sm:$0xff]
      %v339 = vld [vmem:[%s273 + $0x1d0] sm:$0xff]
      %v340 = vld [vmem:[%s273 + $0x1d8] sm:$0xff]
      %v341 = vld [vmem:[%s273 + $0x1e0] sm:$0xff]
      %v342 = vld [vmem:[%s273 + $0x1e8] sm:$0xff]
      %v343 = vld [vmem:[%s273 + $0x1f0] sm:$0xff]
      %v344 = vld [vmem:[%s273 + $0x1f8] sm:$0xff]
      %v345 = vld [vmem:[%s273 + $0x200] sm:$0xff]
      %v346 = vld [vmem:[%s273 + $0x208] sm:$0xff]
      %v347 = vld [vmem:[%s273 + $0x210] sm:$0xff]
      %v348 = vld [vmem:[%s273 + $0x218] sm:$0xff]
      %v349 = vld [vmem:[%s273 + $0x220] sm:$0xff]
      %v350 = vld [vmem:[%s273 + $0x228] sm:$0xff]
      %v351 = vld [vmem:[%s273 + $0x230] sm:$0xff]
      %v352 = vld [vmem:[%s273 + $0x238] sm:$0xff]
      %v353 = vld [vmem:[%s273 + $0x240] sm:$0xff]
      %v354 = vld [vmem:[%s273 + $0x248] sm:$0xff]
      %v355 = vld [vmem:[%s273 + $0x250] sm:$0xff]
      %v356 = vld [vmem:[%s273 + $0x258] sm:$0xff]
      %v357 = vld [vmem:[%s273 + $0x260] sm:$0xff]
      %v358 = vld [vmem:[%s273 + $0x268] sm:$0xff]
      %v359 = vld [vmem:[%s273 + $0x270] sm:$0xff]
      %v360 = vld [vmem:[%s273 + $0x278] sm:$0xff]
      %v361 = vld [vmem:[%s273 + $0x280] sm:$0xff]
      %v362 = vld [vmem:[%s273 + $0x288] sm:$0xff]
      %v363 = vld [vmem:[%s273 + $0x290] sm:$0xff]
      %v364 = vld [vmem:[%s273 + $0x298] sm:$0xff]
      %v365 = vld [vmem:[%s273 + $0x2a0] sm:$0xff]
      %v366 = vld [vmem:[%s273 + $0x2a8] sm:$0xff]
      %v367 = vld [vmem:[%s273 + $0x2b0] sm:$0xff]
      %v368 = vld [vmem:[%s273 + $0x2b8] sm:$0xff]
      %v369 = vld [vmem:[%s273 + $0x2c0] sm:$0xff]
      %v370 = vld [vmem:[%s273 + $0x2c8] sm:$0xff]
      %v371 = vld [vmem:[%s273 + $0x2d0] sm:$0xff]
      %v372 = vld [vmem:[%s273 + $0x2d8] sm:$0xff]
      %v373 = vld [vmem:[%s273 + $0x2e0] sm:$0xff]
      %v374 = vld [vmem:[%s273 + $0x2e8] sm:$0xff]
      %v375 = vld [vmem:[%s273 + $0x2f0] sm:$0xff]
      %v376 = vld [vmem:[%s273 + $0x2f8] sm:$0xff]
      %v377 = vld [vmem:[%s273 + $0x300] sm:$0xff]
      %v378 = vld [vmem:[%s273 + $0x308] sm:$0xff]
      %v379 = vld [vmem:[%s273 + $0x310] sm:$0xff]
      %v380 = vld [vmem:[%s273 + $0x318] sm:$0xff]
      %v381 = vld [vmem:[%s273 + $0x320] sm:$0xff]
      %v382 = vld [vmem:[%s273 + $0x328] sm:$0xff]
      %v383 = vld [vmem:[%s273 + $0x330] sm:$0xff]
      %v384 = vld [vmem:[%s273 + $0x338] sm:$0xff]
      %v385 = vld [vmem:[%s273 + $0x340] sm:$0xff]
      %v386 = vld [vmem:[%s273 + $0x348] sm:$0xff]
      %v387 = vld [vmem:[%s273 + $0x350] sm:$0xff]
      %v388 = vld [vmem:[%s273 + $0x358] sm:$0xff]
      %v389 = vld [vmem:[%s273 + $0x360] sm:$0xff]
      %v390 = vld [vmem:[%s273 + $0x368] sm:$0xff]
      %v391 = vld [vmem:[%s273 + $0x370] sm:$0xff]
      %v392 = vld [vmem:[%s273 + $0x378] sm:$0xff]
      %v393 = vld [vmem:[%s273 + $0x380] sm:$0xff]
      %v394 = vld [vmem:[%s273 + $0x388] sm:$0xff]
      %v395 = vld [vmem:[%s273 + $0x390] sm:$0xff]
      %v396 = vld [vmem:[%s273 + $0x398] sm:$0xff]
      %v397 = vld [vmem:[%s273 + $0x3a0] sm:$0xff]
      %v398 = vld [vmem:[%s273 + $0x3a8] sm:$0xff]
      %v399 = vld [vmem:[%s273 + $0x3b0] sm:$0xff]
      %v400 = vld [vmem:[%s273 + $0x3b8] sm:$0xff]
      %v401 = vld [vmem:[%s273 + $0x3c0] sm:$0xff]
      %v402 = vld [vmem:[%s273 + $0x3c8] sm:$0xff]
      %v403 = vld [vmem:[%s273 + $0x3d0] sm:$0xff]
      %v404 = vld [vmem:[%s273 + $0x3d8] sm:$0xff]
      %v405 = vld [vmem:[%s273 + $0x3e0] sm:$0xff]
      %v406 = vld [vmem:[%s273 + $0x3e8] sm:$0xff]
      %v407 = vld [vmem:[%s273 + $0x3f0] sm:$0xff]
      %v408 = vld [vmem:[%s273 + $0x3f8] sm:$0xff]
      %v409 = vld [vmem:[%s1] sm:$0xff]
      %v410 = vld [vmem:[%s1 + $0x8] sm:$0xff]
      %v411 = vld [vmem:[%s1 + $0x10] sm:$0xff]
      %v412 = vld [vmem:[%s1 + $0x18] sm:$0xff]
      %v413 = vld [vmem:[%s1 + $0x20] sm:$0xff]
      %v414 = vld [vmem:[%s1 + $0x28] sm:$0xff]
      %v415 = vld [vmem:[%s1 + $0x30] sm:$0xff]
      %v416 = vld [vmem:[%s1 + $0x38] sm:$0xff]
      %v417 = vld [vmem:[%s1 + $0x40] sm:$0xff]
      %v418 = vld [vmem:[%s1 + $0x48] sm:$0xff]
      %v419 = vld [vmem:[%s1 + $0x50] sm:$0xff]
      %v420 = vld [vmem:[%s1 + $0x58] sm:$0xff]
      %v421 = vld [vmem:[%s1 + $0x60] sm:$0xff]
      %v422 = vld [vmem:[%s1 + $0x68] sm:$0xff]
      %v423 = vld [vmem:[%s1 + $0x70] sm:$0xff]
      %v424 = vld [vmem:[%s1 + $0x78] sm:$0xff]
      %v425 = vld [vmem:[%s1 + $0x80] sm:$0xff]
      %v426 = vld [vmem:[%s1 + $0x88] sm:$0xff]
      %v427 = vld [vmem:[%s1 + $0x90] sm:$0xff]
      %v428 = vld [vmem:[%s1 + $0x98] sm:$0xff]
      %v429 = vld [vmem:[%s1 + $0xa0] sm:$0xff]
      %v430 = vld [vmem:[%s1 + $0xa8] sm:$0xff]
      %v431 = vld [vmem:[%s1 + $0xb0] sm:$0xff]
      %v432 = vld [vmem:[%s1 + $0xb8] sm:$0xff]
      %v433 = vld [vmem:[%s1 + $0xc0] sm:$0xff]
      %v434 = vld [vmem:[%s1 + $0xc8] sm:$0xff]
      %v435 = vld [vmem:[%s1 + $0xd0] sm:$0xff]
      %v436 = vld [vmem:[%s1 + $0xd8] sm:$0xff]
      %v437 = vld [vmem:[%s1 + $0xe0] sm:$0xff]
      %v438 = vld [vmem:[%s1 + $0xe8] sm:$0xff]
      %v439 = vld [vmem:[%s1 + $0xf0] sm:$0xff]
      %v440 = vld [vmem:[%s1 + $0xf8] sm:$0xff]
      %441 = vmatprep.subr.mxu0 0.0
      %442 = vmatpush1.msra.mxu0 %v409
      %443 = vmatprep.subr.mxu0 0.0
      %444 = vmatpush1.msra.mxu0 %v410
      %445 = vmatprep.subr.mxu0 0.0
      %446 = vmatpush1.msra.mxu0 %v411
      %447 = vmatprep.subr.mxu0 0.0
      %448 = vmatpush1.msra.mxu0 %v412
      %449 = vmatprep.subr.mxu0 0.0
      %450 = vmatpush1.msra.mxu0 %v413
      %451 = vmatprep.subr.mxu0 0.0
      %452 = vmatpush1.msra.mxu0 %v414
      %453 = vmatprep.subr.mxu0 0.0
      %454 = vmatpush1.msra.mxu0 %v415
      %455 = vmatprep.subr.mxu0 0.0
      %456 = vmatpush1.msra.mxu0 %v416
      %457 = vmatprep.subr.mxu0 0.0
      %458 = vmatpush1.msra.mxu0 %v417
      %459 = vmatprep.subr.mxu0 0.0
      %460 = vmatpush1.msra.mxu0 %v418
      %461 = vmatprep.subr.mxu0 0.0
      %462 = vmatpush1.msra.mxu0 %v419
      %463 = vmatprep.subr.mxu0 0.0
      %464 = vmatpush1.msra.mxu0 %v420
      %465 = vmatprep.subr.mxu0 0.0
      %466 = vmatpush1.msra.mxu0 %v421
      %467 = vmatprep.subr.mxu0 0.0
      %468 = vmatpush1.msra.mxu0 %v422
      %469 = vmatprep.subr.mxu0 0.0
      %470 = vmatpush1.msra.mxu0 %v423
      %471 = vmatprep.subr.mxu0 0.0
      %472 = vmatpush1.msra.mxu0 %v424
      %473 = vmatprep.subr.mxu0 0.0
      %474 = vmatpush1.msra.mxu0 %v425
      %475 = vmatprep.subr.mxu0 0.0
      %476 = vmatpush1.msra.mxu0 %v426
      %477 = vmatprep.subr.mxu0 0.0
      %478 = vmatpush1.msra.mxu0 %v427
      %479 = vmatprep.subr.mxu0 0.0
      %480 = vmatpush1.msra.mxu0 %v428
      %481 = vmatprep.subr.mxu0 0.0
      %482 = vmatpush1.msra.mxu0 %v429
      %483 = vmatprep.subr.mxu0 0.0
      %484 = vmatpush1.msra.mxu0 %v430
      %485 = vmatprep.subr.mxu0 0.0
      %486 = vmatpush1.msra.mxu0 %v431
      %487 = vmatprep.subr.mxu0 0.0
      %488 = vmatpush1.msra.mxu0 %v432
      %489 = vmatprep.subr.mxu0 0.0
      %490 = vmatpush1.msra.mxu0 %v433
      %491 = vmatprep.subr.mxu0 0.0
      %492 = vmatpush1.msra.mxu0 %v434
      %493 = vmatprep.subr.mxu0 0.0
      %494 = vmatpush1.msra.mxu0 %v435
      %495 = vmatprep.subr.mxu0 0.0
      %496 = vmatpush1.msra.mxu0 %v436
      %497 = vmatprep.subr.mxu0 0.0
      %498 = vmatpush1.msra.mxu0 %v437
      %499 = vmatprep.subr.mxu0 0.0
      %500 = vmatpush1.msra.mxu0 %v438
      %501 = vmatprep.subr.mxu0 0.0
      %502 = vmatpush1.msra.mxu0 %v439
      %503 = vmatprep.subr.mxu0 0.0
      %504 = vmatpush1.msra.mxu0 %v440
      %505 = vmatprep.mubr.f32.mxu0 %v282
      %506 = vmatmul.mubr.f32.gmra.mrb[0].mxu0 %v281
      %v507 = vpop.f32.mrb[0].mxu0
      %v508 = vadd.f32 0.0, %v507
      %v509 = vpop.f32.mrb[0].mxu0
      %510 = vmatprep.mubr.f32.mxu0 %v284
      %511 = vmatmul.mubr.f32.gmra.mrb[0].mxu0 %v283
      %v512 = vpop.f32.mrb[0].mxu0
      %v513 = vadd.f32 0.0, %v512
      %v514 = vpop.f32.mrb[0].mxu0
      %515 = vmatprep.mubr.f32.mxu0 %v286
      %516 = vmatmul.mubr.f32.gmra.mrb[0].mxu0 %v285
      %v517 = vpop.f32.mrb[0].mxu0
      %v518 = vadd.f32 0.0, %v517
      %v519 = vpop.f32.mrb[0].mxu0
      %520 = vmatprep.mubr.f32.mxu0 %v288
      %521 = vmatmul.mubr.f32.gmra.mrb[0].mxu0 %v287
      %v522 = vpop.f32.mrb[0].mxu0
      %v523 = vadd.f32 0.0, %v522
      %v524 = vpop.f32.mrb[0].mxu0
      %525 = vmatprep.mubr.f32.mxu0 %v290
      %526 = vmatmul.mubr.f32.gmra.mrb[0].mxu0 %v289
      %v527 = vpop.f32.mrb[0].mxu0
      %v528 = vadd.f32 0.0, %v527
      %v529 = vpop.f32.mrb[0].mxu0
      %530 = vmatprep.mubr.f32.mxu0 %v292
      %531 = vmatmul.mubr.f32.gmra.mrb[0].mxu0 %v291
      %v532 = vpop.f32.mrb[0].mxu0
      %v533 = vadd.f32 0.0, %v532
      %v534 = vpop.f32.mrb[0].mxu0
      %535 = vmatprep.mubr.f32.mxu0 %v294
      %536 = vmatmul.mubr.f32.gmra.mrb[0].mxu0 %v293
      %v537 = vpop.f32.mrb[0].mxu0
      %v538 = vadd.f32 0.0, %v537
      %v539 = vpop.f32.mrb[0].mxu0
      %540 = vmatprep.mubr.f32.mxu0 %v296
      %541 = vmatmul.mubr.f32.gmra.mrb[0].mxu0 %v295
      %v542 = vpop.f32.mrb[0].mxu0
      %v543 = vadd.f32 0.0, %v542
      %v544 = vpop.f32.mrb[0].mxu0
      %545 = vmatprep.mubr.f32.mxu0 %v298
      %546 = vmatmul.mubr.f32.gmra.mrb[0].mxu0 %v297
      %v547 = vpop.f32.mrb[0].mxu0
      %v548 = vadd.f32 0.0, %v547
      %v549 = vpop.f32.mrb[0].mxu0
      %550 = vmatprep.mubr.f32.mxu0 %v300
      %551 = vmatmul.mubr.f32.gmra.mrb[0].mxu0 %v299
      %v552 = vpop.f32.mrb[0].mxu0
      %v553 = vadd.f32 0.0, %v552
      %v554 = vpop.f32.mrb[0].mxu0
      %555 = vmatprep.mubr.f32.mxu0 %v302
      %556 = vmatmul.mubr.f32.gmra.mrb[0].mxu0 %v301
      %v557 = vpop.f32.mrb[0].mxu0
      %v558 = vadd.f32 0.0, %v557
      %v559 = vpop.f32.mrb[0].mxu0
      %560 = vmatprep.mubr.f32.mxu0 %v304
      %561 = vmatmul.mubr.f32.gmra.mrb[0].mxu0 %v303
      %v562 = vpop.f32.mrb[0].mxu0
      %v563 = vadd.f32 0.0, %v562
      %v564 = vpop.f32.mrb[0].mxu0
      %565 = vmatprep.mubr.f32.mxu0 %v306
      %566 = vmatmul.mubr.f32.gmra.mrb[0].mxu0 %v305
      %v567 = vpop.f32.mrb[0].mxu0
      %v568 = vadd.f32 0.0, %v567
      %v569 = vpop.f32.mrb[0].mxu0
      %570 = vmatprep.mubr.f32.mxu0 %v308
      %571 = vmatmul.mubr.f32.gmra.mrb[0].mxu0 %v307
      %v572 = vpop.f32.mrb[0].mxu0
      %v573 = vadd.f32 0.0, %v572
      %v574 = vpop.f32.mrb[0].mxu0
      %575 = vmatprep.mubr.f32.mxu0 %v310
      %576 = vmatmul.mubr.f32.gmra.mrb[0].mxu0 %v309
      %v577 = vpop.f32.mrb[0].mxu0
      %v578 = vadd.f32 0.0, %v577
      %v579 = vpop.f32.mrb[0].mxu0
      %580 = vmatprep.mubr.f32.mxu0 %v312
      %581 = vmatmul.mubr.f32.gmra.mrb[0].mxu0 %v311
      %v582 = vpop.f32.mrb[0].mxu0
      %v583 = vadd.f32 0.0, %v582
      %v584 = vpop.f32.mrb[0].mxu0
      %585 = vmatprep.mubr.f32.mxu0 %v314
      %586 = vmatmul.mubr.f32.gmra.mrb[0].mxu0 %v313
      %v587 = vpop.f32.mrb[0].mxu0
      %v588 = vadd.f32 0.0, %v587
      %v589 = vpop.f32.mrb[0].mxu0
      %590 = vmatprep.mubr.f32.mxu0 %v316
      %591 = vmatmul.mubr.f32.gmra.mrb[0].mxu0 %v315
      %v592 = vpop.f32.mrb[0].mxu0
      %v593 = vadd.f32 0.0, %v592
      %v594 = vpop.f32.mrb[0].mxu0
      %595 = vmatprep.mubr.f32.mxu0 %v318
      %596 = vmatmul.mubr.f32.gmra.mrb[0].mxu0 %v317
      %v597 = vpop.f32.mrb[0].mxu0
      %v598 = vadd.f32 0.0, %v597
      %v599 = vpop.f32.mrb[0].mxu0
      %600 = vmatprep.mubr.f32.mxu0 %v320
      %601 = vmatmul.mubr.f32.gmra.mrb[0].mxu0 %v319
      %v602 = vpop.f32.mrb[0].mxu0
      %v603 = vadd.f32 0.0, %v602
      %v604 = vpop.f32.mrb[0].mxu0
      %605 = vmatprep.mubr.f32.mxu0 %v322
      %606 = vmatmul.mubr.f32.gmra.mrb[0].mxu0 %v321
      %v607 = vpop.f32.mrb[0].mxu0
      %v608 = vadd.f32 0.0, %v607
      %v609 = vpop.f32.mrb[0].mxu0
      %610 = vmatprep.mubr.f32.mxu0 %v324
      %611 = vmatmul.mubr.f32.gmra.mrb[0].mxu0 %v323
      %v612 = vpop.f32.mrb[0].mxu0
      %v613 = vadd.f32 0.0, %v612
      %v614 = vpop.f32.mrb[0].mxu0
      %615 = vmatprep.mubr.f32.mxu0 %v326
      %616 = vmatmul.mubr.f32.gmra.mrb[0].mxu0 %v325
      %v617 = vpop.f32.mrb[0].mxu0
      %v618 = vadd.f32 0.0, %v617
      %v619 = vpop.f32.mrb[0].mxu0
      %620 = vmatprep.mubr.f32.mxu0 %v328
      %621 = vmatmul.mubr.f32.gmra.mrb[0].mxu0 %v327
      %v622 = vpop.f32.mrb[0].mxu0
      %v623 = vadd.f32 0.0, %v622
      %v624 = vpop.f32.mrb[0].mxu0
      %625 = vmatprep.mubr.f32.mxu0 %v330
      %626 = vmatmul.mubr.f32.gmra.mrb[0].mxu0 %v329
      %v627 = vpop.f32.mrb[0].mxu0
      %v628 = vadd.f32 0.0, %v627
      %v629 = vpop.f32.mrb[0].mxu0
      %630 = vmatprep.mubr.f32.mxu0 %v332
      %631 = vmatmul.mubr.f32.gmra.mrb[0].mxu0 %v331
      %v632 = vpop.f32.mrb[0].mxu0
      %v633 = vadd.f32 0.0, %v632
      %v634 = vpop.f32.mrb[0].mxu0
      %635 = vmatprep.mubr.f32.mxu0 %v334
      %636 = vmatmul.mubr.f32.gmra.mrb[0].mxu0 %v333
      %v637 = vpop.f32.mrb[0].mxu0
      %v638 = vadd.f32 0.0, %v637
      %v639 = vpop.f32.mrb[0].mxu0
      %640 = vmatprep.mubr.f32.mxu0 %v336
      %641 = vmatmul.mubr.f32.gmra.mrb[0].mxu0 %v335
      %v642 = vpop.f32.mrb[0].mxu0
      %v643 = vadd.f32 0.0, %v642
      %v644 = vpop.f32.mrb[0].mxu0
      %645 = vmatprep.mubr.f32.mxu0 %v338
      %646 = vmatmul.mubr.f32.gmra.mrb[0].mxu0 %v337
      %v647 = vpop.f32.mrb[0].mxu0
      %v648 = vadd.f32 0.0, %v647
      %v649 = vpop.f32.mrb[0].mxu0
      %650 = vmatprep.mubr.f32.mxu0 %v340
      %651 = vmatmul.mubr.f32.gmra.mrb[0].mxu0 %v339
      %v652 = vpop.f32.mrb[0].mxu0
      %v653 = vadd.f32 0.0, %v652
      %v654 = vpop.f32.mrb[0].mxu0
      %655 = vmatprep.mubr.f32.mxu0 %v342
      %656 = vmatmul.mubr.f32.gmra.mrb[0].mxu0 %v341
      %v657 = vpop.f32.mrb[0].mxu0
      %v658 = vadd.f32 0.0, %v657
      %v659 = vpop.f32.mrb[0].mxu0
      %660 = vmatprep.mubr.f32.mxu0 %v344
      %661 = vmatmul.mubr.f32.gmra.mrb[0].mxu0 %v343
      %v662 = vpop.f32.mrb[0].mxu0
      %v663 = vadd.f32 0.0, %v662
      %v664 = vpop.f32.mrb[0].mxu0
      %665 = vmatprep.mubr.f32.mxu0 %v346
      %666 = vmatmul.mubr.f32.gmra.mrb[0].mxu0 %v345
      %v667 = vpop.f32.mrb[0].mxu0
      %v668 = vadd.f32 0.0, %v667
      %v669 = vpop.f32.mrb[0].mxu0
      %670 = vmatprep.mubr.f32.mxu0 %v348
      %671 = vmatmul.mubr.f32.gmra.mrb[0].mxu0 %v347
      %v672 = vpop.f32.mrb[0].mxu0
      %v673 = vadd.f32 0.0, %v672
      %v674 = vpop.f32.mrb[0].mxu0
      %675 = vmatprep.mubr.f32.mxu0 %v350
      %676 = vmatmul.mubr.f32.gmra.mrb[0].mxu0 %v349
      %v677 = vpop.f32.mrb[0].mxu0
      %v678 = vadd.f32 0.0, %v677
      %v679 = vpop.f32.mrb[0].mxu0
      %680 = vmatprep.mubr.f32.mxu0 %v352
      %681 = vmatmul.mubr.f32.gmra.mrb[0].mxu0 %v351
      %v682 = vpop.f32.mrb[0].mxu0
      %v683 = vadd.f32 0.0, %v682
      %v684 = vpop.f32.mrb[0].mxu0
      %685 = vmatprep.mubr.f32.mxu0 %v354
      %686 = vmatmul.mubr.f32.gmra.mrb[0].mxu0 %v353
      %v687 = vpop.f32.mrb[0].mxu0
      %v688 = vadd.f32 0.0, %v687
      %v689 = vpop.f32.mrb[0].mxu0
      %690 = vmatprep.mubr.f32.mxu0 %v356
      %691 = vmatmul.mubr.f32.gmra.mrb[0].mxu0 %v355
      %v692 = vpop.f32.mrb[0].mxu0
      %v693 = vadd.f32 0.0, %v692
      %v694 = vpop.f32.mrb[0].mxu0
      %695 = vmatprep.mubr.f32.mxu0 %v358
      %696 = vmatmul.mubr.f32.gmra.mrb[0].mxu0 %v357
      %v697 = vpop.f32.mrb[0].mxu0
      %v698 = vadd.f32 0.0, %v697
      %v699 = vpop.f32.mrb[0].mxu0
      %700 = vmatprep.mubr.f32.mxu0 %v360
      %701 = vmatmul.mubr.f32.gmra.mrb[0].mxu0 %v359
      %v702 = vpop.f32.mrb[0].mxu0
      %v703 = vadd.f32 0.0, %v702
      %v704 = vpop.f32.mrb[0].mxu0
      %705 = vmatprep.mubr.f32.mxu0 %v362
      %706 = vmatmul.mubr.f32.gmra.mrb[0].mxu0 %v361
      %v707 = vpop.f32.mrb[0].mxu0
      %v708 = vadd.f32 0.0, %v707
      %v709 = vpop.f32.mrb[0].mxu0
      %710 = vmatprep.mubr.f32.mxu0 %v364
      %711 = vmatmul.mubr.f32.gmra.mrb[0].mxu0 %v363
      %v712 = vpop.f32.mrb[0].mxu0
      %v713 = vadd.f32 0.0, %v712
      %v714 = vpop.f32.mrb[0].mxu0
      %715 = vmatprep.mubr.f32.mxu0 %v366
      %716 = vmatmul.mubr.f32.gmra.mrb[0].mxu0 %v365
      %v717 = vpop.f32.mrb[0].mxu0
      %v718 = vadd.f32 0.0, %v717
      %v719 = vpop.f32.mrb[0].mxu0
      %720 = vmatprep.mubr.f32.mxu0 %v368
      %721 = vmatmul.mubr.f32.gmra.mrb[0].mxu0 %v367
      %v722 = vpop.f32.mrb[0].mxu0
      %v723 = vadd.f32 0.0, %v722
      %v724 = vpop.f32.mrb[0].mxu0
      %725 = vmatprep.mubr.f32.mxu0 %v370
      %726 = vmatmul.mubr.f32.gmra.mrb[0].mxu0 %v369
      %v727 = vpop.f32.mrb[0].mxu0
      %v728 = vadd.f32 0.0, %v727
      %v729 = vpop.f32.mrb[0].mxu0
      %730 = vmatprep.mubr.f32.mxu0 %v372
      %731 = vmatmul.mubr.f32.gmra.mrb[0].mxu0 %v371
      %v732 = vpop.f32.mrb[0].mxu0
      %v733 = vadd.f32 0.0, %v732
      %v734 = vpop.f32.mrb[0].mxu0
      %735 = vmatprep.mubr.f32.mxu0 %v374
      %736 = vmatmul.mubr.f32.gmra.mrb[0].mxu0 %v373
      %v737 = vpop.f32.mrb[0].mxu0
      %v738 = vadd.f32 0.0, %v737
      %v739 = vpop.f32.mrb[0].mxu0
      %740 = vmatprep.mubr.f32.mxu0 %v376
      %741 = vmatmul.mubr.f32.gmra.mrb[0].mxu0 %v375
      %v742 = vpop.f32.mrb[0].mxu0
      %v743 = vadd.f32 0.0, %v742
      %v744 = vpop.f32.mrb[0].mxu0
      %745 = vmatprep.mubr.f32.mxu0 %v378
      %746 = vmatmul.mubr.f32.gmra.mrb[0].mxu0 %v377
      %v747 = vpop.f32.mrb[0].mxu0
      %v748 = vadd.f32 0.0, %v747
      %v749 = vpop.f32.mrb[0].mxu0
      %750 = vmatprep.mubr.f32.mxu0 %v380
      %751 = vmatmul.mubr.f32.gmra.mrb[0].mxu0 %v379
      %v752 = vpop.f32.mrb[0].mxu0
      %v753 = vadd.f32 0.0, %v752
      %v754 = vpop.f32.mrb[0].mxu0
      %755 = vmatprep.mubr.f32.mxu0 %v382
      %756 = vmatmul.mubr.f32.gmra.mrb[0].mxu0 %v381
      %v757 = vpop.f32.mrb[0].mxu0
      %v758 = vadd.f32 0.0, %v757
      %v759 = vpop.f32.mrb[0].mxu0
      %760 = vmatprep.mubr.f32.mxu0 %v384
      %761 = vmatmul.mubr.f32.gmra.mrb[0].mxu0 %v383
      %v762 = vpop.f32.mrb[0].mxu0
      %v763 = vadd.f32 0.0, %v762
      %v764 = vpop.f32.mrb[0].mxu0
      %765 = vmatprep.mubr.f32.mxu0 %v386
      %766 = vmatmul.mubr.f32.gmra.mrb[0].mxu0 %v385
      %v767 = vpop.f32.mrb[0].mxu0
      %v768 = vadd.f32 0.0, %v767
      %v769 = vpop.f32.mrb[0].mxu0
      %770 = vmatprep.mubr.f32.mxu0 %v388
      %771 = vmatmul.mubr.f32.gmra.mrb[0].mxu0 %v387
      %v772 = vpop.f32.mrb[0].mxu0
      %v773 = vadd.f32 0.0, %v772
      %v774 = vpop.f32.mrb[0].mxu0
      %775 = vmatprep.mubr.f32.mxu0 %v390
      %776 = vmatmul.mubr.f32.gmra.mrb[0].mxu0 %v389
      %v777 = vpop.f32.mrb[0].mxu0
      %v778 = vadd.f32 0.0, %v777
      %v779 = vpop.f32.mrb[0].mxu0
      %780 = vmatprep.mubr.f32.mxu0 %v392
      %781 = vmatmul.mubr.f32.gmra.mrb[0].mxu0 %v391
      %v782 = vpop.f32.mrb[0].mxu0
      %v783 = vadd.f32 0.0, %v782
      %v784 = vpop.f32.mrb[0].mxu0
      %785 = vmatprep.mubr.f32.mxu0 %v394
      %786 = vmatmul.mubr.f32.gmra.mrb[0].mxu0 %v393
      %v787 = vpop.f32.mrb[0].mxu0
      %v788 = vadd.f32 0.0, %v787
      %v789 = vpop.f32.mrb[0].mxu0
      %790 = vmatprep.mubr.f32.mxu0 %v396
      %791 = vmatmul.mubr.f32.gmra.mrb[0].mxu0 %v395
      %v792 = vpop.f32.mrb[0].mxu0
      %v793 = vadd.f32 0.0, %v792
      %v794 = vpop.f32.mrb[0].mxu0
      %795 = vmatprep.mubr.f32.mxu0 %v398
      %796 = vmatmul.mubr.f32.gmra.mrb[0].mxu0 %v397
      %v797 = vpop.f32.mrb[0].mxu0
      %v798 = vadd.f32 0.0, %v797
      %v799 = vpop.f32.mrb[0].mxu0
      %800 = vmatprep.mubr.f32.mxu0 %v400
      %801 = vmatmul.mubr.f32.gmra.mrb[0].mxu0 %v399
      %v802 = vpop.f32.mrb[0].mxu0
      %v803 = vadd.f32 0.0, %v802
      %v804 = vpop.f32.mrb[0].mxu0
      %805 = vmatprep.mubr.f32.mxu0 %v402
      %806 = vmatmul.mubr.f32.gmra.mrb[0].mxu0 %v401
      %v807 = vpop.f32.mrb[0].mxu0
      %v808 = vadd.f32 0.0, %v807
      %v809 = vpop.f32.mrb[0].mxu0
      %810 = vmatprep.mubr.f32.mxu0 %v404
      %811 = vmatmul.mubr.f32.gmra.mrb[0].mxu0 %v403
      %v812 = vpop.f32.mrb[0].mxu0
      %v813 = vadd.f32 0.0, %v812
      %v814 = vpop.f32.mrb[0].mxu0
      %815 = vmatprep.mubr.f32.mxu0 %v406
      %816 = vmatmul.mubr.f32.gmra.mrb[0].mxu0 %v405
      %v817 = vpop.f32.mrb[0].mxu0
      %v818 = vadd.f32 0.0, %v817
      %v819 = vpop.f32.mrb[0].mxu0
      %820 = vmatprep.mubr.f32.mxu0 %v408
      %821 = vmatmul.mubr.f32.gmra.mrb[0].mxu0 %v407
      %v822 = vpop.f32.mrb[0].mxu0
      %v823 = vadd.f32 0.0, %v822
      %v824 = vpop.f32.mrb[0].mxu0
      %825 = vdwg.mxu0
      %v826 = vlaneseq
      %v827 = vshrl.u32 %v826, 7
      %v828 = vsub.s32 0, %v827
      %v829 = vrot.slane %v279, %v828
      %v830 = vmul.f32 %v508, %v829
      %v831 = vmul.f32 %v513, %v829
      %v832 = vmul.f32 %v518, %v829
      %v833 = vmul.f32 %v523, %v829
      %v834 = vmul.f32 %v528, %v829
      %v835 = vmul.f32 %v533, %v829
      %v836 = vmul.f32 %v538, %v829
      %v837 = vmul.f32 %v543, %v829
      %v838 = vmul.f32 %v548, %v829
      %v839 = vmul.f32 %v553, %v829
      %v840 = vmul.f32 %v558, %v829
      %v841 = vmul.f32 %v563, %v829
      %v842 = vmul.f32 %v568, %v829
      %v843 = vmul.f32 %v573, %v829
      %v844 = vmul.f32 %v578, %v829
      %v845 = vmul.f32 %v583, %v829
      %v846 = vmul.f32 %v588, %v829
      %v847 = vmul.f32 %v593, %v829
      %v848 = vmul.f32 %v598, %v829
      %v849 = vmul.f32 %v603, %v829
      %v850 = vmul.f32 %v608, %v829
      %v851 = vmul.f32 %v613, %v829
      %v852 = vmul.f32 %v618, %v829
      %v853 = vmul.f32 %v623, %v829
      %v854 = vmul.f32 %v628, %v829
      %v855 = vmul.f32 %v633, %v829
      %v856 = vmul.f32 %v638, %v829
      %v857 = vmul.f32 %v643, %v829
      %v858 = vmul.f32 %v648, %v829
      %v859 = vmul.f32 %v653, %v829
      %v860 = vmul.f32 %v658, %v829
      %v861 = vmul.f32 %v663, %v829
      %v862 = vmul.f32 %v668, %v829
      %v863 = vmul.f32 %v673, %v829
      %v864 = vmul.f32 %v678, %v829
      %v865 = vmul.f32 %v683, %v829
      %v866 = vmul.f32 %v688, %v829
      %v867 = vmul.f32 %v693, %v829
      %v868 = vmul.f32 %v698, %v829
      %v869 = vmul.f32 %v703, %v829
      %v870 = vmul.f32 %v708, %v829
      %v871 = vmul.f32 %v713, %v829
      %v872 = vmul.f32 %v718, %v829
      %v873 = vmul.f32 %v723, %v829
      %v874 = vmul.f32 %v728, %v829
      %v875 = vmul.f32 %v733, %v829
      %v876 = vmul.f32 %v738, %v829
      %v877 = vmul.f32 %v743, %v829
      %v878 = vmul.f32 %v748, %v829
      %v879 = vmul.f32 %v753, %v829
      %v880 = vmul.f32 %v758, %v829
      %v881 = vmul.f32 %v763, %v829
      %v882 = vmul.f32 %v768, %v829
      %v883 = vmul.f32 %v773, %v829
      %v884 = vmul.f32 %v778, %v829
      %v885 = vmul.f32 %v783, %v829
      %v886 = vmul.f32 %v788, %v829
      %v887 = vmul.f32 %v793, %v829
      %v888 = vmul.f32 %v798, %v829
      %v889 = vmul.f32 %v803, %v829
      %v890 = vmul.f32 %v808, %v829
      %v891 = vmul.f32 %v813, %v829
      %v892 = vmul.f32 %v818, %v829
      %v893 = vmul.f32 %v823, %v829
      %v894 = vlaneseq
      %v895 = vshrl.u32 %v894, 7
      %v896 = vsub.s32 1, %v895
      %v897 = vrot.slane %v279, %v896
      %v898 = vadd.f32 %v830, %v897
      %v899 = vadd.f32 %v831, %v897
      %v900 = vadd.f32 %v832, %v897
      %v901 = vadd.f32 %v833, %v897
      %v902 = vadd.f32 %v834, %v897
      %v903 = vadd.f32 %v835, %v897
      %v904 = vadd.f32 %v836, %v897
      %v905 = vadd.f32 %v837, %v897
      %v906 = vadd.f32 %v838, %v897
      %v907 = vadd.f32 %v839, %v897
      %v908 = vadd.f32 %v840, %v897
      %v909 = vadd.f32 %v841, %v897
      %v910 = vadd.f32 %v842, %v897
      %v911 = vadd.f32 %v843, %v897
      %v912 = vadd.f32 %v844, %v897
      %v913 = vadd.f32 %v845, %v897
      %v914 = vadd.f32 %v846, %v897
      %v915 = vadd.f32 %v847, %v897
      %v916 = vadd.f32 %v848, %v897
      %v917 = vadd.f32 %v849, %v897
      %v918 = vadd.f32 %v850, %v897
      %v919 = vadd.f32 %v851, %v897
      %v920 = vadd.f32 %v852, %v897
      %v921 = vadd.f32 %v853, %v897
      %v922 = vadd.f32 %v854, %v897
      %v923 = vadd.f32 %v855, %v897
      %v924 = vadd.f32 %v856, %v897
      %v925 = vadd.f32 %v857, %v897
      %v926 = vadd.f32 %v858, %v897
      %v927 = vadd.f32 %v859, %v897
      %v928 = vadd.f32 %v860, %v897
      %v929 = vadd.f32 %v861, %v897
      %v930 = vadd.f32 %v862, %v897
      %v931 = vadd.f32 %v863, %v897
      %v932 = vadd.f32 %v864, %v897
      %v933 = vadd.f32 %v865, %v897
      %v934 = vadd.f32 %v866, %v897
      %v935 = vadd.f32 %v867, %v897
      %v936 = vadd.f32 %v868, %v897
      %v937 = vadd.f32 %v869, %v897
      %v938 = vadd.f32 %v870, %v897
      %v939 = vadd.f32 %v871, %v897
      %v940 = vadd.f32 %v872, %v897
      %v941 = vadd.f32 %v873, %v897
      %v942 = vadd.f32 %v874, %v897
      %v943 = vadd.f32 %v875, %v897
      %v944 = vadd.f32 %v876, %v897
      %v945 = vadd.f32 %v877, %v897
      %v946 = vadd.f32 %v878, %v897
      %v947 = vadd.f32 %v879, %v897
      %v948 = vadd.f32 %v880, %v897
      %v949 = vadd.f32 %v881, %v897
      %v950 = vadd.f32 %v882, %v897
      %v951 = vadd.f32 %v883, %v897
      %v952 = vadd.f32 %v884, %v897
      %v953 = vadd.f32 %v885, %v897
      %v954 = vadd.f32 %v886, %v897
      %v955 = vadd.f32 %v887, %v897
      %v956 = vadd.f32 %v888, %v897
      %v957 = vadd.f32 %v889, %v897
      %v958 = vadd.f32 %v890, %v897
      %v959 = vadd.f32 %v891, %v897
      %v960 = vadd.f32 %v892, %v897
      %v961 = vadd.f32 %v893, %v897
      %v962 = vmax.f32 %v898, 0.0
      %v963 = vmax.f32 %v899, 0.0
      %v964 = vmax.f32 %v900, 0.0
      %v965 = vmax.f32 %v901, 0.0
      %v966 = vmax.f32 %v902, 0.0
      %v967 = vmax.f32 %v903, 0.0
      %v968 = vmax.f32 %v904, 0.0
      %v969 = vmax.f32 %v905, 0.0
      %v970 = vmax.f32 %v906, 0.0
      %v971 = vmax.f32 %v907, 0.0
      %v972 = vmax.f32 %v908, 0.0
      %v973 = vmax.f32 %v909, 0.0
      %v974 = vmax.f32 %v910, 0.0
      %v975 = vmax.f32 %v911, 0.0
      %v976 = vmax.f32 %v912, 0.0
      %v977 = vmax.f32 %v913, 0.0
      %v978 = vmax.f32 %v914, 0.0
      %v979 = vmax.f32 %v915, 0.0
      %v980 = vmax.f32 %v916, 0.0
      %v981 = vmax.f32 %v917, 0.0
      %v982 = vmax.f32 %v918, 0.0
      %v983 = vmax.f32 %v919, 0.0
      %v984 = vmax.f32 %v920, 0.0
      %v985 = vmax.f32 %v921, 0.0
      %v986 = vmax.f32 %v922, 0.0
      %v987 = vmax.f32 %v923, 0.0
      %v988 = vmax.f32 %v924, 0.0
      %v989 = vmax.f32 %v925, 0.0
      %v990 = vmax.f32 %v926, 0.0
      %v991 = vmax.f32 %v927, 0.0
      %v992 = vmax.f32 %v928, 0.0
      %v993 = vmax.f32 %v929, 0.0
      %v994 = vmax.f32 %v930, 0.0
      %v995 = vmax.f32 %v931, 0.0
      %v996 = vmax.f32 %v932, 0.0
      %v997 = vmax.f32 %v933, 0.0
      %v998 = vmax.f32 %v934, 0.0
      %v999 = vmax.f32 %v935, 0.0
      %v1000 = vmax.f32 %v936, 0.0
      %v1001 = vmax.f32 %v937, 0.0
      %v1002 = vmax.f32 %v938, 0.0
      %v1003 = vmax.f32 %v939, 0.0
      %v1004 = vmax.f32 %v940, 0.0
      %v1005 = vmax.f32 %v941, 0.0
      %v1006 = vmax.f32 %v942, 0.0
      %v1007 = vmax.f32 %v943, 0.0
      %v1008 = vmax.f32 %v944, 0.0
      %v1009 = vmax.f32 %v945, 0.0
      %v1010 = vmax.f32 %v946, 0.0
      %v1011 = vmax.f32 %v947, 0.0
      %v1012 = vmax.f32 %v948, 0.0
      %v1013 = vmax.f32 %v949, 0.0
      %v1014 = vmax.f32 %v950, 0.0
      %v1015 = vmax.f32 %v951, 0.0
      %v1016 = vmax.f32 %v952, 0.0
      %v1017 = vmax.f32 %v953, 0.0
      %v1018 = vmax.f32 %v954, 0.0
      %v1019 = vmax.f32 %v955, 0.0
      %v1020 = vmax.f32 %v956, 0.0
      %v1021 = vmax.f32 %v957, 0.0
      %v1022 = vmax.f32 %v958, 0.0
      %v1023 = vmax.f32 %v959, 0.0
      %v1024 = vmax.f32 %v960, 0.0
      %v1025 = vmax.f32 %v961, 0.0
      %v1026 = vld [vmem:[%s2] sm:$0xff]
      %v1027 = vld [vmem:[%s2 + $0x8] sm:$0xff]
      %v1028 = vld [vmem:[%s2 + $0x10] sm:$0xff]
      %v1029 = vld [vmem:[%s2 + $0x18] sm:$0xff]
      %vm1030 = vcmask 261120
      %v1032 = vsel %vm1030, %v962, 0
      %v1035 = vsel %vm1030, %v963, 0
      %v1038 = vsel %vm1030, %v964, 0
      %v1041 = vsel %vm1030, %v965, 0
      %v1044 = vsel %vm1030, %v966, 0
      %v1047 = vsel %vm1030, %v967, 0
      %v1050 = vsel %vm1030, %v968, 0
      %v1053 = vsel %vm1030, %v969, 0
      %v1056 = vsel %vm1030, %v970, 0
      %v1059 = vsel %vm1030, %v971, 0
      %v1062 = vsel %vm1030, %v972, 0
      %v1065 = vsel %vm1030, %v973, 0
      %v1068 = vsel %vm1030, %v974, 0
      %v1071 = vsel %vm1030, %v975, 0
      %v1074 = vsel %vm1030, %v976, 0
      %v1077 = vsel %vm1030, %v977, 0
      %v1080 = vsel %vm1030, %v978, 0
      %v1083 = vsel %vm1030, %v979, 0
      %v1086 = vsel %vm1030, %v980, 0
      %v1089 = vsel %vm1030, %v981, 0
      %v1092 = vsel %vm1030, %v982, 0
      %v1095 = vsel %vm1030, %v983, 0
      %v1098 = vsel %vm1030, %v984, 0
      %v1101 = vsel %vm1030, %v985, 0
      %v1104 = vsel %vm1030, %v986, 0
      %v1107 = vsel %vm1030, %v987, 0
      %v1110 = vsel %vm1030, %v988, 0
      %v1113 = vsel %vm1030, %v989, 0
      %v1116 = vsel %vm1030, %v990, 0
      %v1119 = vsel %vm1030, %v991, 0
      %v1122 = vsel %vm1030, %v992, 0
      %v1125 = vsel %vm1030, %v993, 0
      %v1128 = vsel %vm1030, %v994, 0
      %v1131 = vsel %vm1030, %v995, 0
      %v1134 = vsel %vm1030, %v996, 0
      %v1137 = vsel %vm1030, %v997, 0
      %v1140 = vsel %vm1030, %v998, 0
      %v1143 = vsel %vm1030, %v999, 0
      %v1146 = vsel %vm1030, %v1000, 0
      %v1149 = vsel %vm1030, %v1001, 0
      %v1152 = vsel %vm1030, %v1002, 0
      %v1155 = vsel %vm1030, %v1003, 0
      %v1158 = vsel %vm1030, %v1004, 0
      %v1161 = vsel %vm1030, %v1005, 0
      %v1164 = vsel %vm1030, %v1006, 0
      %v1167 = vsel %vm1030, %v1007, 0
      %v1170 = vsel %vm1030, %v1008, 0
      %v1173 = vsel %vm1030, %v1009, 0
      %v1176 = vsel %vm1030, %v1010, 0
      %v1179 = vsel %vm1030, %v1011, 0
      %v1182 = vsel %vm1030, %v1012, 0
      %v1185 = vsel %vm1030, %v1013, 0
      %v1188 = vsel %vm1030, %v1014, 0
      %v1191 = vsel %vm1030, %v1015, 0
      %v1194 = vsel %vm1030, %v1016, 0
      %v1197 = vsel %vm1030, %v1017, 0
      %v1200 = vsel %vm1030, %v1018, 0
      %v1203 = vsel %vm1030, %v1019, 0
      %v1206 = vsel %vm1030, %v1020, 0
      %v1209 = vsel %vm1030, %v1021, 0
      %v1212 = vsel %vm1030, %v1022, 0
      %v1215 = vsel %vm1030, %v1023, 0
      %v1218 = vsel %vm1030, %v1024, 0
      %v1221 = vsel %vm1030, %v1025, 0
      %1223 = vmatprep.subr.mxu0 0.0
      %1224 = vmatpush1.msra.mxu0 %v1026
      %1225 = vmatprep.subr.mxu0 0.0
      %1226 = vmatpush1.msra.mxu0 %v1027
      %1227 = vmatprep.subr.mxu0 0.0
      %1228 = vmatpush1.msra.mxu0 %v1028
      %1229 = vmatprep.subr.mxu0 0.0
      %1230 = vmatpush1.msra.mxu0 %v1029
      %1231 = vmatprep.subr.mxu0 0.0
      %1232 = vmatpush1.msra.mxu0 0.0
      %1233 = vmatprep.subr.mxu0 0.0
      %1234 = vmatpush1.msra.mxu0 0.0
      %1235 = vmatprep.subr.mxu0 0.0
      %1236 = vmatpush1.msra.mxu0 0.0
      %1237 = vmatprep.subr.mxu0 0.0
      %1238 = vmatpush1.msra.mxu0 0.0
      %1239 = vmatprep.subr.mxu0 0.0
      %1240 = vmatpush1.msra.mxu0 0.0
      %1241 = vmatprep.subr.mxu0 0.0
      %1242 = vmatpush1.msra.mxu0 0.0
      %1243 = vmatprep.subr.mxu0 0.0
      %1244 = vmatpush1.msra.mxu0 0.0
      %1245 = vmatprep.subr.mxu0 0.0
      %1246 = vmatpush1.msra.mxu0 0.0
      %1247 = vmatprep.subr.mxu0 0.0
      %1248 = vmatpush1.msra.mxu0 0.0
      %1249 = vmatprep.subr.mxu0 0.0
      %1250 = vmatpush1.msra.mxu0 0.0
      %1251 = vmatprep.subr.mxu0 0.0
      %1252 = vmatpush1.msra.mxu0 0.0
      %1253 = vmatprep.subr.mxu0 0.0
      %1254 = vmatpush1.msra.mxu0 0.0
      %1255 = vmatprep.subr.mxu0 0.0
      %1256 = vmatpush1.msra.mxu0 0.0
      %1257 = vmatprep.subr.mxu0 0.0
      %1258 = vmatpush1.msra.mxu0 0.0
      %1259 = vmatprep.subr.mxu0 0.0
      %1260 = vmatpush1.msra.mxu0 0.0
      %1261 = vmatprep.subr.mxu0 0.0
      %1262 = vmatpush1.msra.mxu0 0.0
      %1263 = vmatprep.subr.mxu0 0.0
      %1264 = vmatpush1.msra.mxu0 0.0
      %1265 = vmatprep.subr.mxu0 0.0
      %1266 = vmatpush1.msra.mxu0 0.0
      %1267 = vmatprep.subr.mxu0 0.0
      %1268 = vmatpush1.msra.mxu0 0.0
      %1269 = vmatprep.subr.mxu0 0.0
      %1270 = vmatpush1.msra.mxu0 0.0
      %1271 = vmatprep.subr.mxu0 0.0
      %1272 = vmatpush1.msra.mxu0 0.0
      %1273 = vmatprep.subr.mxu0 0.0
      %1274 = vmatpush1.msra.mxu0 0.0
      %1275 = vmatprep.subr.mxu0 0.0
      %1276 = vmatpush1.msra.mxu0 0.0
      %1277 = vmatprep.subr.mxu0 0.0
      %1278 = vmatpush1.msra.mxu0 0.0
      %1279 = vmatprep.subr.mxu0 0.0
      %1280 = vmatpush1.msra.mxu0 0.0
      %1281 = vmatprep.subr.mxu0 0.0
      %1282 = vmatpush1.msra.mxu0 0.0
      %1283 = vmatprep.subr.mxu0 0.0
      %1284 = vmatpush1.msra.mxu0 0.0
      %1285 = vmatprep.subr.mxu0 0.0
      %1286 = vmatpush1.msra.mxu0 0.0
      %1287 = vmatprep.mubr.f32.mxu0 0.0
      %1288 = vmatmul.mubr.f32.gmra.mrb[0].mxu0 %v1032
      %v1289 = vpop.f32.mrb[0].mxu0
      %v1290 = vadd.f32 0.0, %v1289
      %v1291 = vpop.f32.mrb[0].mxu0
      %1292 = vmatprep.mubr.f32.mxu0 0.0
      %1293 = vmatmul.mubr.f32.gmra.mrb[0].mxu0 %v1035
      %v1294 = vpop.f32.mrb[0].mxu0
      %v1295 = vadd.f32 0.0, %v1294
      %v1296 = vpop.f32.mrb[0].mxu0
      %1297 = vmatprep.mubr.f32.mxu0 0.0
      %1298 = vmatmul.mubr.f32.gmra.mrb[0].mxu0 %v1038
      %v1299 = vpop.f32.mrb[0].mxu0
      %v1300 = vadd.f32 0.0, %v1299
      %v1301 = vpop.f32.mrb[0].mxu0
      %1302 = vmatprep.mubr.f32.mxu0 0.0
      %1303 = vmatmul.mubr.f32.gmra.mrb[0].mxu0 %v1041
      %v1304 = vpop.f32.mrb[0].mxu0
      %v1305 = vadd.f32 0.0, %v1304
      %v1306 = vpop.f32.mrb[0].mxu0
      %1307 = vmatprep.mubr.f32.mxu0 0.0
      %1308 = vmatmul.mubr.f32.gmra.mrb[0].mxu0 %v1044
      %v1309 = vpop.f32.mrb[0].mxu0
      %v1310 = vadd.f32 0.0, %v1309
      %v1311 = vpop.f32.mrb[0].mxu0
      %1312 = vmatprep.mubr.f32.mxu0 0.0
      %1313 = vmatmul.mubr.f32.gmra.mrb[0].mxu0 %v1047
      %v1314 = vpop.f32.mrb[0].mxu0
      %v1315 = vadd.f32 0.0, %v1314
      %v1316 = vpop.f32.mrb[0].mxu0
      %1317 = vmatprep.mubr.f32.mxu0 0.0
      %1318 = vmatmul.mubr.f32.gmra.mrb[0].mxu0 %v1050
      %v1319 = vpop.f32.mrb[0].mxu0
      %v1320 = vadd.f32 0.0, %v1319
      %v1321 = vpop.f32.mrb[0].mxu0
      %1322 = vmatprep.mubr.f32.mxu0 0.0
      %1323 = vmatmul.mubr.f32.gmra.mrb[0].mxu0 %v1053
      %v1324 = vpop.f32.mrb[0].mxu0
      %v1325 = vadd.f32 0.0, %v1324
      %v1326 = vpop.f32.mrb[0].mxu0
      %1327 = vmatprep.mubr.f32.mxu0 0.0
      %1328 = vmatmul.mubr.f32.gmra.mrb[0].mxu0 %v1056
      %v1329 = vpop.f32.mrb[0].mxu0
      %v1330 = vadd.f32 0.0, %v1329
      %v1331 = vpop.f32.mrb[0].mxu0
      %1332 = vmatprep.mubr.f32.mxu0 0.0
      %1333 = vmatmul.mubr.f32.gmra.mrb[0].mxu0 %v1059
      %v1334 = vpop.f32.mrb[0].mxu0
      %v1335 = vadd.f32 0.0, %v1334
      %v1336 = vpop.f32.mrb[0].mxu0
      %1337 = vmatprep.mubr.f32.mxu0 0.0
      %1338 = vmatmul.mubr.f32.gmra.mrb[0].mxu0 %v1062
      %v1339 = vpop.f32.mrb[0].mxu0
      %v1340 = vadd.f32 0.0, %v1339
      %v1341 = vpop.f32.mrb[0].mxu0
      %1342 = vmatprep.mubr.f32.mxu0 0.0
      %1343 = vmatmul.mubr.f32.gmra.mrb[0].mxu0 %v1065
      %v1344 = vpop.f32.mrb[0].mxu0
      %v1345 = vadd.f32 0.0, %v1344
      %v1346 = vpop.f32.mrb[0].mxu0
      %1347 = vmatprep.mubr.f32.mxu0 0.0
      %1348 = vmatmul.mubr.f32.gmra.mrb[0].mxu0 %v1068
      %v1349 = vpop.f32.mrb[0].mxu0
      %v1350 = vadd.f32 0.0, %v1349
      %v1351 = vpop.f32.mrb[0].mxu0
      %1352 = vmatprep.mubr.f32.mxu0 0.0
      %1353 = vmatmul.mubr.f32.gmra.mrb[0].mxu0 %v1071
      %v1354 = vpop.f32.mrb[0].mxu0
      %v1355 = vadd.f32 0.0, %v1354
      %v1356 = vpop.f32.mrb[0].mxu0
      %1357 = vmatprep.mubr.f32.mxu0 0.0
      %1358 = vmatmul.mubr.f32.gmra.mrb[0].mxu0 %v1074
      %v1359 = vpop.f32.mrb[0].mxu0
      %v1360 = vadd.f32 0.0, %v1359
      %v1361 = vpop.f32.mrb[0].mxu0
      %1362 = vmatprep.mubr.f32.mxu0 0.0
      %1363 = vmatmul.mubr.f32.gmra.mrb[0].mxu0 %v1077
      %v1364 = vpop.f32.mrb[0].mxu0
      %v1365 = vadd.f32 0.0, %v1364
      %v1366 = vpop.f32.mrb[0].mxu0
      %1367 = vmatprep.mubr.f32.mxu0 0.0
      %1368 = vmatmul.mubr.f32.gmra.mrb[0].mxu0 %v1080
      %v1369 = vpop.f32.mrb[0].mxu0
      %v1370 = vadd.f32 0.0, %v1369
      %v1371 = vpop.f32.mrb[0].mxu0
      %1372 = vmatprep.mubr.f32.mxu0 0.0
      %1373 = vmatmul.mubr.f32.gmra.mrb[0].mxu0 %v1083
      %v1374 = vpop.f32.mrb[0].mxu0
      %v1375 = vadd.f32 0.0, %v1374
      %v1376 = vpop.f32.mrb[0].mxu0
      %1377 = vmatprep.mubr.f32.mxu0 0.0
      %1378 = vmatmul.mubr.f32.gmra.mrb[0].mxu0 %v1086
      %v1379 = vpop.f32.mrb[0].mxu0
      %v1380 = vadd.f32 0.0, %v1379
      %v1381 = vpop.f32.mrb[0].mxu0
      %1382 = vmatprep.mubr.f32.mxu0 0.0
      %1383 = vmatmul.mubr.f32.gmra.mrb[0].mxu0 %v1089
      %v1384 = vpop.f32.mrb[0].mxu0
      %v1385 = vadd.f32 0.0, %v1384
      %v1386 = vpop.f32.mrb[0].mxu0
      %1387 = vmatprep.mubr.f32.mxu0 0.0
      %1388 = vmatmul.mubr.f32.gmra.mrb[0].mxu0 %v1092
      %v1389 = vpop.f32.mrb[0].mxu0
      %v1390 = vadd.f32 0.0, %v1389
      %v1391 = vpop.f32.mrb[0].mxu0
      %1392 = vmatprep.mubr.f32.mxu0 0.0
      %1393 = vmatmul.mubr.f32.gmra.mrb[0].mxu0 %v1095
      %v1394 = vpop.f32.mrb[0].mxu0
      %v1395 = vadd.f32 0.0, %v1394
      %v1396 = vpop.f32.mrb[0].mxu0
      %1397 = vmatprep.mubr.f32.mxu0 0.0
      %1398 = vmatmul.mubr.f32.gmra.mrb[0].mxu0 %v1098
      %v1399 = vpop.f32.mrb[0].mxu0
      %v1400 = vadd.f32 0.0, %v1399
      %v1401 = vpop.f32.mrb[0].mxu0
      %1402 = vmatprep.mubr.f32.mxu0 0.0
      %1403 = vmatmul.mubr.f32.gmra.mrb[0].mxu0 %v1101
      %v1404 = vpop.f32.mrb[0].mxu0
      %v1405 = vadd.f32 0.0, %v1404
      %v1406 = vpop.f32.mrb[0].mxu0
      %1407 = vmatprep.mubr.f32.mxu0 0.0
      %1408 = vmatmul.mubr.f32.gmra.mrb[0].mxu0 %v1104
      %v1409 = vpop.f32.mrb[0].mxu0
      %v1410 = vadd.f32 0.0, %v1409
      %v1411 = vpop.f32.mrb[0].mxu0
      %1412 = vmatprep.mubr.f32.mxu0 0.0
      %1413 = vmatmul.mubr.f32.gmra.mrb[0].mxu0 %v1107
      %v1414 = vpop.f32.mrb[0].mxu0
      %v1415 = vadd.f32 0.0, %v1414
      %v1416 = vpop.f32.mrb[0].mxu0
      %1417 = vmatprep.mubr.f32.mxu0 0.0
      %1418 = vmatmul.mubr.f32.gmra.mrb[0].mxu0 %v1110
      %v1419 = vpop.f32.mrb[0].mxu0
      %v1420 = vadd.f32 0.0, %v1419
      %v1421 = vpop.f32.mrb[0].mxu0
      %1422 = vmatprep.mubr.f32.mxu0 0.0
      %1423 = vmatmul.mubr.f32.gmra.mrb[0].mxu0 %v1113
      %v1424 = vpop.f32.mrb[0].mxu0
      %v1425 = vadd.f32 0.0, %v1424
      %v1426 = vpop.f32.mrb[0].mxu0
      %1427 = vmatprep.mubr.f32.mxu0 0.0
      %1428 = vmatmul.mubr.f32.gmra.mrb[0].mxu0 %v1116
      %v1429 = vpop.f32.mrb[0].mxu0
      %v1430 = vadd.f32 0.0, %v1429
      %v1431 = vpop.f32.mrb[0].mxu0
      %1432 = vmatprep.mubr.f32.mxu0 0.0
      %1433 = vmatmul.mubr.f32.gmra.mrb[0].mxu0 %v1119
      %v1434 = vpop.f32.mrb[0].mxu0
      %v1435 = vadd.f32 0.0, %v1434
      %v1436 = vpop.f32.mrb[0].mxu0
      %1437 = vmatprep.mubr.f32.mxu0 0.0
      %1438 = vmatmul.mubr.f32.gmra.mrb[0].mxu0 %v1122
      %v1439 = vpop.f32.mrb[0].mxu0
      %v1440 = vadd.f32 0.0, %v1439
      %v1441 = vpop.f32.mrb[0].mxu0
      %1442 = vmatprep.mubr.f32.mxu0 0.0
      %1443 = vmatmul.mubr.f32.gmra.mrb[0].mxu0 %v1125
      %v1444 = vpop.f32.mrb[0].mxu0
      %v1445 = vadd.f32 0.0, %v1444
      %v1446 = vpop.f32.mrb[0].mxu0
      %1447 = vmatprep.mubr.f32.mxu0 0.0
      %1448 = vmatmul.mubr.f32.gmra.mrb[0].mxu0 %v1128
      %v1449 = vpop.f32.mrb[0].mxu0
      %v1450 = vadd.f32 0.0, %v1449
      %v1451 = vpop.f32.mrb[0].mxu0
      %1452 = vmatprep.mubr.f32.mxu0 0.0
      %1453 = vmatmul.mubr.f32.gmra.mrb[0].mxu0 %v1131
      %v1454 = vpop.f32.mrb[0].mxu0
      %v1455 = vadd.f32 0.0, %v1454
      %v1456 = vpop.f32.mrb[0].mxu0
      %1457 = vmatprep.mubr.f32.mxu0 0.0
      %1458 = vmatmul.mubr.f32.gmra.mrb[0].mxu0 %v1134
      %v1459 = vpop.f32.mrb[0].mxu0
      %v1460 = vadd.f32 0.0, %v1459
      %v1461 = vpop.f32.mrb[0].mxu0
      %1462 = vmatprep.mubr.f32.mxu0 0.0
      %1463 = vmatmul.mubr.f32.gmra.mrb[0].mxu0 %v1137
      %v1464 = vpop.f32.mrb[0].mxu0
      %v1465 = vadd.f32 0.0, %v1464
      %v1466 = vpop.f32.mrb[0].mxu0
      %1467 = vmatprep.mubr.f32.mxu0 0.0
      %1468 = vmatmul.mubr.f32.gmra.mrb[0].mxu0 %v1140
      %v1469 = vpop.f32.mrb[0].mxu0
      %v1470 = vadd.f32 0.0, %v1469
      %v1471 = vpop.f32.mrb[0].mxu0
      %1472 = vmatprep.mubr.f32.mxu0 0.0
      %1473 = vmatmul.mubr.f32.gmra.mrb[0].mxu0 %v1143
      %v1474 = vpop.f32.mrb[0].mxu0
      %v1475 = vadd.f32 0.0, %v1474
      %v1476 = vpop.f32.mrb[0].mxu0
      %1477 = vmatprep.mubr.f32.mxu0 0.0
      %1478 = vmatmul.mubr.f32.gmra.mrb[0].mxu0 %v1146
      %v1479 = vpop.f32.mrb[0].mxu0
      %v1480 = vadd.f32 0.0, %v1479
      %v1481 = vpop.f32.mrb[0].mxu0
      %1482 = vmatprep.mubr.f32.mxu0 0.0
      %1483 = vmatmul.mubr.f32.gmra.mrb[0].mxu0 %v1149
      %v1484 = vpop.f32.mrb[0].mxu0
      %v1485 = vadd.f32 0.0, %v1484
      %v1486 = vpop.f32.mrb[0].mxu0
      %1487 = vmatprep.mubr.f32.mxu0 0.0
      %1488 = vmatmul.mubr.f32.gmra.mrb[0].mxu0 %v1152
      %v1489 = vpop.f32.mrb[0].mxu0
      %v1490 = vadd.f32 0.0, %v1489
      %v1491 = vpop.f32.mrb[0].mxu0
      %1492 = vmatprep.mubr.f32.mxu0 0.0
      %1493 = vmatmul.mubr.f32.gmra.mrb[0].mxu0 %v1155
      %v1494 = vpop.f32.mrb[0].mxu0
      %v1495 = vadd.f32 0.0, %v1494
      %v1496 = vpop.f32.mrb[0].mxu0
      %1497 = vmatprep.mubr.f32.mxu0 0.0
      %1498 = vmatmul.mubr.f32.gmra.mrb[0].mxu0 %v1158
      %v1499 = vpop.f32.mrb[0].mxu0
      %v1500 = vadd.f32 0.0, %v1499
      %v1501 = vpop.f32.mrb[0].mxu0
      %1502 = vmatprep.mubr.f32.mxu0 0.0
      %1503 = vmatmul.mubr.f32.gmra.mrb[0].mxu0 %v1161
      %v1504 = vpop.f32.mrb[0].mxu0
      %v1505 = vadd.f32 0.0, %v1504
      %v1506 = vpop.f32.mrb[0].mxu0
      %1507 = vmatprep.mubr.f32.mxu0 0.0
      %1508 = vmatmul.mubr.f32.gmra.mrb[0].mxu0 %v1164
      %v1509 = vpop.f32.mrb[0].mxu0
      %v1510 = vadd.f32 0.0, %v1509
      %v1511 = vpop.f32.mrb[0].mxu0
      %1512 = vmatprep.mubr.f32.mxu0 0.0
      %1513 = vmatmul.mubr.f32.gmra.mrb[0].mxu0 %v1167
      %v1514 = vpop.f32.mrb[0].mxu0
      %v1515 = vadd.f32 0.0, %v1514
      %v1516 = vpop.f32.mrb[0].mxu0
      %1517 = vmatprep.mubr.f32.mxu0 0.0
      %1518 = vmatmul.mubr.f32.gmra.mrb[0].mxu0 %v1170
      %v1519 = vpop.f32.mrb[0].mxu0
      %v1520 = vadd.f32 0.0, %v1519
      %v1521 = vpop.f32.mrb[0].mxu0
      %1522 = vmatprep.mubr.f32.mxu0 0.0
      %1523 = vmatmul.mubr.f32.gmra.mrb[0].mxu0 %v1173
      %v1524 = vpop.f32.mrb[0].mxu0
      %v1525 = vadd.f32 0.0, %v1524
      %v1526 = vpop.f32.mrb[0].mxu0
      %1527 = vmatprep.mubr.f32.mxu0 0.0
      %1528 = vmatmul.mubr.f32.gmra.mrb[0].mxu0 %v1176
      %v1529 = vpop.f32.mrb[0].mxu0
      %v1530 = vadd.f32 0.0, %v1529
      %v1531 = vpop.f32.mrb[0].mxu0
      %1532 = vmatprep.mubr.f32.mxu0 0.0
      %1533 = vmatmul.mubr.f32.gmra.mrb[0].mxu0 %v1179
      %v1534 = vpop.f32.mrb[0].mxu0
      %v1535 = vadd.f32 0.0, %v1534
      %v1536 = vpop.f32.mrb[0].mxu0
      %1537 = vmatprep.mubr.f32.mxu0 0.0
      %1538 = vmatmul.mubr.f32.gmra.mrb[0].mxu0 %v1182
      %v1539 = vpop.f32.mrb[0].mxu0
      %v1540 = vadd.f32 0.0, %v1539
      %v1541 = vpop.f32.mrb[0].mxu0
      %1542 = vmatprep.mubr.f32.mxu0 0.0
      %1543 = vmatmul.mubr.f32.gmra.mrb[0].mxu0 %v1185
      %v1544 = vpop.f32.mrb[0].mxu0
      %v1545 = vadd.f32 0.0, %v1544
      %v1546 = vpop.f32.mrb[0].mxu0
      %1547 = vmatprep.mubr.f32.mxu0 0.0
      %1548 = vmatmul.mubr.f32.gmra.mrb[0].mxu0 %v1188
      %v1549 = vpop.f32.mrb[0].mxu0
      %v1550 = vadd.f32 0.0, %v1549
      %v1551 = vpop.f32.mrb[0].mxu0
      %1552 = vmatprep.mubr.f32.mxu0 0.0
      %1553 = vmatmul.mubr.f32.gmra.mrb[0].mxu0 %v1191
      %v1554 = vpop.f32.mrb[0].mxu0
      %v1555 = vadd.f32 0.0, %v1554
      %v1556 = vpop.f32.mrb[0].mxu0
      %1557 = vmatprep.mubr.f32.mxu0 0.0
      %1558 = vmatmul.mubr.f32.gmra.mrb[0].mxu0 %v1194
      %v1559 = vpop.f32.mrb[0].mxu0
      %v1560 = vadd.f32 0.0, %v1559
      %v1561 = vpop.f32.mrb[0].mxu0
      %1562 = vmatprep.mubr.f32.mxu0 0.0
      %1563 = vmatmul.mubr.f32.gmra.mrb[0].mxu0 %v1197
      %v1564 = vpop.f32.mrb[0].mxu0
      %v1565 = vadd.f32 0.0, %v1564
      %v1566 = vpop.f32.mrb[0].mxu0
      %1567 = vmatprep.mubr.f32.mxu0 0.0
      %1568 = vmatmul.mubr.f32.gmra.mrb[0].mxu0 %v1200
      %v1569 = vpop.f32.mrb[0].mxu0
      %v1570 = vadd.f32 0.0, %v1569
      %v1571 = vpop.f32.mrb[0].mxu0
      %1572 = vmatprep.mubr.f32.mxu0 0.0
      %1573 = vmatmul.mubr.f32.gmra.mrb[0].mxu0 %v1203
      %v1574 = vpop.f32.mrb[0].mxu0
      %v1575 = vadd.f32 0.0, %v1574
      %v1576 = vpop.f32.mrb[0].mxu0
      %1577 = vmatprep.mubr.f32.mxu0 0.0
      %1578 = vmatmul.mubr.f32.gmra.mrb[0].mxu0 %v1206
      %v1579 = vpop.f32.mrb[0].mxu0
      %v1580 = vadd.f32 0.0, %v1579
      %v1581 = vpop.f32.mrb[0].mxu0
      %1582 = vmatprep.mubr.f32.mxu0 0.0
      %1583 = vmatmul.mubr.f32.gmra.mrb[0].mxu0 %v1209
      %v1584 = vpop.f32.mrb[0].mxu0
      %v1585 = vadd.f32 0.0, %v1584
      %v1586 = vpop.f32.mrb[0].mxu0
      %1587 = vmatprep.mubr.f32.mxu0 0.0
      %1588 = vmatmul.mubr.f32.gmra.mrb[0].mxu0 %v1212
      %v1589 = vpop.f32.mrb[0].mxu0
      %v1590 = vadd.f32 0.0, %v1589
      %v1591 = vpop.f32.mrb[0].mxu0
      %1592 = vmatprep.mubr.f32.mxu0 0.0
      %1593 = vmatmul.mubr.f32.gmra.mrb[0].mxu0 %v1215
      %v1594 = vpop.f32.mrb[0].mxu0
      %v1595 = vadd.f32 0.0, %v1594
      %v1596 = vpop.f32.mrb[0].mxu0
      %1597 = vmatprep.mubr.f32.mxu0 0.0
      %1598 = vmatmul.mubr.f32.gmra.mrb[0].mxu0 %v1218
      %v1599 = vpop.f32.mrb[0].mxu0
      %v1600 = vadd.f32 0.0, %v1599
      %v1601 = vpop.f32.mrb[0].mxu0
      %1602 = vmatprep.mubr.f32.mxu0 0.0
      %1603 = vmatmul.mubr.f32.gmra.mrb[0].mxu0 %v1221
      %v1604 = vpop.f32.mrb[0].mxu0
      %v1605 = vadd.f32 0.0, %v1604
      %v1606 = vpop.f32.mrb[0].mxu0
      %1607 = vdwg.mxu0
      %v1608 = vlaneseq
      %v1609 = vshrl.u32 %v1608, 7
      %v1610 = vsub.s32 2, %v1609
      %v1611 = vrot.slane %v279, %v1610
      %v1612 = vmul.f32 %v1290, %v1611
      %v1613 = vmul.f32 %v1295, %v1611
      %v1614 = vmul.f32 %v1300, %v1611
      %v1615 = vmul.f32 %v1305, %v1611
      %v1616 = vmul.f32 %v1310, %v1611
      %v1617 = vmul.f32 %v1315, %v1611
      %v1618 = vmul.f32 %v1320, %v1611
      %v1619 = vmul.f32 %v1325, %v1611
      %v1620 = vmul.f32 %v1330, %v1611
      %v1621 = vmul.f32 %v1335, %v1611
      %v1622 = vmul.f32 %v1340, %v1611
      %v1623 = vmul.f32 %v1345, %v1611
      %v1624 = vmul.f32 %v1350, %v1611
      %v1625 = vmul.f32 %v1355, %v1611
      %v1626 = vmul.f32 %v1360, %v1611
      %v1627 = vmul.f32 %v1365, %v1611
      %v1628 = vmul.f32 %v1370, %v1611
      %v1629 = vmul.f32 %v1375, %v1611
      %v1630 = vmul.f32 %v1380, %v1611
      %v1631 = vmul.f32 %v1385, %v1611
      %v1632 = vmul.f32 %v1390, %v1611
      %v1633 = vmul.f32 %v1395, %v1611
      %v1634 = vmul.f32 %v1400, %v1611
      %v1635 = vmul.f32 %v1405, %v1611
      %v1636 = vmul.f32 %v1410, %v1611
      %v1637 = vmul.f32 %v1415, %v1611
      %v1638 = vmul.f32 %v1420, %v1611
      %v1639 = vmul.f32 %v1425, %v1611
      %v1640 = vmul.f32 %v1430, %v1611
      %v1641 = vmul.f32 %v1435, %v1611
      %v1642 = vmul.f32 %v1440, %v1611
      %v1643 = vmul.f32 %v1445, %v1611
      %v1644 = vmul.f32 %v1450, %v1611
      %v1645 = vmul.f32 %v1455, %v1611
      %v1646 = vmul.f32 %v1460, %v1611
      %v1647 = vmul.f32 %v1465, %v1611
      %v1648 = vmul.f32 %v1470, %v1611
      %v1649 = vmul.f32 %v1475, %v1611
      %v1650 = vmul.f32 %v1480, %v1611
      %v1651 = vmul.f32 %v1485, %v1611
      %v1652 = vmul.f32 %v1490, %v1611
      %v1653 = vmul.f32 %v1495, %v1611
      %v1654 = vmul.f32 %v1500, %v1611
      %v1655 = vmul.f32 %v1505, %v1611
      %v1656 = vmul.f32 %v1510, %v1611
      %v1657 = vmul.f32 %v1515, %v1611
      %v1658 = vmul.f32 %v1520, %v1611
      %v1659 = vmul.f32 %v1525, %v1611
      %v1660 = vmul.f32 %v1530, %v1611
      %v1661 = vmul.f32 %v1535, %v1611
      %v1662 = vmul.f32 %v1540, %v1611
      %v1663 = vmul.f32 %v1545, %v1611
      %v1664 = vmul.f32 %v1550, %v1611
      %v1665 = vmul.f32 %v1555, %v1611
      %v1666 = vmul.f32 %v1560, %v1611
      %v1667 = vmul.f32 %v1565, %v1611
      %v1668 = vmul.f32 %v1570, %v1611
      %v1669 = vmul.f32 %v1575, %v1611
      %v1670 = vmul.f32 %v1580, %v1611
      %v1671 = vmul.f32 %v1585, %v1611
      %v1672 = vmul.f32 %v1590, %v1611
      %v1673 = vmul.f32 %v1595, %v1611
      %v1674 = vmul.f32 %v1600, %v1611
      %v1675 = vmul.f32 %v1605, %v1611
      %v1676 = vlaneseq
      %v1677 = vshrl.u32 %v1676, 7
      %v1678 = vsub.s32 3, %v1677
      %v1679 = vrot.slane %v279, %v1678
      %v1680 = vadd.f32 %v1612, %v1679
      %v1681 = vadd.f32 %v1613, %v1679
      %v1682 = vadd.f32 %v1614, %v1679
      %v1683 = vadd.f32 %v1615, %v1679
      %v1684 = vadd.f32 %v1616, %v1679
      %v1685 = vadd.f32 %v1617, %v1679
      %v1686 = vadd.f32 %v1618, %v1679
      %v1687 = vadd.f32 %v1619, %v1679
      %v1688 = vadd.f32 %v1620, %v1679
      %v1689 = vadd.f32 %v1621, %v1679
      %v1690 = vadd.f32 %v1622, %v1679
      %v1691 = vadd.f32 %v1623, %v1679
      %v1692 = vadd.f32 %v1624, %v1679
      %v1693 = vadd.f32 %v1625, %v1679
      %v1694 = vadd.f32 %v1626, %v1679
      %v1695 = vadd.f32 %v1627, %v1679
      %v1696 = vadd.f32 %v1628, %v1679
      %v1697 = vadd.f32 %v1629, %v1679
      %v1698 = vadd.f32 %v1630, %v1679
      %v1699 = vadd.f32 %v1631, %v1679
      %v1700 = vadd.f32 %v1632, %v1679
      %v1701 = vadd.f32 %v1633, %v1679
      %v1702 = vadd.f32 %v1634, %v1679
      %v1703 = vadd.f32 %v1635, %v1679
      %v1704 = vadd.f32 %v1636, %v1679
      %v1705 = vadd.f32 %v1637, %v1679
      %v1706 = vadd.f32 %v1638, %v1679
      %v1707 = vadd.f32 %v1639, %v1679
      %v1708 = vadd.f32 %v1640, %v1679
      %v1709 = vadd.f32 %v1641, %v1679
      %v1710 = vadd.f32 %v1642, %v1679
      %v1711 = vadd.f32 %v1643, %v1679
      %v1712 = vadd.f32 %v1644, %v1679
      %v1713 = vadd.f32 %v1645, %v1679
      %v1714 = vadd.f32 %v1646, %v1679
      %v1715 = vadd.f32 %v1647, %v1679
      %v1716 = vadd.f32 %v1648, %v1679
      %v1717 = vadd.f32 %v1649, %v1679
      %v1718 = vadd.f32 %v1650, %v1679
      %v1719 = vadd.f32 %v1651, %v1679
      %v1720 = vadd.f32 %v1652, %v1679
      %v1721 = vadd.f32 %v1653, %v1679
      %v1722 = vadd.f32 %v1654, %v1679
      %v1723 = vadd.f32 %v1655, %v1679
      %v1724 = vadd.f32 %v1656, %v1679
      %v1725 = vadd.f32 %v1657, %v1679
      %v1726 = vadd.f32 %v1658, %v1679
      %v1727 = vadd.f32 %v1659, %v1679
      %v1728 = vadd.f32 %v1660, %v1679
      %v1729 = vadd.f32 %v1661, %v1679
      %v1730 = vadd.f32 %v1662, %v1679
      %v1731 = vadd.f32 %v1663, %v1679
      %v1732 = vadd.f32 %v1664, %v1679
      %v1733 = vadd.f32 %v1665, %v1679
      %v1734 = vadd.f32 %v1666, %v1679
      %v1735 = vadd.f32 %v1667, %v1679
      %v1736 = vadd.f32 %v1668, %v1679
      %v1737 = vadd.f32 %v1669, %v1679
      %v1738 = vadd.f32 %v1670, %v1679
      %v1739 = vadd.f32 %v1671, %v1679
      %v1740 = vadd.f32 %v1672, %v1679
      %v1741 = vadd.f32 %v1673, %v1679
      %v1742 = vadd.f32 %v1674, %v1679
      %v1743 = vadd.f32 %v1675, %v1679
      %v1744 = vmax.f32 %v1680, 0.0
      %v1745 = vmax.f32 %v1681, 0.0
      %v1746 = vmax.f32 %v1682, 0.0
      %v1747 = vmax.f32 %v1683, 0.0
      %v1748 = vmax.f32 %v1684, 0.0
      %v1749 = vmax.f32 %v1685, 0.0
      %v1750 = vmax.f32 %v1686, 0.0
      %v1751 = vmax.f32 %v1687, 0.0
      %v1752 = vmax.f32 %v1688, 0.0
      %v1753 = vmax.f32 %v1689, 0.0
      %v1754 = vmax.f32 %v1690, 0.0
      %v1755 = vmax.f32 %v1691, 0.0
      %v1756 = vmax.f32 %v1692, 0.0
      %v1757 = vmax.f32 %v1693, 0.0
      %v1758 = vmax.f32 %v1694, 0.0
      %v1759 = vmax.f32 %v1695, 0.0
      %v1760 = vmax.f32 %v1696, 0.0
      %v1761 = vmax.f32 %v1697, 0.0
      %v1762 = vmax.f32 %v1698, 0.0
      %v1763 = vmax.f32 %v1699, 0.0
      %v1764 = vmax.f32 %v1700, 0.0
      %v1765 = vmax.f32 %v1701, 0.0
      %v1766 = vmax.f32 %v1702, 0.0
      %v1767 = vmax.f32 %v1703, 0.0
      %v1768 = vmax.f32 %v1704, 0.0
      %v1769 = vmax.f32 %v1705, 0.0
      %v1770 = vmax.f32 %v1706, 0.0
      %v1771 = vmax.f32 %v1707, 0.0
      %v1772 = vmax.f32 %v1708, 0.0
      %v1773 = vmax.f32 %v1709, 0.0
      %v1774 = vmax.f32 %v1710, 0.0
      %v1775 = vmax.f32 %v1711, 0.0
      %v1776 = vmax.f32 %v1712, 0.0
      %v1777 = vmax.f32 %v1713, 0.0
      %v1778 = vmax.f32 %v1714, 0.0
      %v1779 = vmax.f32 %v1715, 0.0
      %v1780 = vmax.f32 %v1716, 0.0
      %v1781 = vmax.f32 %v1717, 0.0
      %v1782 = vmax.f32 %v1718, 0.0
      %v1783 = vmax.f32 %v1719, 0.0
      %v1784 = vmax.f32 %v1720, 0.0
      %v1785 = vmax.f32 %v1721, 0.0
      %v1786 = vmax.f32 %v1722, 0.0
      %v1787 = vmax.f32 %v1723, 0.0
      %v1788 = vmax.f32 %v1724, 0.0
      %v1789 = vmax.f32 %v1725, 0.0
      %v1790 = vmax.f32 %v1726, 0.0
      %v1791 = vmax.f32 %v1727, 0.0
      %v1792 = vmax.f32 %v1728, 0.0
      %v1793 = vmax.f32 %v1729, 0.0
      %v1794 = vmax.f32 %v1730, 0.0
      %v1795 = vmax.f32 %v1731, 0.0
      %v1796 = vmax.f32 %v1732, 0.0
      %v1797 = vmax.f32 %v1733, 0.0
      %v1798 = vmax.f32 %v1734, 0.0
      %v1799 = vmax.f32 %v1735, 0.0
      %v1800 = vmax.f32 %v1736, 0.0
      %v1801 = vmax.f32 %v1737, 0.0
      %v1802 = vmax.f32 %v1738, 0.0
      %v1803 = vmax.f32 %v1739, 0.0
      %v1804 = vmax.f32 %v1740, 0.0
      %v1805 = vmax.f32 %v1741, 0.0
      %v1806 = vmax.f32 %v1742, 0.0
      %v1807 = vmax.f32 %v1743, 0.0
      %v1808 = vld [vmem:[%s3] sm:$0xff]
      %v1809 = vld [vmem:[%s3 + $0x8] sm:$0xff]
      %v1810 = vld [vmem:[%s3 + $0x10] sm:$0xff]
      %v1811 = vld [vmem:[%s3 + $0x18] sm:$0xff]
      %v1813 = vsel %vm1030, %v1744, 0
      %v1816 = vsel %vm1030, %v1745, 0
      %v1819 = vsel %vm1030, %v1746, 0
      %v1822 = vsel %vm1030, %v1747, 0
      %v1825 = vsel %vm1030, %v1748, 0
      %v1828 = vsel %vm1030, %v1749, 0
      %v1831 = vsel %vm1030, %v1750, 0
      %v1834 = vsel %vm1030, %v1751, 0
      %v1837 = vsel %vm1030, %v1752, 0
      %v1840 = vsel %vm1030, %v1753, 0
      %v1843 = vsel %vm1030, %v1754, 0
      %v1846 = vsel %vm1030, %v1755, 0
      %v1849 = vsel %vm1030, %v1756, 0
      %v1852 = vsel %vm1030, %v1757, 0
      %v1855 = vsel %vm1030, %v1758, 0
      %v1858 = vsel %vm1030, %v1759, 0
      %v1861 = vsel %vm1030, %v1760, 0
      %v1864 = vsel %vm1030, %v1761, 0
      %v1867 = vsel %vm1030, %v1762, 0
      %v1870 = vsel %vm1030, %v1763, 0
      %v1873 = vsel %vm1030, %v1764, 0
      %v1876 = vsel %vm1030, %v1765, 0
      %v1879 = vsel %vm1030, %v1766, 0
      %v1882 = vsel %vm1030, %v1767, 0
      %v1885 = vsel %vm1030, %v1768, 0
      %v1888 = vsel %vm1030, %v1769, 0
      %v1891 = vsel %vm1030, %v1770, 0
      %v1894 = vsel %vm1030, %v1771, 0
      %v1897 = vsel %vm1030, %v1772, 0
      %v1900 = vsel %vm1030, %v1773, 0
      %v1903 = vsel %vm1030, %v1774, 0
      %v1906 = vsel %vm1030, %v1775, 0
      %v1909 = vsel %vm1030, %v1776, 0
      %v1912 = vsel %vm1030, %v1777, 0
      %v1915 = vsel %vm1030, %v1778, 0
      %v1918 = vsel %vm1030, %v1779, 0
      %v1921 = vsel %vm1030, %v1780, 0
      %v1924 = vsel %vm1030, %v1781, 0
      %v1927 = vsel %vm1030, %v1782, 0
      %v1930 = vsel %vm1030, %v1783, 0
      %v1933 = vsel %vm1030, %v1784, 0
      %v1936 = vsel %vm1030, %v1785, 0
      %v1939 = vsel %vm1030, %v1786, 0
      %v1942 = vsel %vm1030, %v1787, 0
      %v1945 = vsel %vm1030, %v1788, 0
      %v1948 = vsel %vm1030, %v1789, 0
      %v1951 = vsel %vm1030, %v1790, 0
      %v1954 = vsel %vm1030, %v1791, 0
      %v1957 = vsel %vm1030, %v1792, 0
      %v1960 = vsel %vm1030, %v1793, 0
      %v1963 = vsel %vm1030, %v1794, 0
      %v1966 = vsel %vm1030, %v1795, 0
      %v1969 = vsel %vm1030, %v1796, 0
      %v1972 = vsel %vm1030, %v1797, 0
      %v1975 = vsel %vm1030, %v1798, 0
      %v1978 = vsel %vm1030, %v1799, 0
      %v1981 = vsel %vm1030, %v1800, 0
      %v1984 = vsel %vm1030, %v1801, 0
      %v1987 = vsel %vm1030, %v1802, 0
      %v1990 = vsel %vm1030, %v1803, 0
      %v1993 = vsel %vm1030, %v1804, 0
      %v1996 = vsel %vm1030, %v1805, 0
      %v1999 = vsel %vm1030, %v1806, 0
      %v2002 = vsel %vm1030, %v1807, 0
      %2004 = vmatprep.subr.mxu0 0.0
      %2005 = vmatpush1.msra.mxu0 %v1808
      %2006 = vmatprep.subr.mxu0 0.0
      %2007 = vmatpush1.msra.mxu0 %v1809
      %2008 = vmatprep.subr.mxu0 0.0
      %2009 = vmatpush1.msra.mxu0 %v1810
      %2010 = vmatprep.subr.mxu0 0.0
      %2011 = vmatpush1.msra.mxu0 %v1811
      %2012 = vmatprep.subr.mxu0 0.0
      %2013 = vmatpush1.msra.mxu0 0.0
      %2014 = vmatprep.subr.mxu0 0.0
      %2015 = vmatpush1.msra.mxu0 0.0
      %2016 = vmatprep.subr.mxu0 0.0
      %2017 = vmatpush1.msra.mxu0 0.0
      %2018 = vmatprep.subr.mxu0 0.0
      %2019 = vmatpush1.msra.mxu0 0.0
      %2020 = vmatprep.subr.mxu0 0.0
      %2021 = vmatpush1.msra.mxu0 0.0
      %2022 = vmatprep.subr.mxu0 0.0
      %2023 = vmatpush1.msra.mxu0 0.0
      %2024 = vmatprep.subr.mxu0 0.0
      %2025 = vmatpush1.msra.mxu0 0.0
      %2026 = vmatprep.subr.mxu0 0.0
      %2027 = vmatpush1.msra.mxu0 0.0
      %2028 = vmatprep.subr.mxu0 0.0
      %2029 = vmatpush1.msra.mxu0 0.0
      %2030 = vmatprep.subr.mxu0 0.0
      %2031 = vmatpush1.msra.mxu0 0.0
      %2032 = vmatprep.subr.mxu0 0.0
      %2033 = vmatpush1.msra.mxu0 0.0
      %2034 = vmatprep.subr.mxu0 0.0
      %2035 = vmatpush1.msra.mxu0 0.0
      %2036 = vmatprep.subr.mxu0 0.0
      %2037 = vmatpush1.msra.mxu0 0.0
      %2038 = vmatprep.subr.mxu0 0.0
      %2039 = vmatpush1.msra.mxu0 0.0
      %2040 = vmatprep.subr.mxu0 0.0
      %2041 = vmatpush1.msra.mxu0 0.0
      %2042 = vmatprep.subr.mxu0 0.0
      %2043 = vmatpush1.msra.mxu0 0.0
      %2044 = vmatprep.subr.mxu0 0.0
      %2045 = vmatpush1.msra.mxu0 0.0
      %2046 = vmatprep.subr.mxu0 0.0
      %2047 = vmatpush1.msra.mxu0 0.0
      %2048 = vmatprep.subr.mxu0 0.0
      %2049 = vmatpush1.msra.mxu0 0.0
      %2050 = vmatprep.subr.mxu0 0.0
      %2051 = vmatpush1.msra.mxu0 0.0
      %2052 = vmatprep.subr.mxu0 0.0
      %2053 = vmatpush1.msra.mxu0 0.0
      %2054 = vmatprep.subr.mxu0 0.0
      %2055 = vmatpush1.msra.mxu0 0.0
      %2056 = vmatprep.subr.mxu0 0.0
      %2057 = vmatpush1.msra.mxu0 0.0
      %2058 = vmatprep.subr.mxu0 0.0
      %2059 = vmatpush1.msra.mxu0 0.0
      %2060 = vmatprep.subr.mxu0 0.0
      %2061 = vmatpush1.msra.mxu0 0.0
      %2062 = vmatprep.subr.mxu0 0.0
      %2063 = vmatpush1.msra.mxu0 0.0
      %2064 = vmatprep.subr.mxu0 0.0
      %2065 = vmatpush1.msra.mxu0 0.0
      %2066 = vmatprep.subr.mxu0 0.0
      %2067 = vmatpush1.msra.mxu0 0.0
      %2068 = vmatprep.mubr.f32.mxu0 0.0
      %2069 = vmatmul.mubr.f32.gmra.mrb[0].mxu0 %v1813
      %v2070 = vpop.f32.mrb[0].mxu0
      %v2071 = vadd.f32 %v962, %v2070
      %v2072 = vpop.f32.mrb[0].mxu0
      %2073 = vmatprep.mubr.f32.mxu0 0.0
      %2074 = vmatmul.mubr.f32.gmra.mrb[0].mxu0 %v1816
      %v2075 = vpop.f32.mrb[0].mxu0
      %v2076 = vadd.f32 %v963, %v2075
      %v2077 = vpop.f32.mrb[0].mxu0
      %2078 = vmatprep.mubr.f32.mxu0 0.0
      %2079 = vmatmul.mubr.f32.gmra.mrb[0].mxu0 %v1819
      %v2080 = vpop.f32.mrb[0].mxu0
      %v2081 = vadd.f32 %v964, %v2080
      %v2082 = vpop.f32.mrb[0].mxu0
      %2083 = vmatprep.mubr.f32.mxu0 0.0
      %2084 = vmatmul.mubr.f32.gmra.mrb[0].mxu0 %v1822
      %v2085 = vpop.f32.mrb[0].mxu0
      %v2086 = vadd.f32 %v965, %v2085
      %v2087 = vpop.f32.mrb[0].mxu0
      %2088 = vmatprep.mubr.f32.mxu0 0.0
      %2089 = vmatmul.mubr.f32.gmra.mrb[0].mxu0 %v1825
      %v2090 = vpop.f32.mrb[0].mxu0
      %v2091 = vadd.f32 %v966, %v2090
      %v2092 = vpop.f32.mrb[0].mxu0
      %2093 = vmatprep.mubr.f32.mxu0 0.0
      %2094 = vmatmul.mubr.f32.gmra.mrb[0].mxu0 %v1828
      %v2095 = vpop.f32.mrb[0].mxu0
      %v2096 = vadd.f32 %v967, %v2095
      %v2097 = vpop.f32.mrb[0].mxu0
      %2098 = vmatprep.mubr.f32.mxu0 0.0
      %2099 = vmatmul.mubr.f32.gmra.mrb[0].mxu0 %v1831
      %v2100 = vpop.f32.mrb[0].mxu0
      %v2101 = vadd.f32 %v968, %v2100
      %v2102 = vpop.f32.mrb[0].mxu0
      %2103 = vmatprep.mubr.f32.mxu0 0.0
      %2104 = vmatmul.mubr.f32.gmra.mrb[0].mxu0 %v1834
      %v2105 = vpop.f32.mrb[0].mxu0
      %v2106 = vadd.f32 %v969, %v2105
      %v2107 = vpop.f32.mrb[0].mxu0
      %2108 = vmatprep.mubr.f32.mxu0 0.0
      %2109 = vmatmul.mubr.f32.gmra.mrb[0].mxu0 %v1837
      %v2110 = vpop.f32.mrb[0].mxu0
      %v2111 = vadd.f32 %v970, %v2110
      %v2112 = vpop.f32.mrb[0].mxu0
      %2113 = vmatprep.mubr.f32.mxu0 0.0
      %2114 = vmatmul.mubr.f32.gmra.mrb[0].mxu0 %v1840
      %v2115 = vpop.f32.mrb[0].mxu0
      %v2116 = vadd.f32 %v971, %v2115
      %v2117 = vpop.f32.mrb[0].mxu0
      %2118 = vmatprep.mubr.f32.mxu0 0.0
      %2119 = vmatmul.mubr.f32.gmra.mrb[0].mxu0 %v1843
      %v2120 = vpop.f32.mrb[0].mxu0
      %v2121 = vadd.f32 %v972, %v2120
      %v2122 = vpop.f32.mrb[0].mxu0
      %2123 = vmatprep.mubr.f32.mxu0 0.0
      %2124 = vmatmul.mubr.f32.gmra.mrb[0].mxu0 %v1846
      %v2125 = vpop.f32.mrb[0].mxu0
      %v2126 = vadd.f32 %v973, %v2125
      %v2127 = vpop.f32.mrb[0].mxu0
      %2128 = vmatprep.mubr.f32.mxu0 0.0
      %2129 = vmatmul.mubr.f32.gmra.mrb[0].mxu0 %v1849
      %v2130 = vpop.f32.mrb[0].mxu0
      %v2131 = vadd.f32 %v974, %v2130
      %v2132 = vpop.f32.mrb[0].mxu0
      %2133 = vmatprep.mubr.f32.mxu0 0.0
      %2134 = vmatmul.mubr.f32.gmra.mrb[0].mxu0 %v1852
      %v2135 = vpop.f32.mrb[0].mxu0
      %v2136 = vadd.f32 %v975, %v2135
      %v2137 = vpop.f32.mrb[0].mxu0
      %2138 = vmatprep.mubr.f32.mxu0 0.0
      %2139 = vmatmul.mubr.f32.gmra.mrb[0].mxu0 %v1855
      %v2140 = vpop.f32.mrb[0].mxu0
      %v2141 = vpop.f32.mrb[0].mxu0
      %2142 = vmatprep.mubr.f32.mxu0 0.0
      %2143 = vmatmul.mubr.f32.gmra.mrb[0].mxu0 %v1858
      %v2144 = vpop.f32.mrb[0].mxu0
      %v2145 = vpop.f32.mrb[0].mxu0
      %2146 = vmatprep.mubr.f32.mxu0 0.0
      %2147 = vmatmul.mubr.f32.gmra.mrb[0].mxu0 %v1861
      %v2148 = vpop.f32.mrb[0].mxu0
      %v2149 = vadd.f32 %v978, %v2148
      %v2150 = vpop.f32.mrb[0].mxu0
      %2151 = vmatprep.mubr.f32.mxu0 0.0
      %2152 = vmatmul.mubr.f32.gmra.mrb[0].mxu0 %v1864
      %v2153 = vpop.f32.mrb[0].mxu0
      %v2154 = vadd.f32 %v979, %v2153
      %v2155 = vpop.f32.mrb[0].mxu0
      %2156 = vmatprep.mubr.f32.mxu0 0.0
      %2157 = vmatmul.mubr.f32.gmra.mrb[0].mxu0 %v1867
      %v2158 = vpop.f32.mrb[0].mxu0
      %v2159 = vadd.f32 %v980, %v2158
      %v2160 = vpop.f32.mrb[0].mxu0
      %2161 = vmatprep.mubr.f32.mxu0 0.0
      %2162 = vmatmul.mubr.f32.gmra.mrb[0].mxu0 %v1870
      %v2163 = vpop.f32.mrb[0].mxu0
      %v2164 = vadd.f32 %v981, %v2163
      %v2165 = vpop.f32.mrb[0].mxu0
      %2166 = vmatprep.mubr.f32.mxu0 0.0
      %2167 = vmatmul.mubr.f32.gmra.mrb[0].mxu0 %v1873
      %v2168 = vpop.f32.mrb[0].mxu0
      %v2169 = vadd.f32 %v982, %v2168
      %v2170 = vpop.f32.mrb[0].mxu0
      %2171 = vmatprep.mubr.f32.mxu0 0.0
      %2172 = vmatmul.mubr.f32.gmra.mrb[0].mxu0 %v1876
      %v2173 = vpop.f32.mrb[0].mxu0
      %v2174 = vadd.f32 %v983, %v2173
      %v2175 = vpop.f32.mrb[0].mxu0
      %2176 = vmatprep.mubr.f32.mxu0 0.0
      %2177 = vmatmul.mubr.f32.gmra.mrb[0].mxu0 %v1879
      %v2178 = vpop.f32.mrb[0].mxu0
      %v2179 = vadd.f32 %v984, %v2178
      %v2180 = vpop.f32.mrb[0].mxu0
      %2181 = vmatprep.mubr.f32.mxu0 0.0
      %2182 = vmatmul.mubr.f32.gmra.mrb[0].mxu0 %v1882
      %v2183 = vpop.f32.mrb[0].mxu0
      %v2184 = vadd.f32 %v985, %v2183
      %v2185 = vpop.f32.mrb[0].mxu0
      %2186 = vmatprep.mubr.f32.mxu0 0.0
      %2187 = vmatmul.mubr.f32.gmra.mrb[0].mxu0 %v1885
      %v2188 = vpop.f32.mrb[0].mxu0
      %v2189 = vadd.f32 %v986, %v2188
      %v2190 = vpop.f32.mrb[0].mxu0
      %2191 = vmatprep.mubr.f32.mxu0 0.0
      %2192 = vmatmul.mubr.f32.gmra.mrb[0].mxu0 %v1888
      %v2193 = vpop.f32.mrb[0].mxu0
      %v2194 = vadd.f32 %v987, %v2193
      %v2195 = vpop.f32.mrb[0].mxu0
      %2196 = vmatprep.mubr.f32.mxu0 0.0
      %2197 = vmatmul.mubr.f32.gmra.mrb[0].mxu0 %v1891
      %v2198 = vpop.f32.mrb[0].mxu0
      %v2199 = vadd.f32 %v988, %v2198
      %v2200 = vpop.f32.mrb[0].mxu0
      %2201 = vmatprep.mubr.f32.mxu0 0.0
      %2202 = vmatmul.mubr.f32.gmra.mrb[0].mxu0 %v1894
      %v2203 = vpop.f32.mrb[0].mxu0
      %v2204 = vadd.f32 %v989, %v2203
      %v2205 = vpop.f32.mrb[0].mxu0
      %2206 = vmatprep.mubr.f32.mxu0 0.0
      %2207 = vmatmul.mubr.f32.gmra.mrb[0].mxu0 %v1897
      %v2208 = vpop.f32.mrb[0].mxu0
      %v2209 = vadd.f32 %v990, %v2208
      %v2210 = vpop.f32.mrb[0].mxu0
      %2211 = vmatprep.mubr.f32.mxu0 0.0
      %2212 = vmatmul.mubr.f32.gmra.mrb[0].mxu0 %v1900
      %v2213 = vpop.f32.mrb[0].mxu0
      %v2214 = vadd.f32 %v991, %v2213
      %v2215 = vpop.f32.mrb[0].mxu0
      %2216 = vmatprep.mubr.f32.mxu0 0.0
      %2217 = vmatmul.mubr.f32.gmra.mrb[0].mxu0 %v1903
      %v2218 = vpop.f32.mrb[0].mxu0
      %v2219 = vpop.f32.mrb[0].mxu0
      %2220 = vmatprep.mubr.f32.mxu0 0.0
      %2221 = vmatmul.mubr.f32.gmra.mrb[0].mxu0 %v1906
      %v2222 = vpop.f32.mrb[0].mxu0
      %v2223 = vpop.f32.mrb[0].mxu0
      %2224 = vmatprep.mubr.f32.mxu0 0.0
      %2225 = vmatmul.mubr.f32.gmra.mrb[0].mxu0 %v1909
      %v2226 = vpop.f32.mrb[0].mxu0
      %v2227 = vadd.f32 %v994, %v2226
      %v2228 = vpop.f32.mrb[0].mxu0
      %2229 = vmatprep.mubr.f32.mxu0 0.0
      %2230 = vmatmul.mubr.f32.gmra.mrb[0].mxu0 %v1912
      %v2231 = vpop.f32.mrb[0].mxu0
      %v2232 = vadd.f32 %v995, %v2231
      %v2233 = vpop.f32.mrb[0].mxu0
      %2234 = vmatprep.mubr.f32.mxu0 0.0
      %2235 = vmatmul.mubr.f32.gmra.mrb[0].mxu0 %v1915
      %v2236 = vpop.f32.mrb[0].mxu0
      %v2237 = vadd.f32 %v996, %v2236
      %v2238 = vpop.f32.mrb[0].mxu0
      %2239 = vmatprep.mubr.f32.mxu0 0.0
      %2240 = vmatmul.mubr.f32.gmra.mrb[0].mxu0 %v1918
      %v2241 = vpop.f32.mrb[0].mxu0
      %v2242 = vadd.f32 %v997, %v2241
      %v2243 = vpop.f32.mrb[0].mxu0
      %2244 = vmatprep.mubr.f32.mxu0 0.0
      %2245 = vmatmul.mubr.f32.gmra.mrb[0].mxu0 %v1921
      %v2246 = vpop.f32.mrb[0].mxu0
      %v2247 = vadd.f32 %v998, %v2246
      %v2248 = vpop.f32.mrb[0].mxu0
      %2249 = vmatprep.mubr.f32.mxu0 0.0
      %2250 = vmatmul.mubr.f32.gmra.mrb[0].mxu0 %v1924
      %v2251 = vpop.f32.mrb[0].mxu0
      %v2252 = vadd.f32 %v999, %v2251
      %v2253 = vpop.f32.mrb[0].mxu0
      %2254 = vmatprep.mubr.f32.mxu0 0.0
      %2255 = vmatmul.mubr.f32.gmra.mrb[0].mxu0 %v1927
      %v2256 = vpop.f32.mrb[0].mxu0
      %v2257 = vadd.f32 %v1000, %v2256
      %v2258 = vpop.f32.mrb[0].mxu0
      %2259 = vmatprep.mubr.f32.mxu0 0.0
      %2260 = vmatmul.mubr.f32.gmra.mrb[0].mxu0 %v1930
      %v2261 = vpop.f32.mrb[0].mxu0
      %v2262 = vadd.f32 %v1001, %v2261
      %v2263 = vpop.f32.mrb[0].mxu0
      %2264 = vmatprep.mubr.f32.mxu0 0.0
      %2265 = vmatmul.mubr.f32.gmra.mrb[0].mxu0 %v1933
      %v2266 = vpop.f32.mrb[0].mxu0
      %v2267 = vadd.f32 %v1002, %v2266
      %v2268 = vpop.f32.mrb[0].mxu0
      %2269 = vmatprep.mubr.f32.mxu0 0.0
      %2270 = vmatmul.mubr.f32.gmra.mrb[0].mxu0 %v1936
      %v2271 = vpop.f32.mrb[0].mxu0
      %v2272 = vadd.f32 %v1003, %v2271
      %v2273 = vpop.f32.mrb[0].mxu0
      %2274 = vmatprep.mubr.f32.mxu0 0.0
      %2275 = vmatmul.mubr.f32.gmra.mrb[0].mxu0 %v1939
      %v2276 = vpop.f32.mrb[0].mxu0
      %v2277 = vadd.f32 %v1004, %v2276
      %v2278 = vpop.f32.mrb[0].mxu0
      %2279 = vmatprep.mubr.f32.mxu0 0.0
      %2280 = vmatmul.mubr.f32.gmra.mrb[0].mxu0 %v1942
      %v2281 = vpop.f32.mrb[0].mxu0
      %v2282 = vadd.f32 %v1005, %v2281
      %v2283 = vpop.f32.mrb[0].mxu0
      %2284 = vmatprep.mubr.f32.mxu0 0.0
      %2285 = vmatmul.mubr.f32.gmra.mrb[0].mxu0 %v1945
      %v2286 = vpop.f32.mrb[0].mxu0
      %v2287 = vadd.f32 %v1006, %v2286
      %v2288 = vpop.f32.mrb[0].mxu0
      %2289 = vmatprep.mubr.f32.mxu0 0.0
      %2290 = vmatmul.mubr.f32.gmra.mrb[0].mxu0 %v1948
      %v2291 = vpop.f32.mrb[0].mxu0
      %v2292 = vadd.f32 %v1007, %v2291
      %v2293 = vpop.f32.mrb[0].mxu0
      %2294 = vmatprep.mubr.f32.mxu0 0.0
      %2295 = vmatmul.mubr.f32.gmra.mrb[0].mxu0 %v1951
      %v2296 = vpop.f32.mrb[0].mxu0
      %v2297 = vpop.f32.mrb[0].mxu0
      %2298 = vmatprep.mubr.f32.mxu0 0.0
      %2299 = vmatmul.mubr.f32.gmra.mrb[0].mxu0 %v1954
      %v2300 = vpop.f32.mrb[0].mxu0
      %v2301 = vpop.f32.mrb[0].mxu0
      %2302 = vmatprep.mubr.f32.mxu0 0.0
      %2303 = vmatmul.mubr.f32.gmra.mrb[0].mxu0 %v1957
      %v2304 = vpop.f32.mrb[0].mxu0
      %v2305 = vadd.f32 %v1010, %v2304
      %v2306 = vpop.f32.mrb[0].mxu0
      %2307 = vmatprep.mubr.f32.mxu0 0.0
      %2308 = vmatmul.mubr.f32.gmra.mrb[0].mxu0 %v1960
      %v2309 = vpop.f32.mrb[0].mxu0
      %v2310 = vadd.f32 %v1011, %v2309
      %v2311 = vpop.f32.mrb[0].mxu0
      %2312 = vmatprep.mubr.f32.mxu0 0.0
      %2313 = vmatmul.mubr.f32.gmra.mrb[0].mxu0 %v1963
      %v2314 = vpop.f32.mrb[0].mxu0
      %v2315 = vadd.f32 %v1012, %v2314
      %v2316 = vpop.f32.mrb[0].mxu0
      %2317 = vmatprep.mubr.f32.mxu0 0.0
      %2318 = vmatmul.mubr.f32.gmra.mrb[0].mxu0 %v1966
      %v2319 = vpop.f32.mrb[0].mxu0
      %v2320 = vadd.f32 %v1013, %v2319
      %v2321 = vpop.f32.mrb[0].mxu0
      %2322 = vmatprep.mubr.f32.mxu0 0.0
      %2323 = vmatmul.mubr.f32.gmra.mrb[0].mxu0 %v1969
      %v2324 = vpop.f32.mrb[0].mxu0
      %v2325 = vadd.f32 %v1014, %v2324
      %v2326 = vpop.f32.mrb[0].mxu0
      %2327 = vmatprep.mubr.f32.mxu0 0.0
      %2328 = vmatmul.mubr.f32.gmra.mrb[0].mxu0 %v1972
      %v2329 = vpop.f32.mrb[0].mxu0
      %v2330 = vadd.f32 %v1015, %v2329
      %v2331 = vpop.f32.mrb[0].mxu0
      %2332 = vmatprep.mubr.f32.mxu0 0.0
      %2333 = vmatmul.mubr.f32.gmra.mrb[0].mxu0 %v1975
      %v2334 = vpop.f32.mrb[0].mxu0
      %v2335 = vadd.f32 %v1016, %v2334
      %v2336 = vpop.f32.mrb[0].mxu0
      %2337 = vmatprep.mubr.f32.mxu0 0.0
      %2338 = vmatmul.mubr.f32.gmra.mrb[0].mxu0 %v1978
      %v2339 = vpop.f32.mrb[0].mxu0
      %v2340 = vadd.f32 %v1017, %v2339
      %v2341 = vpop.f32.mrb[0].mxu0
      %2342 = vmatprep.mubr.f32.mxu0 0.0
      %2343 = vmatmul.mubr.f32.gmra.mrb[0].mxu0 %v1981
      %v2344 = vpop.f32.mrb[0].mxu0
      %v2345 = vadd.f32 %v1018, %v2344
      %v2346 = vpop.f32.mrb[0].mxu0
      %2347 = vmatprep.mubr.f32.mxu0 0.0
      %2348 = vmatmul.mubr.f32.gmra.mrb[0].mxu0 %v1984
      %v2349 = vpop.f32.mrb[0].mxu0
      %v2350 = vadd.f32 %v1019, %v2349
      %v2351 = vpop.f32.mrb[0].mxu0
      %2352 = vmatprep.mubr.f32.mxu0 0.0
      %2353 = vmatmul.mubr.f32.gmra.mrb[0].mxu0 %v1987
      %v2354 = vpop.f32.mrb[0].mxu0
      %v2355 = vadd.f32 %v1020, %v2354
      %v2356 = vpop.f32.mrb[0].mxu0
      %2357 = vmatprep.mubr.f32.mxu0 0.0
      %2358 = vmatmul.mubr.f32.gmra.mrb[0].mxu0 %v1990
      %v2359 = vpop.f32.mrb[0].mxu0
      %v2360 = vadd.f32 %v1021, %v2359
      %v2361 = vpop.f32.mrb[0].mxu0
      %2362 = vmatprep.mubr.f32.mxu0 0.0
      %2363 = vmatmul.mubr.f32.gmra.mrb[0].mxu0 %v1993
      %v2364 = vpop.f32.mrb[0].mxu0
      %v2365 = vadd.f32 %v1022, %v2364
      %v2366 = vpop.f32.mrb[0].mxu0
      %2367 = vmatprep.mubr.f32.mxu0 0.0
      %2368 = vmatmul.mubr.f32.gmra.mrb[0].mxu0 %v1996
      %v2369 = vpop.f32.mrb[0].mxu0
      %v2370 = vadd.f32 %v1023, %v2369
      %v2371 = vpop.f32.mrb[0].mxu0
      %2372 = vmatprep.mubr.f32.mxu0 0.0
      %2373 = vmatmul.mubr.f32.gmra.mrb[0].mxu0 %v1999
      %v2374 = vpop.f32.mrb[0].mxu0
      %v2375 = vpop.f32.mrb[0].mxu0
      %2376 = vmatprep.mubr.f32.mxu0 0.0
      %2377 = vmatmul.mubr.f32.gmra.mrb[0].mxu0 %v2002
      %v2378 = vpop.f32.mrb[0].mxu0
      %v2379 = vpop.f32.mrb[0].mxu0
      %2380 = vdwg.mxu0
      %v2381 = vlaneseq
      %v2382 = vshrl.u32 %v2381, 7
      %v2383 = vsub.s32 4, %v2382
      %v2384 = vrot.slane %v279, %v2383
      %v2385 = vmul.f32 %v2071, %v2384
      %v2386 = vmul.f32 %v2076, %v2384
      %v2387 = vmul.f32 %v2081, %v2384
      %v2388 = vmul.f32 %v2086, %v2384
      %v2389 = vmul.f32 %v2091, %v2384
      %v2390 = vmul.f32 %v2096, %v2384
      %v2391 = vmul.f32 %v2101, %v2384
      %v2392 = vmul.f32 %v2106, %v2384
      %v2393 = vmul.f32 %v2111, %v2384
      %v2394 = vmul.f32 %v2116, %v2384
      %v2395 = vmul.f32 %v2121, %v2384
      %v2396 = vmul.f32 %v2126, %v2384
      %v2397 = vmul.f32 %v2131, %v2384
      %v2398 = vmul.f32 %v2136, %v2384
      %v2399 = vmul.f32 %v2149, %v2384
      %v2400 = vmul.f32 %v2154, %v2384
      %v2401 = vmul.f32 %v2159, %v2384
      %v2402 = vmul.f32 %v2164, %v2384
      %v2403 = vmul.f32 %v2169, %v2384
      %v2404 = vmul.f32 %v2174, %v2384
      %v2405 = vmul.f32 %v2179, %v2384
      %v2406 = vmul.f32 %v2184, %v2384
      %v2407 = vmul.f32 %v2189, %v2384
      %v2408 = vmul.f32 %v2194, %v2384
      %v2409 = vmul.f32 %v2199, %v2384
      %v2410 = vmul.f32 %v2204, %v2384
      %v2411 = vmul.f32 %v2209, %v2384
      %v2412 = vmul.f32 %v2214, %v2384
      %v2413 = vmul.f32 %v2227, %v2384
      %v2414 = vmul.f32 %v2232, %v2384
      %v2415 = vmul.f32 %v2237, %v2384
      %v2416 = vmul.f32 %v2242, %v2384
      %v2417 = vmul.f32 %v2247, %v2384
      %v2418 = vmul.f32 %v2252, %v2384
      %v2419 = vmul.f32 %v2257, %v2384
      %v2420 = vmul.f32 %v2262, %v2384
      %v2421 = vmul.f32 %v2267, %v2384
      %v2422 = vmul.f32 %v2272, %v2384
      %v2423 = vmul.f32 %v2277, %v2384
      %v2424 = vmul.f32 %v2282, %v2384
      %v2425 = vmul.f32 %v2287, %v2384
      %v2426 = vmul.f32 %v2292, %v2384
      %v2427 = vmul.f32 %v2305, %v2384
      %v2428 = vmul.f32 %v2310, %v2384
      %v2429 = vmul.f32 %v2315, %v2384
      %v2430 = vmul.f32 %v2320, %v2384
      %v2431 = vmul.f32 %v2325, %v2384
      %v2432 = vmul.f32 %v2330, %v2384
      %v2433 = vmul.f32 %v2335, %v2384
      %v2434 = vmul.f32 %v2340, %v2384
      %v2435 = vmul.f32 %v2345, %v2384
      %v2436 = vmul.f32 %v2350, %v2384
      %v2437 = vmul.f32 %v2355, %v2384
      %v2438 = vmul.f32 %v2360, %v2384
      %v2439 = vmul.f32 %v2365, %v2384
      %v2440 = vmul.f32 %v2370, %v2384
      %v2441 = vlaneseq
      %v2442 = vshrl.u32 %v2441, 7
      %v2443 = vsub.s32 5, %v2442
      %v2444 = vrot.slane %v279, %v2443
      %v2445 = vadd.f32 %v2385, %v2444
      %v2446 = vadd.f32 %v2386, %v2444
      %v2447 = vadd.f32 %v2387, %v2444
      %v2448 = vadd.f32 %v2388, %v2444
      %v2449 = vadd.f32 %v2389, %v2444
      %v2450 = vadd.f32 %v2390, %v2444
      %v2451 = vadd.f32 %v2391, %v2444
      %v2452 = vadd.f32 %v2392, %v2444
      %v2453 = vadd.f32 %v2393, %v2444
      %v2454 = vadd.f32 %v2394, %v2444
      %v2455 = vadd.f32 %v2395, %v2444
      %v2456 = vadd.f32 %v2396, %v2444
      %v2457 = vadd.f32 %v2397, %v2444
      %v2458 = vadd.f32 %v2398, %v2444
      %v2459 = vadd.f32 %v2399, %v2444
      %v2460 = vadd.f32 %v2400, %v2444
      %v2461 = vadd.f32 %v2401, %v2444
      %v2462 = vadd.f32 %v2402, %v2444
      %v2463 = vadd.f32 %v2403, %v2444
      %v2464 = vadd.f32 %v2404, %v2444
      %v2465 = vadd.f32 %v2405, %v2444
      %v2466 = vadd.f32 %v2406, %v2444
      %v2467 = vadd.f32 %v2407, %v2444
      %v2468 = vadd.f32 %v2408, %v2444
      %v2469 = vadd.f32 %v2409, %v2444
      %v2470 = vadd.f32 %v2410, %v2444
      %v2471 = vadd.f32 %v2411, %v2444
      %v2472 = vadd.f32 %v2412, %v2444
      %v2473 = vadd.f32 %v2413, %v2444
      %v2474 = vadd.f32 %v2414, %v2444
      %v2475 = vadd.f32 %v2415, %v2444
      %v2476 = vadd.f32 %v2416, %v2444
      %v2477 = vadd.f32 %v2417, %v2444
      %v2478 = vadd.f32 %v2418, %v2444
      %v2479 = vadd.f32 %v2419, %v2444
      %v2480 = vadd.f32 %v2420, %v2444
      %v2481 = vadd.f32 %v2421, %v2444
      %v2482 = vadd.f32 %v2422, %v2444
      %v2483 = vadd.f32 %v2423, %v2444
      %v2484 = vadd.f32 %v2424, %v2444
      %v2485 = vadd.f32 %v2425, %v2444
      %v2486 = vadd.f32 %v2426, %v2444
      %v2487 = vadd.f32 %v2427, %v2444
      %v2488 = vadd.f32 %v2428, %v2444
      %v2489 = vadd.f32 %v2429, %v2444
      %v2490 = vadd.f32 %v2430, %v2444
      %v2491 = vadd.f32 %v2431, %v2444
      %v2492 = vadd.f32 %v2432, %v2444
      %v2493 = vadd.f32 %v2433, %v2444
      %v2494 = vadd.f32 %v2434, %v2444
      %v2495 = vadd.f32 %v2435, %v2444
      %v2496 = vadd.f32 %v2436, %v2444
      %v2497 = vadd.f32 %v2437, %v2444
      %v2498 = vadd.f32 %v2438, %v2444
      %v2499 = vadd.f32 %v2439, %v2444
      %v2500 = vadd.f32 %v2440, %v2444
      %v2501 = vmax.f32 %v2445, 0.0
      %v2502 = vmax.f32 %v2446, 0.0
      %v2503 = vmax.f32 %v2447, 0.0
      %v2504 = vmax.f32 %v2448, 0.0
      %v2505 = vmax.f32 %v2449, 0.0
      %v2506 = vmax.f32 %v2450, 0.0
      %v2507 = vmax.f32 %v2451, 0.0
      %v2508 = vmax.f32 %v2452, 0.0
      %v2509 = vmax.f32 %v2453, 0.0
      %v2510 = vmax.f32 %v2454, 0.0
      %v2511 = vmax.f32 %v2455, 0.0
      %v2512 = vmax.f32 %v2456, 0.0
      %v2513 = vmax.f32 %v2457, 0.0
      %v2514 = vmax.f32 %v2458, 0.0
      %v2515 = vmax.f32 %v2459, 0.0
      %v2516 = vmax.f32 %v2460, 0.0
      %v2517 = vmax.f32 %v2461, 0.0
      %v2518 = vmax.f32 %v2462, 0.0
      %v2519 = vmax.f32 %v2463, 0.0
      %v2520 = vmax.f32 %v2464, 0.0
      %v2521 = vmax.f32 %v2465, 0.0
      %v2522 = vmax.f32 %v2466, 0.0
      %v2523 = vmax.f32 %v2467, 0.0
      %v2524 = vmax.f32 %v2468, 0.0
      %v2525 = vmax.f32 %v2469, 0.0
      %v2526 = vmax.f32 %v2470, 0.0
      %v2527 = vmax.f32 %v2471, 0.0
      %v2528 = vmax.f32 %v2472, 0.0
      %v2529 = vmax.f32 %v2473, 0.0
      %v2530 = vmax.f32 %v2474, 0.0
      %v2531 = vmax.f32 %v2475, 0.0
      %v2532 = vmax.f32 %v2476, 0.0
      %v2533 = vmax.f32 %v2477, 0.0
      %v2534 = vmax.f32 %v2478, 0.0
      %v2535 = vmax.f32 %v2479, 0.0
      %v2536 = vmax.f32 %v2480, 0.0
      %v2537 = vmax.f32 %v2481, 0.0
      %v2538 = vmax.f32 %v2482, 0.0
      %v2539 = vmax.f32 %v2483, 0.0
      %v2540 = vmax.f32 %v2484, 0.0
      %v2541 = vmax.f32 %v2485, 0.0
      %v2542 = vmax.f32 %v2486, 0.0
      %v2543 = vmax.f32 %v2487, 0.0
      %v2544 = vmax.f32 %v2488, 0.0
      %v2545 = vmax.f32 %v2489, 0.0
      %v2546 = vmax.f32 %v2490, 0.0
      %v2547 = vmax.f32 %v2491, 0.0
      %v2548 = vmax.f32 %v2492, 0.0
      %v2549 = vmax.f32 %v2493, 0.0
      %v2550 = vmax.f32 %v2494, 0.0
      %v2551 = vmax.f32 %v2495, 0.0
      %v2552 = vmax.f32 %v2496, 0.0
      %v2553 = vmax.f32 %v2497, 0.0
      %v2554 = vmax.f32 %v2498, 0.0
      %v2555 = vmax.f32 %v2499, 0.0
      %v2556 = vmax.f32 %v2500, 0.0
      %v2557 = vld [vmem:[%s4] sm:$0xff]
      %v2558 = vld [vmem:[%s4 + $0x8] sm:$0xff]
      %v2559 = vld [vmem:[%s4 + $0x10] sm:$0xff]
      %v2560 = vld [vmem:[%s4 + $0x18] sm:$0xff]
      %v2561 = vld [vmem:[%s4 + $0x20] sm:$0xff]
      %v2562 = vld [vmem:[%s4 + $0x28] sm:$0xff]
      %v2563 = vld [vmem:[%s4 + $0x30] sm:$0xff]
      %v2564 = vld [vmem:[%s4 + $0x38] sm:$0xff]
      %v2565 = vld [vmem:[%s4 + $0x40] sm:$0xff]
      %v2566 = vld [vmem:[%s4 + $0x48] sm:$0xff]
      %v2567 = vld [vmem:[%s4 + $0x50] sm:$0xff]
      %v2568 = vld [vmem:[%s4 + $0x58] sm:$0xff]
      %v2569 = vld [vmem:[%s4 + $0x60] sm:$0xff]
      %v2570 = vld [vmem:[%s4 + $0x68] sm:$0xff]
      %v2571 = vld [vmem:[%s4 + $0x70] sm:$0xff]
      %v2572 = vld [vmem:[%s4 + $0x78] sm:$0xff]
      %v2573 = vld [vmem:[%s4 + $0x80] sm:$0xff]
      %v2574 = vld [vmem:[%s4 + $0x88] sm:$0xff]
      %v2575 = vld [vmem:[%s4 + $0x90] sm:$0xff]
      %v2576 = vld [vmem:[%s4 + $0x98] sm:$0xff]
      %v2577 = vld [vmem:[%s4 + $0xa0] sm:$0xff]
      %v2578 = vld [vmem:[%s4 + $0xa8] sm:$0xff]
      %v2579 = vld [vmem:[%s4 + $0xb0] sm:$0xff]
      %v2580 = vld [vmem:[%s4 + $0xb8] sm:$0xff]
      %v2581 = vld [vmem:[%s4 + $0xc0] sm:$0xff]
      %v2582 = vld [vmem:[%s4 + $0xc8] sm:$0xff]
      %v2583 = vld [vmem:[%s4 + $0xd0] sm:$0xff]
      %v2584 = vld [vmem:[%s4 + $0xd8] sm:$0xff]
      %v2585 = vld [vmem:[%s4 + $0xe0] sm:$0xff]
      %v2586 = vld [vmem:[%s4 + $0xe8] sm:$0xff]
      %v2587 = vld [vmem:[%s4 + $0xf0] sm:$0xff]
      %v2588 = vld [vmem:[%s4 + $0xf8] sm:$0xff]
      %v2589 = vld [vmem:[%s4 + $0x100] sm:$0xff]
      %v2590 = vld [vmem:[%s4 + $0x108] sm:$0xff]
      %v2591 = vld [vmem:[%s4 + $0x110] sm:$0xff]
      %v2592 = vld [vmem:[%s4 + $0x118] sm:$0xff]
      %v2593 = vld [vmem:[%s4 + $0x120] sm:$0xff]
      %v2594 = vld [vmem:[%s4 + $0x128] sm:$0xff]
      %v2595 = vld [vmem:[%s4 + $0x130] sm:$0xff]
      %v2596 = vld [vmem:[%s4 + $0x138] sm:$0xff]
      %v2597 = vld [vmem:[%s4 + $0x140] sm:$0xff]
      %v2598 = vld [vmem:[%s4 + $0x148] sm:$0xff]
      %v2599 = vld [vmem:[%s4 + $0x150] sm:$0xff]
      %v2600 = vld [vmem:[%s4 + $0x158] sm:$0xff]
      %v2601 = vld [vmem:[%s4 + $0x160] sm:$0xff]
      %v2602 = vld [vmem:[%s4 + $0x168] sm:$0xff]
      %v2603 = vld [vmem:[%s4 + $0x170] sm:$0xff]
      %v2604 = vld [vmem:[%s4 + $0x178] sm:$0xff]
      %v2605 = vld [vmem:[%s4 + $0x180] sm:$0xff]
      %v2606 = vld [vmem:[%s4 + $0x188] sm:$0xff]
      %v2607 = vld [vmem:[%s4 + $0x190] sm:$0xff]
      %v2608 = vld [vmem:[%s4 + $0x198] sm:$0xff]
      %v2609 = vld [vmem:[%s4 + $0x1a0] sm:$0xff]
      %v2610 = vld [vmem:[%s4 + $0x1a8] sm:$0xff]
      %v2611 = vld [vmem:[%s4 + $0x1b0] sm:$0xff]
      %v2612 = vld [vmem:[%s4 + $0x1b8] sm:$0xff]
      %v2613 = vld [vmem:[%s4 + $0x1c0] sm:$0xff]
      %v2614 = vld [vmem:[%s4 + $0x1c8] sm:$0xff]
      %v2615 = vld [vmem:[%s4 + $0x1d0] sm:$0xff]
      %v2616 = vld [vmem:[%s4 + $0x1d8] sm:$0xff]
      %v2617 = vld [vmem:[%s4 + $0x1e0] sm:$0xff]
      %v2618 = vld [vmem:[%s4 + $0x1e8] sm:$0xff]
      %v2619 = vld [vmem:[%s4 + $0x1f0] sm:$0xff]
      %v2620 = vld [vmem:[%s4 + $0x1f8] sm:$0xff]
      %v2622 = vsel %vm1030, %v2515, 0
      %v2625 = vsel %vm1030, %v2517, 0
      %v2628 = vsel %vm1030, %v2519, 0
      %v2631 = vsel %vm1030, %v2521, 0
      %v2634 = vsel %vm1030, %v2523, 0
      %v2637 = vsel %vm1030, %v2525, 0
      %2639 = vmatprep.subr.mxu0 0.0
      %2640 = vmatpush1.msra.mxu0 %v2561
      %2641 = vmatprep.subr.mxu0 0.0
      %2642 = vmatpush1.msra.mxu0 %v2562
      %2643 = vmatprep.subr.mxu0 0.0
      %2644 = vmatpush1.msra.mxu0 %v2563
      %2645 = vmatprep.subr.mxu0 0.0
      %2646 = vmatpush1.msra.mxu0 %v2564
      %2647 = vmatprep.subr.mxu0 0.0
      %2648 = vmatpush1.msra.mxu0 0.0
      %2649 = vmatprep.subr.mxu0 0.0
      %2650 = vmatpush1.msra.mxu0 0.0
      %2651 = vmatprep.subr.mxu0 0.0
      %2652 = vmatpush1.msra.mxu0 0.0
      %2653 = vmatprep.subr.mxu0 0.0
      %2654 = vmatpush1.msra.mxu0 0.0
      %2655 = vmatprep.subr.mxu0 0.0
      %2656 = vmatpush1.msra.mxu0 0.0
      %2657 = vmatprep.subr.mxu0 0.0
      %2658 = vmatpush1.msra.mxu0 0.0
      %2659 = vmatprep.subr.mxu0 0.0
      %2660 = vmatpush1.msra.mxu0 0.0
      %2661 = vmatprep.subr.mxu0 0.0
      %2662 = vmatpush1.msra.mxu0 0.0
      %2663 = vmatprep.subr.mxu0 0.0
      %2664 = vmatpush1.msra.mxu0 0.0
      %2665 = vmatprep.subr.mxu0 0.0
      %2666 = vmatpush1.msra.mxu0 0.0
      %2667 = vmatprep.subr.mxu0 0.0
      %2668 = vmatpush1.msra.mxu0 0.0
      %2669 = vmatprep.subr.mxu0 0.0
      %2670 = vmatpush1.msra.mxu0 0.0
      %2671 = vmatprep.subr.mxu0 0.0
      %2672 = vmatpush1.msra.mxu0 0.0
      %2673 = vmatprep.subr.mxu0 0.0
      %2674 = vmatpush1.msra.mxu0 0.0
      %2675 = vmatprep.subr.mxu0 0.0
      %2676 = vmatpush1.msra.mxu0 0.0
      %2677 = vmatprep.subr.mxu0 0.0
      %2678 = vmatpush1.msra.mxu0 0.0
      %2679 = vmatprep.subr.mxu0 0.0
      %2680 = vmatpush1.msra.mxu0 0.0
      %2681 = vmatprep.subr.mxu0 0.0
      %2682 = vmatpush1.msra.mxu0 0.0
      %2683 = vmatprep.subr.mxu0 0.0
      %2684 = vmatpush1.msra.mxu0 0.0
      %2685 = vmatprep.subr.mxu0 0.0
      %2686 = vmatpush1.msra.mxu0 0.0
      %2687 = vmatprep.subr.mxu0 0.0
      %2688 = vmatpush1.msra.mxu0 0.0
      %2689 = vmatprep.subr.mxu0 0.0
      %2690 = vmatpush1.msra.mxu0 0.0
      %2691 = vmatprep.subr.mxu0 0.0
      %2692 = vmatpush1.msra.mxu0 0.0
      %2693 = vmatprep.subr.mxu0 0.0
      %2694 = vmatpush1.msra.mxu0 0.0
      %2695 = vmatprep.subr.mxu0 0.0
      %2696 = vmatpush1.msra.mxu0 0.0
      %2697 = vmatprep.subr.mxu0 0.0
      %2698 = vmatpush1.msra.mxu0 0.0
      %2699 = vmatprep.subr.mxu0 0.0
      %2700 = vmatpush1.msra.mxu0 0.0
      %2701 = vmatprep.subr.mxu0 0.0
      %2702 = vmatpush1.msra.mxu0 0.0
      %2703 = vmatprep.mubr.f32.mxu0 0.0
      %2704 = vmatmul.mubr.f32.gmra.mrb[0].mxu0 %v2622
      %v2705 = vpop.f32.mrb[0].mxu0
      %v2706 = vadd.f32 0.0, %v2705
      %v2707 = vpop.f32.mrb[0].mxu0
      %2708 = vmatprep.mubr.f32.mxu0 0.0
      %2709 = vmatmul.mubr.f32.gmra.mrb[0].mxu0 %v2625
      %v2710 = vpop.f32.mrb[0].mxu0
      %v2711 = vadd.f32 0.0, %v2710
      %v2712 = vpop.f32.mrb[0].mxu0
      %2713 = vmatprep.mubr.f32.mxu0 0.0
      %2714 = vmatmul.mubr.f32.gmra.mrb[0].mxu0 %v2628
      %v2715 = vpop.f32.mrb[0].mxu0
      %v2716 = vadd.f32 0.0, %v2715
      %v2717 = vpop.f32.mrb[0].mxu0
      %2718 = vmatprep.mubr.f32.mxu0 0.0
      %2719 = vmatmul.mubr.f32.gmra.mrb[0].mxu0 %v2631
      %v2720 = vpop.f32.mrb[0].mxu0
      %v2721 = vadd.f32 0.0, %v2720
      %v2722 = vpop.f32.mrb[0].mxu0
      %2723 = vmatprep.mubr.f32.mxu0 0.0
      %2724 = vmatmul.mubr.f32.gmra.mrb[0].mxu0 %v2634
      %v2725 = vpop.f32.mrb[0].mxu0
      %v2726 = vadd.f32 0.0, %v2725
      %v2727 = vpop.f32.mrb[0].mxu0
      %2728 = vmatprep.mubr.f32.mxu0 0.0
      %2729 = vmatmul.mubr.f32.gmra.mrb[0].mxu0 %v2637
      %v2730 = vpop.f32.mrb[0].mxu0
      %v2731 = vadd.f32 0.0, %v2730
      %v2732 = vpop.f32.mrb[0].mxu0
      %2733 = vdwg.mxu0
      %v2735 = vsel %vm1030, %v2501, 0
      %v2738 = vsel %vm1030, %v2503, 0
      %v2741 = vsel %vm1030, %v2505, 0
      %v2744 = vsel %vm1030, %v2507, 0
      %v2747 = vsel %vm1030, %v2509, 0
      %v2750 = vsel %vm1030, %v2511, 0
      %2752 = vmatprep.subr.mxu0 0.0
      %2753 = vmatpush1.msra.mxu0 %v2557
      %2754 = vmatprep.subr.mxu0 0.0
      %2755 = vmatpush1.msra.mxu0 %v2558
      %2756 = vmatprep.subr.mxu0 0.0
      %2757 = vmatpush1.msra.mxu0 %v2559
      %2758 = vmatprep.subr.mxu0 0.0
      %2759 = vmatpush1.msra.mxu0 %v2560
      %2760 = vmatprep.subr.mxu0 0.0
      %2761 = vmatpush1.msra.mxu0 0.0
      %2762 = vmatprep.subr.mxu0 0.0
      %2763 = vmatpush1.msra.mxu0 0.0
      %2764 = vmatprep.subr.mxu0 0.0
      %2765 = vmatpush1.msra.mxu0 0.0
      %2766 = vmatprep.subr.mxu0 0.0
      %2767 = vmatpush1.msra.mxu0 0.0
      %2768 = vmatprep.subr.mxu0 0.0
      %2769 = vmatpush1.msra.mxu0 0.0
      %2770 = vmatprep.subr.mxu0 0.0
      %2771 = vmatpush1.msra.mxu0 0.0
      %2772 = vmatprep.subr.mxu0 0.0
      %2773 = vmatpush1.msra.mxu0 0.0
      %2774 = vmatprep.subr.mxu0 0.0
      %2775 = vmatpush1.msra.mxu0 0.0
      %2776 = vmatprep.subr.mxu0 0.0
      %2777 = vmatpush1.msra.mxu0 0.0
      %2778 = vmatprep.subr.mxu0 0.0
      %2779 = vmatpush1.msra.mxu0 0.0
      %2780 = vmatprep.subr.mxu0 0.0
      %2781 = vmatpush1.msra.mxu0 0.0
      %2782 = vmatprep.subr.mxu0 0.0
      %2783 = vmatpush1.msra.mxu0 0.0
      %2784 = vmatprep.subr.mxu0 0.0
      %2785 = vmatpush1.msra.mxu0 0.0
      %2786 = vmatprep.subr.mxu0 0.0
      %2787 = vmatpush1.msra.mxu0 0.0
      %2788 = vmatprep.subr.mxu0 0.0
      %2789 = vmatpush1.msra.mxu0 0.0
      %2790 = vmatprep.subr.mxu0 0.0
      %2791 = vmatpush1.msra.mxu0 0.0
      %2792 = vmatprep.subr.mxu0 0.0
      %2793 = vmatpush1.msra.mxu0 0.0
      %2794 = vmatprep.subr.mxu0 0.0
      %2795 = vmatpush1.msra.mxu0 0.0
      %2796 = vmatprep.subr.mxu0 0.0
      %2797 = vmatpush1.msra.mxu0 0.0
      %2798 = vmatprep.subr.mxu0 0.0
      %2799 = vmatpush1.msra.mxu0 0.0
      %2800 = vmatprep.subr.mxu0 0.0
      %2801 = vmatpush1.msra.mxu0 0.0
      %2802 = vmatprep.subr.mxu0 0.0
      %2803 = vmatpush1.msra.mxu0 0.0
      %2804 = vmatprep.subr.mxu0 0.0
      %2805 = vmatpush1.msra.mxu0 0.0
      %2806 = vmatprep.subr.mxu0 0.0
      %2807 = vmatpush1.msra.mxu0 0.0
      %2808 = vmatprep.subr.mxu0 0.0
      %2809 = vmatpush1.msra.mxu0 0.0
      %2810 = vmatprep.subr.mxu0 0.0
      %2811 = vmatpush1.msra.mxu0 0.0
      %2812 = vmatprep.subr.mxu0 0.0
      %2813 = vmatpush1.msra.mxu0 0.0
      %2814 = vmatprep.subr.mxu0 0.0
      %2815 = vmatpush1.msra.mxu0 0.0
      %2816 = vmatprep.mubr.f32.mxu0 0.0
      %2817 = vmatmul.mubr.f32.gmra.mrb[0].mxu0 %v2735
      %v2818 = vpop.f32.mrb[0].mxu0
      %v2819 = vadd.f32 %v2706, %v2818
      %v2820 = vpop.f32.mrb[0].mxu0
      %2821 = vmatprep.mubr.f32.mxu0 0.0
      %2822 = vmatmul.mubr.f32.gmra.mrb[0].mxu0 %v2738
      %v2823 = vpop.f32.mrb[0].mxu0
      %v2824 = vadd.f32 %v2711, %v2823
      %v2825 = vpop.f32.mrb[0].mxu0
      %2826 = vmatprep.mubr.f32.mxu0 0.0
      %2827 = vmatmul.mubr.f32.gmra.mrb[0].mxu0 %v2741
      %v2828 = vpop.f32.mrb[0].mxu0
      %v2829 = vadd.f32 %v2716, %v2828
      %v2830 = vpop.f32.mrb[0].mxu0
      %2831 = vmatprep.mubr.f32.mxu0 0.0
      %2832 = vmatmul.mubr.f32.gmra.mrb[0].mxu0 %v2744
      %v2833 = vpop.f32.mrb[0].mxu0
      %v2834 = vadd.f32 %v2721, %v2833
      %v2835 = vpop.f32.mrb[0].mxu0
      %2836 = vmatprep.mubr.f32.mxu0 0.0
      %2837 = vmatmul.mubr.f32.gmra.mrb[0].mxu0 %v2747
      %v2838 = vpop.f32.mrb[0].mxu0
      %v2839 = vadd.f32 %v2726, %v2838
      %v2840 = vpop.f32.mrb[0].mxu0
      %2841 = vmatprep.mubr.f32.mxu0 0.0
      %2842 = vmatmul.mubr.f32.gmra.mrb[0].mxu0 %v2750
      %v2843 = vpop.f32.mrb[0].mxu0
      %v2844 = vadd.f32 %v2731, %v2843
      %v2845 = vpop.f32.mrb[0].mxu0
      %2846 = vdwg.mxu0
      %vm2853 = vcmask 1046528
      %v2854 = vrot.slane %v2501, 1
      %v2855 = vrot.slane %v2502, 1
      %v2856 = vsel %vm2853, %v2854, %v2855
      %v2857 = vrot.slane %v2503, 1
      %v2858 = vrot.slane %v2504, 1
      %v2859 = vsel %vm2853, %v2857, %v2858
      %v2860 = vrot.slane %v2505, 1
      %v2861 = vrot.slane %v2506, 1
      %v2862 = vsel %vm2853, %v2860, %v2861
      %v2863 = vrot.slane %v2507, 1
      %v2864 = vrot.slane %v2508, 1
      %v2865 = vsel %vm2853, %v2863, %v2864
      %v2866 = vrot.slane %v2509, 1
      %v2867 = vrot.slane %v2510, 1
      %v2868 = vsel %vm2853, %v2866, %v2867
      %v2869 = vrot.slane %v2511, 1
      %v2870 = vrot.slane %v2512, 1
      %v2871 = vsel %vm2853, %v2869, %v2870
      %v2872 = vsel %vm1030, %v2856, 0
      %v2874 = vsel %vm1030, %v2859, 0
      %v2876 = vsel %vm1030, %v2862, 0
      %v2878 = vsel %vm1030, %v2865, 0
      %v2880 = vsel %vm1030, %v2868, 0
      %v2882 = vsel %vm1030, %v2871, 0
      %2884 = vmatprep.subr.mxu0 0.0
      %2885 = vmatpush1.msra.mxu0 %v2565
      %2886 = vmatprep.subr.mxu0 0.0
      %2887 = vmatpush1.msra.mxu0 %v2566
      %2888 = vmatprep.subr.mxu0 0.0
      %2889 = vmatpush1.msra.mxu0 %v2567
      %2890 = vmatprep.subr.mxu0 0.0
      %2891 = vmatpush1.msra.mxu0 %v2568
      %2892 = vmatprep.subr.mxu0 0.0
      %2893 = vmatpush1.msra.mxu0 0.0
      %2894 = vmatprep.subr.mxu0 0.0
      %2895 = vmatpush1.msra.mxu0 0.0
      %2896 = vmatprep.subr.mxu0 0.0
      %2897 = vmatpush1.msra.mxu0 0.0
      %2898 = vmatprep.subr.mxu0 0.0
      %2899 = vmatpush1.msra.mxu0 0.0
      %2900 = vmatprep.subr.mxu0 0.0
      %2901 = vmatpush1.msra.mxu0 0.0
      %2902 = vmatprep.subr.mxu0 0.0
      %2903 = vmatpush1.msra.mxu0 0.0
      %2904 = vmatprep.subr.mxu0 0.0
      %2905 = vmatpush1.msra.mxu0 0.0
      %2906 = vmatprep.subr.mxu0 0.0
      %2907 = vmatpush1.msra.mxu0 0.0
      %2908 = vmatprep.subr.mxu0 0.0
      %2909 = vmatpush1.msra.mxu0 0.0
      %2910 = vmatprep.subr.mxu0 0.0
      %2911 = vmatpush1.msra.mxu0 0.0
      %2912 = vmatprep.subr.mxu0 0.0
      %2913 = vmatpush1.msra.mxu0 0.0
      %2914 = vmatprep.subr.mxu0 0.0
      %2915 = vmatpush1.msra.mxu0 0.0
      %2916 = vmatprep.subr.mxu0 0.0
      %2917 = vmatpush1.msra.mxu0 0.0
      %2918 = vmatprep.subr.mxu0 0.0
      %2919 = vmatpush1.msra.mxu0 0.0
      %2920 = vmatprep.subr.mxu0 0.0
      %2921 = vmatpush1.msra.mxu0 0.0
      %2922 = vmatprep.subr.mxu0 0.0
      %2923 = vmatpush1.msra.mxu0 0.0
      %2924 = vmatprep.subr.mxu0 0.0
      %2925 = vmatpush1.msra.mxu0 0.0
      %2926 = vmatprep.subr.mxu0 0.0
      %2927 = vmatpush1.msra.mxu0 0.0
      %2928 = vmatprep.subr.mxu0 0.0
      %2929 = vmatpush1.msra.mxu0 0.0
      %2930 = vmatprep.subr.mxu0 0.0
      %2931 = vmatpush1.msra.mxu0 0.0
      %2932 = vmatprep.subr.mxu0 0.0
      %2933 = vmatpush1.msra.mxu0 0.0
      %2934 = vmatprep.subr.mxu0 0.0
      %2935 = vmatpush1.msra.mxu0 0.0
      %2936 = vmatprep.subr.mxu0 0.0
      %2937 = vmatpush1.msra.mxu0 0.0
      %2938 = vmatprep.subr.mxu0 0.0
      %2939 = vmatpush1.msra.mxu0 0.0
      %2940 = vmatprep.subr.mxu0 0.0
      %2941 = vmatpush1.msra.mxu0 0.0
      %2942 = vmatprep.subr.mxu0 0.0
      %2943 = vmatpush1.msra.mxu0 0.0
      %2944 = vmatprep.subr.mxu0 0.0
      %2945 = vmatpush1.msra.mxu0 0.0
      %2946 = vmatprep.subr.mxu0 0.0
      %2947 = vmatpush1.msra.mxu0 0.0
      %2948 = vmatprep.mubr.f32.mxu0 0.0
      %2949 = vmatmul.mubr.f32.gmra.mrb[0].mxu0 %v2872
      %v2950 = vpop.f32.mrb[0].mxu0
      %v2951 = vadd.f32 0.0, %v2950
      %v2952 = vpop.f32.mrb[0].mxu0
      %2953 = vmatprep.mubr.f32.mxu0 0.0
      %2954 = vmatmul.mubr.f32.gmra.mrb[0].mxu0 %v2874
      %v2955 = vpop.f32.mrb[0].mxu0
      %v2956 = vadd.f32 0.0, %v2955
      %v2957 = vpop.f32.mrb[0].mxu0
      %2958 = vmatprep.mubr.f32.mxu0 0.0
      %2959 = vmatmul.mubr.f32.gmra.mrb[0].mxu0 %v2876
      %v2960 = vpop.f32.mrb[0].mxu0
      %v2961 = vadd.f32 0.0, %v2960
      %v2962 = vpop.f32.mrb[0].mxu0
      %2963 = vmatprep.mubr.f32.mxu0 0.0
      %2964 = vmatmul.mubr.f32.gmra.mrb[0].mxu0 %v2878
      %v2965 = vpop.f32.mrb[0].mxu0
      %v2966 = vadd.f32 0.0, %v2965
      %v2967 = vpop.f32.mrb[0].mxu0
      %2968 = vmatprep.mubr.f32.mxu0 0.0
      %2969 = vmatmul.mubr.f32.gmra.mrb[0].mxu0 %v2880
      %v2970 = vpop.f32.mrb[0].mxu0
      %v2971 = vadd.f32 0.0, %v2970
      %v2972 = vpop.f32.mrb[0].mxu0
      %2973 = vmatprep.mubr.f32.mxu0 0.0
      %2974 = vmatmul.mubr.f32.gmra.mrb[0].mxu0 %v2882
      %v2975 = vpop.f32.mrb[0].mxu0
      %v2976 = vadd.f32 0.0, %v2975
      %v2977 = vpop.f32.mrb[0].mxu0
      %2978 = vdwg.mxu0
      %v2979 = vadd.f32 %v2819, %v2951
      %v2980 = vadd.f32 %v2824, %v2956
      %v2981 = vadd.f32 %v2829, %v2961
      %v2982 = vadd.f32 %v2834, %v2966
      %v2983 = vadd.f32 %v2839, %v2971
      %v2984 = vadd.f32 %v2844, %v2976
      %v2991 = vrot.slane %v2515, 1
      %v2992 = vrot.slane %v2516, 1
      %v2993 = vsel %vm2853, %v2991, %v2992
      %v2994 = vrot.slane %v2517, 1
      %v2995 = vrot.slane %v2518, 1
      %v2996 = vsel %vm2853, %v2994, %v2995
      %v2997 = vrot.slane %v2519, 1
      %v2998 = vrot.slane %v2520, 1
      %v2999 = vsel %vm2853, %v2997, %v2998
      %v3000 = vrot.slane %v2521, 1
      %v3001 = vrot.slane %v2522, 1
      %v3002 = vsel %vm2853, %v3000, %v3001
      %v3003 = vrot.slane %v2523, 1
      %v3004 = vrot.slane %v2524, 1
      %v3005 = vsel %vm2853, %v3003, %v3004
      %v3006 = vrot.slane %v2525, 1
      %v3007 = vrot.slane %v2526, 1
      %v3008 = vsel %vm2853, %v3006, %v3007
      %v3009 = vsel %vm1030, %v2993, 0
      %v3011 = vsel %vm1030, %v2996, 0
      %v3013 = vsel %vm1030, %v2999, 0
      %v3015 = vsel %vm1030, %v3002, 0
      %v3017 = vsel %vm1030, %v3005, 0
      %v3019 = vsel %vm1030, %v3008, 0
      %3021 = vmatprep.subr.mxu0 0.0
      %3022 = vmatpush1.msra.mxu0 %v2569
      %3023 = vmatprep.subr.mxu0 0.0
      %3024 = vmatpush1.msra.mxu0 %v2570
      %3025 = vmatprep.subr.mxu0 0.0
      %3026 = vmatpush1.msra.mxu0 %v2571
      %3027 = vmatprep.subr.mxu0 0.0
      %3028 = vmatpush1.msra.mxu0 %v2572
      %3029 = vmatprep.subr.mxu0 0.0
      %3030 = vmatpush1.msra.mxu0 0.0
      %3031 = vmatprep.subr.mxu0 0.0
      %3032 = vmatpush1.msra.mxu0 0.0
      %3033 = vmatprep.subr.mxu0 0.0
      %3034 = vmatpush1.msra.mxu0 0.0
      %3035 = vmatprep.subr.mxu0 0.0
      %3036 = vmatpush1.msra.mxu0 0.0
      %3037 = vmatprep.subr.mxu0 0.0
      %3038 = vmatpush1.msra.mxu0 0.0
      %3039 = vmatprep.subr.mxu0 0.0
      %3040 = vmatpush1.msra.mxu0 0.0
      %3041 = vmatprep.subr.mxu0 0.0
      %3042 = vmatpush1.msra.mxu0 0.0
      %3043 = vmatprep.subr.mxu0 0.0
      %3044 = vmatpush1.msra.mxu0 0.0
      %3045 = vmatprep.subr.mxu0 0.0
      %3046 = vmatpush1.msra.mxu0 0.0
      %3047 = vmatprep.subr.mxu0 0.0
      %3048 = vmatpush1.msra.mxu0 0.0
      %3049 = vmatprep.subr.mxu0 0.0
      %3050 = vmatpush1.msra.mxu0 0.0
      %3051 = vmatprep.subr.mxu0 0.0
      %3052 = vmatpush1.msra.mxu0 0.0
      %3053 = vmatprep.subr.mxu0 0.0
      %3054 = vmatpush1.msra.mxu0 0.0
      %3055 = vmatprep.subr.mxu0 0.0
      %3056 = vmatpush1.msra.mxu0 0.0
      %3057 = vmatprep.subr.mxu0 0.0
      %3058 = vmatpush1.msra.mxu0 0.0
      %3059 = vmatprep.subr.mxu0 0.0
      %3060 = vmatpush1.msra.mxu0 0.0
      %3061 = vmatprep.subr.mxu0 0.0
      %3062 = vmatpush1.msra.mxu0 0.0
      %3063 = vmatprep.subr.mxu0 0.0
      %3064 = vmatpush1.msra.mxu0 0.0
      %3065 = vmatprep.subr.mxu0 0.0
      %3066 = vmatpush1.msra.mxu0 0.0
      %3067 = vmatprep.subr.mxu0 0.0
      %3068 = vmatpush1.msra.mxu0 0.0
      %3069 = vmatprep.subr.mxu0 0.0
      %3070 = vmatpush1.msra.mxu0 0.0
      %3071 = vmatprep.subr.mxu0 0.0
      %3072 = vmatpush1.msra.mxu0 0.0
      %3073 = vmatprep.subr.mxu0 0.0
      %3074 = vmatpush1.msra.mxu0 0.0
      %3075 = vmatprep.subr.mxu0 0.0
      %3076 = vmatpush1.msra.mxu0 0.0
      %3077 = vmatprep.subr.mxu0 0.0
      %3078 = vmatpush1.msra.mxu0 0.0
      %3079 = vmatprep.subr.mxu0 0.0
      %3080 = vmatpush1.msra.mxu0 0.0
      %3081 = vmatprep.subr.mxu0 0.0
      %3082 = vmatpush1.msra.mxu0 0.0
      %3083 = vmatprep.subr.mxu0 0.0
      %3084 = vmatpush1.msra.mxu0 0.0
      %3085 = vmatprep.mubr.f32.mxu0 0.0
      %3086 = vmatmul.mubr.f32.gmra.mrb[0].mxu0 %v3009
      %v3087 = vpop.f32.mrb[0].mxu0
      %v3088 = vadd.f32 0.0, %v3087
      %v3089 = vpop.f32.mrb[0].mxu0
      %3090 = vmatprep.mubr.f32.mxu0 0.0
      %3091 = vmatmul.mubr.f32.gmra.mrb[0].mxu0 %v3011
      %v3092 = vpop.f32.mrb[0].mxu0
      %v3093 = vadd.f32 0.0, %v3092
      %v3094 = vpop.f32.mrb[0].mxu0
      %3095 = vmatprep.mubr.f32.mxu0 0.0
      %3096 = vmatmul.mubr.f32.gmra.mrb[0].mxu0 %v3013
      %v3097 = vpop.f32.mrb[0].mxu0
      %v3098 = vadd.f32 0.0, %v3097
      %v3099 = vpop.f32.mrb[0].mxu0
      %3100 = vmatprep.mubr.f32.mxu0 0.0
      %3101 = vmatmul.mubr.f32.gmra.mrb[0].mxu0 %v3015
      %v3102 = vpop.f32.mrb[0].mxu0
      %v3103 = vadd.f32 0.0, %v3102
      %v3104 = vpop.f32.mrb[0].mxu0
      %3105 = vmatprep.mubr.f32.mxu0 0.0
      %3106 = vmatmul.mubr.f32.gmra.mrb[0].mxu0 %v3017
      %v3107 = vpop.f32.mrb[0].mxu0
      %v3108 = vadd.f32 0.0, %v3107
      %v3109 = vpop.f32.mrb[0].mxu0
      %3110 = vmatprep.mubr.f32.mxu0 0.0
      %3111 = vmatmul.mubr.f32.gmra.mrb[0].mxu0 %v3019
      %v3112 = vpop.f32.mrb[0].mxu0
      %v3113 = vadd.f32 0.0, %v3112
      %v3114 = vpop.f32.mrb[0].mxu0
      %3115 = vdwg.mxu0
      %v3116 = vadd.f32 %v2979, %v3088
      %v3117 = vadd.f32 %v2980, %v3093
      %v3118 = vadd.f32 %v2981, %v3098
      %v3119 = vadd.f32 %v2982, %v3103
      %v3120 = vadd.f32 %v2983, %v3108
      %v3121 = vadd.f32 %v2984, %v3113
      %v3123 = vsel %vm1030, %v2529, 0
      %v3126 = vsel %vm1030, %v2531, 0
      %v3129 = vsel %vm1030, %v2533, 0
      %v3132 = vsel %vm1030, %v2535, 0
      %v3135 = vsel %vm1030, %v2537, 0
      %v3138 = vsel %vm1030, %v2539, 0
      %3140 = vmatprep.subr.mxu0 0.0
      %3141 = vmatpush1.msra.mxu0 %v2573
      %3142 = vmatprep.subr.mxu0 0.0
      %3143 = vmatpush1.msra.mxu0 %v2574
      %3144 = vmatprep.subr.mxu0 0.0
      %3145 = vmatpush1.msra.mxu0 %v2575
      %3146 = vmatprep.subr.mxu0 0.0
      %3147 = vmatpush1.msra.mxu0 %v2576
      %3148 = vmatprep.subr.mxu0 0.0
      %3149 = vmatpush1.msra.mxu0 0.0
      %3150 = vmatprep.subr.mxu0 0.0
      %3151 = vmatpush1.msra.mxu0 0.0
      %3152 = vmatprep.subr.mxu0 0.0
      %3153 = vmatpush1.msra.mxu0 0.0
      %3154 = vmatprep.subr.mxu0 0.0
      %3155 = vmatpush1.msra.mxu0 0.0
      %3156 = vmatprep.subr.mxu0 0.0
      %3157 = vmatpush1.msra.mxu0 0.0
      %3158 = vmatprep.subr.mxu0 0.0
      %3159 = vmatpush1.msra.mxu0 0.0
      %3160 = vmatprep.subr.mxu0 0.0
      %3161 = vmatpush1.msra.mxu0 0.0
      %3162 = vmatprep.subr.mxu0 0.0
      %3163 = vmatpush1.msra.mxu0 0.0
      %3164 = vmatprep.subr.mxu0 0.0
      %3165 = vmatpush1.msra.mxu0 0.0
      %3166 = vmatprep.subr.mxu0 0.0
      %3167 = vmatpush1.msra.mxu0 0.0
      %3168 = vmatprep.subr.mxu0 0.0
      %3169 = vmatpush1.msra.mxu0 0.0
      %3170 = vmatprep.subr.mxu0 0.0
      %3171 = vmatpush1.msra.mxu0 0.0
      %3172 = vmatprep.subr.mxu0 0.0
      %3173 = vmatpush1.msra.mxu0 0.0
      %3174 = vmatprep.subr.mxu0 0.0
      %3175 = vmatpush1.msra.mxu0 0.0
      %3176 = vmatprep.subr.mxu0 0.0
      %3177 = vmatpush1.msra.mxu0 0.0
      %3178 = vmatprep.subr.mxu0 0.0
      %3179 = vmatpush1.msra.mxu0 0.0
      %3180 = vmatprep.subr.mxu0 0.0
      %3181 = vmatpush1.msra.mxu0 0.0
      %3182 = vmatprep.subr.mxu0 0.0
      %3183 = vmatpush1.msra.mxu0 0.0
      %3184 = vmatprep.subr.mxu0 0.0
      %3185 = vmatpush1.msra.mxu0 0.0
      %3186 = vmatprep.subr.mxu0 0.0
      %3187 = vmatpush1.msra.mxu0 0.0
      %3188 = vmatprep.subr.mxu0 0.0
      %3189 = vmatpush1.msra.mxu0 0.0
      %3190 = vmatprep.subr.mxu0 0.0
      %3191 = vmatpush1.msra.mxu0 0.0
      %3192 = vmatprep.subr.mxu0 0.0
      %3193 = vmatpush1.msra.mxu0 0.0
      %3194 = vmatprep.subr.mxu0 0.0
      %3195 = vmatpush1.msra.mxu0 0.0
      %3196 = vmatprep.subr.mxu0 0.0
      %3197 = vmatpush1.msra.mxu0 0.0
      %3198 = vmatprep.subr.mxu0 0.0
      %3199 = vmatpush1.msra.mxu0 0.0
      %3200 = vmatprep.subr.mxu0 0.0
      %3201 = vmatpush1.msra.mxu0 0.0
      %3202 = vmatprep.subr.mxu0 0.0
      %3203 = vmatpush1.msra.mxu0 0.0
      %3204 = vmatprep.mubr.f32.mxu0 0.0
      %3205 = vmatmul.mubr.f32.gmra.mrb[0].mxu0 %v3123
      %v3206 = vpop.f32.mrb[0].mxu0
      %v3207 = vadd.f32 0.0, %v3206
      %v3208 = vpop.f32.mrb[0].mxu0
      %3209 = vmatprep.mubr.f32.mxu0 0.0
      %3210 = vmatmul.mubr.f32.gmra.mrb[0].mxu0 %v3126
      %v3211 = vpop.f32.mrb[0].mxu0
      %v3212 = vadd.f32 0.0, %v3211
      %v3213 = vpop.f32.mrb[0].mxu0
      %3214 = vmatprep.mubr.f32.mxu0 0.0
      %3215 = vmatmul.mubr.f32.gmra.mrb[0].mxu0 %v3129
      %v3216 = vpop.f32.mrb[0].mxu0
      %v3217 = vadd.f32 0.0, %v3216
      %v3218 = vpop.f32.mrb[0].mxu0
      %3219 = vmatprep.mubr.f32.mxu0 0.0
      %3220 = vmatmul.mubr.f32.gmra.mrb[0].mxu0 %v3132
      %v3221 = vpop.f32.mrb[0].mxu0
      %v3222 = vadd.f32 0.0, %v3221
      %v3223 = vpop.f32.mrb[0].mxu0
      %3224 = vmatprep.mubr.f32.mxu0 0.0
      %3225 = vmatmul.mubr.f32.gmra.mrb[0].mxu0 %v3135
      %v3226 = vpop.f32.mrb[0].mxu0
      %v3227 = vadd.f32 0.0, %v3226
      %v3228 = vpop.f32.mrb[0].mxu0
      %3229 = vmatprep.mubr.f32.mxu0 0.0
      %3230 = vmatmul.mubr.f32.gmra.mrb[0].mxu0 %v3138
      %v3231 = vpop.f32.mrb[0].mxu0
      %v3232 = vadd.f32 0.0, %v3231
      %v3233 = vpop.f32.mrb[0].mxu0
      %3234 = vdwg.mxu0
      %v3235 = vadd.f32 %v3116, %v3207
      %v3236 = vadd.f32 %v3117, %v3212
      %v3237 = vadd.f32 %v3118, %v3217
      %v3238 = vadd.f32 %v3119, %v3222
      %v3239 = vadd.f32 %v3120, %v3227
      %v3240 = vadd.f32 %v3121, %v3232
      %v3242 = vsel %vm1030, %v2543, 0
      %v3245 = vsel %vm1030, %v2545, 0
      %v3248 = vsel %vm1030, %v2547, 0
      %v3251 = vsel %vm1030, %v2549, 0
      %v3254 = vsel %vm1030, %v2551, 0
      %v3257 = vsel %vm1030, %v2553, 0
      %3259 = vmatprep.subr.mxu0 0.0
      %3260 = vmatpush1.msra.mxu0 %v2577
      %3261 = vmatprep.subr.mxu0 0.0
      %3262 = vmatpush1.msra.mxu0 %v2578
      %3263 = vmatprep.subr.mxu0 0.0
      %3264 = vmatpush1.msra.mxu0 %v2579
      %3265 = vmatprep.subr.mxu0 0.0
      %3266 = vmatpush1.msra.mxu0 %v2580
      %3267 = vmatprep.subr.mxu0 0.0
      %3268 = vmatpush1.msra.mxu0 0.0
      %3269 = vmatprep.subr.mxu0 0.0
      %3270 = vmatpush1.msra.mxu0 0.0
      %3271 = vmatprep.subr.mxu0 0.0
      %3272 = vmatpush1.msra.mxu0 0.0
      %3273 = vmatprep.subr.mxu0 0.0
      %3274 = vmatpush1.msra.mxu0 0.0
      %3275 = vmatprep.subr.mxu0 0.0
      %3276 = vmatpush1.msra.mxu0 0.0
      %3277 = vmatprep.subr.mxu0 0.0
      %3278 = vmatpush1.msra.mxu0 0.0
      %3279 = vmatprep.subr.mxu0 0.0
      %3280 = vmatpush1.msra.mxu0 0.0
      %3281 = vmatprep.subr.mxu0 0.0
      %3282 = vmatpush1.msra.mxu0 0.0
      %3283 = vmatprep.subr.mxu0 0.0
      %3284 = vmatpush1.msra.mxu0 0.0
      %3285 = vmatprep.subr.mxu0 0.0
      %3286 = vmatpush1.msra.mxu0 0.0
      %3287 = vmatprep.subr.mxu0 0.0
      %3288 = vmatpush1.msra.mxu0 0.0
      %3289 = vmatprep.subr.mxu0 0.0
      %3290 = vmatpush1.msra.mxu0 0.0
      %3291 = vmatprep.subr.mxu0 0.0
      %3292 = vmatpush1.msra.mxu0 0.0
      %3293 = vmatprep.subr.mxu0 0.0
      %3294 = vmatpush1.msra.mxu0 0.0
      %3295 = vmatprep.subr.mxu0 0.0
      %3296 = vmatpush1.msra.mxu0 0.0
      %3297 = vmatprep.subr.mxu0 0.0
      %3298 = vmatpush1.msra.mxu0 0.0
      %3299 = vmatprep.subr.mxu0 0.0
      %3300 = vmatpush1.msra.mxu0 0.0
      %3301 = vmatprep.subr.mxu0 0.0
      %3302 = vmatpush1.msra.mxu0 0.0
      %3303 = vmatprep.subr.mxu0 0.0
      %3304 = vmatpush1.msra.mxu0 0.0
      %3305 = vmatprep.subr.mxu0 0.0
      %3306 = vmatpush1.msra.mxu0 0.0
      %3307 = vmatprep.subr.mxu0 0.0
      %3308 = vmatpush1.msra.mxu0 0.0
      %3309 = vmatprep.subr.mxu0 0.0
      %3310 = vmatpush1.msra.mxu0 0.0
      %3311 = vmatprep.subr.mxu0 0.0
      %3312 = vmatpush1.msra.mxu0 0.0
      %3313 = vmatprep.subr.mxu0 0.0
      %3314 = vmatpush1.msra.mxu0 0.0
      %3315 = vmatprep.subr.mxu0 0.0
      %3316 = vmatpush1.msra.mxu0 0.0
      %3317 = vmatprep.subr.mxu0 0.0
      %3318 = vmatpush1.msra.mxu0 0.0
      %3319 = vmatprep.subr.mxu0 0.0
      %3320 = vmatpush1.msra.mxu0 0.0
      %3321 = vmatprep.subr.mxu0 0.0
      %3322 = vmatpush1.msra.mxu0 0.0
      %3323 = vmatprep.mubr.f32.mxu0 0.0
      %3324 = vmatmul.mubr.f32.gmra.mrb[0].mxu0 %v3242
      %v3325 = vpop.f32.mrb[0].mxu0
      %v3326 = vadd.f32 0.0, %v3325
      %v3327 = vpop.f32.mrb[0].mxu0
      %3328 = vmatprep.mubr.f32.mxu0 0.0
      %3329 = vmatmul.mubr.f32.gmra.mrb[0].mxu0 %v3245
      %v3330 = vpop.f32.mrb[0].mxu0
      %v3331 = vadd.f32 0.0, %v3330
      %v3332 = vpop.f32.mrb[0].mxu0
      %3333 = vmatprep.mubr.f32.mxu0 0.0
      %3334 = vmatmul.mubr.f32.gmra.mrb[0].mxu0 %v3248
      %v3335 = vpop.f32.mrb[0].mxu0
      %v3336 = vadd.f32 0.0, %v3335
      %v3337 = vpop.f32.mrb[0].mxu0
      %3338 = vmatprep.mubr.f32.mxu0 0.0
      %3339 = vmatmul.mubr.f32.gmra.mrb[0].mxu0 %v3251
      %v3340 = vpop.f32.mrb[0].mxu0
      %v3341 = vadd.f32 0.0, %v3340
      %v3342 = vpop.f32.mrb[0].mxu0
      %3343 = vmatprep.mubr.f32.mxu0 0.0
      %3344 = vmatmul.mubr.f32.gmra.mrb[0].mxu0 %v3254
      %v3345 = vpop.f32.mrb[0].mxu0
      %v3346 = vadd.f32 0.0, %v3345
      %v3347 = vpop.f32.mrb[0].mxu0
      %3348 = vmatprep.mubr.f32.mxu0 0.0
      %3349 = vmatmul.mubr.f32.gmra.mrb[0].mxu0 %v3257
      %v3350 = vpop.f32.mrb[0].mxu0
      %v3351 = vadd.f32 0.0, %v3350
      %v3352 = vpop.f32.mrb[0].mxu0
      %3353 = vdwg.mxu0
      %v3354 = vadd.f32 %v3235, %v3326
      %v3355 = vadd.f32 %v3236, %v3331
      %v3356 = vadd.f32 %v3237, %v3336
      %v3357 = vadd.f32 %v3238, %v3341
      %v3358 = vadd.f32 %v3239, %v3346
      %v3359 = vadd.f32 %v3240, %v3351
      %v3366 = vrot.slane %v2529, 1
      %v3367 = vrot.slane %v2530, 1
      %v3368 = vsel %vm2853, %v3366, %v3367
      %v3369 = vrot.slane %v2531, 1
      %v3370 = vrot.slane %v2532, 1
      %v3371 = vsel %vm2853, %v3369, %v3370
      %v3372 = vrot.slane %v2533, 1
      %v3373 = vrot.slane %v2534, 1
      %v3374 = vsel %vm2853, %v3372, %v3373
      %v3375 = vrot.slane %v2535, 1
      %v3376 = vrot.slane %v2536, 1
      %v3377 = vsel %vm2853, %v3375, %v3376
      %v3378 = vrot.slane %v2537, 1
      %v3379 = vrot.slane %v2538, 1
      %v3380 = vsel %vm2853, %v3378, %v3379
      %v3381 = vrot.slane %v2539, 1
      %v3382 = vrot.slane %v2540, 1
      %v3383 = vsel %vm2853, %v3381, %v3382
      %v3384 = vsel %vm1030, %v3368, 0
      %v3386 = vsel %vm1030, %v3371, 0
      %v3388 = vsel %vm1030, %v3374, 0
      %v3390 = vsel %vm1030, %v3377, 0
      %v3392 = vsel %vm1030, %v3380, 0
      %v3394 = vsel %vm1030, %v3383, 0
      %3396 = vmatprep.subr.mxu0 0.0
      %3397 = vmatpush1.msra.mxu0 %v2581
      %3398 = vmatprep.subr.mxu0 0.0
      %3399 = vmatpush1.msra.mxu0 %v2582
      %3400 = vmatprep.subr.mxu0 0.0
      %3401 = vmatpush1.msra.mxu0 %v2583
      %3402 = vmatprep.subr.mxu0 0.0
      %3403 = vmatpush1.msra.mxu0 %v2584
      %3404 = vmatprep.subr.mxu0 0.0
      %3405 = vmatpush1.msra.mxu0 0.0
      %3406 = vmatprep.subr.mxu0 0.0
      %3407 = vmatpush1.msra.mxu0 0.0
      %3408 = vmatprep.subr.mxu0 0.0
      %3409 = vmatpush1.msra.mxu0 0.0
      %3410 = vmatprep.subr.mxu0 0.0
      %3411 = vmatpush1.msra.mxu0 0.0
      %3412 = vmatprep.subr.mxu0 0.0
      %3413 = vmatpush1.msra.mxu0 0.0
      %3414 = vmatprep.subr.mxu0 0.0
      %3415 = vmatpush1.msra.mxu0 0.0
      %3416 = vmatprep.subr.mxu0 0.0
      %3417 = vmatpush1.msra.mxu0 0.0
      %3418 = vmatprep.subr.mxu0 0.0
      %3419 = vmatpush1.msra.mxu0 0.0
      %3420 = vmatprep.subr.mxu0 0.0
      %3421 = vmatpush1.msra.mxu0 0.0
      %3422 = vmatprep.subr.mxu0 0.0
      %3423 = vmatpush1.msra.mxu0 0.0
      %3424 = vmatprep.subr.mxu0 0.0
      %3425 = vmatpush1.msra.mxu0 0.0
      %3426 = vmatprep.subr.mxu0 0.0
      %3427 = vmatpush1.msra.mxu0 0.0
      %3428 = vmatprep.subr.mxu0 0.0
      %3429 = vmatpush1.msra.mxu0 0.0
      %3430 = vmatprep.subr.mxu0 0.0
      %3431 = vmatpush1.msra.mxu0 0.0
      %3432 = vmatprep.subr.mxu0 0.0
      %3433 = vmatpush1.msra.mxu0 0.0
      %3434 = vmatprep.subr.mxu0 0.0
      %3435 = vmatpush1.msra.mxu0 0.0
      %3436 = vmatprep.subr.mxu0 0.0
      %3437 = vmatpush1.msra.mxu0 0.0
      %3438 = vmatprep.subr.mxu0 0.0
      %3439 = vmatpush1.msra.mxu0 0.0
      %3440 = vmatprep.subr.mxu0 0.0
      %3441 = vmatpush1.msra.mxu0 0.0
      %3442 = vmatprep.subr.mxu0 0.0
      %3443 = vmatpush1.msra.mxu0 0.0
      %3444 = vmatprep.subr.mxu0 0.0
      %3445 = vmatpush1.msra.mxu0 0.0
      %3446 = vmatprep.subr.mxu0 0.0
      %3447 = vmatpush1.msra.mxu0 0.0
      %3448 = vmatprep.subr.mxu0 0.0
      %3449 = vmatpush1.msra.mxu0 0.0
      %3450 = vmatprep.subr.mxu0 0.0
      %3451 = vmatpush1.msra.mxu0 0.0
      %3452 = vmatprep.subr.mxu0 0.0
      %3453 = vmatpush1.msra.mxu0 0.0
      %3454 = vmatprep.subr.mxu0 0.0
      %3455 = vmatpush1.msra.mxu0 0.0
      %3456 = vmatprep.subr.mxu0 0.0
      %3457 = vmatpush1.msra.mxu0 0.0
      %3458 = vmatprep.subr.mxu0 0.0
      %3459 = vmatpush1.msra.mxu0 0.0
      %3460 = vmatprep.mubr.f32.mxu0 0.0
      %3461 = vmatmul.mubr.f32.gmra.mrb[0].mxu0 %v3384
      %v3462 = vpop.f32.mrb[0].mxu0
      %v3463 = vadd.f32 0.0, %v3462
      %v3464 = vpop.f32.mrb[0].mxu0
      %3465 = vmatprep.mubr.f32.mxu0 0.0
      %3466 = vmatmul.mubr.f32.gmra.mrb[0].mxu0 %v3386
      %v3467 = vpop.f32.mrb[0].mxu0
      %v3468 = vadd.f32 0.0, %v3467
      %v3469 = vpop.f32.mrb[0].mxu0
      %3470 = vmatprep.mubr.f32.mxu0 0.0
      %3471 = vmatmul.mubr.f32.gmra.mrb[0].mxu0 %v3388
      %v3472 = vpop.f32.mrb[0].mxu0
      %v3473 = vadd.f32 0.0, %v3472
      %v3474 = vpop.f32.mrb[0].mxu0
      %3475 = vmatprep.mubr.f32.mxu0 0.0
      %3476 = vmatmul.mubr.f32.gmra.mrb[0].mxu0 %v3390
      %v3477 = vpop.f32.mrb[0].mxu0
      %v3478 = vadd.f32 0.0, %v3477
      %v3479 = vpop.f32.mrb[0].mxu0
      %3480 = vmatprep.mubr.f32.mxu0 0.0
      %3481 = vmatmul.mubr.f32.gmra.mrb[0].mxu0 %v3392
      %v3482 = vpop.f32.mrb[0].mxu0
      %v3483 = vadd.f32 0.0, %v3482
      %v3484 = vpop.f32.mrb[0].mxu0
      %3485 = vmatprep.mubr.f32.mxu0 0.0
      %3486 = vmatmul.mubr.f32.gmra.mrb[0].mxu0 %v3394
      %v3487 = vpop.f32.mrb[0].mxu0
      %v3488 = vadd.f32 0.0, %v3487
      %v3489 = vpop.f32.mrb[0].mxu0
      %3490 = vdwg.mxu0
      %v3491 = vadd.f32 %v3354, %v3463
      %v3492 = vadd.f32 %v3355, %v3468
      %v3493 = vadd.f32 %v3356, %v3473
      %v3494 = vadd.f32 %v3357, %v3478
      %v3495 = vadd.f32 %v3358, %v3483
      %v3496 = vadd.f32 %v3359, %v3488
      %v3503 = vrot.slane %v2543, 1
      %v3504 = vrot.slane %v2544, 1
      %v3505 = vsel %vm2853, %v3503, %v3504
      %v3506 = vrot.slane %v2545, 1
      %v3507 = vrot.slane %v2546, 1
      %v3508 = vsel %vm2853, %v3506, %v3507
      %v3509 = vrot.slane %v2547, 1
      %v3510 = vrot.slane %v2548, 1
      %v3511 = vsel %vm2853, %v3509, %v3510
      %v3512 = vrot.slane %v2549, 1
      %v3513 = vrot.slane %v2550, 1
      %v3514 = vsel %vm2853, %v3512, %v3513
      %v3515 = vrot.slane %v2551, 1
      %v3516 = vrot.slane %v2552, 1
      %v3517 = vsel %vm2853, %v3515, %v3516
      %v3518 = vrot.slane %v2553, 1
      %v3519 = vrot.slane %v2554, 1
      %v3520 = vsel %vm2853, %v3518, %v3519
      %v3521 = vsel %vm1030, %v3505, 0
      %v3523 = vsel %vm1030, %v3508, 0
      %v3525 = vsel %vm1030, %v3511, 0
      %v3527 = vsel %vm1030, %v3514, 0
      %v3529 = vsel %vm1030, %v3517, 0
      %v3531 = vsel %vm1030, %v3520, 0
      %3533 = vmatprep.subr.mxu0 0.0
      %3534 = vmatpush1.msra.mxu0 %v2585
      %3535 = vmatprep.subr.mxu0 0.0
      %3536 = vmatpush1.msra.mxu0 %v2586
      %3537 = vmatprep.subr.mxu0 0.0
      %3538 = vmatpush1.msra.mxu0 %v2587
      %3539 = vmatprep.subr.mxu0 0.0
      %3540 = vmatpush1.msra.mxu0 %v2588
      %3541 = vmatprep.subr.mxu0 0.0
      %3542 = vmatpush1.msra.mxu0 0.0
      %3543 = vmatprep.subr.mxu0 0.0
      %3544 = vmatpush1.msra.mxu0 0.0
      %3545 = vmatprep.subr.mxu0 0.0
      %3546 = vmatpush1.msra.mxu0 0.0
      %3547 = vmatprep.subr.mxu0 0.0
      %3548 = vmatpush1.msra.mxu0 0.0
      %3549 = vmatprep.subr.mxu0 0.0
      %3550 = vmatpush1.msra.mxu0 0.0
      %3551 = vmatprep.subr.mxu0 0.0
      %3552 = vmatpush1.msra.mxu0 0.0
      %3553 = vmatprep.subr.mxu0 0.0
      %3554 = vmatpush1.msra.mxu0 0.0
      %3555 = vmatprep.subr.mxu0 0.0
      %3556 = vmatpush1.msra.mxu0 0.0
      %3557 = vmatprep.subr.mxu0 0.0
      %3558 = vmatpush1.msra.mxu0 0.0
      %3559 = vmatprep.subr.mxu0 0.0
      %3560 = vmatpush1.msra.mxu0 0.0
      %3561 = vmatprep.subr.mxu0 0.0
      %3562 = vmatpush1.msra.mxu0 0.0
      %3563 = vmatprep.subr.mxu0 0.0
      %3564 = vmatpush1.msra.mxu0 0.0
      %3565 = vmatprep.subr.mxu0 0.0
      %3566 = vmatpush1.msra.mxu0 0.0
      %3567 = vmatprep.subr.mxu0 0.0
      %3568 = vmatpush1.msra.mxu0 0.0
      %3569 = vmatprep.subr.mxu0 0.0
      %3570 = vmatpush1.msra.mxu0 0.0
      %3571 = vmatprep.subr.mxu0 0.0
      %3572 = vmatpush1.msra.mxu0 0.0
      %3573 = vmatprep.subr.mxu0 0.0
      %3574 = vmatpush1.msra.mxu0 0.0
      %3575 = vmatprep.subr.mxu0 0.0
      %3576 = vmatpush1.msra.mxu0 0.0
      %3577 = vmatprep.subr.mxu0 0.0
      %3578 = vmatpush1.msra.mxu0 0.0
      %3579 = vmatprep.subr.mxu0 0.0
      %3580 = vmatpush1.msra.mxu0 0.0
      %3581 = vmatprep.subr.mxu0 0.0
      %3582 = vmatpush1.msra.mxu0 0.0
      %3583 = vmatprep.subr.mxu0 0.0
      %3584 = vmatpush1.msra.mxu0 0.0
      %3585 = vmatprep.subr.mxu0 0.0
      %3586 = vmatpush1.msra.mxu0 0.0
      %3587 = vmatprep.subr.mxu0 0.0
      %3588 = vmatpush1.msra.mxu0 0.0
      %3589 = vmatprep.subr.mxu0 0.0
      %3590 = vmatpush1.msra.mxu0 0.0
      %3591 = vmatprep.subr.mxu0 0.0
      %3592 = vmatpush1.msra.mxu0 0.0
      %3593 = vmatprep.subr.mxu0 0.0
      %3594 = vmatpush1.msra.mxu0 0.0
      %3595 = vmatprep.subr.mxu0 0.0
      %3596 = vmatpush1.msra.mxu0 0.0
      %3597 = vmatprep.mubr.f32.mxu0 0.0
      %3598 = vmatmul.mubr.f32.gmra.mrb[0].mxu0 %v3521
      %v3599 = vpop.f32.mrb[0].mxu0
      %v3600 = vadd.f32 0.0, %v3599
      %v3601 = vpop.f32.mrb[0].mxu0
      %3602 = vmatprep.mubr.f32.mxu0 0.0
      %3603 = vmatmul.mubr.f32.gmra.mrb[0].mxu0 %v3523
      %v3604 = vpop.f32.mrb[0].mxu0
      %v3605 = vadd.f32 0.0, %v3604
      %v3606 = vpop.f32.mrb[0].mxu0
      %3607 = vmatprep.mubr.f32.mxu0 0.0
      %3608 = vmatmul.mubr.f32.gmra.mrb[0].mxu0 %v3525
      %v3609 = vpop.f32.mrb[0].mxu0
      %v3610 = vadd.f32 0.0, %v3609
      %v3611 = vpop.f32.mrb[0].mxu0
      %3612 = vmatprep.mubr.f32.mxu0 0.0
      %3613 = vmatmul.mubr.f32.gmra.mrb[0].mxu0 %v3527
      %v3614 = vpop.f32.mrb[0].mxu0
      %v3615 = vadd.f32 0.0, %v3614
      %v3616 = vpop.f32.mrb[0].mxu0
      %3617 = vmatprep.mubr.f32.mxu0 0.0
      %3618 = vmatmul.mubr.f32.gmra.mrb[0].mxu0 %v3529
      %v3619 = vpop.f32.mrb[0].mxu0
      %v3620 = vadd.f32 0.0, %v3619
      %v3621 = vpop.f32.mrb[0].mxu0
      %3622 = vmatprep.mubr.f32.mxu0 0.0
      %3623 = vmatmul.mubr.f32.gmra.mrb[0].mxu0 %v3531
      %v3624 = vpop.f32.mrb[0].mxu0
      %v3625 = vadd.f32 0.0, %v3624
      %v3626 = vpop.f32.mrb[0].mxu0
      %3627 = vdwg.mxu0
      %v3628 = vadd.f32 %v3491, %v3600
      %v3629 = vadd.f32 %v3492, %v3605
      %v3630 = vadd.f32 %v3493, %v3610
      %v3631 = vadd.f32 %v3494, %v3615
      %v3632 = vadd.f32 %v3495, %v3620
      %v3633 = vadd.f32 %v3496, %v3625
      %v3635 = vsel %vm1030, %v2513, 0
      %3637 = vmatprep.subr.mxu0 0.0
      %3638 = vmatpush1.msra.mxu0 %v2589
      %3639 = vmatprep.subr.mxu0 0.0
      %3640 = vmatpush1.msra.mxu0 %v2590
      %3641 = vmatprep.subr.mxu0 0.0
      %3642 = vmatpush1.msra.mxu0 %v2591
      %3643 = vmatprep.subr.mxu0 0.0
      %3644 = vmatpush1.msra.mxu0 %v2592
      %3645 = vmatprep.subr.mxu0 0.0
      %3646 = vmatpush1.msra.mxu0 0.0
      %3647 = vmatprep.subr.mxu0 0.0
      %3648 = vmatpush1.msra.mxu0 0.0
      %3649 = vmatprep.subr.mxu0 0.0
      %3650 = vmatpush1.msra.mxu0 0.0
      %3651 = vmatprep.subr.mxu0 0.0
      %3652 = vmatpush1.msra.mxu0 0.0
      %3653 = vmatprep.subr.mxu0 0.0
      %3654 = vmatpush1.msra.mxu0 0.0
      %3655 = vmatprep.subr.mxu0 0.0
      %3656 = vmatpush1.msra.mxu0 0.0
      %3657 = vmatprep.subr.mxu0 0.0
      %3658 = vmatpush1.msra.mxu0 0.0
      %3659 = vmatprep.subr.mxu0 0.0
      %3660 = vmatpush1.msra.mxu0 0.0
      %3661 = vmatprep.subr.mxu0 0.0
      %3662 = vmatpush1.msra.mxu0 0.0
      %3663 = vmatprep.subr.mxu0 0.0
      %3664 = vmatpush1.msra.mxu0 0.0
      %3665 = vmatprep.subr.mxu0 0.0
      %3666 = vmatpush1.msra.mxu0 0.0
      %3667 = vmatprep.subr.mxu0 0.0
      %3668 = vmatpush1.msra.mxu0 0.0
      %3669 = vmatprep.subr.mxu0 0.0
      %3670 = vmatpush1.msra.mxu0 0.0
      %3671 = vmatprep.subr.mxu0 0.0
      %3672 = vmatpush1.msra.mxu0 0.0
      %3673 = vmatprep.subr.mxu0 0.0
      %3674 = vmatpush1.msra.mxu0 0.0
      %3675 = vmatprep.subr.mxu0 0.0
      %3676 = vmatpush1.msra.mxu0 0.0
      %3677 = vmatprep.subr.mxu0 0.0
      %3678 = vmatpush1.msra.mxu0 0.0
      %3679 = vmatprep.subr.mxu0 0.0
      %3680 = vmatpush1.msra.mxu0 0.0
      %3681 = vmatprep.subr.mxu0 0.0
      %3682 = vmatpush1.msra.mxu0 0.0
      %3683 = vmatprep.subr.mxu0 0.0
      %3684 = vmatpush1.msra.mxu0 0.0
      %3685 = vmatprep.subr.mxu0 0.0
      %3686 = vmatpush1.msra.mxu0 0.0
      %3687 = vmatprep.subr.mxu0 0.0
      %3688 = vmatpush1.msra.mxu0 0.0
      %3689 = vmatprep.subr.mxu0 0.0
      %3690 = vmatpush1.msra.mxu0 0.0
      %3691 = vmatprep.subr.mxu0 0.0
      %3692 = vmatpush1.msra.mxu0 0.0
      %3693 = vmatprep.subr.mxu0 0.0
      %3694 = vmatpush1.msra.mxu0 0.0
      %3695 = vmatprep.subr.mxu0 0.0
      %3696 = vmatpush1.msra.mxu0 0.0
      %3697 = vmatprep.subr.mxu0 0.0
      %3698 = vmatpush1.msra.mxu0 0.0
      %3699 = vmatprep.subr.mxu0 0.0
      %3700 = vmatpush1.msra.mxu0 0.0
      %3701 = vmatprep.mubr.f32.mxu0 0.0
      %3702 = vmatmul.mubr.f32.gmra.mrb[0].mxu0 %v2738
      %v3703 = vpop.f32.mrb[0].mxu0
      %v3704 = vadd.f32 0.0, %v3703
      %v3705 = vpop.f32.mrb[0].mxu0
      %3706 = vmatprep.mubr.f32.mxu0 0.0
      %3707 = vmatmul.mubr.f32.gmra.mrb[0].mxu0 %v2741
      %v3708 = vpop.f32.mrb[0].mxu0
      %v3709 = vadd.f32 0.0, %v3708
      %v3710 = vpop.f32.mrb[0].mxu0
      %3711 = vmatprep.mubr.f32.mxu0 0.0
      %3712 = vmatmul.mubr.f32.gmra.mrb[0].mxu0 %v2744
      %v3713 = vpop.f32.mrb[0].mxu0
      %v3714 = vadd.f32 0.0, %v3713
      %v3715 = vpop.f32.mrb[0].mxu0
      %3716 = vmatprep.mubr.f32.mxu0 0.0
      %3717 = vmatmul.mubr.f32.gmra.mrb[0].mxu0 %v2747
      %v3718 = vpop.f32.mrb[0].mxu0
      %v3719 = vadd.f32 0.0, %v3718
      %v3720 = vpop.f32.mrb[0].mxu0
      %3721 = vmatprep.mubr.f32.mxu0 0.0
      %3722 = vmatmul.mubr.f32.gmra.mrb[0].mxu0 %v2750
      %v3723 = vpop.f32.mrb[0].mxu0
      %v3724 = vadd.f32 0.0, %v3723
      %v3725 = vpop.f32.mrb[0].mxu0
      %3726 = vmatprep.mubr.f32.mxu0 0.0
      %3727 = vmatmul.mubr.f32.gmra.mrb[0].mxu0 %v3635
      %v3728 = vpop.f32.mrb[0].mxu0
      %v3729 = vadd.f32 0.0, %v3728
      %v3730 = vpop.f32.mrb[0].mxu0
      %3731 = vdwg.mxu0
      %v3732 = vadd.f32 %v3628, %v3704
      %v3733 = vadd.f32 %v3629, %v3709
      %v3734 = vadd.f32 %v3630, %v3714
      %v3735 = vadd.f32 %v3631, %v3719
      %v3736 = vadd.f32 %v3632, %v3724
      %v3737 = vadd.f32 %v3633, %v3729
      %v3739 = vsel %vm1030, %v2527, 0
      %3741 = vmatprep.subr.mxu0 0.0
      %3742 = vmatpush1.msra.mxu0 %v2593
      %3743 = vmatprep.subr.mxu0 0.0
      %3744 = vmatpush1.msra.mxu0 %v2594
      %3745 = vmatprep.subr.mxu0 0.0
      %3746 = vmatpush1.msra.mxu0 %v2595
      %3747 = vmatprep.subr.mxu0 0.0
      %3748 = vmatpush1.msra.mxu0 %v2596
      %3749 = vmatprep.subr.mxu0 0.0
      %3750 = vmatpush1.msra.mxu0 0.0
      %3751 = vmatprep.subr.mxu0 0.0
      %3752 = vmatpush1.msra.mxu0 0.0
      %3753 = vmatprep.subr.mxu0 0.0
      %3754 = vmatpush1.msra.mxu0 0.0
      %3755 = vmatprep.subr.mxu0 0.0
      %3756 = vmatpush1.msra.mxu0 0.0
      %3757 = vmatprep.subr.mxu0 0.0
      %3758 = vmatpush1.msra.mxu0 0.0
      %3759 = vmatprep.subr.mxu0 0.0
      %3760 = vmatpush1.msra.mxu0 0.0
      %3761 = vmatprep.subr.mxu0 0.0
      %3762 = vmatpush1.msra.mxu0 0.0
      %3763 = vmatprep.subr.mxu0 0.0
      %3764 = vmatpush1.msra.mxu0 0.0
      %3765 = vmatprep.subr.mxu0 0.0
      %3766 = vmatpush1.msra.mxu0 0.0
      %3767 = vmatprep.subr.mxu0 0.0
      %3768 = vmatpush1.msra.mxu0 0.0
      %3769 = vmatprep.subr.mxu0 0.0
      %3770 = vmatpush1.msra.mxu0 0.0
      %3771 = vmatprep.subr.mxu0 0.0
      %3772 = vmatpush1.msra.mxu0 0.0
      %3773 = vmatprep.subr.mxu0 0.0
      %3774 = vmatpush1.msra.mxu0 0.0
      %3775 = vmatprep.subr.mxu0 0.0
      %3776 = vmatpush1.msra.mxu0 0.0
      %3777 = vmatprep.subr.mxu0 0.0
      %3778 = vmatpush1.msra.mxu0 0.0
      %3779 = vmatprep.subr.mxu0 0.0
      %3780 = vmatpush1.msra.mxu0 0.0
      %3781 = vmatprep.subr.mxu0 0.0
      %3782 = vmatpush1.msra.mxu0 0.0
      %3783 = vmatprep.subr.mxu0 0.0
      %3784 = vmatpush1.msra.mxu0 0.0
      %3785 = vmatprep.subr.mxu0 0.0
      %3786 = vmatpush1.msra.mxu0 0.0
      %3787 = vmatprep.subr.mxu0 0.0
      %3788 = vmatpush1.msra.mxu0 0.0
      %3789 = vmatprep.subr.mxu0 0.0
      %3790 = vmatpush1.msra.mxu0 0.0
      %3791 = vmatprep.subr.mxu0 0.0
      %3792 = vmatpush1.msra.mxu0 0.0
      %3793 = vmatprep.subr.mxu0 0.0
      %3794 = vmatpush1.msra.mxu0 0.0
      %3795 = vmatprep.subr.mxu0 0.0
      %3796 = vmatpush1.msra.mxu0 0.0
      %3797 = vmatprep.subr.mxu0 0.0
      %3798 = vmatpush1.msra.mxu0 0.0
      %3799 = vmatprep.subr.mxu0 0.0
      %3800 = vmatpush1.msra.mxu0 0.0
      %3801 = vmatprep.subr.mxu0 0.0
      %3802 = vmatpush1.msra.mxu0 0.0
      %3803 = vmatprep.subr.mxu0 0.0
      %3804 = vmatpush1.msra.mxu0 0.0
      %3805 = vmatprep.mubr.f32.mxu0 0.0
      %3806 = vmatmul.mubr.f32.gmra.mrb[0].mxu0 %v2625
      %v3807 = vpop.f32.mrb[0].mxu0
      %v3808 = vadd.f32 0.0, %v3807
      %v3809 = vpop.f32.mrb[0].mxu0
      %3810 = vmatprep.mubr.f32.mxu0 0.0
      %3811 = vmatmul.mubr.f32.gmra.mrb[0].mxu0 %v2628
      %v3812 = vpop.f32.mrb[0].mxu0
      %v3813 = vadd.f32 0.0, %v3812
      %v3814 = vpop.f32.mrb[0].mxu0
      %3815 = vmatprep.mubr.f32.mxu0 0.0
      %3816 = vmatmul.mubr.f32.gmra.mrb[0].mxu0 %v2631
      %v3817 = vpop.f32.mrb[0].mxu0
      %v3818 = vadd.f32 0.0, %v3817
      %v3819 = vpop.f32.mrb[0].mxu0
      %3820 = vmatprep.mubr.f32.mxu0 0.0
      %3821 = vmatmul.mubr.f32.gmra.mrb[0].mxu0 %v2634
      %v3822 = vpop.f32.mrb[0].mxu0
      %v3823 = vadd.f32 0.0, %v3822
      %v3824 = vpop.f32.mrb[0].mxu0
      %3825 = vmatprep.mubr.f32.mxu0 0.0
      %3826 = vmatmul.mubr.f32.gmra.mrb[0].mxu0 %v2637
      %v3827 = vpop.f32.mrb[0].mxu0
      %v3828 = vadd.f32 0.0, %v3827
      %v3829 = vpop.f32.mrb[0].mxu0
      %3830 = vmatprep.mubr.f32.mxu0 0.0
      %3831 = vmatmul.mubr.f32.gmra.mrb[0].mxu0 %v3739
      %v3832 = vpop.f32.mrb[0].mxu0
      %v3833 = vadd.f32 0.0, %v3832
      %v3834 = vpop.f32.mrb[0].mxu0
      %3835 = vdwg.mxu0
      %v3836 = vadd.f32 %v3732, %v3808
      %v3837 = vadd.f32 %v3733, %v3813
      %v3838 = vadd.f32 %v3734, %v3818
      %v3839 = vadd.f32 %v3735, %v3823
      %v3840 = vadd.f32 %v3736, %v3828
      %v3841 = vadd.f32 %v3737, %v3833
      %v3843 = vrot.slane %v2513, 1
      %v3844 = vrot.slane %v2514, 1
      %v3845 = vsel %vm2853, %v3843, %v3844
      %v3846 = vsel %vm1030, %v3845, 0
      %3848 = vmatprep.subr.mxu0 0.0
      %3849 = vmatpush1.msra.mxu0 %v2597
      %3850 = vmatprep.subr.mxu0 0.0
      %3851 = vmatpush1.msra.mxu0 %v2598
      %3852 = vmatprep.subr.mxu0 0.0
      %3853 = vmatpush1.msra.mxu0 %v2599
      %3854 = vmatprep.subr.mxu0 0.0
      %3855 = vmatpush1.msra.mxu0 %v2600
      %3856 = vmatprep.subr.mxu0 0.0
      %3857 = vmatpush1.msra.mxu0 0.0
      %3858 = vmatprep.subr.mxu0 0.0
      %3859 = vmatpush1.msra.mxu0 0.0
      %3860 = vmatprep.subr.mxu0 0.0
      %3861 = vmatpush1.msra.mxu0 0.0
      %3862 = vmatprep.subr.mxu0 0.0
      %3863 = vmatpush1.msra.mxu0 0.0
      %3864 = vmatprep.subr.mxu0 0.0
      %3865 = vmatpush1.msra.mxu0 0.0
      %3866 = vmatprep.subr.mxu0 0.0
      %3867 = vmatpush1.msra.mxu0 0.0
      %3868 = vmatprep.subr.mxu0 0.0
      %3869 = vmatpush1.msra.mxu0 0.0
      %3870 = vmatprep.subr.mxu0 0.0
      %3871 = vmatpush1.msra.mxu0 0.0
      %3872 = vmatprep.subr.mxu0 0.0
      %3873 = vmatpush1.msra.mxu0 0.0
      %3874 = vmatprep.subr.mxu0 0.0
      %3875 = vmatpush1.msra.mxu0 0.0
      %3876 = vmatprep.subr.mxu0 0.0
      %3877 = vmatpush1.msra.mxu0 0.0
      %3878 = vmatprep.subr.mxu0 0.0
      %3879 = vmatpush1.msra.mxu0 0.0
      %3880 = vmatprep.subr.mxu0 0.0
      %3881 = vmatpush1.msra.mxu0 0.0
      %3882 = vmatprep.subr.mxu0 0.0
      %3883 = vmatpush1.msra.mxu0 0.0
      %3884 = vmatprep.subr.mxu0 0.0
      %3885 = vmatpush1.msra.mxu0 0.0
      %3886 = vmatprep.subr.mxu0 0.0
      %3887 = vmatpush1.msra.mxu0 0.0
      %3888 = vmatprep.subr.mxu0 0.0
      %3889 = vmatpush1.msra.mxu0 0.0
      %3890 = vmatprep.subr.mxu0 0.0
      %3891 = vmatpush1.msra.mxu0 0.0
      %3892 = vmatprep.subr.mxu0 0.0
      %3893 = vmatpush1.msra.mxu0 0.0
      %3894 = vmatprep.subr.mxu0 0.0
      %3895 = vmatpush1.msra.mxu0 0.0
      %3896 = vmatprep.subr.mxu0 0.0
      %3897 = vmatpush1.msra.mxu0 0.0
      %3898 = vmatprep.subr.mxu0 0.0
      %3899 = vmatpush1.msra.mxu0 0.0
      %3900 = vmatprep.subr.mxu0 0.0
      %3901 = vmatpush1.msra.mxu0 0.0
      %3902 = vmatprep.subr.mxu0 0.0
      %3903 = vmatpush1.msra.mxu0 0.0
      %3904 = vmatprep.subr.mxu0 0.0
      %3905 = vmatpush1.msra.mxu0 0.0
      %3906 = vmatprep.subr.mxu0 0.0
      %3907 = vmatpush1.msra.mxu0 0.0
      %3908 = vmatprep.subr.mxu0 0.0
      %3909 = vmatpush1.msra.mxu0 0.0
      %3910 = vmatprep.subr.mxu0 0.0
      %3911 = vmatpush1.msra.mxu0 0.0
      %3912 = vmatprep.mubr.f32.mxu0 0.0
      %3913 = vmatmul.mubr.f32.gmra.mrb[0].mxu0 %v2874
      %v3914 = vpop.f32.mrb[0].mxu0
      %v3915 = vadd.f32 0.0, %v3914
      %v3916 = vpop.f32.mrb[0].mxu0
      %3917 = vmatprep.mubr.f32.mxu0 0.0
      %3918 = vmatmul.mubr.f32.gmra.mrb[0].mxu0 %v2876
      %v3919 = vpop.f32.mrb[0].mxu0
      %v3920 = vadd.f32 0.0, %v3919
      %v3921 = vpop.f32.mrb[0].mxu0
      %3922 = vmatprep.mubr.f32.mxu0 0.0
      %3923 = vmatmul.mubr.f32.gmra.mrb[0].mxu0 %v2878
      %v3924 = vpop.f32.mrb[0].mxu0
      %v3925 = vadd.f32 0.0, %v3924
      %v3926 = vpop.f32.mrb[0].mxu0
      %3927 = vmatprep.mubr.f32.mxu0 0.0
      %3928 = vmatmul.mubr.f32.gmra.mrb[0].mxu0 %v2880
      %v3929 = vpop.f32.mrb[0].mxu0
      %v3930 = vadd.f32 0.0, %v3929
      %v3931 = vpop.f32.mrb[0].mxu0
      %3932 = vmatprep.mubr.f32.mxu0 0.0
      %3933 = vmatmul.mubr.f32.gmra.mrb[0].mxu0 %v2882
      %v3934 = vpop.f32.mrb[0].mxu0
      %v3935 = vadd.f32 0.0, %v3934
      %v3936 = vpop.f32.mrb[0].mxu0
      %3937 = vmatprep.mubr.f32.mxu0 0.0
      %3938 = vmatmul.mubr.f32.gmra.mrb[0].mxu0 %v3846
      %v3939 = vpop.f32.mrb[0].mxu0
      %v3940 = vadd.f32 0.0, %v3939
      %v3941 = vpop.f32.mrb[0].mxu0
      %3942 = vdwg.mxu0
      %v3943 = vadd.f32 %v3836, %v3915
      %v3944 = vadd.f32 %v3837, %v3920
      %v3945 = vadd.f32 %v3838, %v3925
      %v3946 = vadd.f32 %v3839, %v3930
      %v3947 = vadd.f32 %v3840, %v3935
      %v3948 = vadd.f32 %v3841, %v3940
      %v3950 = vrot.slane %v2527, 1
      %v3951 = vrot.slane %v2528, 1
      %v3952 = vsel %vm2853, %v3950, %v3951
      %v3953 = vsel %vm1030, %v3952, 0
      %3955 = vmatprep.subr.mxu0 0.0
      %3956 = vmatpush1.msra.mxu0 %v2601
      %3957 = vmatprep.subr.mxu0 0.0
      %3958 = vmatpush1.msra.mxu0 %v2602
      %3959 = vmatprep.subr.mxu0 0.0
      %3960 = vmatpush1.msra.mxu0 %v2603
      %3961 = vmatprep.subr.mxu0 0.0
      %3962 = vmatpush1.msra.mxu0 %v2604
      %3963 = vmatprep.subr.mxu0 0.0
      %3964 = vmatpush1.msra.mxu0 0.0
      %3965 = vmatprep.subr.mxu0 0.0
      %3966 = vmatpush1.msra.mxu0 0.0
      %3967 = vmatprep.subr.mxu0 0.0
      %3968 = vmatpush1.msra.mxu0 0.0
      %3969 = vmatprep.subr.mxu0 0.0
      %3970 = vmatpush1.msra.mxu0 0.0
      %3971 = vmatprep.subr.mxu0 0.0
      %3972 = vmatpush1.msra.mxu0 0.0
      %3973 = vmatprep.subr.mxu0 0.0
      %3974 = vmatpush1.msra.mxu0 0.0
      %3975 = vmatprep.subr.mxu0 0.0
      %3976 = vmatpush1.msra.mxu0 0.0
      %3977 = vmatprep.subr.mxu0 0.0
      %3978 = vmatpush1.msra.mxu0 0.0
      %3979 = vmatprep.subr.mxu0 0.0
      %3980 = vmatpush1.msra.mxu0 0.0
      %3981 = vmatprep.subr.mxu0 0.0
      %3982 = vmatpush1.msra.mxu0 0.0
      %3983 = vmatprep.subr.mxu0 0.0
      %3984 = vmatpush1.msra.mxu0 0.0
      %3985 = vmatprep.subr.mxu0 0.0
      %3986 = vmatpush1.msra.mxu0 0.0
      %3987 = vmatprep.subr.mxu0 0.0
      %3988 = vmatpush1.msra.mxu0 0.0
      %3989 = vmatprep.subr.mxu0 0.0
      %3990 = vmatpush1.msra.mxu0 0.0
      %3991 = vmatprep.subr.mxu0 0.0
      %3992 = vmatpush1.msra.mxu0 0.0
      %3993 = vmatprep.subr.mxu0 0.0
      %3994 = vmatpush1.msra.mxu0 0.0
      %3995 = vmatprep.subr.mxu0 0.0
      %3996 = vmatpush1.msra.mxu0 0.0
      %3997 = vmatprep.subr.mxu0 0.0
      %3998 = vmatpush1.msra.mxu0 0.0
      %3999 = vmatprep.subr.mxu0 0.0
      %4000 = vmatpush1.msra.mxu0 0.0
      %4001 = vmatprep.subr.mxu0 0.0
      %4002 = vmatpush1.msra.mxu0 0.0
      %4003 = vmatprep.subr.mxu0 0.0
      %4004 = vmatpush1.msra.mxu0 0.0
      %4005 = vmatprep.subr.mxu0 0.0
      %4006 = vmatpush1.msra.mxu0 0.0
      %4007 = vmatprep.subr.mxu0 0.0
      %4008 = vmatpush1.msra.mxu0 0.0
      %4009 = vmatprep.subr.mxu0 0.0
      %4010 = vmatpush1.msra.mxu0 0.0
      %4011 = vmatprep.subr.mxu0 0.0
      %4012 = vmatpush1.msra.mxu0 0.0
      %4013 = vmatprep.subr.mxu0 0.0
      %4014 = vmatpush1.msra.mxu0 0.0
      %4015 = vmatprep.subr.mxu0 0.0
      %4016 = vmatpush1.msra.mxu0 0.0
      %4017 = vmatprep.subr.mxu0 0.0
      %4018 = vmatpush1.msra.mxu0 0.0
      %4019 = vmatprep.mubr.f32.mxu0 0.0
      %4020 = vmatmul.mubr.f32.gmra.mrb[0].mxu0 %v3011
      %v4021 = vpop.f32.mrb[0].mxu0
      %v4022 = vadd.f32 0.0, %v4021
      %v4023 = vpop.f32.mrb[0].mxu0
      %4024 = vmatprep.mubr.f32.mxu0 0.0
      %4025 = vmatmul.mubr.f32.gmra.mrb[0].mxu0 %v3013
      %v4026 = vpop.f32.mrb[0].mxu0
      %v4027 = vadd.f32 0.0, %v4026
      %v4028 = vpop.f32.mrb[0].mxu0
      %4029 = vmatprep.mubr.f32.mxu0 0.0
      %4030 = vmatmul.mubr.f32.gmra.mrb[0].mxu0 %v3015
      %v4031 = vpop.f32.mrb[0].mxu0
      %v4032 = vadd.f32 0.0, %v4031
      %v4033 = vpop.f32.mrb[0].mxu0
      %4034 = vmatprep.mubr.f32.mxu0 0.0
      %4035 = vmatmul.mubr.f32.gmra.mrb[0].mxu0 %v3017
      %v4036 = vpop.f32.mrb[0].mxu0
      %v4037 = vadd.f32 0.0, %v4036
      %v4038 = vpop.f32.mrb[0].mxu0
      %4039 = vmatprep.mubr.f32.mxu0 0.0
      %4040 = vmatmul.mubr.f32.gmra.mrb[0].mxu0 %v3019
      %v4041 = vpop.f32.mrb[0].mxu0
      %v4042 = vadd.f32 0.0, %v4041
      %v4043 = vpop.f32.mrb[0].mxu0
      %4044 = vmatprep.mubr.f32.mxu0 0.0
      %4045 = vmatmul.mubr.f32.gmra.mrb[0].mxu0 %v3953
      %v4046 = vpop.f32.mrb[0].mxu0
      %v4047 = vadd.f32 0.0, %v4046
      %v4048 = vpop.f32.mrb[0].mxu0
      %4049 = vdwg.mxu0
      %v4050 = vadd.f32 %v3943, %v4022
      %v4051 = vadd.f32 %v3944, %v4027
      %v4052 = vadd.f32 %v3945, %v4032
      %v4053 = vadd.f32 %v3946, %v4037
      %v4054 = vadd.f32 %v3947, %v4042
      %v4055 = vadd.f32 %v3948, %v4047
      %v4057 = vsel %vm1030, %v2541, 0
      %4059 = vmatprep.subr.mxu0 0.0
      %4060 = vmatpush1.msra.mxu0 %v2605
      %4061 = vmatprep.subr.mxu0 0.0
      %4062 = vmatpush1.msra.mxu0 %v2606
      %4063 = vmatprep.subr.mxu0 0.0
      %4064 = vmatpush1.msra.mxu0 %v2607
      %4065 = vmatprep.subr.mxu0 0.0
      %4066 = vmatpush1.msra.mxu0 %v2608
      %4067 = vmatprep.subr.mxu0 0.0
      %4068 = vmatpush1.msra.mxu0 0.0
      %4069 = vmatprep.subr.mxu0 0.0
      %4070 = vmatpush1.msra.mxu0 0.0
      %4071 = vmatprep.subr.mxu0 0.0
      %4072 = vmatpush1.msra.mxu0 0.0
      %4073 = vmatprep.subr.mxu0 0.0
      %4074 = vmatpush1.msra.mxu0 0.0
      %4075 = vmatprep.subr.mxu0 0.0
      %4076 = vmatpush1.msra.mxu0 0.0
      %4077 = vmatprep.subr.mxu0 0.0
      %4078 = vmatpush1.msra.mxu0 0.0
      %4079 = vmatprep.subr.mxu0 0.0
      %4080 = vmatpush1.msra.mxu0 0.0
      %4081 = vmatprep.subr.mxu0 0.0
      %4082 = vmatpush1.msra.mxu0 0.0
      %4083 = vmatprep.subr.mxu0 0.0
      %4084 = vmatpush1.msra.mxu0 0.0
      %4085 = vmatprep.subr.mxu0 0.0
      %4086 = vmatpush1.msra.mxu0 0.0
      %4087 = vmatprep.subr.mxu0 0.0
      %4088 = vmatpush1.msra.mxu0 0.0
      %4089 = vmatprep.subr.mxu0 0.0
      %4090 = vmatpush1.msra.mxu0 0.0
      %4091 = vmatprep.subr.mxu0 0.0
      %4092 = vmatpush1.msra.mxu0 0.0
      %4093 = vmatprep.subr.mxu0 0.0
      %4094 = vmatpush1.msra.mxu0 0.0
      %4095 = vmatprep.subr.mxu0 0.0
      %4096 = vmatpush1.msra.mxu0 0.0
      %4097 = vmatprep.subr.mxu0 0.0
      %4098 = vmatpush1.msra.mxu0 0.0
      %4099 = vmatprep.subr.mxu0 0.0
      %4100 = vmatpush1.msra.mxu0 0.0
      %4101 = vmatprep.subr.mxu0 0.0
      %4102 = vmatpush1.msra.mxu0 0.0
      %4103 = vmatprep.subr.mxu0 0.0
      %4104 = vmatpush1.msra.mxu0 0.0
      %4105 = vmatprep.subr.mxu0 0.0
      %4106 = vmatpush1.msra.mxu0 0.0
      %4107 = vmatprep.subr.mxu0 0.0
      %4108 = vmatpush1.msra.mxu0 0.0
      %4109 = vmatprep.subr.mxu0 0.0
      %4110 = vmatpush1.msra.mxu0 0.0
      %4111 = vmatprep.subr.mxu0 0.0
      %4112 = vmatpush1.msra.mxu0 0.0
      %4113 = vmatprep.subr.mxu0 0.0
      %4114 = vmatpush1.msra.mxu0 0.0
      %4115 = vmatprep.subr.mxu0 0.0
      %4116 = vmatpush1.msra.mxu0 0.0
      %4117 = vmatprep.subr.mxu0 0.0
      %4118 = vmatpush1.msra.mxu0 0.0
      %4119 = vmatprep.subr.mxu0 0.0
      %4120 = vmatpush1.msra.mxu0 0.0
      %4121 = vmatprep.subr.mxu0 0.0
      %4122 = vmatpush1.msra.mxu0 0.0
      %4123 = vmatprep.mubr.f32.mxu0 0.0
      %4124 = vmatmul.mubr.f32.gmra.mrb[0].mxu0 %v3126
      %v4125 = vpop.f32.mrb[0].mxu0
      %v4126 = vadd.f32 0.0, %v4125
      %v4127 = vpop.f32.mrb[0].mxu0
      %4128 = vmatprep.mubr.f32.mxu0 0.0
      %4129 = vmatmul.mubr.f32.gmra.mrb[0].mxu0 %v3129
      %v4130 = vpop.f32.mrb[0].mxu0
      %v4131 = vadd.f32 0.0, %v4130
      %v4132 = vpop.f32.mrb[0].mxu0
      %4133 = vmatprep.mubr.f32.mxu0 0.0
      %4134 = vmatmul.mubr.f32.gmra.mrb[0].mxu0 %v3132
      %v4135 = vpop.f32.mrb[0].mxu0
      %v4136 = vadd.f32 0.0, %v4135
      %v4137 = vpop.f32.mrb[0].mxu0
      %4138 = vmatprep.mubr.f32.mxu0 0.0
      %4139 = vmatmul.mubr.f32.gmra.mrb[0].mxu0 %v3135
      %v4140 = vpop.f32.mrb[0].mxu0
      %v4141 = vadd.f32 0.0, %v4140
      %v4142 = vpop.f32.mrb[0].mxu0
      %4143 = vmatprep.mubr.f32.mxu0 0.0
      %4144 = vmatmul.mubr.f32.gmra.mrb[0].mxu0 %v3138
      %v4145 = vpop.f32.mrb[0].mxu0
      %v4146 = vadd.f32 0.0, %v4145
      %v4147 = vpop.f32.mrb[0].mxu0
      %4148 = vmatprep.mubr.f32.mxu0 0.0
      %4149 = vmatmul.mubr.f32.gmra.mrb[0].mxu0 %v4057
      %v4150 = vpop.f32.mrb[0].mxu0
      %v4151 = vadd.f32 0.0, %v4150
      %v4152 = vpop.f32.mrb[0].mxu0
      %4153 = vdwg.mxu0
      %v4154 = vadd.f32 %v4050, %v4126
      %v4155 = vadd.f32 %v4051, %v4131
      %v4156 = vadd.f32 %v4052, %v4136
      %v4157 = vadd.f32 %v4053, %v4141
      %v4158 = vadd.f32 %v4054, %v4146
      %v4159 = vadd.f32 %v4055, %v4151
      %v4161 = vsel %vm1030, %v2555, 0
      %4163 = vmatprep.subr.mxu0 0.0
      %4164 = vmatpush1.msra.mxu0 %v2609
      %4165 = vmatprep.subr.mxu0 0.0
      %4166 = vmatpush1.msra.mxu0 %v2610
      %4167 = vmatprep.subr.mxu0 0.0
      %4168 = vmatpush1.msra.mxu0 %v2611
      %4169 = vmatprep.subr.mxu0 0.0
      %4170 = vmatpush1.msra.mxu0 %v2612
      %4171 = vmatprep.subr.mxu0 0.0
      %4172 = vmatpush1.msra.mxu0 0.0
      %4173 = vmatprep.subr.mxu0 0.0
      %4174 = vmatpush1.msra.mxu0 0.0
      %4175 = vmatprep.subr.mxu0 0.0
      %4176 = vmatpush1.msra.mxu0 0.0
      %4177 = vmatprep.subr.mxu0 0.0
      %4178 = vmatpush1.msra.mxu0 0.0
      %4179 = vmatprep.subr.mxu0 0.0
      %4180 = vmatpush1.msra.mxu0 0.0
      %4181 = vmatprep.subr.mxu0 0.0
      %4182 = vmatpush1.msra.mxu0 0.0
      %4183 = vmatprep.subr.mxu0 0.0
      %4184 = vmatpush1.msra.mxu0 0.0
      %4185 = vmatprep.subr.mxu0 0.0
      %4186 = vmatpush1.msra.mxu0 0.0
      %4187 = vmatprep.subr.mxu0 0.0
      %4188 = vmatpush1.msra.mxu0 0.0
      %4189 = vmatprep.subr.mxu0 0.0
      %4190 = vmatpush1.msra.mxu0 0.0
      %4191 = vmatprep.subr.mxu0 0.0
      %4192 = vmatpush1.msra.mxu0 0.0
      %4193 = vmatprep.subr.mxu0 0.0
      %4194 = vmatpush1.msra.mxu0 0.0
      %4195 = vmatprep.subr.mxu0 0.0
      %4196 = vmatpush1.msra.mxu0 0.0
      %4197 = vmatprep.subr.mxu0 0.0
      %4198 = vmatpush1.msra.mxu0 0.0
      %4199 = vmatprep.subr.mxu0 0.0
      %4200 = vmatpush1.msra.mxu0 0.0
      %4201 = vmatprep.subr.mxu0 0.0
      %4202 = vmatpush1.msra.mxu0 0.0
      %4203 = vmatprep.subr.mxu0 0.0
      %4204 = vmatpush1.msra.mxu0 0.0
      %4205 = vmatprep.subr.mxu0 0.0
      %4206 = vmatpush1.msra.mxu0 0.0
      %4207 = vmatprep.subr.mxu0 0.0
      %4208 = vmatpush1.msra.mxu0 0.0
      %4209 = vmatprep.subr.mxu0 0.0
      %4210 = vmatpush1.msra.mxu0 0.0
      %4211 = vmatprep.subr.mxu0 0.0
      %4212 = vmatpush1.msra.mxu0 0.0
      %4213 = vmatprep.subr.mxu0 0.0
      %4214 = vmatpush1.msra.mxu0 0.0
      %4215 = vmatprep.subr.mxu0 0.0
      %4216 = vmatpush1.msra.mxu0 0.0
      %4217 = vmatprep.subr.mxu0 0.0
      %4218 = vmatpush1.msra.mxu0 0.0
      %4219 = vmatprep.subr.mxu0 0.0
      %4220 = vmatpush1.msra.mxu0 0.0
      %4221 = vmatprep.subr.mxu0 0.0
      %4222 = vmatpush1.msra.mxu0 0.0
      %4223 = vmatprep.subr.mxu0 0.0
      %4224 = vmatpush1.msra.mxu0 0.0
      %4225 = vmatprep.subr.mxu0 0.0
      %4226 = vmatpush1.msra.mxu0 0.0
      %4227 = vmatprep.mubr.f32.mxu0 0.0
      %4228 = vmatmul.mubr.f32.gmra.mrb[0].mxu0 %v3245
      %v4229 = vpop.f32.mrb[0].mxu0
      %v4230 = vadd.f32 0.0, %v4229
      %v4231 = vpop.f32.mrb[0].mxu0
      %4232 = vmatprep.mubr.f32.mxu0 0.0
      %4233 = vmatmul.mubr.f32.gmra.mrb[0].mxu0 %v3248
      %v4234 = vpop.f32.mrb[0].mxu0
      %v4235 = vadd.f32 0.0, %v4234
      %v4236 = vpop.f32.mrb[0].mxu0
      %4237 = vmatprep.mubr.f32.mxu0 0.0
      %4238 = vmatmul.mubr.f32.gmra.mrb[0].mxu0 %v3251
      %v4239 = vpop.f32.mrb[0].mxu0
      %v4240 = vadd.f32 0.0, %v4239
      %v4241 = vpop.f32.mrb[0].mxu0
      %4242 = vmatprep.mubr.f32.mxu0 0.0
      %4243 = vmatmul.mubr.f32.gmra.mrb[0].mxu0 %v3254
      %v4244 = vpop.f32.mrb[0].mxu0
      %v4245 = vadd.f32 0.0, %v4244
      %v4246 = vpop.f32.mrb[0].mxu0
      %4247 = vmatprep.mubr.f32.mxu0 0.0
      %4248 = vmatmul.mubr.f32.gmra.mrb[0].mxu0 %v3257
      %v4249 = vpop.f32.mrb[0].mxu0
      %v4250 = vadd.f32 0.0, %v4249
      %v4251 = vpop.f32.mrb[0].mxu0
      %4252 = vmatprep.mubr.f32.mxu0 0.0
      %4253 = vmatmul.mubr.f32.gmra.mrb[0].mxu0 %v4161
      %v4254 = vpop.f32.mrb[0].mxu0
      %v4255 = vadd.f32 0.0, %v4254
      %v4256 = vpop.f32.mrb[0].mxu0
      %4257 = vdwg.mxu0
      %v4258 = vadd.f32 %v4154, %v4230
      %v4259 = vadd.f32 %v4155, %v4235
      %v4260 = vadd.f32 %v4156, %v4240
      %v4261 = vadd.f32 %v4157, %v4245
      %v4262 = vadd.f32 %v4158, %v4250
      %v4263 = vadd.f32 %v4159, %v4255
      %v4265 = vrot.slane %v2541, 1
      %v4266 = vrot.slane %v2542, 1
      %v4267 = vsel %vm2853, %v4265, %v4266
      %v4268 = vsel %vm1030, %v4267, 0
      %4270 = vmatprep.subr.mxu0 0.0
      %4271 = vmatpush1.msra.mxu0 %v2613
      %4272 = vmatprep.subr.mxu0 0.0
      %4273 = vmatpush1.msra.mxu0 %v2614
      %4274 = vmatprep.subr.mxu0 0.0
      %4275 = vmatpush1.msra.mxu0 %v2615
      %4276 = vmatprep.subr.mxu0 0.0
      %4277 = vmatpush1.msra.mxu0 %v2616
      %4278 = vmatprep.subr.mxu0 0.0
      %4279 = vmatpush1.msra.mxu0 0.0
      %4280 = vmatprep.subr.mxu0 0.0
      %4281 = vmatpush1.msra.mxu0 0.0
      %4282 = vmatprep.subr.mxu0 0.0
      %4283 = vmatpush1.msra.mxu0 0.0
      %4284 = vmatprep.subr.mxu0 0.0
      %4285 = vmatpush1.msra.mxu0 0.0
      %4286 = vmatprep.subr.mxu0 0.0
      %4287 = vmatpush1.msra.mxu0 0.0
      %4288 = vmatprep.subr.mxu0 0.0
      %4289 = vmatpush1.msra.mxu0 0.0
      %4290 = vmatprep.subr.mxu0 0.0
      %4291 = vmatpush1.msra.mxu0 0.0
      %4292 = vmatprep.subr.mxu0 0.0
      %4293 = vmatpush1.msra.mxu0 0.0
      %4294 = vmatprep.subr.mxu0 0.0
      %4295 = vmatpush1.msra.mxu0 0.0
      %4296 = vmatprep.subr.mxu0 0.0
      %4297 = vmatpush1.msra.mxu0 0.0
      %4298 = vmatprep.subr.mxu0 0.0
      %4299 = vmatpush1.msra.mxu0 0.0
      %4300 = vmatprep.subr.mxu0 0.0
      %4301 = vmatpush1.msra.mxu0 0.0
      %4302 = vmatprep.subr.mxu0 0.0
      %4303 = vmatpush1.msra.mxu0 0.0
      %4304 = vmatprep.subr.mxu0 0.0
      %4305 = vmatpush1.msra.mxu0 0.0
      %4306 = vmatprep.subr.mxu0 0.0
      %4307 = vmatpush1.msra.mxu0 0.0
      %4308 = vmatprep.subr.mxu0 0.0
      %4309 = vmatpush1.msra.mxu0 0.0
      %4310 = vmatprep.subr.mxu0 0.0
      %4311 = vmatpush1.msra.mxu0 0.0
      %4312 = vmatprep.subr.mxu0 0.0
      %4313 = vmatpush1.msra.mxu0 0.0
      %4314 = vmatprep.subr.mxu0 0.0
      %4315 = vmatpush1.msra.mxu0 0.0
      %4316 = vmatprep.subr.mxu0 0.0
      %4317 = vmatpush1.msra.mxu0 0.0
      %4318 = vmatprep.subr.mxu0 0.0
      %4319 = vmatpush1.msra.mxu0 0.0
      %4320 = vmatprep.subr.mxu0 0.0
      %4321 = vmatpush1.msra.mxu0 0.0
      %4322 = vmatprep.subr.mxu0 0.0
      %4323 = vmatpush1.msra.mxu0 0.0
      %4324 = vmatprep.subr.mxu0 0.0
      %4325 = vmatpush1.msra.mxu0 0.0
      %4326 = vmatprep.subr.mxu0 0.0
      %4327 = vmatpush1.msra.mxu0 0.0
      %4328 = vmatprep.subr.mxu0 0.0
      %4329 = vmatpush1.msra.mxu0 0.0
      %4330 = vmatprep.subr.mxu0 0.0
      %4331 = vmatpush1.msra.mxu0 0.0
      %4332 = vmatprep.subr.mxu0 0.0
      %4333 = vmatpush1.msra.mxu0 0.0
      %4334 = vmatprep.mubr.f32.mxu0 0.0
      %4335 = vmatmul.mubr.f32.gmra.mrb[0].mxu0 %v3386
      %v4336 = vpop.f32.mrb[0].mxu0
      %v4337 = vadd.f32 0.0, %v4336
      %v4338 = vpop.f32.mrb[0].mxu0
      %4339 = vmatprep.mubr.f32.mxu0 0.0
      %4340 = vmatmul.mubr.f32.gmra.mrb[0].mxu0 %v3388
      %v4341 = vpop.f32.mrb[0].mxu0
      %v4342 = vadd.f32 0.0, %v4341
      %v4343 = vpop.f32.mrb[0].mxu0
      %4344 = vmatprep.mubr.f32.mxu0 0.0
      %4345 = vmatmul.mubr.f32.gmra.mrb[0].mxu0 %v3390
      %v4346 = vpop.f32.mrb[0].mxu0
      %v4347 = vadd.f32 0.0, %v4346
      %v4348 = vpop.f32.mrb[0].mxu0
      %4349 = vmatprep.mubr.f32.mxu0 0.0
      %4350 = vmatmul.mubr.f32.gmra.mrb[0].mxu0 %v3392
      %v4351 = vpop.f32.mrb[0].mxu0
      %v4352 = vadd.f32 0.0, %v4351
      %v4353 = vpop.f32.mrb[0].mxu0
      %4354 = vmatprep.mubr.f32.mxu0 0.0
      %4355 = vmatmul.mubr.f32.gmra.mrb[0].mxu0 %v3394
      %v4356 = vpop.f32.mrb[0].mxu0
      %v4357 = vadd.f32 0.0, %v4356
      %v4358 = vpop.f32.mrb[0].mxu0
      %4359 = vmatprep.mubr.f32.mxu0 0.0
      %4360 = vmatmul.mubr.f32.gmra.mrb[0].mxu0 %v4268
      %v4361 = vpop.f32.mrb[0].mxu0
      %v4362 = vadd.f32 0.0, %v4361
      %v4363 = vpop.f32.mrb[0].mxu0
      %4364 = vdwg.mxu0
      %v4365 = vadd.f32 %v4258, %v4337
      %v4366 = vadd.f32 %v4259, %v4342
      %v4367 = vadd.f32 %v4260, %v4347
      %v4368 = vadd.f32 %v4261, %v4352
      %v4369 = vadd.f32 %v4262, %v4357
      %v4370 = vadd.f32 %v4263, %v4362
      %v4372 = vrot.slane %v2555, 1
      %v4373 = vrot.slane %v2556, 1
      %v4374 = vsel %vm2853, %v4372, %v4373
      %v4375 = vsel %vm1030, %v4374, 0
      %4377 = vmatprep.subr.mxu0 0.0
      %4378 = vmatpush1.msra.mxu0 %v2617
      %4379 = vmatprep.subr.mxu0 0.0
      %4380 = vmatpush1.msra.mxu0 %v2618
      %4381 = vmatprep.subr.mxu0 0.0
      %4382 = vmatpush1.msra.mxu0 %v2619
      %4383 = vmatprep.subr.mxu0 0.0
      %4384 = vmatpush1.msra.mxu0 %v2620
      %4385 = vmatprep.subr.mxu0 0.0
      %4386 = vmatpush1.msra.mxu0 0.0
      %4387 = vmatprep.subr.mxu0 0.0
      %4388 = vmatpush1.msra.mxu0 0.0
      %4389 = vmatprep.subr.mxu0 0.0
      %4390 = vmatpush1.msra.mxu0 0.0
      %4391 = vmatprep.subr.mxu0 0.0
      %4392 = vmatpush1.msra.mxu0 0.0
      %4393 = vmatprep.subr.mxu0 0.0
      %4394 = vmatpush1.msra.mxu0 0.0
      %4395 = vmatprep.subr.mxu0 0.0
      %4396 = vmatpush1.msra.mxu0 0.0
      %4397 = vmatprep.subr.mxu0 0.0
      %4398 = vmatpush1.msra.mxu0 0.0
      %4399 = vmatprep.subr.mxu0 0.0
      %4400 = vmatpush1.msra.mxu0 0.0
      %4401 = vmatprep.subr.mxu0 0.0
      %4402 = vmatpush1.msra.mxu0 0.0
      %4403 = vmatprep.subr.mxu0 0.0
      %4404 = vmatpush1.msra.mxu0 0.0
      %4405 = vmatprep.subr.mxu0 0.0
      %4406 = vmatpush1.msra.mxu0 0.0
      %4407 = vmatprep.subr.mxu0 0.0
      %4408 = vmatpush1.msra.mxu0 0.0
      %4409 = vmatprep.subr.mxu0 0.0
      %4410 = vmatpush1.msra.mxu0 0.0
      %4411 = vmatprep.subr.mxu0 0.0
      %4412 = vmatpush1.msra.mxu0 0.0
      %4413 = vmatprep.subr.mxu0 0.0
      %4414 = vmatpush1.msra.mxu0 0.0
      %4415 = vmatprep.subr.mxu0 0.0
      %4416 = vmatpush1.msra.mxu0 0.0
      %4417 = vmatprep.subr.mxu0 0.0
      %4418 = vmatpush1.msra.mxu0 0.0
      %4419 = vmatprep.subr.mxu0 0.0
      %4420 = vmatpush1.msra.mxu0 0.0
      %4421 = vmatprep.subr.mxu0 0.0
      %4422 = vmatpush1.msra.mxu0 0.0
      %4423 = vmatprep.subr.mxu0 0.0
      %4424 = vmatpush1.msra.mxu0 0.0
      %4425 = vmatprep.subr.mxu0 0.0
      %4426 = vmatpush1.msra.mxu0 0.0
      %4427 = vmatprep.subr.mxu0 0.0
      %4428 = vmatpush1.msra.mxu0 0.0
      %4429 = vmatprep.subr.mxu0 0.0
      %4430 = vmatpush1.msra.mxu0 0.0
      %4431 = vmatprep.subr.mxu0 0.0
      %4432 = vmatpush1.msra.mxu0 0.0
      %4433 = vmatprep.subr.mxu0 0.0
      %4434 = vmatpush1.msra.mxu0 0.0
      %4435 = vmatprep.subr.mxu0 0.0
      %4436 = vmatpush1.msra.mxu0 0.0
      %4437 = vmatprep.subr.mxu0 0.0
      %4438 = vmatpush1.msra.mxu0 0.0
      %4439 = vmatprep.subr.mxu0 0.0
      %4440 = vmatpush1.msra.mxu0 0.0
      %4441 = vmatprep.mubr.f32.mxu0 0.0
      %4442 = vmatmul.mubr.f32.gmra.mrb[0].mxu0 %v3523
      %v4443 = vpop.f32.mrb[0].mxu0
      %v4444 = vadd.f32 0.0, %v4443
      %v4445 = vpop.f32.mrb[0].mxu0
      %4446 = vmatprep.mubr.f32.mxu0 0.0
      %4447 = vmatmul.mubr.f32.gmra.mrb[0].mxu0 %v3525
      %v4448 = vpop.f32.mrb[0].mxu0
      %v4449 = vadd.f32 0.0, %v4448
      %v4450 = vpop.f32.mrb[0].mxu0
      %4451 = vmatprep.mubr.f32.mxu0 0.0
      %4452 = vmatmul.mubr.f32.gmra.mrb[0].mxu0 %v3527
      %v4453 = vpop.f32.mrb[0].mxu0
      %v4454 = vadd.f32 0.0, %v4453
      %v4455 = vpop.f32.mrb[0].mxu0
      %4456 = vmatprep.mubr.f32.mxu0 0.0
      %4457 = vmatmul.mubr.f32.gmra.mrb[0].mxu0 %v3529
      %v4458 = vpop.f32.mrb[0].mxu0
      %v4459 = vadd.f32 0.0, %v4458
      %v4460 = vpop.f32.mrb[0].mxu0
      %4461 = vmatprep.mubr.f32.mxu0 0.0
      %4462 = vmatmul.mubr.f32.gmra.mrb[0].mxu0 %v3531
      %v4463 = vpop.f32.mrb[0].mxu0
      %v4464 = vadd.f32 0.0, %v4463
      %v4465 = vpop.f32.mrb[0].mxu0
      %4466 = vmatprep.mubr.f32.mxu0 0.0
      %4467 = vmatmul.mubr.f32.gmra.mrb[0].mxu0 %v4375
      %v4468 = vpop.f32.mrb[0].mxu0
      %v4469 = vadd.f32 0.0, %v4468
      %v4470 = vpop.f32.mrb[0].mxu0
      %4471 = vdwg.mxu0
      %v4472 = vadd.f32 %v4365, %v4444
      %v4473 = vadd.f32 %v4366, %v4449
      %v4474 = vadd.f32 %v4367, %v4454
      %v4475 = vadd.f32 %v4368, %v4459
      %v4476 = vadd.f32 %v4369, %v4464
      %v4477 = vadd.f32 %v4370, %v4469
      %v4478 = vlaneseq
      %v4479 = vshrl.u32 %v4478, 7
      %v4480 = vsub.s32 0, %v4479
      %v4481 = vrot.slane %v280, %v4480
      %v4482 = vmul.f32 %v4472, %v4481
      %v4483 = vmul.f32 %v4473, %v4481
      %v4484 = vmul.f32 %v4474, %v4481
      %v4485 = vmul.f32 %v4475, %v4481
      %v4486 = vmul.f32 %v4476, %v4481
      %v4487 = vmul.f32 %v4477, %v4481
      %v4488 = vlaneseq
      %v4489 = vshrl.u32 %v4488, 7
      %v4490 = vsub.s32 1, %v4489
      %v4491 = vrot.slane %v280, %v4490
      %v4492 = vadd.f32 %v4482, %v4491
      %v4493 = vadd.f32 %v4483, %v4491
      %v4494 = vadd.f32 %v4484, %v4491
      %v4495 = vadd.f32 %v4485, %v4491
      %v4496 = vadd.f32 %v4486, %v4491
      %v4497 = vadd.f32 %v4487, %v4491
      %v4498 = vmax.f32 %v4492, 0.0
      %v4499 = vmax.f32 %v4493, 0.0
      %v4500 = vmax.f32 %v4494, 0.0
      %v4501 = vmax.f32 %v4495, 0.0
      %v4502 = vmax.f32 %v4496, 0.0
      %v4503 = vmax.f32 %v4497, 0.0
      %vm4504 = vcmask 523264
      %4505 = vst.msk [vmem:[%s278] sm:$0xff] %vm4504, %v4498
      %4506 = vst.msk [vmem:[%s278 + $0x8] sm:$0xff] %vm4504, %v4499
      %4507 = vst.msk [vmem:[%s278 + $0x10] sm:$0xff] %vm4504, %v4500
      %4508 = vst.msk [vmem:[%s278 + $0x18] sm:$0xff] %vm4504, %v4501
      %4509 = vst.msk [vmem:[%s278 + $0x20] sm:$0xff] %vm4504, %v4502
      %4510 = vst.msk [vmem:[%s278 + $0x28] sm:$0xff] %vm4504, %v4503
      %p4511 = scmp.lt.s32.totalorder %s18, 1
      %s4512 = scalar_select %p4511, %s18, 1
      %s4513 = smul.addr %s4512, 6
      %s4514 = smul.addr %s4513, 8
      %s4515 = scalar_lea.vmem %s7, %s4514
      // Predicated region
      $region49: #{ddqn_forward.2} parent=47 // pred_check
        %p4516 = pneg %p188
      $region50: #{ddqn_forward.2} parent=47 // pred_check_branch
        %4518 = sbr.rel (%p4516) target = $region52
      $region51: #{ddqn_forward.2} parent=47 // pred_region
        _
      $region52: #{ddqn_forward.2} parent=47 // pred_fallthru
        _
    $region48: #{ddqn_forward.2} parent=5 // pred_fallthru
      _
    %p4519 = scmp.le.s32.totalorder 2, %s13
    // Predicated region
    $region53: #{ddqn_forward.2} parent=5 // pred_check
      %p4520 = pneg %p4519
    $region54: #{ddqn_forward.2} parent=5 // pred_check_branch
      %4522 = sbr.rel (%p4520) target = $region56
    $region55: #{ddqn_forward.2} parent=5 // pred_region
      %s4523 = ssub.s32 %s13, 2
      // Predicated region
      $region57: #{ddqn_forward.2} parent=55 // pred_check
        %p4524 = pneg %p194
      $region58: #{ddqn_forward.2} parent=55 // pred_check_branch
        %4526 = sbr.rel (%p4524) target = $region60
      $region59: #{ddqn_forward.2} parent=55 // pred_region
        %p4527 = scmp.lt.s32.totalorder %s19, 1
        %s4528 = scalar_select %p4527, %s19, 1
        %s4529 = smul.addr %s4528, 6
        %s4530 = smul.addr %s4529, 8
        %s4531 = scalar_lea.vmem %s7, %s4530
      $region60: #{ddqn_forward.2} parent=55 // pred_fallthru
        _
    $region56: #{ddqn_forward.2} parent=5 // pred_fallthru
      _
  $region6: #{ddqn_forward.2} parent=0 // loop_footer
    %s17 = sadd.s32 1, %s13
  $region7: #{ddqn_forward.2} parent=0 // loop_footer_branch
    %12 = sbr.rel target = $region3
  $region8: #{ddqn_forward.2} parent=0 // loop_exit
    _

// kernel: ddqn_forward.3
$region0: #{ddqn_forward.3}
  #allocation0 [shape = 'u32[]', space=smem, size = 0x4, offset = 0x4, fixed_abs, tag = 'smem constant byte address 0x4 - core index']
  #allocation1 [shape = 'u32[144,128]{1,0:T(1,128)}', space=vmem, size = 0x12000, scoped, tag = 'internal scratch']
  %s0 = inlined_call_operand.vmem [shape: f32[2,3072], index: 0, kind: input, shape index: {}]
  %s1 = inlined_call_operand.vmem [shape: f32[3072,256], index: 1, kind: input, shape index: {}]
  %s2 = inlined_call_operand.vmem [shape: f32[1,256], index: 2, kind: input, shape index: {}]
  %s3 = inlined_call_operand.vmem [shape: f32[256,7], index: 3, kind: input, shape index: {}]
  %s4 = inlined_call_operand.vmem [shape: f32[1,7], index: 4, kind: input, shape index: {}]
  %s5 = inlined_call_operand.hbm [shape: f32[2,6], index: 5, kind: output, shape index: {}]
  %s6 = sld [smem:[#allocation0]]
  $region30: #{ddqn_forward.3} parent=0
    _
  %s8 = ssub.s32 1, %s6
  %s9 = scalar_select 0, %s8, %s6
  $region1: #{ddqn_forward.3} parent=0
    #allocation2 [shape = 'u8[1024]{0}', space=vmem, size = 0x400, scoped, tag = 'output window, operand 0, single buffered']
    #allocation3 [shape = 's32[1]{0}', space=sflag, size = 0x4, scoped, tag = 'scoped memory for ddqn_forward.3']
    %10 = vsyncpa [#allocation3], 0
    // Predicated region
    $region2: #{ddqn_forward.3} parent=1 // pred_check
      _
    $region3: #{ddqn_forward.3} parent=1 // pred_check_branch
      %12 = sbr.rel (0) target = $region5
    $region4: #{ddqn_forward.3} parent=1 // pred_region
      _
    $region5: #{ddqn_forward.3} parent=1 // pred_fallthru
      _
    // Predicated region
    $region6: #{ddqn_forward.3} parent=1 // pred_check
      _
    $region7: #{ddqn_forward.3} parent=1 // pred_check_branch
      %14 = sbr.rel (0) target = $region9
    $region8: #{ddqn_forward.3} parent=1 // pred_region
      _
    $region9: #{ddqn_forward.3} parent=1 // pred_fallthru
      _
    // Predicated region
    $region10: #{ddqn_forward.3} parent=1 // pred_check
      _
    $region11: #{ddqn_forward.3} parent=1 // pred_check_branch
      %16 = sbr.rel (0) target = $region13
    $region12: #{ddqn_forward.3} parent=1 // pred_region
      _
    $region13: #{ddqn_forward.3} parent=1 // pred_fallthru
      _
    // Predicated region
    $region14: #{ddqn_forward.3} parent=1 // pred_check
      _
    $region15: #{ddqn_forward.3} parent=1 // pred_check_branch
      %18 = sbr.rel (0) target = $region17
    $region16: #{ddqn_forward.3} parent=1 // pred_region
      _
    $region17: #{ddqn_forward.3} parent=1 // pred_fallthru
      _
    // Predicated region
    $region18: #{ddqn_forward.3} parent=1 // pred_check
      _
    $region19: #{ddqn_forward.3} parent=1 // pred_check_branch
      %20 = sbr.rel (0) target = $region21
    $region20: #{ddqn_forward.3} parent=1 // pred_region
      _
    $region21: #{ddqn_forward.3} parent=1 // pred_fallthru
      _
    %v21 = vld [vmem:[%s0] sm:$0xff]
    %v22 = vld [vmem:[%s0 + $0x8] sm:$0xff]
    %v23 = vld [vmem:[%s0 + $0x10] sm:$0xff]
    %v24 = vld [vmem:[%s0 + $0x18] sm:$0xff]
    %v25 = vld [vmem:[%s0 + $0x20] sm:$0xff]
    %v26 = vld [vmem:[%s0 + $0x28] sm:$0xff]
    %v27 = vld [vmem:[%s1] sm:$0xff]
    %v28 = vld [vmem:[%s1 + $0x8] sm:$0xff]
    %v29 = vld [vmem:[%s1 + $0x10] sm:$0xff]
    %v30 = vld [vmem:[%s1 + $0x18] sm:$0xff]
    %v31 = vld [vmem:[%s1 + $0x20] sm:$0xff]
    %v32 = vld [vmem:[%s1 + $0x28] sm:$0xff]
    %v33 = vld [vmem:[%s1 + $0x30] sm:$0xff]
    %v34 = vld [vmem:[%s1 + $0x38] sm:$0xff]
    %v35 = vld [vmem:[%s1 + $0x40] sm:$0xff]
    %v36 = vld [vmem:[%s1 + $0x48] sm:$0xff]
    %v37 = vld [vmem:[%s1 + $0x50] sm:$0xff]
    %v38 = vld [vmem:[%s1 + $0x58] sm:$0xff]
    %v39 = vld [vmem:[%s1 + $0x60] sm:$0xff]
    %v40 = vld [vmem:[%s1 + $0x68] sm:$0xff]
    %v41 = vld [vmem:[%s1 + $0x70] sm:$0xff]
    %v42 = vld [vmem:[%s1 + $0x78] sm:$0xff]
    %v43 = vld [vmem:[%s1 + $0x80] sm:$0xff]
    %v44 = vld [vmem:[%s1 + $0x88] sm:$0xff]
    %v45 = vld [vmem:[%s1 + $0x90] sm:$0xff]
    %v46 = vld [vmem:[%s1 + $0x98] sm:$0xff]
    %v47 = vld [vmem:[%s1 + $0xa0] sm:$0xff]
    %v48 = vld [vmem:[%s1 + $0xa8] sm:$0xff]
    %v49 = vld [vmem:[%s1 + $0xb0] sm:$0xff]
    %v50 = vld [vmem:[%s1 + $0xb8] sm:$0xff]
    %v51 = vld [vmem:[%s1 + $0xc0] sm:$0xff]
    %v52 = vld [vmem:[%s1 + $0xc8] sm:$0xff]
    %v53 = vld [vmem:[%s1 + $0xd0] sm:$0xff]
    %v54 = vld [vmem:[%s1 + $0xd8] sm:$0xff]
    %v55 = vld [vmem:[%s1 + $0xe0] sm:$0xff]
    %v56 = vld [vmem:[%s1 + $0xe8] sm:$0xff]
    %v57 = vld [vmem:[%s1 + $0xf0] sm:$0xff]
    %v58 = vld [vmem:[%s1 + $0xf8] sm:$0xff]
    %v59 = vld [vmem:[%s1 + $0x100] sm:$0xff]
    %v60 = vld [vmem:[%s1 + $0x108] sm:$0xff]
    %v61 = vld [vmem:[%s1 + $0x110] sm:$0xff]
    %v62 = vld [vmem:[%s1 + $0x118] sm:$0xff]
    %v63 = vld [vmem:[%s1 + $0x120] sm:$0xff]
    %v64 = vld [vmem:[%s1 + $0x128] sm:$0xff]
    %v65 = vld [vmem:[%s1 + $0x130] sm:$0xff]
    %v66 = vld [vmem:[%s1 + $0x138] sm:$0xff]
    %v67 = vld [vmem:[%s1 + $0x140] sm:$0xff]
    %v68 = vld [vmem:[%s1 + $0x148] sm:$0xff]
    %v69 = vld [vmem:[%s1 + $0x150] sm:$0xff]
    %v70 = vld [vmem:[%s1 + $0x158] sm:$0xff]
    %v71 = vld [vmem:[%s1 + $0x160] sm:$0xff]
    %v72 = vld [vmem:[%s1 + $0x168] sm:$0xff]
    %v73 = vld [vmem:[%s1 + $0x170] sm:$0xff]
    %v74 = vld [vmem:[%s1 + $0x178] sm:$0xff]
    %v75 = vld [vmem:[%s1 + $0x180] sm:$0xff]
    %v76 = vld [vmem:[%s1 + $0x188] sm:$0xff]
    %v77 = vld [vmem:[%s1 + $0x190] sm:$0xff]
    %v78 = vld [vmem:[%s1 + $0x198] sm:$0xff]
    %v79 = vld [vmem:[%s1 + $0x1a0] sm:$0xff]
    %v80 = vld [vmem:[%s1 + $0x1a8] sm:$0xff]
    %v81 = vld [vmem:[%s1 + $0x1b0] sm:$0xff]
    %v82 = vld [vmem:[%s1 + $0x1b8] sm:$0xff]
    %v83 = vld [vmem:[%s1 + $0x1c0] sm:$0xff]
    %v84 = vld [vmem:[%s1 + $0x1c8] sm:$0xff]
    %v85 = vld [vmem:[%s1 + $0x1d0] sm:$0xff]
    %v86 = vld [vmem:[%s1 + $0x1d8] sm:$0xff]
    %v87 = vld [vmem:[%s1 + $0x1e0] sm:$0xff]
    %v88 = vld [vmem:[%s1 + $0x1e8] sm:$0xff]
    %v89 = vld [vmem:[%s1 + $0x1f0] sm:$0xff]
    %v90 = vld [vmem:[%s1 + $0x1f8] sm:$0xff]
    %v91 = vld [vmem:[%s1 + $0x200] sm:$0xff]
    %v92 = vld [vmem:[%s1 + $0x208] sm:$0xff]
    %v93 = vld [vmem:[%s1 + $0x210] sm:$0xff]
    %v94 = vld [vmem:[%s1 + $0x218] sm:$0xff]
    %v95 = vld [vmem:[%s1 + $0x220] sm:$0xff]
    %v96 = vld [vmem:[%s1 + $0x228] sm:$0xff]
    %v97 = vld [vmem:[%s1 + $0x230] sm:$0xff]
    %v98 = vld [vmem:[%s1 + $0x238] sm:$0xff]
    %v99 = vld [vmem:[%s1 + $0x240] sm:$0xff]
    %v100 = vld [vmem:[%s1 + $0x248] sm:$0xff]
    %v101 = vld [vmem:[%s1 + $0x250] sm:$0xff]
    %v102 = vld [vmem:[%s1 + $0x258] sm:$0xff]
    %v103 = vld [vmem:[%s1 + $0x260] sm:$0xff]
    %v104 = vld [vmem:[%s1 + $0x268] sm:$0xff]
    %v105 = vld [vmem:[%s1 + $0x270] sm:$0xff]
    %v106 = vld [vmem:[%s1 + $0x278] sm:$0xff]
    %v107 = vld [vmem:[%s1 + $0x280] sm:$0xff]
    %v108 = vld [vmem:[%s1 + $0x288] sm:$0xff]
    %v109 = vld [vmem:[%s1 + $0x290] sm:$0xff]
    %v110 = vld [vmem:[%s1 + $0x298] sm:$0xff]
    %v111 = vld [vmem:[%s1 + $0x2a0] sm:$0xff]
    %v112 = vld [vmem:[%s1 + $0x2a8] sm:$0xff]
    %v113 = vld [vmem:[%s1 + $0x2b0] sm:$0xff]
    %v114 = vld [vmem:[%s1 + $0x2b8] sm:$0xff]
    %v115 = vld [vmem:[%s1 + $0x2c0] sm:$0xff]
    %v116 = vld [vmem:[%s1 + $0x2c8] sm:$0xff]
    %v117 = vld [vmem:[%s1 + $0x2d0] sm:$0xff]
    %v118 = vld [vmem:[%s1 + $0x2d8] sm:$0xff]
    %v119 = vld [vmem:[%s1 + $0x2e0] sm:$0xff]
    %v120 = vld [vmem:[%s1 + $0x2e8] sm:$0xff]
    %v121 = vld [vmem:[%s1 + $0x2f0] sm:$0xff]
    %v122 = vld [vmem:[%s1 + $0x2f8] sm:$0xff]
    %v123 = vld [vmem:[%s1 + $0x300] sm:$0xff]
    %v124 = vld [vmem:[%s1 + $0x308] sm:$0xff]
    %v125 = vld [vmem:[%s1 + $0x310] sm:$0xff]
    %v126 = vld [vmem:[%s1 + $0x318] sm:$0xff]
    %v127 = vld [vmem:[%s1 + $0x320] sm:$0xff]
    %v128 = vld [vmem:[%s1 + $0x328] sm:$0xff]
    %v129 = vld [vmem:[%s1 + $0x330] sm:$0xff]
    %v130 = vld [vmem:[%s1 + $0x338] sm:$0xff]
    %v131 = vld [vmem:[%s1 + $0x340] sm:$0xff]
    %v132 = vld [vmem:[%s1 + $0x348] sm:$0xff]
    %v133 = vld [vmem:[%s1 + $0x350] sm:$0xff]
    %v134 = vld [vmem:[%s1 + $0x358] sm:$0xff]
    %v135 = vld [vmem:[%s1 + $0x360] sm:$0xff]
    %v136 = vld [vmem:[%s1 + $0x368] sm:$0xff]
    %v137 = vld [vmem:[%s1 + $0x370] sm:$0xff]
    %v138 = vld [vmem:[%s1 + $0x378] sm:$0xff]
    %v139 = vld [vmem:[%s1 + $0x380] sm:$0xff]
    %v140 = vld [vmem:[%s1 + $0x388] sm:$0xff]
    %v141 = vld [vmem:[%s1 + $0x390] sm:$0xff]
    %v142 = vld [vmem:[%s1 + $0x398] sm:$0xff]
    %v143 = vld [vmem:[%s1 + $0x3a0] sm:$0xff]
    %v144 = vld [vmem:[%s1 + $0x3a8] sm:$0xff]
    %v145 = vld [vmem:[%s1 + $0x3b0] sm:$0xff]
    %v146 = vld [vmem:[%s1 + $0x3b8] sm:$0xff]
    %v147 = vld [vmem:[%s1 + $0x3c0] sm:$0xff]
    %v148 = vld [vmem:[%s1 + $0x3c8] sm:$0xff]
    %v149 = vld [vmem:[%s1 + $0x3d0] sm:$0xff]
    %v150 = vld [vmem:[%s1 + $0x3d8] sm:$0xff]
    %v151 = vld [vmem:[%s1 + $0x3e0] sm:$0xff]
    %v152 = vld [vmem:[%s1 + $0x3e8] sm:$0xff]
    %v153 = vld [vmem:[%s1 + $0x3f0] sm:$0xff]
    %v154 = vld [vmem:[%s1 + $0x3f8] sm:$0xff]
    %v155 = vld [vmem:[%s1 + $0x400] sm:$0xff]
    %v156 = vld [vmem:[%s1 + $0x408] sm:$0xff]
    %v157 = vld [vmem:[%s1 + $0x410] sm:$0xff]
    %v158 = vld [vmem:[%s1 + $0x418] sm:$0xff]
    %v159 = vld [vmem:[%s1 + $0x420] sm:$0xff]
    %v160 = vld [vmem:[%s1 + $0x428] sm:$0xff]
    %v161 = vld [vmem:[%s1 + $0x430] sm:$0xff]
    %v162 = vld [vmem:[%s1 + $0x438] sm:$0xff]
    %v163 = vld [vmem:[%s1 + $0x440] sm:$0xff]
    %v164 = vld [vmem:[%s1 + $0x448] sm:$0xff]
    %v165 = vld [vmem:[%s1 + $0x450] sm:$0xff]
    %v166 = vld [vmem:[%s1 + $0x458] sm:$0xff]
    %v167 = vld [vmem:[%s1 + $0x460] sm:$0xff]
    %v168 = vld [vmem:[%s1 + $0x468] sm:$0xff]
    %v169 = vld [vmem:[%s1 + $0x470] sm:$0xff]
    %v170 = vld [vmem:[%s1 + $0x478] sm:$0xff]
    %v171 = vld [vmem:[%s1 + $0x480] sm:$0xff]
    %v172 = vld [vmem:[%s1 + $0x488] sm:$0xff]
    %v173 = vld [vmem:[%s1 + $0x490] sm:$0xff]
    %v174 = vld [vmem:[%s1 + $0x498] sm:$0xff]
    %v175 = vld [vmem:[%s1 + $0x4a0] sm:$0xff]
    %v176 = vld [vmem:[%s1 + $0x4a8] sm:$0xff]
    %v177 = vld [vmem:[%s1 + $0x4b0] sm:$0xff]
    %v178 = vld [vmem:[%s1 + $0x4b8] sm:$0xff]
    %v179 = vld [vmem:[%s1 + $0x4c0] sm:$0xff]
    %v180 = vld [vmem:[%s1 + $0x4c8] sm:$0xff]
    %v181 = vld [vmem:[%s1 + $0x4d0] sm:$0xff]
    %v182 = vld [vmem:[%s1 + $0x4d8] sm:$0xff]
    %v183 = vld [vmem:[%s1 + $0x4e0] sm:$0xff]
    %v184 = vld [vmem:[%s1 + $0x4e8] sm:$0xff]
    %v185 = vld [vmem:[%s1 + $0x4f0] sm:$0xff]
    %v186 = vld [vmem:[%s1 + $0x4f8] sm:$0xff]
    %v187 = vld [vmem:[%s1 + $0x500] sm:$0xff]
    %v188 = vld [vmem:[%s1 + $0x508] sm:$0xff]
    %v189 = vld [vmem:[%s1 + $0x510] sm:$0xff]
    %v190 = vld [vmem:[%s1 + $0x518] sm:$0xff]
    %v191 = vld [vmem:[%s1 + $0x520] sm:$0xff]
    %v192 = vld [vmem:[%s1 + $0x528] sm:$0xff]
    %v193 = vld [vmem:[%s1 + $0x530] sm:$0xff]
    %v194 = vld [vmem:[%s1 + $0x538] sm:$0xff]
    %v195 = vld [vmem:[%s1 + $0x540] sm:$0xff]
    %v196 = vld [vmem:[%s1 + $0x548] sm:$0xff]
    %v197 = vld [vmem:[%s1 + $0x550] sm:$0xff]
    %v198 = vld [vmem:[%s1 + $0x558] sm:$0xff]
    %v199 = vld [vmem:[%s1 + $0x560] sm:$0xff]
    %v200 = vld [vmem:[%s1 + $0x568] sm:$0xff]
    %v201 = vld [vmem:[%s1 + $0x570] sm:$0xff]
    %v202 = vld [vmem:[%s1 + $0x578] sm:$0xff]
    %v203 = vld [vmem:[%s1 + $0x580] sm:$0xff]
    %v204 = vld [vmem:[%s1 + $0x588] sm:$0xff]
    %v205 = vld [vmem:[%s1 + $0x590] sm:$0xff]
    %v206 = vld [vmem:[%s1 + $0x598] sm:$0xff]
    %v207 = vld [vmem:[%s1 + $0x5a0] sm:$0xff]
    %v208 = vld [vmem:[%s1 + $0x5a8] sm:$0xff]
    %v209 = vld [vmem:[%s1 + $0x5b0] sm:$0xff]
    %v210 = vld [vmem:[%s1 + $0x5b8] sm:$0xff]
    %v211 = vld [vmem:[%s1 + $0x5c0] sm:$0xff]
    %v212 = vld [vmem:[%s1 + $0x5c8] sm:$0xff]
    %v213 = vld [vmem:[%s1 + $0x5d0] sm:$0xff]
    %v214 = vld [vmem:[%s1 + $0x5d8] sm:$0xff]
    %v215 = vld [vmem:[%s1 + $0x5e0] sm:$0xff]
    %v216 = vld [vmem:[%s1 + $0x5e8] sm:$0xff]
    %v217 = vld [vmem:[%s1 + $0x5f0] sm:$0xff]
    %v218 = vld [vmem:[%s1 + $0x5f8] sm:$0xff]
    %v219 = vld [vmem:[%s1 + $0x600] sm:$0xff]
    %v220 = vld [vmem:[%s1 + $0x608] sm:$0xff]
    %v221 = vld [vmem:[%s1 + $0x610] sm:$0xff]
    %v222 = vld [vmem:[%s1 + $0x618] sm:$0xff]
    %v223 = vld [vmem:[%s1 + $0x620] sm:$0xff]
    %v224 = vld [vmem:[%s1 + $0x628] sm:$0xff]
    %v225 = vld [vmem:[%s1 + $0x630] sm:$0xff]
    %v226 = vld [vmem:[%s1 + $0x638] sm:$0xff]
    %v227 = vld [vmem:[%s1 + $0x640] sm:$0xff]
    %v228 = vld [vmem:[%s1 + $0x648] sm:$0xff]
    %v229 = vld [vmem:[%s1 + $0x650] sm:$0xff]
    %v230 = vld [vmem:[%s1 + $0x658] sm:$0xff]
    %v231 = vld [vmem:[%s1 + $0x660] sm:$0xff]
    %v232 = vld [vmem:[%s1 + $0x668] sm:$0xff]
    %v233 = vld [vmem:[%s1 + $0x670] sm:$0xff]
    %v234 = vld [vmem:[%s1 + $0x678] sm:$0xff]
    %v235 = vld [vmem:[%s1 + $0x680] sm:$0xff]
    %v236 = vld [vmem:[%s1 + $0x688] sm:$0xff]
    %v237 = vld [vmem:[%s1 + $0x690] sm:$0xff]
    %v238 = vld [vmem:[%s1 + $0x698] sm:$0xff]
    %v239 = vld [vmem:[%s1 + $0x6a0] sm:$0xff]
    %v240 = vld [vmem:[%s1 + $0x6a8] sm:$0xff]
    %v241 = vld [vmem:[%s1 + $0x6b0] sm:$0xff]
    %v242 = vld [vmem:[%s1 + $0x6b8] sm:$0xff]
    %v243 = vld [vmem:[%s1 + $0x6c0] sm:$0xff]
    %v244 = vld [vmem:[%s1 + $0x6c8] sm:$0xff]
    %v245 = vld [vmem:[%s1 + $0x6d0] sm:$0xff]
    %v246 = vld [vmem:[%s1 + $0x6d8] sm:$0xff]
    %v247 = vld [vmem:[%s1 + $0x6e0] sm:$0xff]
    %v248 = vld [vmem:[%s1 + $0x6e8] sm:$0xff]
    %v249 = vld [vmem:[%s1 + $0x6f0] sm:$0xff]
    %v250 = vld [vmem:[%s1 + $0x6f8] sm:$0xff]
    %v251 = vld [vmem:[%s1 + $0x700] sm:$0xff]
    %v252 = vld [vmem:[%s1 + $0x708] sm:$0xff]
    %v253 = vld [vmem:[%s1 + $0x710] sm:$0xff]
    %v254 = vld [vmem:[%s1 + $0x718] sm:$0xff]
    %v255 = vld [vmem:[%s1 + $0x720] sm:$0xff]
    %v256 = vld [vmem:[%s1 + $0x728] sm:$0xff]
    %v257 = vld [vmem:[%s1 + $0x730] sm:$0xff]
    %v258 = vld [vmem:[%s1 + $0x738] sm:$0xff]
    %v259 = vld [vmem:[%s1 + $0x740] sm:$0xff]
    %v260 = vld [vmem:[%s1 + $0x748] sm:$0xff]
    %v261 = vld [vmem:[%s1 + $0x750] sm:$0xff]
    %v262 = vld [vmem:[%s1 + $0x758] sm:$0xff]
    %v263 = vld [vmem:[%s1 + $0x760] sm:$0xff]
    %v264 = vld [vmem:[%s1 + $0x768] sm:$0xff]
    %v265 = vld [vmem:[%s1 + $0x770] sm:$0xff]
    %v266 = vld [vmem:[%s1 + $0x778] sm:$0xff]
    %v267 = vld [vmem:[%s1 + $0x780] sm:$0xff]
    %v268 = vld [vmem:[%s1 + $0x788] sm:$0xff]
    %v269 = vld [vmem:[%s1 + $0x790] sm:$0xff]
    %v270 = vld [vmem:[%s1 + $0x798] sm:$0xff]
    %v271 = vld [vmem:[%s1 + $0x7a0] sm:$0xff]
    %v272 = vld [vmem:[%s1 + $0x7a8] sm:$0xff]
    %v273 = vld [vmem:[%s1 + $0x7b0] sm:$0xff]
    %v274 = vld [vmem:[%s1 + $0x7b8] sm:$0xff]
    %v275 = vld [vmem:[%s1 + $0x7c0] sm:$0xff]
    %v276 = vld [vmem:[%s1 + $0x7c8] sm:$0xff]
    %v277 = vld [vmem:[%s1 + $0x7d0] sm:$0xff]
    %v278 = vld [vmem:[%s1 + $0x7d8] sm:$0xff]
    %v279 = vld [vmem:[%s1 + $0x7e0] sm:$0xff]
    %v280 = vld [vmem:[%s1 + $0x7e8] sm:$0xff]
    %v281 = vld [vmem:[%s1 + $0x7f0] sm:$0xff]
    %v282 = vld [vmem:[%s1 + $0x7f8] sm:$0xff]
    %v283 = vld [vmem:[%s1 + $0x800] sm:$0xff]
    %v284 = vld [vmem:[%s1 + $0x808] sm:$0xff]
    %v285 = vld [vmem:[%s1 + $0x810] sm:$0xff]
    %v286 = vld [vmem:[%s1 + $0x818] sm:$0xff]
    %v287 = vld [vmem:[%s1 + $0x820] sm:$0xff]
    %v288 = vld [vmem:[%s1 + $0x828] sm:$0xff]
    %v289 = vld [vmem:[%s1 + $0x830] sm:$0xff]
    %v290 = vld [vmem:[%s1 + $0x838] sm:$0xff]
    %v291 = vld [vmem:[%s1 + $0x840] sm:$0xff]
    %v292 = vld [vmem:[%s1 + $0x848] sm:$0xff]
    %v293 = vld [vmem:[%s1 + $0x850] sm:$0xff]
    %v294 = vld [vmem:[%s1 + $0x858] sm:$0xff]
    %v295 = vld [vmem:[%s1 + $0x860] sm:$0xff]
    %v296 = vld [vmem:[%s1 + $0x868] sm:$0xff]
    %v297 = vld [vmem:[%s1 + $0x870] sm:$0xff]
    %v298 = vld [vmem:[%s1 + $0x878] sm:$0xff]
    %v299 = vld [vmem:[%s1 + $0x880] sm:$0xff]
    %v300 = vld [vmem:[%s1 + $0x888] sm:$0xff]
    %v301 = vld [vmem:[%s1 + $0x890] sm:$0xff]
    %v302 = vld [vmem:[%s1 + $0x898] sm:$0xff]
    %v303 = vld [vmem:[%s1 + $0x8a0] sm:$0xff]
    %v304 = vld [vmem:[%s1 + $0x8a8] sm:$0xff]
    %v305 = vld [vmem:[%s1 + $0x8b0] sm:$0xff]
    %v306 = vld [vmem:[%s1 + $0x8b8] sm:$0xff]
    %v307 = vld [vmem:[%s1 + $0x8c0] sm:$0xff]
    %v308 = vld [vmem:[%s1 + $0x8c8] sm:$0xff]
    %v309 = vld [vmem:[%s1 + $0x8d0] sm:$0xff]
    %v310 = vld [vmem:[%s1 + $0x8d8] sm:$0xff]
    %v311 = vld [vmem:[%s1 + $0x8e0] sm:$0xff]
    %v312 = vld [vmem:[%s1 + $0x8e8] sm:$0xff]
    %v313 = vld [vmem:[%s1 + $0x8f0] sm:$0xff]
    %v314 = vld [vmem:[%s1 + $0x8f8] sm:$0xff]
    %v315 = vld [vmem:[%s1 + $0x900] sm:$0xff]
    %v316 = vld [vmem:[%s1 + $0x908] sm:$0xff]
    %v317 = vld [vmem:[%s1 + $0x910] sm:$0xff]
    %v318 = vld [vmem:[%s1 + $0x918] sm:$0xff]
    %v319 = vld [vmem:[%s1 + $0x920] sm:$0xff]
    %v320 = vld [vmem:[%s1 + $0x928] sm:$0xff]
    %v321 = vld [vmem:[%s1 + $0x930] sm:$0xff]
    %v322 = vld [vmem:[%s1 + $0x938] sm:$0xff]
    %v323 = vld [vmem:[%s1 + $0x940] sm:$0xff]
    %v324 = vld [vmem:[%s1 + $0x948] sm:$0xff]
    %v325 = vld [vmem:[%s1 + $0x950] sm:$0xff]
    %v326 = vld [vmem:[%s1 + $0x958] sm:$0xff]
    %v327 = vld [vmem:[%s1 + $0x960] sm:$0xff]
    %v328 = vld [vmem:[%s1 + $0x968] sm:$0xff]
    %v329 = vld [vmem:[%s1 + $0x970] sm:$0xff]
    %v330 = vld [vmem:[%s1 + $0x978] sm:$0xff]
    %v331 = vld [vmem:[%s1 + $0x980] sm:$0xff]
    %v332 = vld [vmem:[%s1 + $0x988] sm:$0xff]
    %v333 = vld [vmem:[%s1 + $0x990] sm:$0xff]
    %v334 = vld [vmem:[%s1 + $0x998] sm:$0xff]
    %v335 = vld [vmem:[%s1 + $0x9a0] sm:$0xff]
    %v336 = vld [vmem:[%s1 + $0x9a8] sm:$0xff]
    %v337 = vld [vmem:[%s1 + $0x9b0] sm:$0xff]
    %v338 = vld [vmem:[%s1 + $0x9b8] sm:$0xff]
    %v339 = vld [vmem:[%s1 + $0x9c0] sm:$0xff]
    %v340 = vld [vmem:[%s1 + $0x9c8] sm:$0xff]
    %v341 = vld [vmem:[%s1 + $0x9d0] sm:$0xff]
    %v342 = vld [vmem:[%s1 + $0x9d8] sm:$0xff]
    %v343 = vld [vmem:[%s1 + $0x9e0] sm:$0xff]
    %v344 = vld [vmem:[%s1 + $0x9e8] sm:$0xff]
    %v345 = vld [vmem:[%s1 + $0x9f0] sm:$0xff]
    %v346 = vld [vmem:[%s1 + $0x9f8] sm:$0xff]
    %v347 = vld [vmem:[%s1 + $0xa00] sm:$0xff]
    %v348 = vld [vmem:[%s1 + $0xa08] sm:$0xff]
    %v349 = vld [vmem:[%s1 + $0xa10] sm:$0xff]
    %v350 = vld [vmem:[%s1 + $0xa18] sm:$0xff]
    %v351 = vld [vmem:[%s1 + $0xa20] sm:$0xff]
    %v352 = vld [vmem:[%s1 + $0xa28] sm:$0xff]
    %v353 = vld [vmem:[%s1 + $0xa30] sm:$0xff]
    %v354 = vld [vmem:[%s1 + $0xa38] sm:$0xff]
    %v355 = vld [vmem:[%s1 + $0xa40] sm:$0xff]
    %v356 = vld [vmem:[%s1 + $0xa48] sm:$0xff]
    %v357 = vld [vmem:[%s1 + $0xa50] sm:$0xff]
    %v358 = vld [vmem:[%s1 + $0xa58] sm:$0xff]
    %v359 = vld [vmem:[%s1 + $0xa60] sm:$0xff]
    %v360 = vld [vmem:[%s1 + $0xa68] sm:$0xff]
    %v361 = vld [vmem:[%s1 + $0xa70] sm:$0xff]
    %v362 = vld [vmem:[%s1 + $0xa78] sm:$0xff]
    %v363 = vld [vmem:[%s1 + $0xa80] sm:$0xff]
    %v364 = vld [vmem:[%s1 + $0xa88] sm:$0xff]
    %v365 = vld [vmem:[%s1 + $0xa90] sm:$0xff]
    %v366 = vld [vmem:[%s1 + $0xa98] sm:$0xff]
    %v367 = vld [vmem:[%s1 + $0xaa0] sm:$0xff]
    %v368 = vld [vmem:[%s1 + $0xaa8] sm:$0xff]
    %v369 = vld [vmem:[%s1 + $0xab0] sm:$0xff]
    %v370 = vld [vmem:[%s1 + $0xab8] sm:$0xff]
    %v371 = vld [vmem:[%s1 + $0xac0] sm:$0xff]
    %v372 = vld [vmem:[%s1 + $0xac8] sm:$0xff]
    %v373 = vld [vmem:[%s1 + $0xad0] sm:$0xff]
    %v374 = vld [vmem:[%s1 + $0xad8] sm:$0xff]
    %v375 = vld [vmem:[%s1 + $0xae0] sm:$0xff]
    %v376 = vld [vmem:[%s1 + $0xae8] sm:$0xff]
    %v377 = vld [vmem:[%s1 + $0xaf0] sm:$0xff]
    %v378 = vld [vmem:[%s1 + $0xaf8] sm:$0xff]
    %v379 = vld [vmem:[%s1 + $0xb00] sm:$0xff]
    %v380 = vld [vmem:[%s1 + $0xb08] sm:$0xff]
    %v381 = vld [vmem:[%s1 + $0xb10] sm:$0xff]
    %v382 = vld [vmem:[%s1 + $0xb18] sm:$0xff]
    %v383 = vld [vmem:[%s1 + $0xb20] sm:$0xff]
    %v384 = vld [vmem:[%s1 + $0xb28] sm:$0xff]
    %v385 = vld [vmem:[%s1 + $0xb30] sm:$0xff]
    %v386 = vld [vmem:[%s1 + $0xb38] sm:$0xff]
    %v387 = vld [vmem:[%s1 + $0xb40] sm:$0xff]
    %v388 = vld [vmem:[%s1 + $0xb48] sm:$0xff]
    %v389 = vld [vmem:[%s1 + $0xb50] sm:$0xff]
    %v390 = vld [vmem:[%s1 + $0xb58] sm:$0xff]
    %v391 = vld [vmem:[%s1 + $0xb60] sm:$0xff]
    %v392 = vld [vmem:[%s1 + $0xb68] sm:$0xff]
    %v393 = vld [vmem:[%s1 + $0xb70] sm:$0xff]
    %v394 = vld [vmem:[%s1 + $0xb78] sm:$0xff]
    %v395 = vld [vmem:[%s1 + $0xb80] sm:$0xff]
    %v396 = vld [vmem:[%s1 + $0xb88] sm:$0xff]
    %v397 = vld [vmem:[%s1 + $0xb90] sm:$0xff]
    %v398 = vld [vmem:[%s1 + $0xb98] sm:$0xff]
    %v399 = vld [vmem:[%s1 + $0xba0] sm:$0xff]
    %v400 = vld [vmem:[%s1 + $0xba8] sm:$0xff]
    %v401 = vld [vmem:[%s1 + $0xbb0] sm:$0xff]
    %v402 = vld [vmem:[%s1 + $0xbb8] sm:$0xff]
    %v403 = vld [vmem:[%s1 + $0xbc0] sm:$0xff]
    %v404 = vld [vmem:[%s1 + $0xbc8] sm:$0xff]
    %v405 = vld [vmem:[%s1 + $0xbd0] sm:$0xff]
    %v406 = vld [vmem:[%s1 + $0xbd8] sm:$0xff]
    %v407 = vld [vmem:[%s1 + $0xbe0] sm:$0xff]
    %v408 = vld [vmem:[%s1 + $0xbe8] sm:$0xff]
    %v409 = vld [vmem:[%s1 + $0xbf0] sm:$0xff]
    %v410 = vld [vmem:[%s1 + $0xbf8] sm:$0xff]
    %v411 = vld [vmem:[%s1 + $0xc00] sm:$0xff]
    %v412 = vld [vmem:[%s1 + $0xc08] sm:$0xff]
    %v413 = vld [vmem:[%s1 + $0xc10] sm:$0xff]
    %v414 = vld [vmem:[%s1 + $0xc18] sm:$0xff]
    %v415 = vld [vmem:[%s1 + $0xc20] sm:$0xff]
    %v416 = vld [vmem:[%s1 + $0xc28] sm:$0xff]
    %v417 = vld [vmem:[%s1 + $0xc30] sm:$0xff]
    %v418 = vld [vmem:[%s1 + $0xc38] sm:$0xff]
    %v419 = vld [vmem:[%s1 + $0xc40] sm:$0xff]
    %v420 = vld [vmem:[%s1 + $0xc48] sm:$0xff]
    %v421 = vld [vmem:[%s1 + $0xc50] sm:$0xff]
    %v422 = vld [vmem:[%s1 + $0xc58] sm:$0xff]
    %v423 = vld [vmem:[%s1 + $0xc60] sm:$0xff]
    %v424 = vld [vmem:[%s1 + $0xc68] sm:$0xff]
    %v425 = vld [vmem:[%s1 + $0xc70] sm:$0xff]
    %v426 = vld [vmem:[%s1 + $0xc78] sm:$0xff]
    %v427 = vld [vmem:[%s1 + $0xc80] sm:$0xff]
    %v428 = vld [vmem:[%s1 + $0xc88] sm:$0xff]
    %v429 = vld [vmem:[%s1 + $0xc90] sm:$0xff]
    %v430 = vld [vmem:[%s1 + $0xc98] sm:$0xff]
    %v431 = vld [vmem:[%s1 + $0xca0] sm:$0xff]
    %v432 = vld [vmem:[%s1 + $0xca8] sm:$0xff]
    %v433 = vld [vmem:[%s1 + $0xcb0] sm:$0xff]
    %v434 = vld [vmem:[%s1 + $0xcb8] sm:$0xff]
    %v435 = vld [vmem:[%s1 + $0xcc0] sm:$0xff]
    %v436 = vld [vmem:[%s1 + $0xcc8] sm:$0xff]
    %v437 = vld [vmem:[%s1 + $0xcd0] sm:$0xff]
    %v438 = vld [vmem:[%s1 + $0xcd8] sm:$0xff]
    %v439 = vld [vmem:[%s1 + $0xce0] sm:$0xff]
    %v440 = vld [vmem:[%s1 + $0xce8] sm:$0xff]
    %v441 = vld [vmem:[%s1 + $0xcf0] sm:$0xff]
    %v442 = vld [vmem:[%s1 + $0xcf8] sm:$0xff]
    %v443 = vld [vmem:[%s1 + $0xd00] sm:$0xff]
    %v444 = vld [vmem:[%s1 + $0xd08] sm:$0xff]
    %v445 = vld [vmem:[%s1 + $0xd10] sm:$0xff]
    %v446 = vld [vmem:[%s1 + $0xd18] sm:$0xff]
    %v447 = vld [vmem:[%s1 + $0xd20] sm:$0xff]
    %v448 = vld [vmem:[%s1 + $0xd28] sm:$0xff]
    %v449 = vld [vmem:[%s1 + $0xd30] sm:$0xff]
    %v450 = vld [vmem:[%s1 + $0xd38] sm:$0xff]
    %v451 = vld [vmem:[%s1 + $0xd40] sm:$0xff]
    %v452 = vld [vmem:[%s1 + $0xd48] sm:$0xff]
    %v453 = vld [vmem:[%s1 + $0xd50] sm:$0xff]
    %v454 = vld [vmem:[%s1 + $0xd58] sm:$0xff]
    %v455 = vld [vmem:[%s1 + $0xd60] sm:$0xff]
    %v456 = vld [vmem:[%s1 + $0xd68] sm:$0xff]
    %v457 = vld [vmem:[%s1 + $0xd70] sm:$0xff]
    %v458 = vld [vmem:[%s1 + $0xd78] sm:$0xff]
    %v459 = vld [vmem:[%s1 + $0xd80] sm:$0xff]
    %v460 = vld [vmem:[%s1 + $0xd88] sm:$0xff]
    %v461 = vld [vmem:[%s1 + $0xd90] sm:$0xff]
    %v462 = vld [vmem:[%s1 + $0xd98] sm:$0xff]
    %v463 = vld [vmem:[%s1 + $0xda0] sm:$0xff]
    %v464 = vld [vmem:[%s1 + $0xda8] sm:$0xff]
    %v465 = vld [vmem:[%s1 + $0xdb0] sm:$0xff]
    %v466 = vld [vmem:[%s1 + $0xdb8] sm:$0xff]
    %v467 = vld [vmem:[%s1 + $0xdc0] sm:$0xff]
    %v468 = vld [vmem:[%s1 + $0xdc8] sm:$0xff]
    %v469 = vld [vmem:[%s1 + $0xdd0] sm:$0xff]
    %v470 = vld [vmem:[%s1 + $0xdd8] sm:$0xff]
    %v471 = vld [vmem:[%s1 + $0xde0] sm:$0xff]
    %v472 = vld [vmem:[%s1 + $0xde8] sm:$0xff]
    %v473 = vld [vmem:[%s1 + $0xdf0] sm:$0xff]
    %v474 = vld [vmem:[%s1 + $0xdf8] sm:$0xff]
    %v475 = vld [vmem:[%s1 + $0xe00] sm:$0xff]
    %v476 = vld [vmem:[%s1 + $0xe08] sm:$0xff]
    %v477 = vld [vmem:[%s1 + $0xe10] sm:$0xff]
    %v478 = vld [vmem:[%s1 + $0xe18] sm:$0xff]
    %v479 = vld [vmem:[%s1 + $0xe20] sm:$0xff]
    %v480 = vld [vmem:[%s1 + $0xe28] sm:$0xff]
    %v481 = vld [vmem:[%s1 + $0xe30] sm:$0xff]
    %v482 = vld [vmem:[%s1 + $0xe38] sm:$0xff]
    %v483 = vld [vmem:[%s1 + $0xe40] sm:$0xff]
    %v484 = vld [vmem:[%s1 + $0xe48] sm:$0xff]
    %v485 = vld [vmem:[%s1 + $0xe50] sm:$0xff]
    %v486 = vld [vmem:[%s1 + $0xe58] sm:$0xff]
    %v487 = vld [vmem:[%s1 + $0xe60] sm:$0xff]
    %v488 = vld [vmem:[%s1 + $0xe68] sm:$0xff]
    %v489 = vld [vmem:[%s1 + $0xe70] sm:$0xff]
    %v490 = vld [vmem:[%s1 + $0xe78] sm:$0xff]
    %v491 = vld [vmem:[%s1 + $0xe80] sm:$0xff]
    %v492 = vld [vmem:[%s1 + $0xe88] sm:$0xff]
    %v493 = vld [vmem:[%s1 + $0xe90] sm:$0xff]
    %v494 = vld [vmem:[%s1 + $0xe98] sm:$0xff]
    %v495 = vld [vmem:[%s1 + $0xea0] sm:$0xff]
    %v496 = vld [vmem:[%s1 + $0xea8] sm:$0xff]
    %v497 = vld [vmem:[%s1 + $0xeb0] sm:$0xff]
    %v498 = vld [vmem:[%s1 + $0xeb8] sm:$0xff]
    %v499 = vld [vmem:[%s1 + $0xec0] sm:$0xff]
    %v500 = vld [vmem:[%s1 + $0xec8] sm:$0xff]
    %v501 = vld [vmem:[%s1 + $0xed0] sm:$0xff]
    %v502 = vld [vmem:[%s1 + $0xed8] sm:$0xff]
    %v503 = vld [vmem:[%s1 + $0xee0] sm:$0xff]
    %v504 = vld [vmem:[%s1 + $0xee8] sm:$0xff]
    %v505 = vld [vmem:[%s1 + $0xef0] sm:$0xff]
    %v506 = vld [vmem:[%s1 + $0xef8] sm:$0xff]
    %v507 = vld [vmem:[%s1 + $0xf00] sm:$0xff]
    %v508 = vld [vmem:[%s1 + $0xf08] sm:$0xff]
    %v509 = vld [vmem:[%s1 + $0xf10] sm:$0xff]
    %v510 = vld [vmem:[%s1 + $0xf18] sm:$0xff]
    %v511 = vld [vmem:[%s1 + $0xf20] sm:$0xff]
    %v512 = vld [vmem:[%s1 + $0xf28] sm:$0xff]
    %v513 = vld [vmem:[%s1 + $0xf30] sm:$0xff]
    %v514 = vld [vmem:[%s1 + $0xf38] sm:$0xff]
    %v515 = vld [vmem:[%s1 + $0xf40] sm:$0xff]
    %v516 = vld [vmem:[%s1 + $0xf48] sm:$0xff]
    %v517 = vld [vmem:[%s1 + $0xf50] sm:$0xff]
    %v518 = vld [vmem:[%s1 + $0xf58] sm:$0xff]
    %v519 = vld [vmem:[%s1 + $0xf60] sm:$0xff]
    %v520 = vld [vmem:[%s1 + $0xf68] sm:$0xff]
    %v521 = vld [vmem:[%s1 + $0xf70] sm:$0xff]
    %v522 = vld [vmem:[%s1 + $0xf78] sm:$0xff]
    %v523 = vld [vmem:[%s1 + $0xf80] sm:$0xff]
    %v524 = vld [vmem:[%s1 + $0xf88] sm:$0xff]
    %v525 = vld [vmem:[%s1 + $0xf90] sm:$0xff]
    %v526 = vld [vmem:[%s1 + $0xf98] sm:$0xff]
    %v527 = vld [vmem:[%s1 + $0xfa0] sm:$0xff]
    %v528 = vld [vmem:[%s1 + $0xfa8] sm:$0xff]
    %v529 = vld [vmem:[%s1 + $0xfb0] sm:$0xff]
    %v530 = vld [vmem:[%s1 + $0xfb8] sm:$0xff]
    %v531 = vld [vmem:[%s1 + $0xfc0] sm:$0xff]
    %v532 = vld [vmem:[%s1 + $0xfc8] sm:$0xff]
    %v533 = vld [vmem:[%s1 + $0xfd0] sm:$0xff]
    %v534 = vld [vmem:[%s1 + $0xfd8] sm:$0xff]
    %v535 = vld [vmem:[%s1 + $0xfe0] sm:$0xff]
    %v536 = vld [vmem:[%s1 + $0xfe8] sm:$0xff]
    %v537 = vld [vmem:[%s1 + $0xff0] sm:$0xff]
    %v538 = vld [vmem:[%s1 + $0xff8] sm:$0xff]
    %v539 = vld [vmem:[%s1 + $0x1000] sm:$0xff]
    %v540 = vld [vmem:[%s1 + $0x1008] sm:$0xff]
    %v541 = vld [vmem:[%s1 + $0x1010] sm:$0xff]
    %v542 = vld [vmem:[%s1 + $0x1018] sm:$0xff]
    %v543 = vld [vmem:[%s1 + $0x1020] sm:$0xff]
    %v544 = vld [vmem:[%s1 + $0x1028] sm:$0xff]
    %v545 = vld [vmem:[%s1 + $0x1030] sm:$0xff]
    %v546 = vld [vmem:[%s1 + $0x1038] sm:$0xff]
    %v547 = vld [vmem:[%s1 + $0x1040] sm:$0xff]
    %v548 = vld [vmem:[%s1 + $0x1048] sm:$0xff]
    %v549 = vld [vmem:[%s1 + $0x1050] sm:$0xff]
    %v550 = vld [vmem:[%s1 + $0x1058] sm:$0xff]
    %v551 = vld [vmem:[%s1 + $0x1060] sm:$0xff]
    %v552 = vld [vmem:[%s1 + $0x1068] sm:$0xff]
    %v553 = vld [vmem:[%s1 + $0x1070] sm:$0xff]
    %v554 = vld [vmem:[%s1 + $0x1078] sm:$0xff]
    %v555 = vld [vmem:[%s1 + $0x1080] sm:$0xff]
    %v556 = vld [vmem:[%s1 + $0x1088] sm:$0xff]
    %v557 = vld [vmem:[%s1 + $0x1090] sm:$0xff]
    %v558 = vld [vmem:[%s1 + $0x1098] sm:$0xff]
    %v559 = vld [vmem:[%s1 + $0x10a0] sm:$0xff]
    %v560 = vld [vmem:[%s1 + $0x10a8] sm:$0xff]
    %v561 = vld [vmem:[%s1 + $0x10b0] sm:$0xff]
    %v562 = vld [vmem:[%s1 + $0x10b8] sm:$0xff]
    %v563 = vld [vmem:[%s1 + $0x10c0] sm:$0xff]
    %v564 = vld [vmem:[%s1 + $0x10c8] sm:$0xff]
    %v565 = vld [vmem:[%s1 + $0x10d0] sm:$0xff]
    %v566 = vld [vmem:[%s1 + $0x10d8] sm:$0xff]
    %v567 = vld [vmem:[%s1 + $0x10e0] sm:$0xff]
    %v568 = vld [vmem:[%s1 + $0x10e8] sm:$0xff]
    %v569 = vld [vmem:[%s1 + $0x10f0] sm:$0xff]
    %v570 = vld [vmem:[%s1 + $0x10f8] sm:$0xff]
    %v571 = vld [vmem:[%s1 + $0x1100] sm:$0xff]
    %v572 = vld [vmem:[%s1 + $0x1108] sm:$0xff]
    %v573 = vld [vmem:[%s1 + $0x1110] sm:$0xff]
    %v574 = vld [vmem:[%s1 + $0x1118] sm:$0xff]
    %v575 = vld [vmem:[%s1 + $0x1120] sm:$0xff]
    %v576 = vld [vmem:[%s1 + $0x1128] sm:$0xff]
    %v577 = vld [vmem:[%s1 + $0x1130] sm:$0xff]
    %v578 = vld [vmem:[%s1 + $0x1138] sm:$0xff]
    %v579 = vld [vmem:[%s1 + $0x1140] sm:$0xff]
    %v580 = vld [vmem:[%s1 + $0x1148] sm:$0xff]
    %v581 = vld [vmem:[%s1 + $0x1150] sm:$0xff]
    %v582 = vld [vmem:[%s1 + $0x1158] sm:$0xff]
    %v583 = vld [vmem:[%s1 + $0x1160] sm:$0xff]
    %v584 = vld [vmem:[%s1 + $0x1168] sm:$0xff]
    %v585 = vld [vmem:[%s1 + $0x1170] sm:$0xff]
    %v586 = vld [vmem:[%s1 + $0x1178] sm:$0xff]
    %v587 = vld [vmem:[%s1 + $0x1180] sm:$0xff]
    %v588 = vld [vmem:[%s1 + $0x1188] sm:$0xff]
    %v589 = vld [vmem:[%s1 + $0x1190] sm:$0xff]
    %v590 = vld [vmem:[%s1 + $0x1198] sm:$0xff]
    %v591 = vld [vmem:[%s1 + $0x11a0] sm:$0xff]
    %v592 = vld [vmem:[%s1 + $0x11a8] sm:$0xff]
    %v593 = vld [vmem:[%s1 + $0x11b0] sm:$0xff]
    %v594 = vld [vmem:[%s1 + $0x11b8] sm:$0xff]
    %v595 = vld [vmem:[%s1 + $0x11c0] sm:$0xff]
    %v596 = vld [vmem:[%s1 + $0x11c8] sm:$0xff]
    %v597 = vld [vmem:[%s1 + $0x11d0] sm:$0xff]
    %v598 = vld [vmem:[%s1 + $0x11d8] sm:$0xff]
    %v599 = vld [vmem:[%s1 + $0x11e0] sm:$0xff]
    %v600 = vld [vmem:[%s1 + $0x11e8] sm:$0xff]
    %v601 = vld [vmem:[%s1 + $0x11f0] sm:$0xff]
    %v602 = vld [vmem:[%s1 + $0x11f8] sm:$0xff]
    %v603 = vld [vmem:[%s1 + $0x1200] sm:$0xff]
    %v604 = vld [vmem:[%s1 + $0x1208] sm:$0xff]
    %v605 = vld [vmem:[%s1 + $0x1210] sm:$0xff]
    %v606 = vld [vmem:[%s1 + $0x1218] sm:$0xff]
    %v607 = vld [vmem:[%s1 + $0x1220] sm:$0xff]
    %v608 = vld [vmem:[%s1 + $0x1228] sm:$0xff]
    %v609 = vld [vmem:[%s1 + $0x1230] sm:$0xff]
    %v610 = vld [vmem:[%s1 + $0x1238] sm:$0xff]
    %v611 = vld [vmem:[%s1 + $0x1240] sm:$0xff]
    %v612 = vld [vmem:[%s1 + $0x1248] sm:$0xff]
    %v613 = vld [vmem:[%s1 + $0x1250] sm:$0xff]
    %v614 = vld [vmem:[%s1 + $0x1258] sm:$0xff]
    %v615 = vld [vmem:[%s1 + $0x1260] sm:$0xff]
    %v616 = vld [vmem:[%s1 + $0x1268] sm:$0xff]
    %v617 = vld [vmem:[%s1 + $0x1270] sm:$0xff]
    %v618 = vld [vmem:[%s1 + $0x1278] sm:$0xff]
    %v619 = vld [vmem:[%s1 + $0x1280] sm:$0xff]
    %v620 = vld [vmem:[%s1 + $0x1288] sm:$0xff]
    %v621 = vld [vmem:[%s1 + $0x1290] sm:$0xff]
    %v622 = vld [vmem:[%s1 + $0x1298] sm:$0xff]
    %v623 = vld [vmem:[%s1 + $0x12a0] sm:$0xff]
    %v624 = vld [vmem:[%s1 + $0x12a8] sm:$0xff]
    %v625 = vld [vmem:[%s1 + $0x12b0] sm:$0xff]
    %v626 = vld [vmem:[%s1 + $0x12b8] sm:$0xff]
    %v627 = vld [vmem:[%s1 + $0x12c0] sm:$0xff]
    %v628 = vld [vmem:[%s1 + $0x12c8] sm:$0xff]
    %v629 = vld [vmem:[%s1 + $0x12d0] sm:$0xff]
    %v630 = vld [vmem:[%s1 + $0x12d8] sm:$0xff]
    %v631 = vld [vmem:[%s1 + $0x12e0] sm:$0xff]
    %v632 = vld [vmem:[%s1 + $0x12e8] sm:$0xff]
    %v633 = vld [vmem:[%s1 + $0x12f0] sm:$0xff]
    %v634 = vld [vmem:[%s1 + $0x12f8] sm:$0xff]
    %v635 = vld [vmem:[%s1 + $0x1300] sm:$0xff]
    %v636 = vld [vmem:[%s1 + $0x1308] sm:$0xff]
    %v637 = vld [vmem:[%s1 + $0x1310] sm:$0xff]
    %v638 = vld [vmem:[%s1 + $0x1318] sm:$0xff]
    %v639 = vld [vmem:[%s1 + $0x1320] sm:$0xff]
    %v640 = vld [vmem:[%s1 + $0x1328] sm:$0xff]
    %v641 = vld [vmem:[%s1 + $0x1330] sm:$0xff]
    %v642 = vld [vmem:[%s1 + $0x1338] sm:$0xff]
    %v643 = vld [vmem:[%s1 + $0x1340] sm:$0xff]
    %v644 = vld [vmem:[%s1 + $0x1348] sm:$0xff]
    %v645 = vld [vmem:[%s1 + $0x1350] sm:$0xff]
    %v646 = vld [vmem:[%s1 + $0x1358] sm:$0xff]
    %v647 = vld [vmem:[%s1 + $0x1360] sm:$0xff]
    %v648 = vld [vmem:[%s1 + $0x1368] sm:$0xff]
    %v649 = vld [vmem:[%s1 + $0x1370] sm:$0xff]
    %v650 = vld [vmem:[%s1 + $0x1378] sm:$0xff]
    %v651 = vld [vmem:[%s1 + $0x1380] sm:$0xff]
    %v652 = vld [vmem:[%s1 + $0x1388] sm:$0xff]
    %v653 = vld [vmem:[%s1 + $0x1390] sm:$0xff]
    %v654 = vld [vmem:[%s1 + $0x1398] sm:$0xff]
    %v655 = vld [vmem:[%s1 + $0x13a0] sm:$0xff]
    %v656 = vld [vmem:[%s1 + $0x13a8] sm:$0xff]
    %v657 = vld [vmem:[%s1 + $0x13b0] sm:$0xff]
    %v658 = vld [vmem:[%s1 + $0x13b8] sm:$0xff]
    %v659 = vld [vmem:[%s1 + $0x13c0] sm:$0xff]
    %v660 = vld [vmem:[%s1 + $0x13c8] sm:$0xff]
    %v661 = vld [vmem:[%s1 + $0x13d0] sm:$0xff]
    %v662 = vld [vmem:[%s1 + $0x13d8] sm:$0xff]
    %v663 = vld [vmem:[%s1 + $0x13e0] sm:$0xff]
    %v664 = vld [vmem:[%s1 + $0x13e8] sm:$0xff]
    %v665 = vld [vmem:[%s1 + $0x13f0] sm:$0xff]
    %v666 = vld [vmem:[%s1 + $0x13f8] sm:$0xff]
    %v667 = vld [vmem:[%s1 + $0x1400] sm:$0xff]
    %v668 = vld [vmem:[%s1 + $0x1408] sm:$0xff]
    %v669 = vld [vmem:[%s1 + $0x1410] sm:$0xff]
    %v670 = vld [vmem:[%s1 + $0x1418] sm:$0xff]
    %v671 = vld [vmem:[%s1 + $0x1420] sm:$0xff]
    %v672 = vld [vmem:[%s1 + $0x1428] sm:$0xff]
    %v673 = vld [vmem:[%s1 + $0x1430] sm:$0xff]
    %v674 = vld [vmem:[%s1 + $0x1438] sm:$0xff]
    %v675 = vld [vmem:[%s1 + $0x1440] sm:$0xff]
    %v676 = vld [vmem:[%s1 + $0x1448] sm:$0xff]
    %v677 = vld [vmem:[%s1 + $0x1450] sm:$0xff]
    %v678 = vld [vmem:[%s1 + $0x1458] sm:$0xff]
    %v679 = vld [vmem:[%s1 + $0x1460] sm:$0xff]
    %v680 = vld [vmem:[%s1 + $0x1468] sm:$0xff]
    %v681 = vld [vmem:[%s1 + $0x1470] sm:$0xff]
    %v682 = vld [vmem:[%s1 + $0x1478] sm:$0xff]
    %v683 = vld [vmem:[%s1 + $0x1480] sm:$0xff]
    %v684 = vld [vmem:[%s1 + $0x1488] sm:$0xff]
    %v685 = vld [vmem:[%s1 + $0x1490] sm:$0xff]
    %v686 = vld [vmem:[%s1 + $0x1498] sm:$0xff]
    %v687 = vld [vmem:[%s1 + $0x14a0] sm:$0xff]
    %v688 = vld [vmem:[%s1 + $0x14a8] sm:$0xff]
    %v689 = vld [vmem:[%s1 + $0x14b0] sm:$0xff]
    %v690 = vld [vmem:[%s1 + $0x14b8] sm:$0xff]
    %v691 = vld [vmem:[%s1 + $0x14c0] sm:$0xff]
    %v692 = vld [vmem:[%s1 + $0x14c8] sm:$0xff]
    %v693 = vld [vmem:[%s1 + $0x14d0] sm:$0xff]
    %v694 = vld [vmem:[%s1 + $0x14d8] sm:$0xff]
    %v695 = vld [vmem:[%s1 + $0x14e0] sm:$0xff]
    %v696 = vld [vmem:[%s1 + $0x14e8] sm:$0xff]
    %v697 = vld [vmem:[%s1 + $0x14f0] sm:$0xff]
    %v698 = vld [vmem:[%s1 + $0x14f8] sm:$0xff]
    %v699 = vld [vmem:[%s1 + $0x1500] sm:$0xff]
    %v700 = vld [vmem:[%s1 + $0x1508] sm:$0xff]
    %v701 = vld [vmem:[%s1 + $0x1510] sm:$0xff]
    %v702 = vld [vmem:[%s1 + $0x1518] sm:$0xff]
    %v703 = vld [vmem:[%s1 + $0x1520] sm:$0xff]
    %v704 = vld [vmem:[%s1 + $0x1528] sm:$0xff]
    %v705 = vld [vmem:[%s1 + $0x1530] sm:$0xff]
    %v706 = vld [vmem:[%s1 + $0x1538] sm:$0xff]
    %v707 = vld [vmem:[%s1 + $0x1540] sm:$0xff]
    %v708 = vld [vmem:[%s1 + $0x1548] sm:$0xff]
    %v709 = vld [vmem:[%s1 + $0x1550] sm:$0xff]
    %v710 = vld [vmem:[%s1 + $0x1558] sm:$0xff]
    %v711 = vld [vmem:[%s1 + $0x1560] sm:$0xff]
    %v712 = vld [vmem:[%s1 + $0x1568] sm:$0xff]
    %v713 = vld [vmem:[%s1 + $0x1570] sm:$0xff]
    %v714 = vld [vmem:[%s1 + $0x1578] sm:$0xff]
    %v715 = vld [vmem:[%s1 + $0x1580] sm:$0xff]
    %v716 = vld [vmem:[%s1 + $0x1588] sm:$0xff]
    %v717 = vld [vmem:[%s1 + $0x1590] sm:$0xff]
    %v718 = vld [vmem:[%s1 + $0x1598] sm:$0xff]
    %v719 = vld [vmem:[%s1 + $0x15a0] sm:$0xff]
    %v720 = vld [vmem:[%s1 + $0x15a8] sm:$0xff]
    %v721 = vld [vmem:[%s1 + $0x15b0] sm:$0xff]
    %v722 = vld [vmem:[%s1 + $0x15b8] sm:$0xff]
    %v723 = vld [vmem:[%s1 + $0x15c0] sm:$0xff]
    %v724 = vld [vmem:[%s1 + $0x15c8] sm:$0xff]
    %v725 = vld [vmem:[%s1 + $0x15d0] sm:$0xff]
    %v726 = vld [vmem:[%s1 + $0x15d8] sm:$0xff]
    %v727 = vld [vmem:[%s1 + $0x15e0] sm:$0xff]
    %v728 = vld [vmem:[%s1 + $0x15e8] sm:$0xff]
    %v729 = vld [vmem:[%s1 + $0x15f0] sm:$0xff]
    %v730 = vld [vmem:[%s1 + $0x15f8] sm:$0xff]
    %v731 = vld [vmem:[%s1 + $0x1600] sm:$0xff]
    %v732 = vld [vmem:[%s1 + $0x1608] sm:$0xff]
    %v733 = vld [vmem:[%s1 + $0x1610] sm:$0xff]
    %v734 = vld [vmem:[%s1 + $0x1618] sm:$0xff]
    %v735 = vld [vmem:[%s1 + $0x1620] sm:$0xff]
    %v736 = vld [vmem:[%s1 + $0x1628] sm:$0xff]
    %v737 = vld [vmem:[%s1 + $0x1630] sm:$0xff]
    %v738 = vld [vmem:[%s1 + $0x1638] sm:$0xff]
    %v739 = vld [vmem:[%s1 + $0x1640] sm:$0xff]
    %v740 = vld [vmem:[%s1 + $0x1648] sm:$0xff]
    %v741 = vld [vmem:[%s1 + $0x1650] sm:$0xff]
    %v742 = vld [vmem:[%s1 + $0x1658] sm:$0xff]
    %v743 = vld [vmem:[%s1 + $0x1660] sm:$0xff]
    %v744 = vld [vmem:[%s1 + $0x1668] sm:$0xff]
    %v745 = vld [vmem:[%s1 + $0x1670] sm:$0xff]
    %v746 = vld [vmem:[%s1 + $0x1678] sm:$0xff]
    %v747 = vld [vmem:[%s1 + $0x1680] sm:$0xff]
    %v748 = vld [vmem:[%s1 + $0x1688] sm:$0xff]
    %v749 = vld [vmem:[%s1 + $0x1690] sm:$0xff]
    %v750 = vld [vmem:[%s1 + $0x1698] sm:$0xff]
    %v751 = vld [vmem:[%s1 + $0x16a0] sm:$0xff]
    %v752 = vld [vmem:[%s1 + $0x16a8] sm:$0xff]
    %v753 = vld [vmem:[%s1 + $0x16b0] sm:$0xff]
    %v754 = vld [vmem:[%s1 + $0x16b8] sm:$0xff]
    %v755 = vld [vmem:[%s1 + $0x16c0] sm:$0xff]
    %v756 = vld [vmem:[%s1 + $0x16c8] sm:$0xff]
    %v757 = vld [vmem:[%s1 + $0x16d0] sm:$0xff]
    %v758 = vld [vmem:[%s1 + $0x16d8] sm:$0xff]
    %v759 = vld [vmem:[%s1 + $0x16e0] sm:$0xff]
    %v760 = vld [vmem:[%s1 + $0x16e8] sm:$0xff]
    %v761 = vld [vmem:[%s1 + $0x16f0] sm:$0xff]
    %v762 = vld [vmem:[%s1 + $0x16f8] sm:$0xff]
    %v763 = vld [vmem:[%s1 + $0x1700] sm:$0xff]
    %v764 = vld [vmem:[%s1 + $0x1708] sm:$0xff]
    %v765 = vld [vmem:[%s1 + $0x1710] sm:$0xff]
    %v766 = vld [vmem:[%s1 + $0x1718] sm:$0xff]
    %v767 = vld [vmem:[%s1 + $0x1720] sm:$0xff]
    %v768 = vld [vmem:[%s1 + $0x1728] sm:$0xff]
    %v769 = vld [vmem:[%s1 + $0x1730] sm:$0xff]
    %v770 = vld [vmem:[%s1 + $0x1738] sm:$0xff]
    %v771 = vld [vmem:[%s1 + $0x1740] sm:$0xff]
    %v772 = vld [vmem:[%s1 + $0x1748] sm:$0xff]
    %v773 = vld [vmem:[%s1 + $0x1750] sm:$0xff]
    %v774 = vld [vmem:[%s1 + $0x1758] sm:$0xff]
    %v775 = vld [vmem:[%s1 + $0x1760] sm:$0xff]
    %v776 = vld [vmem:[%s1 + $0x1768] sm:$0xff]
    %v777 = vld [vmem:[%s1 + $0x1770] sm:$0xff]
    %v778 = vld [vmem:[%s1 + $0x1778] sm:$0xff]
    %v779 = vld [vmem:[%s1 + $0x1780] sm:$0xff]
    %v780 = vld [vmem:[%s1 + $0x1788] sm:$0xff]
    %v781 = vld [vmem:[%s1 + $0x1790] sm:$0xff]
    %v782 = vld [vmem:[%s1 + $0x1798] sm:$0xff]
    %v783 = vld [vmem:[%s1 + $0x17a0] sm:$0xff]
    %v784 = vld [vmem:[%s1 + $0x17a8] sm:$0xff]
    %v785 = vld [vmem:[%s1 + $0x17b0] sm:$0xff]
    %v786 = vld [vmem:[%s1 + $0x17b8] sm:$0xff]
    %v787 = vld [vmem:[%s1 + $0x17c0] sm:$0xff]
    %v788 = vld [vmem:[%s1 + $0x17c8] sm:$0xff]
    %v789 = vld [vmem:[%s1 + $0x17d0] sm:$0xff]
    %v790 = vld [vmem:[%s1 + $0x17d8] sm:$0xff]
    %v791 = vld [vmem:[%s1 + $0x17e0] sm:$0xff]
    %v792 = vld [vmem:[%s1 + $0x17e8] sm:$0xff]
    %v793 = vld [vmem:[%s1 + $0x17f0] sm:$0xff]
    %v794 = vld [vmem:[%s1 + $0x17f8] sm:$0xff]
    %v795 = vld [vmem:[%s2] sm:$0x3]
    %v797 = vlaneseq
    %v798 = vshrl.u32 %v797, 7
    %v799 = vsub.s32 0, %v798
    %v800 = vrot.slane %v795, %v799
    %v801 = vlaneseq
    %v802 = vshrl.u32 %v801, 7
    %v803 = vsub.s32 1, %v802
    %v804 = vrot.slane %v795, %v803
    %v813 = vcombine.high %v21, %v21
    %v815 = vunpack.c.l.s4 1983009808
    %v816 = vunpack.c.0.s8 %v815
    %v817 = vlaneseq
    %v818 = vshrl.u32 %v817, 7
    %v819 = vsub.s32 %v816, %v818
    %v820 = vrot.slane %v21, %v819
    %v822 = vunpack.c.l.s4 1983009808
    %v823 = vunpack.c.0.s8 %v822
    %v824 = vlaneseq
    %v825 = vshrl.u32 %v824, 7
    %v826 = vsub.s32 %v823, %v825
    %v827 = vrot.slane %v813, %v826
    %v828 = vcombine.high %v820, %v820
    %v829 = vcombine.high %v827, %v827
    %v830 = vcombine.high %v22, %v22
    %v832 = vunpack.c.l.s4 1983009808
    %v833 = vunpack.c.0.s8 %v832
    %v834 = vlaneseq
    %v835 = vshrl.u32 %v834, 7
    %v836 = vsub.s32 %v833, %v835
    %v837 = vrot.slane %v22, %v836
    %v839 = vunpack.c.l.s4 1983009808
    %v840 = vunpack.c.0.s8 %v839
    %v841 = vlaneseq
    %v842 = vshrl.u32 %v841, 7
    %v843 = vsub.s32 %v840, %v842
    %v844 = vrot.slane %v830, %v843
    %v845 = vcombine.high %v837, %v837
    %v846 = vcombine.high %v844, %v844
    %v847 = vcombine.high %v23, %v23
    %v849 = vunpack.c.l.s4 1983009808
    %v850 = vunpack.c.0.s8 %v849
    %v851 = vlaneseq
    %v852 = vshrl.u32 %v851, 7
    %v853 = vsub.s32 %v850, %v852
    %v854 = vrot.slane %v23, %v853
    %v856 = vunpack.c.l.s4 1983009808
    %v857 = vunpack.c.0.s8 %v856
    %v858 = vlaneseq
    %v859 = vshrl.u32 %v858, 7
    %v860 = vsub.s32 %v857, %v859
    %v861 = vrot.slane %v847, %v860
    %v862 = vcombine.high %v854, %v854
    %v863 = vcombine.high %v861, %v861
    %v864 = vcombine.high %v24, %v24
    %v866 = vunpack.c.l.s4 1983009808
    %v867 = vunpack.c.0.s8 %v866
    %v868 = vlaneseq
    %v869 = vshrl.u32 %v868, 7
    %v870 = vsub.s32 %v867, %v869
    %v871 = vrot.slane %v24, %v870
    %v873 = vunpack.c.l.s4 1983009808
    %v874 = vunpack.c.0.s8 %v873
    %v875 = vlaneseq
    %v876 = vshrl.u32 %v875, 7
    %v877 = vsub.s32 %v874, %v876
    %v878 = vrot.slane %v864, %v877
    %v879 = vcombine.high %v871, %v871
    %v880 = vcombine.high %v878, %v878
    %v881 = vcombine.high %v25, %v25
    %v883 = vunpack.c.l.s4 1983009808
    %v884 = vunpack.c.0.s8 %v883
    %v885 = vlaneseq
    %v886 = vshrl.u32 %v885, 7
    %v887 = vsub.s32 %v884, %v886
    %v888 = vrot.slane %v25, %v887
    %v890 = vunpack.c.l.s4 1983009808
    %v891 = vunpack.c.0.s8 %v890
    %v892 = vlaneseq
    %v893 = vshrl.u32 %v892, 7
    %v894 = vsub.s32 %v891, %v893
    %v895 = vrot.slane %v881, %v894
    %v896 = vcombine.high %v888, %v888
    %v897 = vcombine.high %v895, %v895
    %v898 = vcombine.high %v26, %v26
    %v900 = vunpack.c.l.s4 1983009808
    %v901 = vunpack.c.0.s8 %v900
    %v902 = vlaneseq
    %v903 = vshrl.u32 %v902, 7
    %v904 = vsub.s32 %v901, %v903
    %v905 = vrot.slane %v26, %v904
    %v907 = vunpack.c.l.s4 1983009808
    %v908 = vunpack.c.0.s8 %v907
    %v909 = vlaneseq
    %v910 = vshrl.u32 %v909, 7
    %v911 = vsub.s32 %v908, %v910
    %v912 = vrot.slane %v898, %v911
    %v913 = vcombine.high %v905, %v905
    %v914 = vcombine.high %v912, %v912
    %939 = vmatprep.subr.mxu0 %v28
    %940 = vmatpush1.msra.mxu0 %v27
    %941 = vmatprep.subr.mxu0 %v30
    %942 = vmatpush1.msra.mxu0 %v29
    %943 = vmatprep.subr.mxu0 %v32
    %944 = vmatpush1.msra.mxu0 %v31
    %945 = vmatprep.subr.mxu0 %v34
    %946 = vmatpush1.msra.mxu0 %v33
    %947 = vmatprep.subr.mxu0 %v36
    %948 = vmatpush1.msra.mxu0 %v35
    %949 = vmatprep.subr.mxu0 %v38
    %950 = vmatpush1.msra.mxu0 %v37
    %951 = vmatprep.subr.mxu0 %v40
    %952 = vmatpush1.msra.mxu0 %v39
    %953 = vmatprep.subr.mxu0 %v42
    %954 = vmatpush1.msra.mxu0 %v41
    %955 = vmatprep.subr.mxu0 %v44
    %956 = vmatpush1.msra.mxu0 %v43
    %957 = vmatprep.subr.mxu0 %v46
    %958 = vmatpush1.msra.mxu0 %v45
    %959 = vmatprep.subr.mxu0 %v48
    %960 = vmatpush1.msra.mxu0 %v47
    %961 = vmatprep.subr.mxu0 %v50
    %962 = vmatpush1.msra.mxu0 %v49
    %963 = vmatprep.subr.mxu0 %v52
    %964 = vmatpush1.msra.mxu0 %v51
    %965 = vmatprep.subr.mxu0 %v54
    %966 = vmatpush1.msra.mxu0 %v53
    %967 = vmatprep.subr.mxu0 %v56
    %968 = vmatpush1.msra.mxu0 %v55
    %969 = vmatprep.subr.mxu0 %v58
    %970 = vmatpush1.msra.mxu0 %v57
    %971 = vmatprep.subr.mxu0 %v60
    %972 = vmatpush1.msra.mxu0 %v59
    %973 = vmatprep.subr.mxu0 %v62
    %974 = vmatpush1.msra.mxu0 %v61
    %975 = vmatprep.subr.mxu0 %v64
    %976 = vmatpush1.msra.mxu0 %v63
    %977 = vmatprep.subr.mxu0 %v66
    %978 = vmatpush1.msra.mxu0 %v65
    %979 = vmatprep.subr.mxu0 %v68
    %980 = vmatpush1.msra.mxu0 %v67
    %981 = vmatprep.subr.mxu0 %v70
    %982 = vmatpush1.msra.mxu0 %v69
    %983 = vmatprep.subr.mxu0 %v72
    %984 = vmatpush1.msra.mxu0 %v71
    %985 = vmatprep.subr.mxu0 %v74
    %986 = vmatpush1.msra.mxu0 %v73
    %987 = vmatprep.subr.mxu0 %v76
    %988 = vmatpush1.msra.mxu0 %v75
    %989 = vmatprep.subr.mxu0 %v78
    %990 = vmatpush1.msra.mxu0 %v77
    %991 = vmatprep.subr.mxu0 %v80
    %992 = vmatpush1.msra.mxu0 %v79
    %993 = vmatprep.subr.mxu0 %v82
    %994 = vmatpush1.msra.mxu0 %v81
    %995 = vmatprep.subr.mxu0 %v84
    %996 = vmatpush1.msra.mxu0 %v83
    %997 = vmatprep.subr.mxu0 %v86
    %998 = vmatpush1.msra.mxu0 %v85
    %999 = vmatprep.subr.mxu0 %v88
    %1000 = vmatpush1.msra.mxu0 %v87
    %1001 = vmatprep.subr.mxu0 %v90
    %1002 = vmatpush1.msra.mxu0 %v89
    %1003 = vmatprep.mubr.f32.mxu0 %v828
    %1004 = vmatmul.mubr.f32.gmra.mrb[0].mxu0 %v820
    %v1005 = vpop.f32.mrb[0].mxu0
    %v1006 = vadd.f32 %v800, %v1005
    %v1007 = vpop.f32.mrb[0].mxu0
    %v1008 = vadd.f32 %v804, %v1007
    %1009 = vdwg.mxu0
    %1010 = vmatprep.subr.mxu0 %v92
    %1011 = vmatpush1.msra.mxu0 %v91
    %1012 = vmatprep.subr.mxu0 %v94
    %1013 = vmatpush1.msra.mxu0 %v93
    %1014 = vmatprep.subr.mxu0 %v96
    %1015 = vmatpush1.msra.mxu0 %v95
    %1016 = vmatprep.subr.mxu0 %v98
    %1017 = vmatpush1.msra.mxu0 %v97
    %1018 = vmatprep.subr.mxu0 %v100
    %1019 = vmatpush1.msra.mxu0 %v99
    %1020 = vmatprep.subr.mxu0 %v102
    %1021 = vmatpush1.msra.mxu0 %v101
    %1022 = vmatprep.subr.mxu0 %v104
    %1023 = vmatpush1.msra.mxu0 %v103
    %1024 = vmatprep.subr.mxu0 %v106
    %1025 = vmatpush1.msra.mxu0 %v105
    %1026 = vmatprep.subr.mxu0 %v108
    %1027 = vmatpush1.msra.mxu0 %v107
    %1028 = vmatprep.subr.mxu0 %v110
    %1029 = vmatpush1.msra.mxu0 %v109
    %1030 = vmatprep.subr.mxu0 %v112
    %1031 = vmatpush1.msra.mxu0 %v111
    %1032 = vmatprep.subr.mxu0 %v114
    %1033 = vmatpush1.msra.mxu0 %v113
    %1034 = vmatprep.subr.mxu0 %v116
    %1035 = vmatpush1.msra.mxu0 %v115
    %1036 = vmatprep.subr.mxu0 %v118
    %1037 = vmatpush1.msra.mxu0 %v117
    %1038 = vmatprep.subr.mxu0 %v120
    %1039 = vmatpush1.msra.mxu0 %v119
    %1040 = vmatprep.subr.mxu0 %v122
    %1041 = vmatpush1.msra.mxu0 %v121
    %1042 = vmatprep.subr.mxu0 %v124
    %1043 = vmatpush1.msra.mxu0 %v123
    %1044 = vmatprep.subr.mxu0 %v126
    %1045 = vmatpush1.msra.mxu0 %v125
    %1046 = vmatprep.subr.mxu0 %v128
    %1047 = vmatpush1.msra.mxu0 %v127
    %1048 = vmatprep.subr.mxu0 %v130
    %1049 = vmatpush1.msra.mxu0 %v129
    %1050 = vmatprep.subr.mxu0 %v132
    %1051 = vmatpush1.msra.mxu0 %v131
    %1052 = vmatprep.subr.mxu0 %v134
    %1053 = vmatpush1.msra.mxu0 %v133
    %1054 = vmatprep.subr.mxu0 %v136
    %1055 = vmatpush1.msra.mxu0 %v135
    %1056 = vmatprep.subr.mxu0 %v138
    %1057 = vmatpush1.msra.mxu0 %v137
    %1058 = vmatprep.subr.mxu0 %v140
    %1059 = vmatpush1.msra.mxu0 %v139
    %1060 = vmatprep.subr.mxu0 %v142
    %1061 = vmatpush1.msra.mxu0 %v141
    %1062 = vmatprep.subr.mxu0 %v144
    %1063 = vmatpush1.msra.mxu0 %v143
    %1064 = vmatprep.subr.mxu0 %v146
    %1065 = vmatpush1.msra.mxu0 %v145
    %1066 = vmatprep.subr.mxu0 %v148
    %1067 = vmatpush1.msra.mxu0 %v147
    %1068 = vmatprep.subr.mxu0 %v150
    %1069 = vmatpush1.msra.mxu0 %v149
    %1070 = vmatprep.subr.mxu0 %v152
    %1071 = vmatpush1.msra.mxu0 %v151
    %1072 = vmatprep.subr.mxu0 %v154
    %1073 = vmatpush1.msra.mxu0 %v153
    %1074 = vmatprep.mubr.f32.mxu0 %v829
    %1075 = vmatmul.mubr.f32.gmra.mrb[0].mxu0 %v827
    %v1076 = vpop.f32.mrb[0].mxu0
    %v1077 = vadd.f32 %v1006, %v1076
    %v1078 = vpop.f32.mrb[0].mxu0
    %v1079 = vadd.f32 %v1008, %v1078
    %1080 = vdwg.mxu0
    %1081 = vmatprep.subr.mxu0 %v156
    %1082 = vmatpush1.msra.mxu0 %v155
    %1083 = vmatprep.subr.mxu0 %v158
    %1084 = vmatpush1.msra.mxu0 %v157
    %1085 = vmatprep.subr.mxu0 %v160
    %1086 = vmatpush1.msra.mxu0 %v159
    %1087 = vmatprep.subr.mxu0 %v162
    %1088 = vmatpush1.msra.mxu0 %v161
    %1089 = vmatprep.subr.mxu0 %v164
    %1090 = vmatpush1.msra.mxu0 %v163
    %1091 = vmatprep.subr.mxu0 %v166
    %1092 = vmatpush1.msra.mxu0 %v165
    %1093 = vmatprep.subr.mxu0 %v168
    %1094 = vmatpush1.msra.mxu0 %v167
    %1095 = vmatprep.subr.mxu0 %v170
    %1096 = vmatpush1.msra.mxu0 %v169
    %1097 = vmatprep.subr.mxu0 %v172
    %1098 = vmatpush1.msra.mxu0 %v171
    %1099 = vmatprep.subr.mxu0 %v174
    %1100 = vmatpush1.msra.mxu0 %v173
    %1101 = vmatprep.subr.mxu0 %v176
    %1102 = vmatpush1.msra.mxu0 %v175
    %1103 = vmatprep.subr.mxu0 %v178
    %1104 = vmatpush1.msra.mxu0 %v177
    %1105 = vmatprep.subr.mxu0 %v180
    %1106 = vmatpush1.msra.mxu0 %v179
    %1107 = vmatprep.subr.mxu0 %v182
    %1108 = vmatpush1.msra.mxu0 %v181
    %1109 = vmatprep.subr.mxu0 %v184
    %1110 = vmatpush1.msra.mxu0 %v183
    %1111 = vmatprep.subr.mxu0 %v186
    %1112 = vmatpush1.msra.mxu0 %v185
    %1113 = vmatprep.subr.mxu0 %v188
    %1114 = vmatpush1.msra.mxu0 %v187
    %1115 = vmatprep.subr.mxu0 %v190
    %1116 = vmatpush1.msra.mxu0 %v189
    %1117 = vmatprep.subr.mxu0 %v192
    %1118 = vmatpush1.msra.mxu0 %v191
    %1119 = vmatprep.subr.mxu0 %v194
    %1120 = vmatpush1.msra.mxu0 %v193
    %1121 = vmatprep.subr.mxu0 %v196
    %1122 = vmatpush1.msra.mxu0 %v195
    %1123 = vmatprep.subr.mxu0 %v198
    %1124 = vmatpush1.msra.mxu0 %v197
    %1125 = vmatprep.subr.mxu0 %v200
    %1126 = vmatpush1.msra.mxu0 %v199
    %1127 = vmatprep.subr.mxu0 %v202
    %1128 = vmatpush1.msra.mxu0 %v201
    %1129 = vmatprep.subr.mxu0 %v204
    %1130 = vmatpush1.msra.mxu0 %v203
    %1131 = vmatprep.subr.mxu0 %v206
    %1132 = vmatpush1.msra.mxu0 %v205
    %1133 = vmatprep.subr.mxu0 %v208
    %1134 = vmatpush1.msra.mxu0 %v207
    %1135 = vmatprep.subr.mxu0 %v210
    %1136 = vmatpush1.msra.mxu0 %v209
    %1137 = vmatprep.subr.mxu0 %v212
    %1138 = vmatpush1.msra.mxu0 %v211
    %1139 = vmatprep.subr.mxu0 %v214
    %1140 = vmatpush1.msra.mxu0 %v213
    %1141 = vmatprep.subr.mxu0 %v216
    %1142 = vmatpush1.msra.mxu0 %v215
    %1143 = vmatprep.subr.mxu0 %v218
    %1144 = vmatpush1.msra.mxu0 %v217
    %1145 = vmatprep.mubr.f32.mxu0 %v845
    %1146 = vmatmul.mubr.f32.gmra.mrb[0].mxu0 %v837
    %v1147 = vpop.f32.mrb[0].mxu0
    %v1148 = vadd.f32 %v1077, %v1147
    %v1149 = vpop.f32.mrb[0].mxu0
    %v1150 = vadd.f32 %v1079, %v1149
    %1151 = vdwg.mxu0
    %1152 = vmatprep.subr.mxu0 %v220
    %1153 = vmatpush1.msra.mxu0 %v219
    %1154 = vmatprep.subr.mxu0 %v222
    %1155 = vmatpush1.msra.mxu0 %v221
    %1156 = vmatprep.subr.mxu0 %v224
    %1157 = vmatpush1.msra.mxu0 %v223
    %1158 = vmatprep.subr.mxu0 %v226
    %1159 = vmatpush1.msra.mxu0 %v225
    %1160 = vmatprep.subr.mxu0 %v228
    %1161 = vmatpush1.msra.mxu0 %v227
    %1162 = vmatprep.subr.mxu0 %v230
    %1163 = vmatpush1.msra.mxu0 %v229
    %1164 = vmatprep.subr.mxu0 %v232
    %1165 = vmatpush1.msra.mxu0 %v231
    %1166 = vmatprep.subr.mxu0 %v234
    %1167 = vmatpush1.msra.mxu0 %v233
    %1168 = vmatprep.subr.mxu0 %v236
    %1169 = vmatpush1.msra.mxu0 %v235
    %1170 = vmatprep.subr.mxu0 %v238
    %1171 = vmatpush1.msra.mxu0 %v237
    %1172 = vmatprep.subr.mxu0 %v240
    %1173 = vmatpush1.msra.mxu0 %v239
    %1174 = vmatprep.subr.mxu0 %v242
    %1175 = vmatpush1.msra.mxu0 %v241
    %1176 = vmatprep.subr.mxu0 %v244
    %1177 = vmatpush1.msra.mxu0 %v243
    %1178 = vmatprep.subr.mxu0 %v246
    %1179 = vmatpush1.msra.mxu0 %v245
    %1180 = vmatprep.subr.mxu0 %v248
    %1181 = vmatpush1.msra.mxu0 %v247
    %1182 = vmatprep.subr.mxu0 %v250
    %1183 = vmatpush1.msra.mxu0 %v249
    %1184 = vmatprep.subr.mxu0 %v252
    %1185 = vmatpush1.msra.mxu0 %v251
    %1186 = vmatprep.subr.mxu0 %v254
    %1187 = vmatpush1.msra.mxu0 %v253
    %1188 = vmatprep.subr.mxu0 %v256
    %1189 = vmatpush1.msra.mxu0 %v255
    %1190 = vmatprep.subr.mxu0 %v258
    %1191 = vmatpush1.msra.mxu0 %v257
    %1192 = vmatprep.subr.mxu0 %v260
    %1193 = vmatpush1.msra.mxu0 %v259
    %1194 = vmatprep.subr.mxu0 %v262
    %1195 = vmatpush1.msra.mxu0 %v261
    %1196 = vmatprep.subr.mxu0 %v264
    %1197 = vmatpush1.msra.mxu0 %v263
    %1198 = vmatprep.subr.mxu0 %v266
    %1199 = vmatpush1.msra.mxu0 %v265
    %1200 = vmatprep.subr.mxu0 %v268
    %1201 = vmatpush1.msra.mxu0 %v267
    %1202 = vmatprep.subr.mxu0 %v270
    %1203 = vmatpush1.msra.mxu0 %v269
    %1204 = vmatprep.subr.mxu0 %v272
    %1205 = vmatpush1.msra.mxu0 %v271
    %1206 = vmatprep.subr.mxu0 %v274
    %1207 = vmatpush1.msra.mxu0 %v273
    %1208 = vmatprep.subr.mxu0 %v276
    %1209 = vmatpush1.msra.mxu0 %v275
    %1210 = vmatprep.subr.mxu0 %v278
    %1211 = vmatpush1.msra.mxu0 %v277
    %1212 = vmatprep.subr.mxu0 %v280
    %1213 = vmatpush1.msra.mxu0 %v279
    %1214 = vmatprep.subr.mxu0 %v282
    %1215 = vmatpush1.msra.mxu0 %v281
    %1216 = vmatprep.mubr.f32.mxu0 %v846
    %1217 = vmatmul.mubr.f32.gmra.mrb[0].mxu0 %v844
    %v1218 = vpop.f32.mrb[0].mxu0
    %v1219 = vadd.f32 %v1148, %v1218
    %v1220 = vpop.f32.mrb[0].mxu0
    %v1221 = vadd.f32 %v1150, %v1220
    %1222 = vdwg.mxu0
    %1223 = vmatprep.subr.mxu0 %v284
    %1224 = vmatpush1.msra.mxu0 %v283
    %1225 = vmatprep.subr.mxu0 %v286
    %1226 = vmatpush1.msra.mxu0 %v285
    %1227 = vmatprep.subr.mxu0 %v288
    %1228 = vmatpush1.msra.mxu0 %v287
    %1229 = vmatprep.subr.mxu0 %v290
    %1230 = vmatpush1.msra.mxu0 %v289
    %1231 = vmatprep.subr.mxu0 %v292
    %1232 = vmatpush1.msra.mxu0 %v291
    %1233 = vmatprep.subr.mxu0 %v294
    %1234 = vmatpush1.msra.mxu0 %v293
    %1235 = vmatprep.subr.mxu0 %v296
    %1236 = vmatpush1.msra.mxu0 %v295
    %1237 = vmatprep.subr.mxu0 %v298
    %1238 = vmatpush1.msra.mxu0 %v297
    %1239 = vmatprep.subr.mxu0 %v300
    %1240 = vmatpush1.msra.mxu0 %v299
    %1241 = vmatprep.subr.mxu0 %v302
    %1242 = vmatpush1.msra.mxu0 %v301
    %1243 = vmatprep.subr.mxu0 %v304
    %1244 = vmatpush1.msra.mxu0 %v303
    %1245 = vmatprep.subr.mxu0 %v306
    %1246 = vmatpush1.msra.mxu0 %v305
    %1247 = vmatprep.subr.mxu0 %v308
    %1248 = vmatpush1.msra.mxu0 %v307
    %1249 = vmatprep.subr.mxu0 %v310
    %1250 = vmatpush1.msra.mxu0 %v309
    %1251 = vmatprep.subr.mxu0 %v312
    %1252 = vmatpush1.msra.mxu0 %v311
    %1253 = vmatprep.subr.mxu0 %v314
    %1254 = vmatpush1.msra.mxu0 %v313
    %1255 = vmatprep.subr.mxu0 %v316
    %1256 = vmatpush1.msra.mxu0 %v315
    %1257 = vmatprep.subr.mxu0 %v318
    %1258 = vmatpush1.msra.mxu0 %v317
    %1259 = vmatprep.subr.mxu0 %v320
    %1260 = vmatpush1.msra.mxu0 %v319
    %1261 = vmatprep.subr.mxu0 %v322
    %1262 = vmatpush1.msra.mxu0 %v321
    %1263 = vmatprep.subr.mxu0 %v324
    %1264 = vmatpush1.msra.mxu0 %v323
    %1265 = vmatprep.subr.mxu0 %v326
    %1266 = vmatpush1.msra.mxu0 %v325
    %1267 = vmatprep.subr.mxu0 %v328
    %1268 = vmatpush1.msra.mxu0 %v327
    %1269 = vmatprep.subr.mxu0 %v330
    %1270 = vmatpush1.msra.mxu0 %v329
    %1271 = vmatprep.subr.mxu0 %v332
    %1272 = vmatpush1.msra.mxu0 %v331
    %1273 = vmatprep.subr.mxu0 %v334
    %1274 = vmatpush1.msra.mxu0 %v333
    %1275 = vmatprep.subr.mxu0 %v336
    %1276 = vmatpush1.msra.mxu0 %v335
    %1277 = vmatprep.subr.mxu0 %v338
    %1278 = vmatpush1.msra.mxu0 %v337
    %1279 = vmatprep.subr.mxu0 %v340
    %1280 = vmatpush1.msra.mxu0 %v339
    %1281 = vmatprep.subr.mxu0 %v342
    %1282 = vmatpush1.msra.mxu0 %v341
    %1283 = vmatprep.subr.mxu0 %v344
    %1284 = vmatpush1.msra.mxu0 %v343
    %1285 = vmatprep.subr.mxu0 %v346
    %1286 = vmatpush1.msra.mxu0 %v345
    %1287 = vmatprep.mubr.f32.mxu0 %v862
    %1288 = vmatmul.mubr.f32.gmra.mrb[0].mxu0 %v854
    %v1289 = vpop.f32.mrb[0].mxu0
    %v1290 = vadd.f32 %v1219, %v1289
    %v1291 = vpop.f32.mrb[0].mxu0
    %v1292 = vadd.f32 %v1221, %v1291
    %1293 = vdwg.mxu0
    %1294 = vmatprep.subr.mxu0 %v348
    %1295 = vmatpush1.msra.mxu0 %v347
    %1296 = vmatprep.subr.mxu0 %v350
    %1297 = vmatpush1.msra.mxu0 %v349
    %1298 = vmatprep.subr.mxu0 %v352
    %1299 = vmatpush1.msra.mxu0 %v351
    %1300 = vmatprep.subr.mxu0 %v354
    %1301 = vmatpush1.msra.mxu0 %v353
    %1302 = vmatprep.subr.mxu0 %v356
    %1303 = vmatpush1.msra.mxu0 %v355
    %1304 = vmatprep.subr.mxu0 %v358
    %1305 = vmatpush1.msra.mxu0 %v357
    %1306 = vmatprep.subr.mxu0 %v360
    %1307 = vmatpush1.msra.mxu0 %v359
    %1308 = vmatprep.subr.mxu0 %v362
    %1309 = vmatpush1.msra.mxu0 %v361
    %1310 = vmatprep.subr.mxu0 %v364
    %1311 = vmatpush1.msra.mxu0 %v363
    %1312 = vmatprep.subr.mxu0 %v366
    %1313 = vmatpush1.msra.mxu0 %v365
    %1314 = vmatprep.subr.mxu0 %v368
    %1315 = vmatpush1.msra.mxu0 %v367
    %1316 = vmatprep.subr.mxu0 %v370
    %1317 = vmatpush1.msra.mxu0 %v369
    %1318 = vmatprep.subr.mxu0 %v372
    %1319 = vmatpush1.msra.mxu0 %v371
    %1320 = vmatprep.subr.mxu0 %v374
    %1321 = vmatpush1.msra.mxu0 %v373
    %1322 = vmatprep.subr.mxu0 %v376
    %1323 = vmatpush1.msra.mxu0 %v375
    %1324 = vmatprep.subr.mxu0 %v378
    %1325 = vmatpush1.msra.mxu0 %v377
    %1326 = vmatprep.subr.mxu0 %v380
    %1327 = vmatpush1.msra.mxu0 %v379
    %1328 = vmatprep.subr.mxu0 %v382
    %1329 = vmatpush1.msra.mxu0 %v381
    %1330 = vmatprep.subr.mxu0 %v384
    %1331 = vmatpush1.msra.mxu0 %v383
    %1332 = vmatprep.subr.mxu0 %v386
    %1333 = vmatpush1.msra.mxu0 %v385
    %1334 = vmatprep.subr.mxu0 %v388
    %1335 = vmatpush1.msra.mxu0 %v387
    %1336 = vmatprep.subr.mxu0 %v390
    %1337 = vmatpush1.msra.mxu0 %v389
    %1338 = vmatprep.subr.mxu0 %v392
    %1339 = vmatpush1.msra.mxu0 %v391
    %1340 = vmatprep.subr.mxu0 %v394
    %1341 = vmatpush1.msra.mxu0 %v393
    %1342 = vmatprep.subr.mxu0 %v396
    %1343 = vmatpush1.msra.mxu0 %v395
    %1344 = vmatprep.subr.mxu0 %v398
    %1345 = vmatpush1.msra.mxu0 %v397
    %1346 = vmatprep.subr.mxu0 %v400
    %1347 = vmatpush1.msra.mxu0 %v399
    %1348 = vmatprep.subr.mxu0 %v402
    %1349 = vmatpush1.msra.mxu0 %v401
    %1350 = vmatprep.subr.mxu0 %v404
    %1351 = vmatpush1.msra.mxu0 %v403
    %1352 = vmatprep.subr.mxu0 %v406
    %1353 = vmatpush1.msra.mxu0 %v405
    %1354 = vmatprep.subr.mxu0 %v408
    %1355 = vmatpush1.msra.mxu0 %v407
    %1356 = vmatprep.subr.mxu0 %v410
    %1357 = vmatpush1.msra.mxu0 %v409
    %1358 = vmatprep.mubr.f32.mxu0 %v863
    %1359 = vmatmul.mubr.f32.gmra.mrb[0].mxu0 %v861
    %v1360 = vpop.f32.mrb[0].mxu0
    %v1361 = vadd.f32 %v1290, %v1360
    %v1362 = vpop.f32.mrb[0].mxu0
    %v1363 = vadd.f32 %v1292, %v1362
    %1364 = vdwg.mxu0
    %1365 = vmatprep.subr.mxu0 %v412
    %1366 = vmatpush1.msra.mxu0 %v411
    %1367 = vmatprep.subr.mxu0 %v414
    %1368 = vmatpush1.msra.mxu0 %v413
    %1369 = vmatprep.subr.mxu0 %v416
    %1370 = vmatpush1.msra.mxu0 %v415
    %1371 = vmatprep.subr.mxu0 %v418
    %1372 = vmatpush1.msra.mxu0 %v417
    %1373 = vmatprep.subr.mxu0 %v420
    %1374 = vmatpush1.msra.mxu0 %v419
    %1375 = vmatprep.subr.mxu0 %v422
    %1376 = vmatpush1.msra.mxu0 %v421
    %1377 = vmatprep.subr.mxu0 %v424
    %1378 = vmatpush1.msra.mxu0 %v423
    %1379 = vmatprep.subr.mxu0 %v426
    %1380 = vmatpush1.msra.mxu0 %v425
    %1381 = vmatprep.subr.mxu0 %v428
    %1382 = vmatpush1.msra.mxu0 %v427
    %1383 = vmatprep.subr.mxu0 %v430
    %1384 = vmatpush1.msra.mxu0 %v429
    %1385 = vmatprep.subr.mxu0 %v432
    %1386 = vmatpush1.msra.mxu0 %v431
    %1387 = vmatprep.subr.mxu0 %v434
    %1388 = vmatpush1.msra.mxu0 %v433
    %1389 = vmatprep.subr.mxu0 %v436
    %1390 = vmatpush1.msra.mxu0 %v435
    %1391 = vmatprep.subr.mxu0 %v438
    %1392 = vmatpush1.msra.mxu0 %v437
    %1393 = vmatprep.subr.mxu0 %v440
    %1394 = vmatpush1.msra.mxu0 %v439
    %1395 = vmatprep.subr.mxu0 %v442
    %1396 = vmatpush1.msra.mxu0 %v441
    %1397 = vmatprep.subr.mxu0 %v444
    %1398 = vmatpush1.msra.mxu0 %v443
    %1399 = vmatprep.subr.mxu0 %v446
    %1400 = vmatpush1.msra.mxu0 %v445
    %1401 = vmatprep.subr.mxu0 %v448
    %1402 = vmatpush1.msra.mxu0 %v447
    %1403 = vmatprep.subr.mxu0 %v450
    %1404 = vmatpush1.msra.mxu0 %v449
    %1405 = vmatprep.subr.mxu0 %v452
    %1406 = vmatpush1.msra.mxu0 %v451
    %1407 = vmatprep.subr.mxu0 %v454
    %1408 = vmatpush1.msra.mxu0 %v453
    %1409 = vmatprep.subr.mxu0 %v456
    %1410 = vmatpush1.msra.mxu0 %v455
    %1411 = vmatprep.subr.mxu0 %v458
    %1412 = vmatpush1.msra.mxu0 %v457
    %1413 = vmatprep.subr.mxu0 %v460
    %1414 = vmatpush1.msra.mxu0 %v459
    %1415 = vmatprep.subr.mxu0 %v462
    %1416 = vmatpush1.msra.mxu0 %v461
    %1417 = vmatprep.subr.mxu0 %v464
    %1418 = vmatpush1.msra.mxu0 %v463
    %1419 = vmatprep.subr.mxu0 %v466
    %1420 = vmatpush1.msra.mxu0 %v465
    %1421 = vmatprep.subr.mxu0 %v468
    %1422 = vmatpush1.msra.mxu0 %v467
    %1423 = vmatprep.subr.mxu0 %v470
    %1424 = vmatpush1.msra.mxu0 %v469
    %1425 = vmatprep.subr.mxu0 %v472
    %1426 = vmatpush1.msra.mxu0 %v471
    %1427 = vmatprep.subr.mxu0 %v474
    %1428 = vmatpush1.msra.mxu0 %v473
    %1429 = vmatprep.mubr.f32.mxu0 %v879
    %1430 = vmatmul.mubr.f32.gmra.mrb[0].mxu0 %v871
    %v1431 = vpop.f32.mrb[0].mxu0
    %v1432 = vadd.f32 %v1361, %v1431
    %v1433 = vpop.f32.mrb[0].mxu0
    %v1434 = vadd.f32 %v1363, %v1433
    %1435 = vdwg.mxu0
    %1436 = vmatprep.subr.mxu0 %v476
    %1437 = vmatpush1.msra.mxu0 %v475
    %1438 = vmatprep.subr.mxu0 %v478
    %1439 = vmatpush1.msra.mxu0 %v477
    %1440 = vmatprep.subr.mxu0 %v480
    %1441 = vmatpush1.msra.mxu0 %v479
    %1442 = vmatprep.subr.mxu0 %v482
    %1443 = vmatpush1.msra.mxu0 %v481
    %1444 = vmatprep.subr.mxu0 %v484
    %1445 = vmatpush1.msra.mxu0 %v483
    %1446 = vmatprep.subr.mxu0 %v486
    %1447 = vmatpush1.msra.mxu0 %v485
    %1448 = vmatprep.subr.mxu0 %v488
    %1449 = vmatpush1.msra.mxu0 %v487
    %1450 = vmatprep.subr.mxu0 %v490
    %1451 = vmatpush1.msra.mxu0 %v489
    %1452 = vmatprep.subr.mxu0 %v492
    %1453 = vmatpush1.msra.mxu0 %v491
    %1454 = vmatprep.subr.mxu0 %v494
    %1455 = vmatpush1.msra.mxu0 %v493
    %1456 = vmatprep.subr.mxu0 %v496
    %1457 = vmatpush1.msra.mxu0 %v495
    %1458 = vmatprep.subr.mxu0 %v498
    %1459 = vmatpush1.msra.mxu0 %v497
    %1460 = vmatprep.subr.mxu0 %v500
    %1461 = vmatpush1.msra.mxu0 %v499
    %1462 = vmatprep.subr.mxu0 %v502
    %1463 = vmatpush1.msra.mxu0 %v501
    %1464 = vmatprep.subr.mxu0 %v504
    %1465 = vmatpush1.msra.mxu0 %v503
    %1466 = vmatprep.subr.mxu0 %v506
    %1467 = vmatpush1.msra.mxu0 %v505
    %1468 = vmatprep.subr.mxu0 %v508
    %1469 = vmatpush1.msra.mxu0 %v507
    %1470 = vmatprep.subr.mxu0 %v510
    %1471 = vmatpush1.msra.mxu0 %v509
    %1472 = vmatprep.subr.mxu0 %v512
    %1473 = vmatpush1.msra.mxu0 %v511
    %1474 = vmatprep.subr.mxu0 %v514
    %1475 = vmatpush1.msra.mxu0 %v513
    %1476 = vmatprep.subr.mxu0 %v516
    %1477 = vmatpush1.msra.mxu0 %v515
    %1478 = vmatprep.subr.mxu0 %v518
    %1479 = vmatpush1.msra.mxu0 %v517
    %1480 = vmatprep.subr.mxu0 %v520
    %1481 = vmatpush1.msra.mxu0 %v519
    %1482 = vmatprep.subr.mxu0 %v522
    %1483 = vmatpush1.msra.mxu0 %v521
    %1484 = vmatprep.subr.mxu0 %v524
    %1485 = vmatpush1.msra.mxu0 %v523
    %1486 = vmatprep.subr.mxu0 %v526
    %1487 = vmatpush1.msra.mxu0 %v525
    %1488 = vmatprep.subr.mxu0 %v528
    %1489 = vmatpush1.msra.mxu0 %v527
    %1490 = vmatprep.subr.mxu0 %v530
    %1491 = vmatpush1.msra.mxu0 %v529
    %1492 = vmatprep.subr.mxu0 %v532
    %1493 = vmatpush1.msra.mxu0 %v531
    %1494 = vmatprep.subr.mxu0 %v534
    %1495 = vmatpush1.msra.mxu0 %v533
    %1496 = vmatprep.subr.mxu0 %v536
    %1497 = vmatpush1.msra.mxu0 %v535
    %1498 = vmatprep.subr.mxu0 %v538
    %1499 = vmatpush1.msra.mxu0 %v537
    %1500 = vmatprep.mubr.f32.mxu0 %v880
    %1501 = vmatmul.mubr.f32.gmra.mrb[0].mxu0 %v878
    %v1502 = vpop.f32.mrb[0].mxu0
    %v1503 = vadd.f32 %v1432, %v1502
    %v1504 = vpop.f32.mrb[0].mxu0
    %v1505 = vadd.f32 %v1434, %v1504
    %1506 = vdwg.mxu0
    %1507 = vmatprep.subr.mxu0 %v540
    %1508 = vmatpush1.msra.mxu0 %v539
    %1509 = vmatprep.subr.mxu0 %v542
    %1510 = vmatpush1.msra.mxu0 %v541
    %1511 = vmatprep.subr.mxu0 %v544
    %1512 = vmatpush1.msra.mxu0 %v543
    %1513 = vmatprep.subr.mxu0 %v546
    %1514 = vmatpush1.msra.mxu0 %v545
    %1515 = vmatprep.subr.mxu0 %v548
    %1516 = vmatpush1.msra.mxu0 %v547
    %1517 = vmatprep.subr.mxu0 %v550
    %1518 = vmatpush1.msra.mxu0 %v549
    %1519 = vmatprep.subr.mxu0 %v552
    %1520 = vmatpush1.msra.mxu0 %v551
    %1521 = vmatprep.subr.mxu0 %v554
    %1522 = vmatpush1.msra.mxu0 %v553
    %1523 = vmatprep.subr.mxu0 %v556
    %1524 = vmatpush1.msra.mxu0 %v555
    %1525 = vmatprep.subr.mxu0 %v558
    %1526 = vmatpush1.msra.mxu0 %v557
    %1527 = vmatprep.subr.mxu0 %v560
    %1528 = vmatpush1.msra.mxu0 %v559
    %1529 = vmatprep.subr.mxu0 %v562
    %1530 = vmatpush1.msra.mxu0 %v561
    %1531 = vmatprep.subr.mxu0 %v564
    %1532 = vmatpush1.msra.mxu0 %v563
    %1533 = vmatprep.subr.mxu0 %v566
    %1534 = vmatpush1.msra.mxu0 %v565
    %1535 = vmatprep.subr.mxu0 %v568
    %1536 = vmatpush1.msra.mxu0 %v567
    %1537 = vmatprep.subr.mxu0 %v570
    %1538 = vmatpush1.msra.mxu0 %v569
    %1539 = vmatprep.subr.mxu0 %v572
    %1540 = vmatpush1.msra.mxu0 %v571
    %1541 = vmatprep.subr.mxu0 %v574
    %1542 = vmatpush1.msra.mxu0 %v573
    %1543 = vmatprep.subr.mxu0 %v576
    %1544 = vmatpush1.msra.mxu0 %v575
    %1545 = vmatprep.subr.mxu0 %v578
    %1546 = vmatpush1.msra.mxu0 %v577
    %1547 = vmatprep.subr.mxu0 %v580
    %1548 = vmatpush1.msra.mxu0 %v579
    %1549 = vmatprep.subr.mxu0 %v582
    %1550 = vmatpush1.msra.mxu0 %v581
    %1551 = vmatprep.subr.mxu0 %v584
    %1552 = vmatpush1.msra.mxu0 %v583
    %1553 = vmatprep.subr.mxu0 %v586
    %1554 = vmatpush1.msra.mxu0 %v585
    %1555 = vmatprep.subr.mxu0 %v588
    %1556 = vmatpush1.msra.mxu0 %v587
    %1557 = vmatprep.subr.mxu0 %v590
    %1558 = vmatpush1.msra.mxu0 %v589
    %1559 = vmatprep.subr.mxu0 %v592
    %1560 = vmatpush1.msra.mxu0 %v591
    %1561 = vmatprep.subr.mxu0 %v594
    %1562 = vmatpush1.msra.mxu0 %v593
    %1563 = vmatprep.subr.mxu0 %v596
    %1564 = vmatpush1.msra.mxu0 %v595
    %1565 = vmatprep.subr.mxu0 %v598
    %1566 = vmatpush1.msra.mxu0 %v597
    %1567 = vmatprep.subr.mxu0 %v600
    %1568 = vmatpush1.msra.mxu0 %v599
    %1569 = vmatprep.subr.mxu0 %v602
    %1570 = vmatpush1.msra.mxu0 %v601
    %1571 = vmatprep.mubr.f32.mxu0 %v896
    %1572 = vmatmul.mubr.f32.gmra.mrb[0].mxu0 %v888
    %v1573 = vpop.f32.mrb[0].mxu0
    %v1574 = vadd.f32 %v1503, %v1573
    %v1575 = vpop.f32.mrb[0].mxu0
    %v1576 = vadd.f32 %v1505, %v1575
    %1577 = vdwg.mxu0
    %1578 = vmatprep.subr.mxu0 %v604
    %1579 = vmatpush1.msra.mxu0 %v603
    %1580 = vmatprep.subr.mxu0 %v606
    %1581 = vmatpush1.msra.mxu0 %v605
    %1582 = vmatprep.subr.mxu0 %v608
    %1583 = vmatpush1.msra.mxu0 %v607
    %1584 = vmatprep.subr.mxu0 %v610
    %1585 = vmatpush1.msra.mxu0 %v609
    %1586 = vmatprep.subr.mxu0 %v612
    %1587 = vmatpush1.msra.mxu0 %v611
    %1588 = vmatprep.subr.mxu0 %v614
    %1589 = vmatpush1.msra.mxu0 %v613
    %1590 = vmatprep.subr.mxu0 %v616
    %1591 = vmatpush1.msra.mxu0 %v615
    %1592 = vmatprep.subr.mxu0 %v618
    %1593 = vmatpush1.msra.mxu0 %v617
    %1594 = vmatprep.subr.mxu0 %v620
    %1595 = vmatpush1.msra.mxu0 %v619
    %1596 = vmatprep.subr.mxu0 %v622
    %1597 = vmatpush1.msra.mxu0 %v621
    %1598 = vmatprep.subr.mxu0 %v624
    %1599 = vmatpush1.msra.mxu0 %v623
    %1600 = vmatprep.subr.mxu0 %v626
    %1601 = vmatpush1.msra.mxu0 %v625
    %1602 = vmatprep.subr.mxu0 %v628
    %1603 = vmatpush1.msra.mxu0 %v627
    %1604 = vmatprep.subr.mxu0 %v630
    %1605 = vmatpush1.msra.mxu0 %v629
    %1606 = vmatprep.subr.mxu0 %v632
    %1607 = vmatpush1.msra.mxu0 %v631
    %1608 = vmatprep.subr.mxu0 %v634
    %1609 = vmatpush1.msra.mxu0 %v633
    %1610 = vmatprep.subr.mxu0 %v636
    %1611 = vmatpush1.msra.mxu0 %v635
    %1612 = vmatprep.subr.mxu0 %v638
    %1613 = vmatpush1.msra.mxu0 %v637
    %1614 = vmatprep.subr.mxu0 %v640
    %1615 = vmatpush1.msra.mxu0 %v639
    %1616 = vmatprep.subr.mxu0 %v642
    %1617 = vmatpush1.msra.mxu0 %v641
    %1618 = vmatprep.subr.mxu0 %v644
    %1619 = vmatpush1.msra.mxu0 %v643
    %1620 = vmatprep.subr.mxu0 %v646
    %1621 = vmatpush1.msra.mxu0 %v645
    %1622 = vmatprep.subr.mxu0 %v648
    %1623 = vmatpush1.msra.mxu0 %v647
    %1624 = vmatprep.subr.mxu0 %v650
    %1625 = vmatpush1.msra.mxu0 %v649
    %1626 = vmatprep.subr.mxu0 %v652
    %1627 = vmatpush1.msra.mxu0 %v651
    %1628 = vmatprep.subr.mxu0 %v654
    %1629 = vmatpush1.msra.mxu0 %v653
    %1630 = vmatprep.subr.mxu0 %v656
    %1631 = vmatpush1.msra.mxu0 %v655
    %1632 = vmatprep.subr.mxu0 %v658
    %1633 = vmatpush1.msra.mxu0 %v657
    %1634 = vmatprep.subr.mxu0 %v660
    %1635 = vmatpush1.msra.mxu0 %v659
    %1636 = vmatprep.subr.mxu0 %v662
    %1637 = vmatpush1.msra.mxu0 %v661
    %1638 = vmatprep.subr.mxu0 %v664
    %1639 = vmatpush1.msra.mxu0 %v663
    %1640 = vmatprep.subr.mxu0 %v666
    %1641 = vmatpush1.msra.mxu0 %v665
    %1642 = vmatprep.mubr.f32.mxu0 %v897
    %1643 = vmatmul.mubr.f32.gmra.mrb[0].mxu0 %v895
    %v1644 = vpop.f32.mrb[0].mxu0
    %v1645 = vadd.f32 %v1574, %v1644
    %v1646 = vpop.f32.mrb[0].mxu0
    %v1647 = vadd.f32 %v1576, %v1646
    %1648 = vdwg.mxu0
    %1649 = vmatprep.subr.mxu0 %v668
    %1650 = vmatpush1.msra.mxu0 %v667
    %1651 = vmatprep.subr.mxu0 %v670
    %1652 = vmatpush1.msra.mxu0 %v669
    %1653 = vmatprep.subr.mxu0 %v672
    %1654 = vmatpush1.msra.mxu0 %v671
    %1655 = vmatprep.subr.mxu0 %v674
    %1656 = vmatpush1.msra.mxu0 %v673
    %1657 = vmatprep.subr.mxu0 %v676
    %1658 = vmatpush1.msra.mxu0 %v675
    %1659 = vmatprep.subr.mxu0 %v678
    %1660 = vmatpush1.msra.mxu0 %v677
    %1661 = vmatprep.subr.mxu0 %v680
    %1662 = vmatpush1.msra.mxu0 %v679
    %1663 = vmatprep.subr.mxu0 %v682
    %1664 = vmatpush1.msra.mxu0 %v681
    %1665 = vmatprep.subr.mxu0 %v684
    %1666 = vmatpush1.msra.mxu0 %v683
    %1667 = vmatprep.subr.mxu0 %v686
    %1668 = vmatpush1.msra.mxu0 %v685
    %1669 = vmatprep.subr.mxu0 %v688
    %1670 = vmatpush1.msra.mxu0 %v687
    %1671 = vmatprep.subr.mxu0 %v690
    %1672 = vmatpush1.msra.mxu0 %v689
    %1673 = vmatprep.subr.mxu0 %v692
    %1674 = vmatpush1.msra.mxu0 %v691
    %1675 = vmatprep.subr.mxu0 %v694
    %1676 = vmatpush1.msra.mxu0 %v693
    %1677 = vmatprep.subr.mxu0 %v696
    %1678 = vmatpush1.msra.mxu0 %v695
    %1679 = vmatprep.subr.mxu0 %v698
    %1680 = vmatpush1.msra.mxu0 %v697
    %1681 = vmatprep.subr.mxu0 %v700
    %1682 = vmatpush1.msra.mxu0 %v699
    %1683 = vmatprep.subr.mxu0 %v702
    %1684 = vmatpush1.msra.mxu0 %v701
    %1685 = vmatprep.subr.mxu0 %v704
    %1686 = vmatpush1.msra.mxu0 %v703
    %1687 = vmatprep.subr.mxu0 %v706
    %1688 = vmatpush1.msra.mxu0 %v705
    %1689 = vmatprep.subr.mxu0 %v708
    %1690 = vmatpush1.msra.mxu0 %v707
    %1691 = vmatprep.subr.mxu0 %v710
    %1692 = vmatpush1.msra.mxu0 %v709
    %1693 = vmatprep.subr.mxu0 %v712
    %1694 = vmatpush1.msra.mxu0 %v711
    %1695 = vmatprep.subr.mxu0 %v714
    %1696 = vmatpush1.msra.mxu0 %v713
    %1697 = vmatprep.subr.mxu0 %v716
    %1698 = vmatpush1.msra.mxu0 %v715
    %1699 = vmatprep.subr.mxu0 %v718
    %1700 = vmatpush1.msra.mxu0 %v717
    %1701 = vmatprep.subr.mxu0 %v720
    %1702 = vmatpush1.msra.mxu0 %v719
    %1703 = vmatprep.subr.mxu0 %v722
    %1704 = vmatpush1.msra.mxu0 %v721
    %1705 = vmatprep.subr.mxu0 %v724
    %1706 = vmatpush1.msra.mxu0 %v723
    %1707 = vmatprep.subr.mxu0 %v726
    %1708 = vmatpush1.msra.mxu0 %v725
    %1709 = vmatprep.subr.mxu0 %v728
    %1710 = vmatpush1.msra.mxu0 %v727
    %1711 = vmatprep.subr.mxu0 %v730
    %1712 = vmatpush1.msra.mxu0 %v729
    %1713 = vmatprep.mubr.f32.mxu0 %v913
    %1714 = vmatmul.mubr.f32.gmra.mrb[0].mxu0 %v905
    %v1715 = vpop.f32.mrb[0].mxu0
    %v1716 = vadd.f32 %v1645, %v1715
    %v1717 = vpop.f32.mrb[0].mxu0
    %v1718 = vadd.f32 %v1647, %v1717
    %1719 = vdwg.mxu0
    %1720 = vmatprep.subr.mxu0 %v732
    %1721 = vmatpush1.msra.mxu0 %v731
    %1722 = vmatprep.subr.mxu0 %v734
    %1723 = vmatpush1.msra.mxu0 %v733
    %1724 = vmatprep.subr.mxu0 %v736
    %1725 = vmatpush1.msra.mxu0 %v735
    %1726 = vmatprep.subr.mxu0 %v738
    %1727 = vmatpush1.msra.mxu0 %v737
    %1728 = vmatprep.subr.mxu0 %v740
    %1729 = vmatpush1.msra.mxu0 %v739
    %1730 = vmatprep.subr.mxu0 %v742
    %1731 = vmatpush1.msra.mxu0 %v741
    %1732 = vmatprep.subr.mxu0 %v744
    %1733 = vmatpush1.msra.mxu0 %v743
    %1734 = vmatprep.subr.mxu0 %v746
    %1735 = vmatpush1.msra.mxu0 %v745
    %1736 = vmatprep.subr.mxu0 %v748
    %1737 = vmatpush1.msra.mxu0 %v747
    %1738 = vmatprep.subr.mxu0 %v750
    %1739 = vmatpush1.msra.mxu0 %v749
    %1740 = vmatprep.subr.mxu0 %v752
    %1741 = vmatpush1.msra.mxu0 %v751
    %1742 = vmatprep.subr.mxu0 %v754
    %1743 = vmatpush1.msra.mxu0 %v753
    %1744 = vmatprep.subr.mxu0 %v756
    %1745 = vmatpush1.msra.mxu0 %v755
    %1746 = vmatprep.subr.mxu0 %v758
    %1747 = vmatpush1.msra.mxu0 %v757
    %1748 = vmatprep.subr.mxu0 %v760
    %1749 = vmatpush1.msra.mxu0 %v759
    %1750 = vmatprep.subr.mxu0 %v762
    %1751 = vmatpush1.msra.mxu0 %v761
    %1752 = vmatprep.subr.mxu0 %v764
    %1753 = vmatpush1.msra.mxu0 %v763
    %1754 = vmatprep.subr.mxu0 %v766
    %1755 = vmatpush1.msra.mxu0 %v765
    %1756 = vmatprep.subr.mxu0 %v768
    %1757 = vmatpush1.msra.mxu0 %v767
    %1758 = vmatprep.subr.mxu0 %v770
    %1759 = vmatpush1.msra.mxu0 %v769
    %1760 = vmatprep.subr.mxu0 %v772
    %1761 = vmatpush1.msra.mxu0 %v771
    %1762 = vmatprep.subr.mxu0 %v774
    %1763 = vmatpush1.msra.mxu0 %v773
    %1764 = vmatprep.subr.mxu0 %v776
    %1765 = vmatpush1.msra.mxu0 %v775
    %1766 = vmatprep.subr.mxu0 %v778
    %1767 = vmatpush1.msra.mxu0 %v777
    %1768 = vmatprep.subr.mxu0 %v780
    %1769 = vmatpush1.msra.mxu0 %v779
    %1770 = vmatprep.subr.mxu0 %v782
    %1771 = vmatpush1.msra.mxu0 %v781
    %1772 = vmatprep.subr.mxu0 %v784
    %1773 = vmatpush1.msra.mxu0 %v783
    %1774 = vmatprep.subr.mxu0 %v786
    %1775 = vmatpush1.msra.mxu0 %v785
    %1776 = vmatprep.subr.mxu0 %v788
    %1777 = vmatpush1.msra.mxu0 %v787
    %1778 = vmatprep.subr.mxu0 %v790
    %1779 = vmatpush1.msra.mxu0 %v789
    %1780 = vmatprep.subr.mxu0 %v792
    %1781 = vmatpush1.msra.mxu0 %v791
    %1782 = vmatprep.subr.mxu0 %v794
    %1783 = vmatpush1.msra.mxu0 %v793
    %1784 = vmatprep.mubr.f32.mxu0 %v914
    %1785 = vmatmul.mubr.f32.gmra.mrb[0].mxu0 %v912
    %v1786 = vpop.f32.mrb[0].mxu0
    %v1787 = vadd.f32 %v1716, %v1786
    %v1788 = vpop.f32.mrb[0].mxu0
    %v1789 = vadd.f32 %v1718, %v1788
    %1790 = vdwg.mxu0
    %vm1791 = vcmp.gt.f32.partialorder %v1787, 0.0
    %vm1792 = vcmp.gt.f32.partialorder %v1789, 0.0
    %v1793 = vmul.f32 %v1787, 0.01
    %v1794 = vmul.f32 %v1789, 0.01
    %v1795 = vsel %vm1791, %v1787, %v1793
    %v1796 = vsel %vm1792, %v1789, %v1794
    %v1797 = vld [vmem:[%s3] sm:$0xff]
    %v1798 = vld [vmem:[%s3 + $0x8] sm:$0xff]
    %v1799 = vld [vmem:[%s3 + $0x10] sm:$0xff]
    %v1800 = vld [vmem:[%s3 + $0x18] sm:$0xff]
    %v1801 = vld [vmem:[%s3 + $0x20] sm:$0xff]
    %v1802 = vld [vmem:[%s3 + $0x28] sm:$0xff]
    %v1803 = vld [vmem:[%s3 + $0x30] sm:$0xff]
    %v1804 = vld [vmem:[%s3 + $0x38] sm:$0xff]
    %v1805 = vld [vmem:[%s3 + $0x40] sm:$0xff]
    %v1806 = vld [vmem:[%s3 + $0x48] sm:$0xff]
    %v1807 = vld [vmem:[%s3 + $0x50] sm:$0xff]
    %v1808 = vld [vmem:[%s3 + $0x58] sm:$0xff]
    %v1809 = vld [vmem:[%s3 + $0x60] sm:$0xff]
    %v1810 = vld [vmem:[%s3 + $0x68] sm:$0xff]
    %v1811 = vld [vmem:[%s3 + $0x70] sm:$0xff]
    %v1812 = vld [vmem:[%s3 + $0x78] sm:$0xff]
    %v1813 = vld [vmem:[%s3 + $0x80] sm:$0xff]
    %v1814 = vld [vmem:[%s3 + $0x88] sm:$0xff]
    %v1815 = vld [vmem:[%s3 + $0x90] sm:$0xff]
    %v1816 = vld [vmem:[%s3 + $0x98] sm:$0xff]
    %v1817 = vld [vmem:[%s3 + $0xa0] sm:$0xff]
    %v1818 = vld [vmem:[%s3 + $0xa8] sm:$0xff]
    %v1819 = vld [vmem:[%s3 + $0xb0] sm:$0xff]
    %v1820 = vld [vmem:[%s3 + $0xb8] sm:$0xff]
    %v1821 = vld [vmem:[%s3 + $0xc0] sm:$0xff]
    %v1822 = vld [vmem:[%s3 + $0xc8] sm:$0xff]
    %v1823 = vld [vmem:[%s3 + $0xd0] sm:$0xff]
    %v1824 = vld [vmem:[%s3 + $0xd8] sm:$0xff]
    %v1825 = vld [vmem:[%s3 + $0xe0] sm:$0xff]
    %v1826 = vld [vmem:[%s3 + $0xe8] sm:$0xff]
    %v1827 = vld [vmem:[%s3 + $0xf0] sm:$0xff]
    %v1828 = vld [vmem:[%s3 + $0xf8] sm:$0xff]
    %v1829 = vld [vmem:[%s4] sm:$0x1]
    %v1831 = vlaneseq
    %v1832 = vshrl.u32 %v1831, 7
    %v1833 = vsub.s32 0, %v1832
    %v1834 = vrot.slane %v1829, %v1833
    %1836 = vmatprep.subr.mxu0 0.0
    %1837 = vmatpush1.msra.mxu0 %v1797
    %1838 = vmatprep.subr.mxu0 0.0
    %1839 = vmatpush1.msra.mxu0 %v1798
    %1840 = vmatprep.subr.mxu0 0.0
    %1841 = vmatpush1.msra.mxu0 %v1799
    %1842 = vmatprep.subr.mxu0 0.0
    %1843 = vmatpush1.msra.mxu0 %v1800
    %1844 = vmatprep.subr.mxu0 0.0
    %1845 = vmatpush1.msra.mxu0 %v1801
    %1846 = vmatprep.subr.mxu0 0.0
    %1847 = vmatpush1.msra.mxu0 %v1802
    %1848 = vmatprep.subr.mxu0 0.0
    %1849 = vmatpush1.msra.mxu0 %v1803
    %1850 = vmatprep.subr.mxu0 0.0
    %1851 = vmatpush1.msra.mxu0 %v1804
    %1852 = vmatprep.subr.mxu0 0.0
    %1853 = vmatpush1.msra.mxu0 %v1805
    %1854 = vmatprep.subr.mxu0 0.0
    %1855 = vmatpush1.msra.mxu0 %v1806
    %1856 = vmatprep.subr.mxu0 0.0
    %1857 = vmatpush1.msra.mxu0 %v1807
    %1858 = vmatprep.subr.mxu0 0.0
    %1859 = vmatpush1.msra.mxu0 %v1808
    %1860 = vmatprep.subr.mxu0 0.0
    %1861 = vmatpush1.msra.mxu0 %v1809
    %1862 = vmatprep.subr.mxu0 0.0
    %1863 = vmatpush1.msra.mxu0 %v1810
    %1864 = vmatprep.subr.mxu0 0.0
    %1865 = vmatpush1.msra.mxu0 %v1811
    %1866 = vmatprep.subr.mxu0 0.0
    %1867 = vmatpush1.msra.mxu0 %v1812
    %1868 = vmatprep.subr.mxu0 0.0
    %1869 = vmatpush1.msra.mxu0 %v1813
    %1870 = vmatprep.subr.mxu0 0.0
    %1871 = vmatpush1.msra.mxu0 %v1814
    %1872 = vmatprep.subr.mxu0 0.0
    %1873 = vmatpush1.msra.mxu0 %v1815
    %1874 = vmatprep.subr.mxu0 0.0
    %1875 = vmatpush1.msra.mxu0 %v1816
    %1876 = vmatprep.subr.mxu0 0.0
    %1877 = vmatpush1.msra.mxu0 %v1817
    %1878 = vmatprep.subr.mxu0 0.0
    %1879 = vmatpush1.msra.mxu0 %v1818
    %1880 = vmatprep.subr.mxu0 0.0
    %1881 = vmatpush1.msra.mxu0 %v1819
    %1882 = vmatprep.subr.mxu0 0.0
    %1883 = vmatpush1.msra.mxu0 %v1820
    %1884 = vmatprep.subr.mxu0 0.0
    %1885 = vmatpush1.msra.mxu0 %v1821
    %1886 = vmatprep.subr.mxu0 0.0
    %1887 = vmatpush1.msra.mxu0 %v1822
    %1888 = vmatprep.subr.mxu0 0.0
    %1889 = vmatpush1.msra.mxu0 %v1823
    %1890 = vmatprep.subr.mxu0 0.0
    %1891 = vmatpush1.msra.mxu0 %v1824
    %1892 = vmatprep.subr.mxu0 0.0
    %1893 = vmatpush1.msra.mxu0 %v1825
    %1894 = vmatprep.subr.mxu0 0.0
    %1895 = vmatpush1.msra.mxu0 %v1826
    %1896 = vmatprep.subr.mxu0 0.0
    %1897 = vmatpush1.msra.mxu0 %v1827
    %1898 = vmatprep.subr.mxu0 0.0
    %1899 = vmatpush1.msra.mxu0 %v1828
    %1900 = vmatprep.mubr.f32.mxu0 %v1796
    %1901 = vmatmul.mubr.f32.gmra.mrb[0].mxu0 %v1795
    %v1902 = vpop.f32.mrb[0].mxu0
    %v1903 = vadd.f32 %v1834, %v1902
    %v1904 = vpop.f32.mrb[0].mxu0
    %1905 = vdwg.mxu0
    %vm1906 = vcmask 41984
    %v1907 = vsel %vm1906, %v1903, 0.0
    %1908 = vadd.xlane.f32.xlu0 %v1907
    %v1909 = vpop.xlane.xlu0 %1908
    %v1910 = vrot.slane %v1909, 4
    %v1911 = vadd.f32 %v1909, %v1910
    %v1912 = vrot.slane %v1911, 2
    %v1913 = vadd.f32 %v1911, %v1912
    %v1914 = vrot.slane %v1913, 1
    %v1915 = vadd.f32 %v1913, %v1914
    %s1916 = vtos %v1915
    %v1917 = vrcp.pop 12.0
    %s1918 = vtos %v1917
    %s1919 = smul.f32 %s1916, %s1918
    %v1920 = vstv %s1919
    %v1921 = vsub.f32 %v1903, %v1920
    %1923 = vset.pattern.permute.xlu0 6
    %1924 = vperm.xlu0 %1923, %v1903
    %v1925 = vpop.permute.xlu0 %1924
    %v1927 = vadd.f32 %v1925, %v1921
    %1928 = vst.msk [vmem:[#allocation2] sm:$0x3] %vm1906, %v1927
    // Predicated region
    $region22: #{ddqn_forward.3} parent=1 // pred_check
      _
    $region23: #{ddqn_forward.3} parent=1 // pred_check_branch
      %1930 = sbr.rel (0) target = $region25
    $region24: #{ddqn_forward.3} parent=1 // pred_region
      %s1932 = ssub.s32 32, 32
      %1933 = vsyncadd [#allocation3], %s1932
      %s1935 = sshll.u32 [#allocation2], 4
      %s1936 = int_to_ptr.vmem [resolvable:$true] %s1935
      %1938 = dma.vmem_to_hbm [thread:$0]  %s1936, 32, %s5, [#allocation3]
    $region25: #{ddqn_forward.3} parent=1 // pred_fallthru
      _
    // Predicated region
    $region26: #{ddqn_forward.3} parent=1 // pred_check
      _
    $region27: #{ddqn_forward.3} parent=1 // pred_check_branch
      %1940 = sbr.rel (0) target = $region29
    $region28: #{ddqn_forward.3} parent=1 // pred_region
      %1941 = dma.done [#allocation3], 32
    $region29: #{ddqn_forward.3} parent=1 // pred_fallthru
      _
    %1942 = vsyncpa [#allocation3], 1

</llo_original>
